<compile_context>
chip_gen: v5e
topology: v5e:2x2
jax: 0.10.0
libtpu: 0.0.40
codegen_flags: <defaults>
</compile_context>

<pallas_src>
import jax
import jax.numpy as jnp
from jax import lax
from jax.experimental import pallas as pl
from jax.experimental.pallas import tpu as pltpu


# ----------------------------------------------------------------------------
# Pallas kernels
# ----------------------------------------------------------------------------
def _conv_pool_kernel(a0_ref, a1_ref, a2_ref, a3_ref, w_ref, b_ref, o_ref):
    """Fused conv-as-matmul over the 4 pooling quadrants + 2x2 max-pool + bias."""
    w = w_ref[...]
    m01 = jnp.maximum(
        jnp.dot(a0_ref[...], w, preferred_element_type=jnp.float32),
        jnp.dot(a1_ref[...], w, preferred_element_type=jnp.float32))
    m23 = jnp.maximum(
        jnp.dot(a2_ref[...], w, preferred_element_type=jnp.float32),
        jnp.dot(a3_ref[...], w, preferred_element_type=jnp.float32))
    o_ref[...] = (jnp.maximum(m01, m23) + b_ref[...]).astype(o_ref.dtype)


def _fc_tail_kernel(h_ref, w1_ref, b1_ref, w2_ref, b2_ref, o_ref):
    """softmax(sigmoid(h @ w1 + b1) @ w2 + b2) — all in one kernel, f32 epilogue."""
    z1 = jnp.dot(h_ref[...], w1_ref[...], preferred_element_type=jnp.float32)
    a1 = jax.nn.sigmoid(z1 + b1_ref[...])                       # f32 elementwise
    z2 = jnp.dot(a1.astype(w2_ref.dtype), w2_ref[...],
                 preferred_element_type=jnp.float32) + b2_ref[...]
    z2 = z2 - jnp.max(z2, axis=-1, keepdims=True)
    e = jnp.exp(z2)
    o_ref[...] = (e / jnp.sum(e, axis=-1, keepdims=True)).astype(o_ref.dtype)


# ----------------------------------------------------------------------------
# XLA glue: quadrant im2col (slicing / stacking only; all math is in-kernel)
# ----------------------------------------------------------------------------
def _quadrant_patches(x_nhwc):
    """x: (B, H, W, C) -> 4 im2col matrices (B*Ho*Wo, 9*C), one per pool quadrant.

    Quadrant (dy, dx) holds the 3x3 patches of the conv outputs that the 2x2
    pooling window reads at offset (dy, dx); columns are ordered (kh, kw, cin).
    """
    B, H, W, C = x_nhwc.shape
    Ho, Wo = H // 2, W // 2
    xp = jnp.pad(x_nhwc, ((0, 0), (1, 1), (1, 1), (0, 0)))
    quads = []
    for dy in (0, 1):
        for dx in (0, 1):
            taps = []
            for kh in range(3):
                for kw in range(3):
                    taps.append(xp[:, dy + kh:dy + kh + 2 * Ho:2,
                                   dx + kw:dx + kw + 2 * Wo:2, :])
            p = jnp.stack(taps, axis=3)                 # (B, Ho, Wo, 9, C)
            quads.append(p.reshape(B * Ho * Wo, 9 * C))
    return quads


# ----------------------------------------------------------------------------
# Pallas wrappers
# ----------------------------------------------------------------------------
def conv3x3_pool2x2(x_nhwc, wm, bias, *, tile_m=512, out_dtype=jnp.bfloat16):
    """Fused Conv2d(Cin, Cout, 3, 1, 1) + MaxPool2d(2) on an NHWC input.

    wm:   (9*Cin, Cout) weight matrix, rows ordered (kh, kw, cin).
    bias: (1, Cout) float32.
    Returns (B, H//2, W//2, Cout) in `out_dtype`.
    """
    B, H, W, Cin = x_nhwc.shape
    K, Cout = wm.shape
    Ho, Wo = H // 2, W // 2
    M = B * Ho * Wo
    quads = _quadrant_patches(x_nhwc.astype(wm.dtype))

    tm = M if M <= tile_m else tile_m
    grid = (pl.cdiv(M, tm),)
    row_spec = pl.BlockSpec((tm, K), lambda i: (i, 0))
    out = pl.pallas_call(
        _conv_pool_kernel,
        out_shape=jax.ShapeDtypeStruct((M, Cout), out_dtype),
        grid=grid,
        in_specs=[row_spec, row_spec, row_spec, row_spec,
                  pl.BlockSpec((K, Cout), lambda i: (0, 0)),
                  pl.BlockSpec((1, Cout), lambda i: (0, 0))],
        out_specs=pl.BlockSpec((tm, Cout), lambda i: (i, 0)),
        compiler_params=pltpu.CompilerParams(
            dimension_semantics=("parallel",)),
    )(*quads, wm, bias)
    return out.reshape(B, Ho, Wo, Cout)


def fc_tail(h, w1, b1, w2, b2, *, tile_b=128):
    """softmax(sigmoid(h @ w1 + b1) @ w2 + b2) in one pallas_call, tiled over rows."""
    B, K = h.shape
    N1 = w1.shape[1]
    N2 = w2.shape[1]
    tb = B if B <= tile_b else tile_b
    grid = (pl.cdiv(B, tb),)
    return pl.pallas_call(
        _fc_tail_kernel,
        out_shape=jax.ShapeDtypeStruct((B, N2), jnp.float32),
        grid=grid,
        in_specs=[pl.BlockSpec((tb, K), lambda i: (i, 0)),
                  pl.BlockSpec((K, N1), lambda i: (0, 0)),
                  pl.BlockSpec((1, N1), lambda i: (0, 0)),
                  pl.BlockSpec((N1, N2), lambda i: (0, 0)),
                  pl.BlockSpec((1, N2), lambda i: (0, 0))],
        out_specs=pl.BlockSpec((tb, N2), lambda i: (i, 0)),
        compiler_params=pltpu.CompilerParams(
            dimension_semantics=("parallel",)),
    )(h.astype(w1.dtype), w1, b1, w2, b2)


# ----------------------------------------------------------------------------
# Parameters (PyTorch layout -> kernel-ready layout, done once)
# ----------------------------------------------------------------------------
def init_torch_params(key):
    """Random params in PyTorch layout: Conv2d (Cout,Cin,kh,kw); Linear (out,in)."""
    ks = jax.random.split(key, 8)
    s = 0.05
    return {
        "conv1_w": jax.random.normal(ks[0], (64, 1, 3, 3), jnp.float32) * s,
        "conv1_b": jax.random.normal(ks[1], (64,), jnp.float32) * s,
        "conv2_w": jax.random.normal(ks[2], (128, 64, 3, 3), jnp.float32) * s,
        "conv2_b": jax.random.normal(ks[3], (128,), jnp.float32) * s,
        "fc1_w": jax.random.normal(ks[4], (128, 128 * 7 * 7), jnp.float32) * s,
        "fc1_b": jax.random.normal(ks[5], (128,), jnp.float32) * s,
        "fc2_w": jax.random.normal(ks[6], (10, 128), jnp.float32) * s,
        "fc2_b": jax.random.normal(ks[7], (10,), jnp.float32) * s,
    }


def prepare_params(tp, compute_dtype=jnp.bfloat16):
    """One-time layout/dtype prep:
    * conv weights -> (9*Cin, Cout) with rows ordered (kh, kw, cin);
    * fc1 weight columns permuted to the NHWC flatten order (h, w, c) and
      pre-transposed to (K, N); fc2 pre-transposed to (K, N);
    * conv2/fc matmul operands cast to bf16 (conv1 kept f32: K=9, memory-bound).
    """
    def conv_mat(w, dtype):
        cout, cin = w.shape[0], w.shape[1]
        return w.transpose(2, 3, 1, 0).reshape(9 * cin, cout).astype(dtype)

    fc1 = tp["fc1_w"].reshape(128, 128, 7, 7)                     # (out, c, h, w)
    fc1 = fc1.transpose(2, 3, 1, 0).reshape(7 * 7 * 128, 128)     # rows (h, w, c)
    return {
        "conv1_wm": conv_mat(tp["conv1_w"], jnp.float32),
        "conv1_b": tp["conv1_b"].reshape(1, -1).astype(jnp.float32),
        "conv2_wm": conv_mat(tp["conv2_w"], compute_dtype),
        "conv2_b": tp["conv2_b"].reshape(1, -1).astype(jnp.float32),
        "fc1_wm": fc1.astype(compute_dtype),
        "fc1_b": tp["fc1_b"].reshape(1, -1).astype(jnp.float32),
        "fc2_wm": tp["fc2_w"].T.astype(compute_dtype),
        "fc2_b": tp["fc2_b"].reshape(1, -1).astype(jnp.float32),
    }


# ----------------------------------------------------------------------------
# Model forward + pure-XLA reference
# ----------------------------------------------------------------------------
def mnist_forward(params, x):
    """x: (B, 1, 28, 28) NCHW float32 -> (B, 10) class probabilities."""
    B = x.shape[0]
    h = jnp.transpose(x, (0, 2, 3, 1))                               # (B,28,28,1)
    h = conv3x3_pool2x2(h, params["conv1_wm"], params["conv1_b"])    # (B,14,14,64)
    h = conv3x3_pool2x2(h, params["conv2_wm"], params["conv2_b"])    # (B,7,7,128)
    h = h.reshape(B, 7 * 7 * 128)                                    # NHWC flatten
    return fc_tail(h, params["fc1_wm"], params["fc1_b"],
                   params["fc2_wm"], params["fc2_b"])                # (B, 10)


def mnist_reference(tp, x):
    """Pure-XLA f32 reference with PyTorch semantics (correctness check)."""
    dn = ("NCHW", "OIHW", "NCHW")
    y = lax.conv_general_dilated(x, tp["conv1_w"], (1, 1), ((1, 1), (1, 1)),
                                 dimension_numbers=dn)
    y = y + tp["conv1_b"].reshape(1, -1, 1, 1)
    y = lax.reduce_window(y, -jnp.inf, lax.max, (1, 1, 2, 2), (1, 1, 2, 2), "VALID")
    y = lax.conv_general_dilated(y, tp["conv2_w"], (1, 1), ((1, 1), (1, 1)),
                                 dimension_numbers=dn)
    y = y + tp["conv2_b"].reshape(1, -1, 1, 1)
    y = lax.reduce_window(y, -jnp.inf, lax.max, (1, 1, 2, 2), (1, 1, 2, 2), "VALID")
    y = y.reshape(y.shape[0], -1)
    y = jax.nn.sigmoid(y @ tp["fc1_w"].T + tp["fc1_b"])
    y = y @ tp["fc2_w"].T + tp["fc2_b"]
    return jax.nn.softmax(y, axis=-1)


if __name__ == "__main__":
    key = jax.random.PRNGKey(0)
    k_param, k_x = jax.random.split(key)
    torch_params = init_torch_params(k_param)
    params = prepare_params(torch_params)

    # Input shape is pinned by Linear(128*7*7, 128): 28x28 single channel; batch=2.
    x = jax.random.normal(k_x, (2, 1, 28, 28), jnp.float32)

    fwd = jax.jit(mnist_forward)
    out = jax.block_until_ready(fwd(params, x))

    assert out.shape == (2, 10)
    # Softmax rows sum to 1 (normalization done in f32 inside the kernel).
    assert jnp.allclose(jnp.sum(out, axis=-1), 1.0, atol=1e-4)
    # Matches the f32 XLA reference up to bf16-matmul drift.
    ref = mnist_reference(torch_params, x)
    assert jnp.allclose(out, ref, atol=5e-2)
    print("KERNEL_OK")
</pallas_src>

<mosaic_0001>
module attributes {stable_mosaic.version = 11 : i64} {
  func.func @_conv_pool_kernel(%arg0: i32, %arg1: memref<392x9xf32, #tpu.memory_space<vmem>>, %arg2: memref<392x9xf32, #tpu.memory_space<vmem>>, %arg3: memref<392x9xf32, #tpu.memory_space<vmem>>, %arg4: memref<392x9xf32, #tpu.memory_space<vmem>>, %arg5: memref<9x64xf32, #tpu.memory_space<vmem>>, %arg6: memref<1x64xf32, #tpu.memory_space<vmem>>, %arg7: memref<392x64xbf16, #tpu.memory_space<vmem>>) attributes {dimension_semantics = [#tpu.dimension_semantics<parallel>], iteration_bounds = array<i64: 1>, scalar_prefetch = 0 : i64, scratch_operands = 0 : i64, tpu.core_type = #tpu.core_type<tc>, window_params = [{transform_indices = @transform_0, window_bounds = array<i64: 392, 9>}, {transform_indices = @transform_1, window_bounds = array<i64: 392, 9>}, {transform_indices = @transform_2, window_bounds = array<i64: 392, 9>}, {transform_indices = @transform_3, window_bounds = array<i64: 392, 9>}, {pipeline_mode = #tpu.pipeline_mode<synchronous>, transform_indices = @transform_4, window_bounds = array<i64: 9, 64>}, {pipeline_mode = #tpu.pipeline_mode<synchronous>, transform_indices = @transform_5, window_bounds = array<i64: 1, 64>}, {transform_indices = @transform_6, window_bounds = array<i64: 392, 64>}]} {
    %c0 = arith.constant 0 : index
    %c0_0 = arith.constant 0 : index
    %0 = vector.load %arg5[%c0, %c0_0] : memref<9x64xf32, #tpu.memory_space<vmem>>, vector<9x64xf32>
    %c0_1 = arith.constant 0 : index
    %c0_2 = arith.constant 0 : index
    %1 = vector.load %arg1[%c0_1, %c0_2] : memref<392x9xf32, #tpu.memory_space<vmem>>, vector<392x9xf32>
    %cst = arith.constant dense<0.000000e+00> : vector<392x64xf32>
    %2 = tpu.matmul %1, %0, %cst {dimension_numbers = #tpu.dot_dimension_numbers<[1], [0], [0], [1], [0, 0, 1, 1], [], []>} : vector<392x9xf32>, vector<9x64xf32>, vector<392x64xf32> -> vector<392x64xf32>
    %c0_3 = arith.constant 0 : index
    %c0_4 = arith.constant 0 : index
    %3 = vector.load %arg2[%c0_3, %c0_4] : memref<392x9xf32, #tpu.memory_space<vmem>>, vector<392x9xf32>
    %cst_5 = arith.constant dense<0.000000e+00> : vector<392x64xf32>
    %4 = tpu.matmul %3, %0, %cst_5 {dimension_numbers = #tpu.dot_dimension_numbers<[1], [0], [0], [1], [0, 0, 1, 1], [], []>} : vector<392x9xf32>, vector<9x64xf32>, vector<392x64xf32> -> vector<392x64xf32>
    %5 = arith.maximumf %2, %4 : vector<392x64xf32>
    %c0_6 = arith.constant 0 : index
    %c0_7 = arith.constant 0 : index
    %6 = vector.load %arg3[%c0_6, %c0_7] : memref<392x9xf32, #tpu.memory_space<vmem>>, vector<392x9xf32>
    %cst_8 = arith.constant dense<0.000000e+00> : vector<392x64xf32>
    %7 = tpu.matmul %6, %0, %cst_8 {dimension_numbers = #tpu.dot_dimension_numbers<[1], [0], [0], [1], [0, 0, 1, 1], [], []>} : vector<392x9xf32>, vector<9x64xf32>, vector<392x64xf32> -> vector<392x64xf32>
    %c0_9 = arith.constant 0 : index
    %c0_10 = arith.constant 0 : index
    %8 = vector.load %arg4[%c0_9, %c0_10] : memref<392x9xf32, #tpu.memory_space<vmem>>, vector<392x9xf32>
    %cst_11 = arith.constant dense<0.000000e+00> : vector<392x64xf32>
    %9 = tpu.matmul %8, %0, %cst_11 {dimension_numbers = #tpu.dot_dimension_numbers<[1], [0], [0], [1], [0, 0, 1, 1], [], []>} : vector<392x9xf32>, vector<9x64xf32>, vector<392x64xf32> -> vector<392x64xf32>
    %10 = arith.maximumf %7, %9 : vector<392x64xf32>
    %11 = arith.maximumf %5, %10 : vector<392x64xf32>
    %c0_12 = arith.constant 0 : index
    %c0_13 = arith.constant 0 : index
    %12 = vector.load %arg6[%c0_12, %c0_13] : memref<1x64xf32, #tpu.memory_space<vmem>>, vector<1x64xf32>
    %13 = vector.broadcast %12 : vector<1x64xf32> to vector<392x64xf32>
    %14 = arith.addf %11, %13 : vector<392x64xf32>
    %15 = arith.truncf %14 : vector<392x64xf32> to vector<392x64xbf16>
    %c0_14 = arith.constant 0 : index
    %c0_15 = arith.constant 0 : index
    %16 = vector.load %arg7[%c0_14, %c0_15] : memref<392x64xbf16, #tpu.memory_space<vmem>>, vector<392x64xbf16>
    tpu.vector_store %arg7[%c0_14, %c0_15], %15 {strides = array<i32>} : memref<392x64xbf16, #tpu.memory_space<vmem>>, vector<392x64xbf16>,
    return
  }
  func.func @transform_0(%arg0: i32) -> (i32, i32) {
    %c0_i32 = arith.constant 0 : i32
    %c0_i32_0 = arith.constant 0 : i32
    return %arg0, %c0_i32 : i32, i32
  }
  func.func @transform_1(%arg0: i32) -> (i32, i32) {
    %c0_i32 = arith.constant 0 : i32
    %c0_i32_0 = arith.constant 0 : i32
    return %arg0, %c0_i32 : i32, i32
  }
  func.func @transform_2(%arg0: i32) -> (i32, i32) {
    %c0_i32 = arith.constant 0 : i32
    %c0_i32_0 = arith.constant 0 : i32
    return %arg0, %c0_i32 : i32, i32
  }
  func.func @transform_3(%arg0: i32) -> (i32, i32) {
    %c0_i32 = arith.constant 0 : i32
    %c0_i32_0 = arith.constant 0 : i32
    return %arg0, %c0_i32 : i32, i32
  }
  func.func @transform_4(%arg0: i32) -> (i32, i32) {
    %c0_i32 = arith.constant 0 : i32
    %c0_i32_0 = arith.constant 0 : i32
    %c0_i32_1 = arith.constant 0 : i32
    return %c0_i32, %c0_i32_0 : i32, i32
  }
  func.func @transform_5(%arg0: i32) -> (i32, i32) {
    %c0_i32 = arith.constant 0 : i32
    %c0_i32_0 = arith.constant 0 : i32
    %c0_i32_1 = arith.constant 0 : i32
    return %c0_i32, %c0_i32_0 : i32, i32
  }
  func.func @transform_6(%arg0: i32) -> (i32, i32) {
    %c0_i32 = arith.constant 0 : i32
    %c0_i32_0 = arith.constant 0 : i32
    return %arg0, %c0_i32 : i32, i32
  }
}

module attributes {stable_mosaic.version = 11 : i64} {
  func.func @_conv_pool_kernel(%arg0: i32, %arg1: memref<98x576xbf16, #tpu.memory_space<vmem>>, %arg2: memref<98x576xbf16, #tpu.memory_space<vmem>>, %arg3: memref<98x576xbf16, #tpu.memory_space<vmem>>, %arg4: memref<98x576xbf16, #tpu.memory_space<vmem>>, %arg5: memref<576x128xbf16, #tpu.memory_space<vmem>>, %arg6: memref<1x128xf32, #tpu.memory_space<vmem>>, %arg7: memref<98x128xbf16, #tpu.memory_space<vmem>>) attributes {dimension_semantics = [#tpu.dimension_semantics<parallel>], iteration_bounds = array<i64: 1>, scalar_prefetch = 0 : i64, scratch_operands = 0 : i64, tpu.core_type = #tpu.core_type<tc>, window_params = [{transform_indices = @transform_0, window_bounds = array<i64: 98, 576>}, {transform_indices = @transform_1, window_bounds = array<i64: 98, 576>}, {transform_indices = @transform_2, window_bounds = array<i64: 98, 576>}, {transform_indices = @transform_3, window_bounds = array<i64: 98, 576>}, {pipeline_mode = #tpu.pipeline_mode<synchronous>, transform_indices = @transform_4, window_bounds = array<i64: 576, 128>}, {pipeline_mode = #tpu.pipeline_mode<synchronous>, transform_indices = @transform_5, window_bounds = array<i64: 1, 128>}, {transform_indices = @transform_6, window_bounds = array<i64: 98, 128>}]} {
    %c0 = arith.constant 0 : index
    %c0_0 = arith.constant 0 : index
    %0 = vector.load %arg5[%c0, %c0_0] : memref<576x128xbf16, #tpu.memory_space<vmem>>, vector<576x128xbf16>
    %c0_1 = arith.constant 0 : index
    %c0_2 = arith.constant 0 : index
    %1 = vector.load %arg1[%c0_1, %c0_2] : memref<98x576xbf16, #tpu.memory_space<vmem>>, vector<98x576xbf16>
    %cst = arith.constant dense<0.000000e+00> : vector<98x128xf32>
    %2 = tpu.matmul %1, %0, %cst {dimension_numbers = #tpu.dot_dimension_numbers<[1], [0], [0], [1], [0, 0, 1, 1], [], []>} : vector<98x576xbf16>, vector<576x128xbf16>, vector<98x128xf32> -> vector<98x128xf32>
    %c0_3 = arith.constant 0 : index
    %c0_4 = arith.constant 0 : index
    %3 = vector.load %arg2[%c0_3, %c0_4] : memref<98x576xbf16, #tpu.memory_space<vmem>>, vector<98x576xbf16>
    %cst_5 = arith.constant dense<0.000000e+00> : vector<98x128xf32>
    %4 = tpu.matmul %3, %0, %cst_5 {dimension_numbers = #tpu.dot_dimension_numbers<[1], [0], [0], [1], [0, 0, 1, 1], [], []>} : vector<98x576xbf16>, vector<576x128xbf16>, vector<98x128xf32> -> vector<98x128xf32>
    %5 = arith.maximumf %2, %4 : vector<98x128xf32>
    %c0_6 = arith.constant 0 : index
    %c0_7 = arith.constant 0 : index
    %6 = vector.load %arg3[%c0_6, %c0_7] : memref<98x576xbf16, #tpu.memory_space<vmem>>, vector<98x576xbf16>
    %cst_8 = arith.constant dense<0.000000e+00> : vector<98x128xf32>
    %7 = tpu.matmul %6, %0, %cst_8 {dimension_numbers = #tpu.dot_dimension_numbers<[1], [0], [0], [1], [0, 0, 1, 1], [], []>} : vector<98x576xbf16>, vector<576x128xbf16>, vector<98x128xf32> -> vector<98x128xf32>
    %c0_9 = arith.constant 0 : index
    %c0_10 = arith.constant 0 : index
    %8 = vector.load %arg4[%c0_9, %c0_10] : memref<98x576xbf16, #tpu.memory_space<vmem>>, vector<98x576xbf16>
    %cst_11 = arith.constant dense<0.000000e+00> : vector<98x128xf32>
    %9 = tpu.matmul %8, %0, %cst_11 {dimension_numbers = #tpu.dot_dimension_numbers<[1], [0], [0], [1], [0, 0, 1, 1], [], []>} : vector<98x576xbf16>, vector<576x128xbf16>, vector<98x128xf32> -> vector<98x128xf32>
    %10 = arith.maximumf %7, %9 : vector<98x128xf32>
    %11 = arith.maximumf %5, %10 : vector<98x128xf32>
    %c0_12 = arith.constant 0 : index
    %c0_13 = arith.constant 0 : index
    %12 = vector.load %arg6[%c0_12, %c0_13] : memref<1x128xf32, #tpu.memory_space<vmem>>, vector<1x128xf32>
    %13 = vector.broadcast %12 : vector<1x128xf32> to vector<98x128xf32>
    %14 = arith.addf %11, %13 : vector<98x128xf32>
    %15 = arith.truncf %14 : vector<98x128xf32> to vector<98x128xbf16>
    %c0_14 = arith.constant 0 : index
    %c0_15 = arith.constant 0 : index
    %16 = vector.load %arg7[%c0_14, %c0_15] : memref<98x128xbf16, #tpu.memory_space<vmem>>, vector<98x128xbf16>
    tpu.vector_store %arg7[%c0_14, %c0_15], %15 {strides = array<i32>} : memref<98x128xbf16, #tpu.memory_space<vmem>>, vector<98x128xbf16>,
    return
  }
  func.func @transform_0(%arg0: i32) -> (i32, i32) {
    %c0_i32 = arith.constant 0 : i32
    %c0_i32_0 = arith.constant 0 : i32
    return %arg0, %c0_i32 : i32, i32
  }
  func.func @transform_1(%arg0: i32) -> (i32, i32) {
    %c0_i32 = arith.constant 0 : i32
    %c0_i32_0 = arith.constant 0 : i32
    return %arg0, %c0_i32 : i32, i32
  }
  func.func @transform_2(%arg0: i32) -> (i32, i32) {
    %c0_i32 = arith.constant 0 : i32
    %c0_i32_0 = arith.constant 0 : i32
    return %arg0, %c0_i32 : i32, i32
  }
  func.func @transform_3(%arg0: i32) -> (i32, i32) {
    %c0_i32 = arith.constant 0 : i32
    %c0_i32_0 = arith.constant 0 : i32
    return %arg0, %c0_i32 : i32, i32
  }
  func.func @transform_4(%arg0: i32) -> (i32, i32) {
    %c0_i32 = arith.constant 0 : i32
    %c0_i32_0 = arith.constant 0 : i32
    %c0_i32_1 = arith.constant 0 : i32
    return %c0_i32, %c0_i32_0 : i32, i32
  }
  func.func @transform_5(%arg0: i32) -> (i32, i32) {
    %c0_i32 = arith.constant 0 : i32
    %c0_i32_0 = arith.constant 0 : i32
    %c0_i32_1 = arith.constant 0 : i32
    return %c0_i32, %c0_i32_0 : i32, i32
  }
  func.func @transform_6(%arg0: i32) -> (i32, i32) {
    %c0_i32 = arith.constant 0 : i32
    %c0_i32_0 = arith.constant 0 : i32
    return %arg0, %c0_i32 : i32, i32
  }
}

module attributes {stable_mosaic.version = 11 : i64} {
  func.func @_fc_tail_kernel(%arg0: i32, %arg1: memref<2x6272xbf16, #tpu.memory_space<vmem>>, %arg2: memref<6272x128xbf16, #tpu.memory_space<vmem>>, %arg3: memref<1x128xf32, #tpu.memory_space<vmem>>, %arg4: memref<128x10xbf16, #tpu.memory_space<vmem>>, %arg5: memref<1x10xf32, #tpu.memory_space<vmem>>, %arg6: memref<2x10xf32, #tpu.memory_space<vmem>>) attributes {dimension_semantics = [#tpu.dimension_semantics<parallel>], iteration_bounds = array<i64: 1>, scalar_prefetch = 0 : i64, scratch_operands = 0 : i64, tpu.core_type = #tpu.core_type<tc>, window_params = [{transform_indices = @transform_0, window_bounds = array<i64: 2, 6272>}, {pipeline_mode = #tpu.pipeline_mode<synchronous>, transform_indices = @transform_1, window_bounds = array<i64: 6272, 128>}, {pipeline_mode = #tpu.pipeline_mode<synchronous>, transform_indices = @transform_2, window_bounds = array<i64: 1, 128>}, {pipeline_mode = #tpu.pipeline_mode<synchronous>, transform_indices = @transform_3, window_bounds = array<i64: 128, 10>}, {pipeline_mode = #tpu.pipeline_mode<synchronous>, transform_indices = @transform_4, window_bounds = array<i64: 1, 10>}, {transform_indices = @transform_5, window_bounds = array<i64: 2, 10>}]} {
    %c0 = arith.constant 0 : index
    %c0_0 = arith.constant 0 : index
    %0 = vector.load %arg1[%c0, %c0_0] : memref<2x6272xbf16, #tpu.memory_space<vmem>>, vector<2x6272xbf16>
    %c0_1 = arith.constant 0 : index
    %c0_2 = arith.constant 0 : index
    %1 = vector.load %arg2[%c0_1, %c0_2] : memref<6272x128xbf16, #tpu.memory_space<vmem>>, vector<6272x128xbf16>
    %cst = arith.constant dense<0.000000e+00> : vector<2x128xf32>
    %2 = tpu.matmul %0, %1, %cst {dimension_numbers = #tpu.dot_dimension_numbers<[1], [0], [0], [1], [0, 0, 1, 1], [], []>} : vector<2x6272xbf16>, vector<6272x128xbf16>, vector<2x128xf32> -> vector<2x128xf32>
    %c0_3 = arith.constant 0 : index
    %c0_4 = arith.constant 0 : index
    %3 = vector.load %arg3[%c0_3, %c0_4] : memref<1x128xf32, #tpu.memory_space<vmem>>, vector<1x128xf32>
    %4 = vector.broadcast %3 : vector<1x128xf32> to vector<2x128xf32>
    %5 = arith.addf %2, %4 : vector<2x128xf32>
    %6 = arith.negf %5 : vector<2x128xf32>
    %7 = math.exp %6 : vector<2x128xf32>
    %cst_5 = arith.constant 1.000000e+00 : f32
    %8 = vector.broadcast %cst_5 : f32 to vector<2x128xf32>
    %9 = arith.addf %8, %7 : vector<2x128xf32>
    %10 = arith.divf %8, %9 : vector<2x128xf32>
    %11 = arith.truncf %10 : vector<2x128xf32> to vector<2x128xbf16>
    %c0_6 = arith.constant 0 : index
    %c0_7 = arith.constant 0 : index
    %12 = vector.load %arg4[%c0_6, %c0_7] : memref<128x10xbf16, #tpu.memory_space<vmem>>, vector<128x10xbf16>
    %cst_8 = arith.constant dense<0.000000e+00> : vector<2x10xf32>
    %13 = tpu.matmul %11, %12, %cst_8 {dimension_numbers = #tpu.dot_dimension_numbers<[1], [0], [0], [1], [0, 0, 1, 1], [], []>} : vector<2x128xbf16>, vector<128x10xbf16>, vector<2x10xf32> -> vector<2x10xf32>
    %c0_9 = arith.constant 0 : index
    %c0_10 = arith.constant 0 : index
    %14 = vector.load %arg5[%c0_9, %c0_10] : memref<1x10xf32, #tpu.memory_space<vmem>>, vector<1x10xf32>
    %15 = vector.broadcast %14 : vector<1x10xf32> to vector<2x10xf32>
    %16 = arith.addf %13, %15 : vector<2x10xf32>
    %cst_11 = arith.constant dense<0xFF800000> : vector<2xf32>
    %17 = vector.multi_reduction <maximumf>, %16, %cst_11 [1] : vector<2x10xf32> to vector<2xf32>
    %18 = vector.shape_cast %17 : vector<2xf32> to vector<2x1xf32>
    %19 = vector.broadcast %18 : vector<2x1xf32> to vector<2x10xf32>
    %20 = arith.subf %16, %19 : vector<2x10xf32>
    %21 = math.exp %20 : vector<2x10xf32>
    %cst_12 = arith.constant dense<0.000000e+00> : vector<2xf32>
    %22 = vector.multi_reduction <add>, %21, %cst_12 [1] : vector<2x10xf32> to vector<2xf32>
    %23 = vector.shape_cast %22 : vector<2xf32> to vector<2x1xf32>
    %24 = vector.broadcast %23 : vector<2x1xf32> to vector<2x10xf32>
    %25 = arith.divf %21, %24 : vector<2x10xf32>
    %c0_13 = arith.constant 0 : index
    %c0_14 = arith.constant 0 : index
    %26 = vector.load %arg6[%c0_13, %c0_14] : memref<2x10xf32, #tpu.memory_space<vmem>>, vector<2x10xf32>
    tpu.vector_store %arg6[%c0_13, %c0_14], %25 {strides = array<i32>} : memref<2x10xf32, #tpu.memory_space<vmem>>, vector<2x10xf32>,
    return
  }
  func.func @transform_0(%arg0: i32) -> (i32, i32) {
    %c0_i32 = arith.constant 0 : i32
    %c0_i32_0 = arith.constant 0 : i32
    return %arg0, %c0_i32 : i32, i32
  }
  func.func @transform_1(%arg0: i32) -> (i32, i32) {
    %c0_i32 = arith.constant 0 : i32
    %c0_i32_0 = arith.constant 0 : i32
    %c0_i32_1 = arith.constant 0 : i32
    return %c0_i32, %c0_i32_0 : i32, i32
  }
  func.func @transform_2(%arg0: i32) -> (i32, i32) {
    %c0_i32 = arith.constant 0 : i32
    %c0_i32_0 = arith.constant 0 : i32
    %c0_i32_1 = arith.constant 0 : i32
    return %c0_i32, %c0_i32_0 : i32, i32
  }
  func.func @transform_3(%arg0: i32) -> (i32, i32) {
    %c0_i32 = arith.constant 0 : i32
    %c0_i32_0 = arith.constant 0 : i32
    %c0_i32_1 = arith.constant 0 : i32
    return %c0_i32, %c0_i32_0 : i32, i32
  }
  func.func @transform_4(%arg0: i32) -> (i32, i32) {
    %c0_i32 = arith.constant 0 : i32
    %c0_i32_0 = arith.constant 0 : i32
    %c0_i32_1 = arith.constant 0 : i32
    return %c0_i32, %c0_i32_0 : i32, i32
  }
  func.func @transform_5(%arg0: i32) -> (i32, i32) {
    %c0_i32 = arith.constant 0 : i32
    %c0_i32_0 = arith.constant 0 : i32
    return %arg0, %c0_i32 : i32, i32
  }
}

</mosaic_0001>

<llo_original>
// kernel: mnist_forward.3
$region0: #{mnist_forward.3}
  #allocation0 [shape = 'u32[]', space=smem, size = 0x4, offset = 0x4, fixed_abs, tag = 'smem constant byte address 0x4 - core index']
  #allocation1 [shape = 'u32[72,128]{1,0:T(1,128)}', space=vmem, size = 0x9000, scoped, tag = 'internal scratch']
  %s0 = inlined_call_operand.vmem [shape: f32[392,9], index: 0, kind: input, shape index: {}]
  %s1 = inlined_call_operand.vmem [shape: f32[392,9], index: 1, kind: input, shape index: {}]
  %s2 = inlined_call_operand.vmem [shape: f32[392,9], index: 2, kind: input, shape index: {}]
  %s3 = inlined_call_operand.vmem [shape: f32[392,9], index: 3, kind: input, shape index: {}]
  %s4 = inlined_call_operand.vmem [shape: f32[9,64], index: 4, kind: input, shape index: {}]
  %s5 = inlined_call_operand.vmem [shape: f32[1,64], index: 5, kind: input, shape index: {}]
  %s6 = inlined_call_operand.vmem [shape: bf16[392,64], index: 6, kind: output, shape index: {}]
  %s7 = sld [smem:[#allocation0]]
  $region34: #{mnist_forward.3} parent=0
    _
  %s9 = ssub.s32 1, %s7
  %s10 = scalar_select 0, %s9, %s7
  // Predicated region
  $region2: #{mnist_forward.3} parent=0 // pred_check
    _
  $region3: #{mnist_forward.3} parent=0 // pred_check_branch
    %12 = sbr.rel (0) target = $region5
  $region4: #{mnist_forward.3} parent=0 // pred_region
    _
  $region5: #{mnist_forward.3} parent=0 // pred_fallthru
    _
  // Predicated region
  $region6: #{mnist_forward.3} parent=0 // pred_check
    _
  $region7: #{mnist_forward.3} parent=0 // pred_check_branch
    %14 = sbr.rel (0) target = $region9
  $region8: #{mnist_forward.3} parent=0 // pred_region
    _
  $region9: #{mnist_forward.3} parent=0 // pred_fallthru
    _
  // Predicated region
  $region10: #{mnist_forward.3} parent=0 // pred_check
    _
  $region11: #{mnist_forward.3} parent=0 // pred_check_branch
    %16 = sbr.rel (0) target = $region13
  $region12: #{mnist_forward.3} parent=0 // pred_region
    _
  $region13: #{mnist_forward.3} parent=0 // pred_fallthru
    _
  // Predicated region
  $region14: #{mnist_forward.3} parent=0 // pred_check
    _
  $region15: #{mnist_forward.3} parent=0 // pred_check_branch
    %18 = sbr.rel (0) target = $region17
  $region16: #{mnist_forward.3} parent=0 // pred_region
    _
  $region17: #{mnist_forward.3} parent=0 // pred_fallthru
    _
  // Predicated region
  $region18: #{mnist_forward.3} parent=0 // pred_check
    _
  $region19: #{mnist_forward.3} parent=0 // pred_check_branch
    %20 = sbr.rel (0) target = $region21
  $region20: #{mnist_forward.3} parent=0 // pred_region
    _
  $region21: #{mnist_forward.3} parent=0 // pred_fallthru
    _
  // Predicated region
  $region22: #{mnist_forward.3} parent=0 // pred_check
    _
  $region23: #{mnist_forward.3} parent=0 // pred_check_branch
    %22 = sbr.rel (0) target = $region25
  $region24: #{mnist_forward.3} parent=0 // pred_region
    _
  $region25: #{mnist_forward.3} parent=0 // pred_fallthru
    _
  %v23 = vld [vmem:[%s4] sm:$0xff]
  %v24 = vld [vmem:[%s4 + $0x8] sm:$0x1]
  %v25 = vld [vmem:[%s0] sm:$0xff]
  %v26 = vld [vmem:[%s0 + $0x8] sm:$0xff]
  %v27 = vld [vmem:[%s0 + $0x10] sm:$0xff]
  %v28 = vld [vmem:[%s0 + $0x18] sm:$0xff]
  %v29 = vld [vmem:[%s0 + $0x20] sm:$0xff]
  %v30 = vld [vmem:[%s0 + $0x28] sm:$0xff]
  %v31 = vld [vmem:[%s0 + $0x30] sm:$0xff]
  %v32 = vld [vmem:[%s0 + $0x38] sm:$0xff]
  %v33 = vld [vmem:[%s0 + $0x40] sm:$0xff]
  %v34 = vld [vmem:[%s0 + $0x48] sm:$0xff]
  %v35 = vld [vmem:[%s0 + $0x50] sm:$0xff]
  %v36 = vld [vmem:[%s0 + $0x58] sm:$0xff]
  %v37 = vld [vmem:[%s0 + $0x60] sm:$0xff]
  %v38 = vld [vmem:[%s0 + $0x68] sm:$0xff]
  %v39 = vld [vmem:[%s0 + $0x70] sm:$0xff]
  %v40 = vld [vmem:[%s0 + $0x78] sm:$0xff]
  %v41 = vld [vmem:[%s0 + $0x80] sm:$0xff]
  %v42 = vld [vmem:[%s0 + $0x88] sm:$0xff]
  %v43 = vld [vmem:[%s0 + $0x90] sm:$0xff]
  %v44 = vld [vmem:[%s0 + $0x98] sm:$0xff]
  %v45 = vld [vmem:[%s0 + $0xa0] sm:$0xff]
  %v46 = vld [vmem:[%s0 + $0xa8] sm:$0xff]
  %v47 = vld [vmem:[%s0 + $0xb0] sm:$0xff]
  %v48 = vld [vmem:[%s0 + $0xb8] sm:$0xff]
  %v49 = vld [vmem:[%s0 + $0xc0] sm:$0xff]
  %v50 = vld [vmem:[%s0 + $0xc8] sm:$0xff]
  %v51 = vld [vmem:[%s0 + $0xd0] sm:$0xff]
  %v52 = vld [vmem:[%s0 + $0xd8] sm:$0xff]
  %v53 = vld [vmem:[%s0 + $0xe0] sm:$0xff]
  %v54 = vld [vmem:[%s0 + $0xe8] sm:$0xff]
  %v55 = vld [vmem:[%s0 + $0xf0] sm:$0xff]
  %v56 = vld [vmem:[%s0 + $0xf8] sm:$0xff]
  %v57 = vld [vmem:[%s0 + $0x100] sm:$0xff]
  %v58 = vld [vmem:[%s0 + $0x108] sm:$0xff]
  %v59 = vld [vmem:[%s0 + $0x110] sm:$0xff]
  %v60 = vld [vmem:[%s0 + $0x118] sm:$0xff]
  %v61 = vld [vmem:[%s0 + $0x120] sm:$0xff]
  %v62 = vld [vmem:[%s0 + $0x128] sm:$0xff]
  %v63 = vld [vmem:[%s0 + $0x130] sm:$0xff]
  %v64 = vld [vmem:[%s0 + $0x138] sm:$0xff]
  %v65 = vld [vmem:[%s0 + $0x140] sm:$0xff]
  %v66 = vld [vmem:[%s0 + $0x148] sm:$0xff]
  %v67 = vld [vmem:[%s0 + $0x150] sm:$0xff]
  %v68 = vld [vmem:[%s0 + $0x158] sm:$0xff]
  %v69 = vld [vmem:[%s0 + $0x160] sm:$0xff]
  %v70 = vld [vmem:[%s0 + $0x168] sm:$0xff]
  %v71 = vld [vmem:[%s0 + $0x170] sm:$0xff]
  %v72 = vld [vmem:[%s0 + $0x178] sm:$0xff]
  %v73 = vld [vmem:[%s0 + $0x180] sm:$0xff]
  %vm74 = vcmask 72704
  %v76 = vsel %vm74, %v25, 0
  %v79 = vsel %vm74, %v26, 0
  %v82 = vsel %vm74, %v27, 0
  %v85 = vsel %vm74, %v28, 0
  %v88 = vsel %vm74, %v29, 0
  %v91 = vsel %vm74, %v30, 0
  %v94 = vsel %vm74, %v31, 0
  %v97 = vsel %vm74, %v32, 0
  %v100 = vsel %vm74, %v33, 0
  %v103 = vsel %vm74, %v34, 0
  %v106 = vsel %vm74, %v35, 0
  %v109 = vsel %vm74, %v36, 0
  %v112 = vsel %vm74, %v37, 0
  %v115 = vsel %vm74, %v38, 0
  %v118 = vsel %vm74, %v39, 0
  %v121 = vsel %vm74, %v40, 0
  %v124 = vsel %vm74, %v41, 0
  %v127 = vsel %vm74, %v42, 0
  %v130 = vsel %vm74, %v43, 0
  %v133 = vsel %vm74, %v44, 0
  %v136 = vsel %vm74, %v45, 0
  %v139 = vsel %vm74, %v46, 0
  %v142 = vsel %vm74, %v47, 0
  %v145 = vsel %vm74, %v48, 0
  %v148 = vsel %vm74, %v49, 0
  %v151 = vsel %vm74, %v50, 0
  %v154 = vsel %vm74, %v51, 0
  %v157 = vsel %vm74, %v52, 0
  %v160 = vsel %vm74, %v53, 0
  %v163 = vsel %vm74, %v54, 0
  %v166 = vsel %vm74, %v55, 0
  %v169 = vsel %vm74, %v56, 0
  %v172 = vsel %vm74, %v57, 0
  %v175 = vsel %vm74, %v58, 0
  %v178 = vsel %vm74, %v59, 0
  %v181 = vsel %vm74, %v60, 0
  %v184 = vsel %vm74, %v61, 0
  %v187 = vsel %vm74, %v62, 0
  %v190 = vsel %vm74, %v63, 0
  %v193 = vsel %vm74, %v64, 0
  %v196 = vsel %vm74, %v65, 0
  %v199 = vsel %vm74, %v66, 0
  %v202 = vsel %vm74, %v67, 0
  %v205 = vsel %vm74, %v68, 0
  %v208 = vsel %vm74, %v69, 0
  %v211 = vsel %vm74, %v70, 0
  %v214 = vsel %vm74, %v71, 0
  %v217 = vsel %vm74, %v72, 0
  %v220 = vsel %vm74, %v73, 0
  %vm222 = vcmask 1040384
  %v224 = vsel %vm222, %v24, 0
  %226 = vmatpush.msra.mxu0 0.0
  %227 = vmatpush.msra.mxu0 0.0
  %228 = vmatpush.msra.mxu0 0.0
  %229 = vmatpush.msra.mxu0 0.0
  %230 = vmatpush.msra.mxu0 0.0
  %231 = vmatpush.msra.mxu0 0.0
  %232 = vmatpush.msra.mxu0 0.0
  %233 = vmatpush.msra.mxu0 0.0
  %234 = vmatpush.msra.mxu0 0.0
  %235 = vmatpush.msra.mxu0 0.0
  %236 = vmatpush.msra.mxu0 0.0
  %237 = vmatpush.msra.mxu0 0.0
  %238 = vmatpush.msra.mxu0 0.0
  %239 = vmatpush.msra.mxu0 0.0
  %240 = vmatpush.msra.mxu0 %v224
  %241 = vmatpush.msra.mxu0 %v23
  %242 = vmatmul.f32.gmra.mxu0 %v76
  %v243 = vpop.f32.mrf.mxu0
  %v244 = vadd.f32 0.0, %v243
  %245 = vmatmul.f32.gmra.mxu0 %v79
  %v246 = vpop.f32.mrf.mxu0
  %v247 = vadd.f32 0.0, %v246
  %248 = vmatmul.f32.gmra.mxu0 %v82
  %v249 = vpop.f32.mrf.mxu0
  %v250 = vadd.f32 0.0, %v249
  %251 = vmatmul.f32.gmra.mxu0 %v85
  %v252 = vpop.f32.mrf.mxu0
  %v253 = vadd.f32 0.0, %v252
  %254 = vmatmul.f32.gmra.mxu0 %v88
  %v255 = vpop.f32.mrf.mxu0
  %v256 = vadd.f32 0.0, %v255
  %257 = vmatmul.f32.gmra.mxu0 %v91
  %v258 = vpop.f32.mrf.mxu0
  %v259 = vadd.f32 0.0, %v258
  %260 = vmatmul.f32.gmra.mxu0 %v94
  %v261 = vpop.f32.mrf.mxu0
  %v262 = vadd.f32 0.0, %v261
  %263 = vmatmul.f32.gmra.mxu0 %v97
  %v264 = vpop.f32.mrf.mxu0
  %v265 = vadd.f32 0.0, %v264
  %266 = vmatmul.f32.gmra.mxu0 %v100
  %v267 = vpop.f32.mrf.mxu0
  %v268 = vadd.f32 0.0, %v267
  %269 = vmatmul.f32.gmra.mxu0 %v103
  %v270 = vpop.f32.mrf.mxu0
  %v271 = vadd.f32 0.0, %v270
  %272 = vmatmul.f32.gmra.mxu0 %v106
  %v273 = vpop.f32.mrf.mxu0
  %v274 = vadd.f32 0.0, %v273
  %275 = vmatmul.f32.gmra.mxu0 %v109
  %v276 = vpop.f32.mrf.mxu0
  %v277 = vadd.f32 0.0, %v276
  %278 = vmatmul.f32.gmra.mxu0 %v112
  %v279 = vpop.f32.mrf.mxu0
  %v280 = vadd.f32 0.0, %v279
  %281 = vmatmul.f32.gmra.mxu0 %v115
  %v282 = vpop.f32.mrf.mxu0
  %v283 = vadd.f32 0.0, %v282
  %284 = vmatmul.f32.gmra.mxu0 %v118
  %v285 = vpop.f32.mrf.mxu0
  %v286 = vadd.f32 0.0, %v285
  %287 = vmatmul.f32.gmra.mxu0 %v121
  %v288 = vpop.f32.mrf.mxu0
  %v289 = vadd.f32 0.0, %v288
  %290 = vmatmul.f32.gmra.mxu0 %v124
  %v291 = vpop.f32.mrf.mxu0
  %v292 = vadd.f32 0.0, %v291
  %293 = vmatmul.f32.gmra.mxu0 %v127
  %v294 = vpop.f32.mrf.mxu0
  %v295 = vadd.f32 0.0, %v294
  %296 = vmatmul.f32.gmra.mxu0 %v130
  %v297 = vpop.f32.mrf.mxu0
  %v298 = vadd.f32 0.0, %v297
  %299 = vmatmul.f32.gmra.mxu0 %v133
  %v300 = vpop.f32.mrf.mxu0
  %v301 = vadd.f32 0.0, %v300
  %302 = vmatmul.f32.gmra.mxu0 %v136
  %v303 = vpop.f32.mrf.mxu0
  %v304 = vadd.f32 0.0, %v303
  %305 = vmatmul.f32.gmra.mxu0 %v139
  %v306 = vpop.f32.mrf.mxu0
  %v307 = vadd.f32 0.0, %v306
  %308 = vmatmul.f32.gmra.mxu0 %v142
  %v309 = vpop.f32.mrf.mxu0
  %v310 = vadd.f32 0.0, %v309
  %311 = vmatmul.f32.gmra.mxu0 %v145
  %v312 = vpop.f32.mrf.mxu0
  %v313 = vadd.f32 0.0, %v312
  %314 = vmatmul.f32.gmra.mxu0 %v148
  %v315 = vpop.f32.mrf.mxu0
  %v316 = vadd.f32 0.0, %v315
  %317 = vmatmul.f32.gmra.mxu0 %v151
  %v318 = vpop.f32.mrf.mxu0
  %v319 = vadd.f32 0.0, %v318
  %320 = vmatmul.f32.gmra.mxu0 %v154
  %v321 = vpop.f32.mrf.mxu0
  %v322 = vadd.f32 0.0, %v321
  %323 = vmatmul.f32.gmra.mxu0 %v157
  %v324 = vpop.f32.mrf.mxu0
  %v325 = vadd.f32 0.0, %v324
  %326 = vmatmul.f32.gmra.mxu0 %v160
  %v327 = vpop.f32.mrf.mxu0
  %v328 = vadd.f32 0.0, %v327
  %329 = vmatmul.f32.gmra.mxu0 %v163
  %v330 = vpop.f32.mrf.mxu0
  %v331 = vadd.f32 0.0, %v330
  %332 = vmatmul.f32.gmra.mxu0 %v166
  %v333 = vpop.f32.mrf.mxu0
  %v334 = vadd.f32 0.0, %v333
  %335 = vmatmul.f32.gmra.mxu0 %v169
  %v336 = vpop.f32.mrf.mxu0
  %v337 = vadd.f32 0.0, %v336
  %338 = vmatmul.f32.gmra.mxu0 %v172
  %v339 = vpop.f32.mrf.mxu0
  %v340 = vadd.f32 0.0, %v339
  %341 = vmatmul.f32.gmra.mxu0 %v175
  %v342 = vpop.f32.mrf.mxu0
  %v343 = vadd.f32 0.0, %v342
  %344 = vmatmul.f32.gmra.mxu0 %v178
  %v345 = vpop.f32.mrf.mxu0
  %v346 = vadd.f32 0.0, %v345
  %347 = vmatmul.f32.gmra.mxu0 %v181
  %v348 = vpop.f32.mrf.mxu0
  %v349 = vadd.f32 0.0, %v348
  %350 = vmatmul.f32.gmra.mxu0 %v184
  %v351 = vpop.f32.mrf.mxu0
  %v352 = vadd.f32 0.0, %v351
  %353 = vmatmul.f32.gmra.mxu0 %v187
  %v354 = vpop.f32.mrf.mxu0
  %v355 = vadd.f32 0.0, %v354
  %356 = vmatmul.f32.gmra.mxu0 %v190
  %v357 = vpop.f32.mrf.mxu0
  %v358 = vadd.f32 0.0, %v357
  %359 = vmatmul.f32.gmra.mxu0 %v193
  %v360 = vpop.f32.mrf.mxu0
  %v361 = vadd.f32 0.0, %v360
  %362 = vmatmul.f32.gmra.mxu0 %v196
  %v363 = vpop.f32.mrf.mxu0
  %v364 = vadd.f32 0.0, %v363
  %365 = vmatmul.f32.gmra.mxu0 %v199
  %v366 = vpop.f32.mrf.mxu0
  %v367 = vadd.f32 0.0, %v366
  %368 = vmatmul.f32.gmra.mxu0 %v202
  %v369 = vpop.f32.mrf.mxu0
  %v370 = vadd.f32 0.0, %v369
  %371 = vmatmul.f32.gmra.mxu0 %v205
  %v372 = vpop.f32.mrf.mxu0
  %v373 = vadd.f32 0.0, %v372
  %374 = vmatmul.f32.gmra.mxu0 %v208
  %v375 = vpop.f32.mrf.mxu0
  %v376 = vadd.f32 0.0, %v375
  %377 = vmatmul.f32.gmra.mxu0 %v211
  %v378 = vpop.f32.mrf.mxu0
  %v379 = vadd.f32 0.0, %v378
  %380 = vmatmul.f32.gmra.mxu0 %v214
  %v381 = vpop.f32.mrf.mxu0
  %v382 = vadd.f32 0.0, %v381
  %383 = vmatmul.f32.gmra.mxu0 %v217
  %v384 = vpop.f32.mrf.mxu0
  %v385 = vadd.f32 0.0, %v384
  %386 = vmatmul.f32.gmra.mxu0 %v220
  %v387 = vpop.f32.mrf.mxu0
  %v388 = vadd.f32 0.0, %v387
  %389 = vdwg.mxu0
  %v390 = vld [vmem:[%s1] sm:$0xff]
  %v391 = vld [vmem:[%s1 + $0x8] sm:$0xff]
  %v392 = vld [vmem:[%s1 + $0x10] sm:$0xff]
  %v393 = vld [vmem:[%s1 + $0x18] sm:$0xff]
  %v394 = vld [vmem:[%s1 + $0x20] sm:$0xff]
  %v395 = vld [vmem:[%s1 + $0x28] sm:$0xff]
  %v396 = vld [vmem:[%s1 + $0x30] sm:$0xff]
  %v397 = vld [vmem:[%s1 + $0x38] sm:$0xff]
  %v398 = vld [vmem:[%s1 + $0x40] sm:$0xff]
  %v399 = vld [vmem:[%s1 + $0x48] sm:$0xff]
  %v400 = vld [vmem:[%s1 + $0x50] sm:$0xff]
  %v401 = vld [vmem:[%s1 + $0x58] sm:$0xff]
  %v402 = vld [vmem:[%s1 + $0x60] sm:$0xff]
  %v403 = vld [vmem:[%s1 + $0x68] sm:$0xff]
  %v404 = vld [vmem:[%s1 + $0x70] sm:$0xff]
  %v405 = vld [vmem:[%s1 + $0x78] sm:$0xff]
  %v406 = vld [vmem:[%s1 + $0x80] sm:$0xff]
  %v407 = vld [vmem:[%s1 + $0x88] sm:$0xff]
  %v408 = vld [vmem:[%s1 + $0x90] sm:$0xff]
  %v409 = vld [vmem:[%s1 + $0x98] sm:$0xff]
  %v410 = vld [vmem:[%s1 + $0xa0] sm:$0xff]
  %v411 = vld [vmem:[%s1 + $0xa8] sm:$0xff]
  %v412 = vld [vmem:[%s1 + $0xb0] sm:$0xff]
  %v413 = vld [vmem:[%s1 + $0xb8] sm:$0xff]
  %v414 = vld [vmem:[%s1 + $0xc0] sm:$0xff]
  %v415 = vld [vmem:[%s1 + $0xc8] sm:$0xff]
  %v416 = vld [vmem:[%s1 + $0xd0] sm:$0xff]
  %v417 = vld [vmem:[%s1 + $0xd8] sm:$0xff]
  %v418 = vld [vmem:[%s1 + $0xe0] sm:$0xff]
  %v419 = vld [vmem:[%s1 + $0xe8] sm:$0xff]
  %v420 = vld [vmem:[%s1 + $0xf0] sm:$0xff]
  %v421 = vld [vmem:[%s1 + $0xf8] sm:$0xff]
  %v422 = vld [vmem:[%s1 + $0x100] sm:$0xff]
  %v423 = vld [vmem:[%s1 + $0x108] sm:$0xff]
  %v424 = vld [vmem:[%s1 + $0x110] sm:$0xff]
  %v425 = vld [vmem:[%s1 + $0x118] sm:$0xff]
  %v426 = vld [vmem:[%s1 + $0x120] sm:$0xff]
  %v427 = vld [vmem:[%s1 + $0x128] sm:$0xff]
  %v428 = vld [vmem:[%s1 + $0x130] sm:$0xff]
  %v429 = vld [vmem:[%s1 + $0x138] sm:$0xff]
  %v430 = vld [vmem:[%s1 + $0x140] sm:$0xff]
  %v431 = vld [vmem:[%s1 + $0x148] sm:$0xff]
  %v432 = vld [vmem:[%s1 + $0x150] sm:$0xff]
  %v433 = vld [vmem:[%s1 + $0x158] sm:$0xff]
  %v434 = vld [vmem:[%s1 + $0x160] sm:$0xff]
  %v435 = vld [vmem:[%s1 + $0x168] sm:$0xff]
  %v436 = vld [vmem:[%s1 + $0x170] sm:$0xff]
  %v437 = vld [vmem:[%s1 + $0x178] sm:$0xff]
  %v438 = vld [vmem:[%s1 + $0x180] sm:$0xff]
  %v440 = vsel %vm74, %v390, 0
  %v443 = vsel %vm74, %v391, 0
  %v446 = vsel %vm74, %v392, 0
  %v449 = vsel %vm74, %v393, 0
  %v452 = vsel %vm74, %v394, 0
  %v455 = vsel %vm74, %v395, 0
  %v458 = vsel %vm74, %v396, 0
  %v461 = vsel %vm74, %v397, 0
  %v464 = vsel %vm74, %v398, 0
  %v467 = vsel %vm74, %v399, 0
  %v470 = vsel %vm74, %v400, 0
  %v473 = vsel %vm74, %v401, 0
  %v476 = vsel %vm74, %v402, 0
  %v479 = vsel %vm74, %v403, 0
  %v482 = vsel %vm74, %v404, 0
  %v485 = vsel %vm74, %v405, 0
  %v488 = vsel %vm74, %v406, 0
  %v491 = vsel %vm74, %v407, 0
  %v494 = vsel %vm74, %v408, 0
  %v497 = vsel %vm74, %v409, 0
  %v500 = vsel %vm74, %v410, 0
  %v503 = vsel %vm74, %v411, 0
  %v506 = vsel %vm74, %v412, 0
  %v509 = vsel %vm74, %v413, 0
  %v512 = vsel %vm74, %v414, 0
  %v515 = vsel %vm74, %v415, 0
  %v518 = vsel %vm74, %v416, 0
  %v521 = vsel %vm74, %v417, 0
  %v524 = vsel %vm74, %v418, 0
  %v527 = vsel %vm74, %v419, 0
  %v530 = vsel %vm74, %v420, 0
  %v533 = vsel %vm74, %v421, 0
  %v536 = vsel %vm74, %v422, 0
  %v539 = vsel %vm74, %v423, 0
  %v542 = vsel %vm74, %v424, 0
  %v545 = vsel %vm74, %v425, 0
  %v548 = vsel %vm74, %v426, 0
  %v551 = vsel %vm74, %v427, 0
  %v554 = vsel %vm74, %v428, 0
  %v557 = vsel %vm74, %v429, 0
  %v560 = vsel %vm74, %v430, 0
  %v563 = vsel %vm74, %v431, 0
  %v566 = vsel %vm74, %v432, 0
  %v569 = vsel %vm74, %v433, 0
  %v572 = vsel %vm74, %v434, 0
  %v575 = vsel %vm74, %v435, 0
  %v578 = vsel %vm74, %v436, 0
  %v581 = vsel %vm74, %v437, 0
  %v584 = vsel %vm74, %v438, 0
  %586 = vmatpush.msra.mxu0 0.0
  %587 = vmatpush.msra.mxu0 0.0
  %588 = vmatpush.msra.mxu0 0.0
  %589 = vmatpush.msra.mxu0 0.0
  %590 = vmatpush.msra.mxu0 0.0
  %591 = vmatpush.msra.mxu0 0.0
  %592 = vmatpush.msra.mxu0 0.0
  %593 = vmatpush.msra.mxu0 0.0
  %594 = vmatpush.msra.mxu0 0.0
  %595 = vmatpush.msra.mxu0 0.0
  %596 = vmatpush.msra.mxu0 0.0
  %597 = vmatpush.msra.mxu0 0.0
  %598 = vmatpush.msra.mxu0 0.0
  %599 = vmatpush.msra.mxu0 0.0
  %600 = vmatpush.msra.mxu0 %v224
  %601 = vmatpush.msra.mxu0 %v23
  %602 = vmatmul.f32.gmra.mxu0 %v440
  %v603 = vpop.f32.mrf.mxu0
  %v604 = vadd.f32 0.0, %v603
  %605 = vmatmul.f32.gmra.mxu0 %v443
  %v606 = vpop.f32.mrf.mxu0
  %v607 = vadd.f32 0.0, %v606
  %608 = vmatmul.f32.gmra.mxu0 %v446
  %v609 = vpop.f32.mrf.mxu0
  %v610 = vadd.f32 0.0, %v609
  %611 = vmatmul.f32.gmra.mxu0 %v449
  %v612 = vpop.f32.mrf.mxu0
  %v613 = vadd.f32 0.0, %v612
  %614 = vmatmul.f32.gmra.mxu0 %v452
  %v615 = vpop.f32.mrf.mxu0
  %v616 = vadd.f32 0.0, %v615
  %617 = vmatmul.f32.gmra.mxu0 %v455
  %v618 = vpop.f32.mrf.mxu0
  %v619 = vadd.f32 0.0, %v618
  %620 = vmatmul.f32.gmra.mxu0 %v458
  %v621 = vpop.f32.mrf.mxu0
  %v622 = vadd.f32 0.0, %v621
  %623 = vmatmul.f32.gmra.mxu0 %v461
  %v624 = vpop.f32.mrf.mxu0
  %v625 = vadd.f32 0.0, %v624
  %626 = vmatmul.f32.gmra.mxu0 %v464
  %v627 = vpop.f32.mrf.mxu0
  %v628 = vadd.f32 0.0, %v627
  %629 = vmatmul.f32.gmra.mxu0 %v467
  %v630 = vpop.f32.mrf.mxu0
  %v631 = vadd.f32 0.0, %v630
  %632 = vmatmul.f32.gmra.mxu0 %v470
  %v633 = vpop.f32.mrf.mxu0
  %v634 = vadd.f32 0.0, %v633
  %635 = vmatmul.f32.gmra.mxu0 %v473
  %v636 = vpop.f32.mrf.mxu0
  %v637 = vadd.f32 0.0, %v636
  %638 = vmatmul.f32.gmra.mxu0 %v476
  %v639 = vpop.f32.mrf.mxu0
  %v640 = vadd.f32 0.0, %v639
  %641 = vmatmul.f32.gmra.mxu0 %v479
  %v642 = vpop.f32.mrf.mxu0
  %v643 = vadd.f32 0.0, %v642
  %644 = vmatmul.f32.gmra.mxu0 %v482
  %v645 = vpop.f32.mrf.mxu0
  %v646 = vadd.f32 0.0, %v645
  %647 = vmatmul.f32.gmra.mxu0 %v485
  %v648 = vpop.f32.mrf.mxu0
  %v649 = vadd.f32 0.0, %v648
  %650 = vmatmul.f32.gmra.mxu0 %v488
  %v651 = vpop.f32.mrf.mxu0
  %v652 = vadd.f32 0.0, %v651
  %653 = vmatmul.f32.gmra.mxu0 %v491
  %v654 = vpop.f32.mrf.mxu0
  %v655 = vadd.f32 0.0, %v654
  %656 = vmatmul.f32.gmra.mxu0 %v494
  %v657 = vpop.f32.mrf.mxu0
  %v658 = vadd.f32 0.0, %v657
  %659 = vmatmul.f32.gmra.mxu0 %v497
  %v660 = vpop.f32.mrf.mxu0
  %v661 = vadd.f32 0.0, %v660
  %662 = vmatmul.f32.gmra.mxu0 %v500
  %v663 = vpop.f32.mrf.mxu0
  %v664 = vadd.f32 0.0, %v663
  %665 = vmatmul.f32.gmra.mxu0 %v503
  %v666 = vpop.f32.mrf.mxu0
  %v667 = vadd.f32 0.0, %v666
  %668 = vmatmul.f32.gmra.mxu0 %v506
  %v669 = vpop.f32.mrf.mxu0
  %v670 = vadd.f32 0.0, %v669
  %671 = vmatmul.f32.gmra.mxu0 %v509
  %v672 = vpop.f32.mrf.mxu0
  %v673 = vadd.f32 0.0, %v672
  %674 = vmatmul.f32.gmra.mxu0 %v512
  %v675 = vpop.f32.mrf.mxu0
  %v676 = vadd.f32 0.0, %v675
  %677 = vmatmul.f32.gmra.mxu0 %v515
  %v678 = vpop.f32.mrf.mxu0
  %v679 = vadd.f32 0.0, %v678
  %680 = vmatmul.f32.gmra.mxu0 %v518
  %v681 = vpop.f32.mrf.mxu0
  %v682 = vadd.f32 0.0, %v681
  %683 = vmatmul.f32.gmra.mxu0 %v521
  %v684 = vpop.f32.mrf.mxu0
  %v685 = vadd.f32 0.0, %v684
  %686 = vmatmul.f32.gmra.mxu0 %v524
  %v687 = vpop.f32.mrf.mxu0
  %v688 = vadd.f32 0.0, %v687
  %689 = vmatmul.f32.gmra.mxu0 %v527
  %v690 = vpop.f32.mrf.mxu0
  %v691 = vadd.f32 0.0, %v690
  %692 = vmatmul.f32.gmra.mxu0 %v530
  %v693 = vpop.f32.mrf.mxu0
  %v694 = vadd.f32 0.0, %v693
  %695 = vmatmul.f32.gmra.mxu0 %v533
  %v696 = vpop.f32.mrf.mxu0
  %v697 = vadd.f32 0.0, %v696
  %698 = vmatmul.f32.gmra.mxu0 %v536
  %v699 = vpop.f32.mrf.mxu0
  %v700 = vadd.f32 0.0, %v699
  %701 = vmatmul.f32.gmra.mxu0 %v539
  %v702 = vpop.f32.mrf.mxu0
  %v703 = vadd.f32 0.0, %v702
  %704 = vmatmul.f32.gmra.mxu0 %v542
  %v705 = vpop.f32.mrf.mxu0
  %v706 = vadd.f32 0.0, %v705
  %707 = vmatmul.f32.gmra.mxu0 %v545
  %v708 = vpop.f32.mrf.mxu0
  %v709 = vadd.f32 0.0, %v708
  %710 = vmatmul.f32.gmra.mxu0 %v548
  %v711 = vpop.f32.mrf.mxu0
  %v712 = vadd.f32 0.0, %v711
  %713 = vmatmul.f32.gmra.mxu0 %v551
  %v714 = vpop.f32.mrf.mxu0
  %v715 = vadd.f32 0.0, %v714
  %716 = vmatmul.f32.gmra.mxu0 %v554
  %v717 = vpop.f32.mrf.mxu0
  %v718 = vadd.f32 0.0, %v717
  %719 = vmatmul.f32.gmra.mxu0 %v557
  %v720 = vpop.f32.mrf.mxu0
  %v721 = vadd.f32 0.0, %v720
  %722 = vmatmul.f32.gmra.mxu0 %v560
  %v723 = vpop.f32.mrf.mxu0
  %v724 = vadd.f32 0.0, %v723
  %725 = vmatmul.f32.gmra.mxu0 %v563
  %v726 = vpop.f32.mrf.mxu0
  %v727 = vadd.f32 0.0, %v726
  %728 = vmatmul.f32.gmra.mxu0 %v566
  %v729 = vpop.f32.mrf.mxu0
  %v730 = vadd.f32 0.0, %v729
  %731 = vmatmul.f32.gmra.mxu0 %v569
  %v732 = vpop.f32.mrf.mxu0
  %v733 = vadd.f32 0.0, %v732
  %734 = vmatmul.f32.gmra.mxu0 %v572
  %v735 = vpop.f32.mrf.mxu0
  %v736 = vadd.f32 0.0, %v735
  %737 = vmatmul.f32.gmra.mxu0 %v575
  %v738 = vpop.f32.mrf.mxu0
  %v739 = vadd.f32 0.0, %v738
  %740 = vmatmul.f32.gmra.mxu0 %v578
  %v741 = vpop.f32.mrf.mxu0
  %v742 = vadd.f32 0.0, %v741
  %743 = vmatmul.f32.gmra.mxu0 %v581
  %v744 = vpop.f32.mrf.mxu0
  %v745 = vadd.f32 0.0, %v744
  %746 = vmatmul.f32.gmra.mxu0 %v584
  %v747 = vpop.f32.mrf.mxu0
  %v748 = vadd.f32 0.0, %v747
  %749 = vdwg.mxu0
  %v750 = vmax.f32 %v244, %v604
  %v751 = vmax.f32 %v247, %v607
  %v752 = vmax.f32 %v250, %v610
  %v753 = vmax.f32 %v253, %v613
  %v754 = vmax.f32 %v256, %v616
  %v755 = vmax.f32 %v259, %v619
  %v756 = vmax.f32 %v262, %v622
  %v757 = vmax.f32 %v265, %v625
  %v758 = vmax.f32 %v268, %v628
  %v759 = vmax.f32 %v271, %v631
  %v760 = vmax.f32 %v274, %v634
  %v761 = vmax.f32 %v277, %v637
  %v762 = vmax.f32 %v280, %v640
  %v763 = vmax.f32 %v283, %v643
  %v764 = vmax.f32 %v286, %v646
  %v765 = vmax.f32 %v289, %v649
  %v766 = vmax.f32 %v292, %v652
  %v767 = vmax.f32 %v295, %v655
  %v768 = vmax.f32 %v298, %v658
  %v769 = vmax.f32 %v301, %v661
  %v770 = vmax.f32 %v304, %v664
  %v771 = vmax.f32 %v307, %v667
  %v772 = vmax.f32 %v310, %v670
  %v773 = vmax.f32 %v313, %v673
  %v774 = vmax.f32 %v316, %v676
  %v775 = vmax.f32 %v319, %v679
  %v776 = vmax.f32 %v322, %v682
  %v777 = vmax.f32 %v325, %v685
  %v778 = vmax.f32 %v328, %v688
  %v779 = vmax.f32 %v331, %v691
  %v780 = vmax.f32 %v334, %v694
  %v781 = vmax.f32 %v337, %v697
  %v782 = vmax.f32 %v340, %v700
  %v783 = vmax.f32 %v343, %v703
  %v784 = vmax.f32 %v346, %v706
  %v785 = vmax.f32 %v349, %v709
  %v786 = vmax.f32 %v352, %v712
  %v787 = vmax.f32 %v355, %v715
  %v788 = vmax.f32 %v358, %v718
  %v789 = vmax.f32 %v361, %v721
  %v790 = vmax.f32 %v364, %v724
  %v791 = vmax.f32 %v367, %v727
  %v792 = vmax.f32 %v370, %v730
  %v793 = vmax.f32 %v373, %v733
  %v794 = vmax.f32 %v376, %v736
  %v795 = vmax.f32 %v379, %v739
  %v796 = vmax.f32 %v382, %v742
  %v797 = vmax.f32 %v385, %v745
  %v798 = vmax.f32 %v388, %v748
  %v799 = vld [vmem:[%s2] sm:$0xff]
  %v800 = vld [vmem:[%s2 + $0x8] sm:$0xff]
  %v801 = vld [vmem:[%s2 + $0x10] sm:$0xff]
  %v802 = vld [vmem:[%s2 + $0x18] sm:$0xff]
  %v803 = vld [vmem:[%s2 + $0x20] sm:$0xff]
  %v804 = vld [vmem:[%s2 + $0x28] sm:$0xff]
  %v805 = vld [vmem:[%s2 + $0x30] sm:$0xff]
  %v806 = vld [vmem:[%s2 + $0x38] sm:$0xff]
  %v807 = vld [vmem:[%s2 + $0x40] sm:$0xff]
  %v808 = vld [vmem:[%s2 + $0x48] sm:$0xff]
  %v809 = vld [vmem:[%s2 + $0x50] sm:$0xff]
  %v810 = vld [vmem:[%s2 + $0x58] sm:$0xff]
  %v811 = vld [vmem:[%s2 + $0x60] sm:$0xff]
  %v812 = vld [vmem:[%s2 + $0x68] sm:$0xff]
  %v813 = vld [vmem:[%s2 + $0x70] sm:$0xff]
  %v814 = vld [vmem:[%s2 + $0x78] sm:$0xff]
  %v815 = vld [vmem:[%s2 + $0x80] sm:$0xff]
  %v816 = vld [vmem:[%s2 + $0x88] sm:$0xff]
  %v817 = vld [vmem:[%s2 + $0x90] sm:$0xff]
  %v818 = vld [vmem:[%s2 + $0x98] sm:$0xff]
  %v819 = vld [vmem:[%s2 + $0xa0] sm:$0xff]
  %v820 = vld [vmem:[%s2 + $0xa8] sm:$0xff]
  %v821 = vld [vmem:[%s2 + $0xb0] sm:$0xff]
  %v822 = vld [vmem:[%s2 + $0xb8] sm:$0xff]
  %v823 = vld [vmem:[%s2 + $0xc0] sm:$0xff]
  %v824 = vld [vmem:[%s2 + $0xc8] sm:$0xff]
  %v825 = vld [vmem:[%s2 + $0xd0] sm:$0xff]
  %v826 = vld [vmem:[%s2 + $0xd8] sm:$0xff]
  %v827 = vld [vmem:[%s2 + $0xe0] sm:$0xff]
  %v828 = vld [vmem:[%s2 + $0xe8] sm:$0xff]
  %v829 = vld [vmem:[%s2 + $0xf0] sm:$0xff]
  %v830 = vld [vmem:[%s2 + $0xf8] sm:$0xff]
  %v831 = vld [vmem:[%s2 + $0x100] sm:$0xff]
  %v832 = vld [vmem:[%s2 + $0x108] sm:$0xff]
  %v833 = vld [vmem:[%s2 + $0x110] sm:$0xff]
  %v834 = vld [vmem:[%s2 + $0x118] sm:$0xff]
  %v835 = vld [vmem:[%s2 + $0x120] sm:$0xff]
  %v836 = vld [vmem:[%s2 + $0x128] sm:$0xff]
  %v837 = vld [vmem:[%s2 + $0x130] sm:$0xff]
  %v838 = vld [vmem:[%s2 + $0x138] sm:$0xff]
  %v839 = vld [vmem:[%s2 + $0x140] sm:$0xff]
  %v840 = vld [vmem:[%s2 + $0x148] sm:$0xff]
  %v841 = vld [vmem:[%s2 + $0x150] sm:$0xff]
  %v842 = vld [vmem:[%s2 + $0x158] sm:$0xff]
  %v843 = vld [vmem:[%s2 + $0x160] sm:$0xff]
  %v844 = vld [vmem:[%s2 + $0x168] sm:$0xff]
  %v845 = vld [vmem:[%s2 + $0x170] sm:$0xff]
  %v846 = vld [vmem:[%s2 + $0x178] sm:$0xff]
  %v847 = vld [vmem:[%s2 + $0x180] sm:$0xff]
  %v849 = vsel %vm74, %v799, 0
  %v852 = vsel %vm74, %v800, 0
  %v855 = vsel %vm74, %v801, 0
  %v858 = vsel %vm74, %v802, 0
  %v861 = vsel %vm74, %v803, 0
  %v864 = vsel %vm74, %v804, 0
  %v867 = vsel %vm74, %v805, 0
  %v870 = vsel %vm74, %v806, 0
  %v873 = vsel %vm74, %v807, 0
  %v876 = vsel %vm74, %v808, 0
  %v879 = vsel %vm74, %v809, 0
  %v882 = vsel %vm74, %v810, 0
  %v885 = vsel %vm74, %v811, 0
  %v888 = vsel %vm74, %v812, 0
  %v891 = vsel %vm74, %v813, 0
  %v894 = vsel %vm74, %v814, 0
  %v897 = vsel %vm74, %v815, 0
  %v900 = vsel %vm74, %v816, 0
  %v903 = vsel %vm74, %v817, 0
  %v906 = vsel %vm74, %v818, 0
  %v909 = vsel %vm74, %v819, 0
  %v912 = vsel %vm74, %v820, 0
  %v915 = vsel %vm74, %v821, 0
  %v918 = vsel %vm74, %v822, 0
  %v921 = vsel %vm74, %v823, 0
  %v924 = vsel %vm74, %v824, 0
  %v927 = vsel %vm74, %v825, 0
  %v930 = vsel %vm74, %v826, 0
  %v933 = vsel %vm74, %v827, 0
  %v936 = vsel %vm74, %v828, 0
  %v939 = vsel %vm74, %v829, 0
  %v942 = vsel %vm74, %v830, 0
  %v945 = vsel %vm74, %v831, 0
  %v948 = vsel %vm74, %v832, 0
  %v951 = vsel %vm74, %v833, 0
  %v954 = vsel %vm74, %v834, 0
  %v957 = vsel %vm74, %v835, 0
  %v960 = vsel %vm74, %v836, 0
  %v963 = vsel %vm74, %v837, 0
  %v966 = vsel %vm74, %v838, 0
  %v969 = vsel %vm74, %v839, 0
  %v972 = vsel %vm74, %v840, 0
  %v975 = vsel %vm74, %v841, 0
  %v978 = vsel %vm74, %v842, 0
  %v981 = vsel %vm74, %v843, 0
  %v984 = vsel %vm74, %v844, 0
  %v987 = vsel %vm74, %v845, 0
  %v990 = vsel %vm74, %v846, 0
  %v993 = vsel %vm74, %v847, 0
  %995 = vmatpush.msra.mxu0 0.0
  %996 = vmatpush.msra.mxu0 0.0
  %997 = vmatpush.msra.mxu0 0.0
  %998 = vmatpush.msra.mxu0 0.0
  %999 = vmatpush.msra.mxu0 0.0
  %1000 = vmatpush.msra.mxu0 0.0
  %1001 = vmatpush.msra.mxu0 0.0
  %1002 = vmatpush.msra.mxu0 0.0
  %1003 = vmatpush.msra.mxu0 0.0
  %1004 = vmatpush.msra.mxu0 0.0
  %1005 = vmatpush.msra.mxu0 0.0
  %1006 = vmatpush.msra.mxu0 0.0
  %1007 = vmatpush.msra.mxu0 0.0
  %1008 = vmatpush.msra.mxu0 0.0
  %1009 = vmatpush.msra.mxu0 %v224
  %1010 = vmatpush.msra.mxu0 %v23
  %1011 = vmatmul.f32.gmra.mxu0 %v849
  %v1012 = vpop.f32.mrf.mxu0
  %v1013 = vadd.f32 0.0, %v1012
  %1014 = vmatmul.f32.gmra.mxu0 %v852
  %v1015 = vpop.f32.mrf.mxu0
  %v1016 = vadd.f32 0.0, %v1015
  %1017 = vmatmul.f32.gmra.mxu0 %v855
  %v1018 = vpop.f32.mrf.mxu0
  %v1019 = vadd.f32 0.0, %v1018
  %1020 = vmatmul.f32.gmra.mxu0 %v858
  %v1021 = vpop.f32.mrf.mxu0
  %v1022 = vadd.f32 0.0, %v1021
  %1023 = vmatmul.f32.gmra.mxu0 %v861
  %v1024 = vpop.f32.mrf.mxu0
  %v1025 = vadd.f32 0.0, %v1024
  %1026 = vmatmul.f32.gmra.mxu0 %v864
  %v1027 = vpop.f32.mrf.mxu0
  %v1028 = vadd.f32 0.0, %v1027
  %1029 = vmatmul.f32.gmra.mxu0 %v867
  %v1030 = vpop.f32.mrf.mxu0
  %v1031 = vadd.f32 0.0, %v1030
  %1032 = vmatmul.f32.gmra.mxu0 %v870
  %v1033 = vpop.f32.mrf.mxu0
  %v1034 = vadd.f32 0.0, %v1033
  %1035 = vmatmul.f32.gmra.mxu0 %v873
  %v1036 = vpop.f32.mrf.mxu0
  %v1037 = vadd.f32 0.0, %v1036
  %1038 = vmatmul.f32.gmra.mxu0 %v876
  %v1039 = vpop.f32.mrf.mxu0
  %v1040 = vadd.f32 0.0, %v1039
  %1041 = vmatmul.f32.gmra.mxu0 %v879
  %v1042 = vpop.f32.mrf.mxu0
  %v1043 = vadd.f32 0.0, %v1042
  %1044 = vmatmul.f32.gmra.mxu0 %v882
  %v1045 = vpop.f32.mrf.mxu0
  %v1046 = vadd.f32 0.0, %v1045
  %1047 = vmatmul.f32.gmra.mxu0 %v885
  %v1048 = vpop.f32.mrf.mxu0
  %v1049 = vadd.f32 0.0, %v1048
  %1050 = vmatmul.f32.gmra.mxu0 %v888
  %v1051 = vpop.f32.mrf.mxu0
  %v1052 = vadd.f32 0.0, %v1051
  %1053 = vmatmul.f32.gmra.mxu0 %v891
  %v1054 = vpop.f32.mrf.mxu0
  %v1055 = vadd.f32 0.0, %v1054
  %1056 = vmatmul.f32.gmra.mxu0 %v894
  %v1057 = vpop.f32.mrf.mxu0
  %v1058 = vadd.f32 0.0, %v1057
  %1059 = vmatmul.f32.gmra.mxu0 %v897
  %v1060 = vpop.f32.mrf.mxu0
  %v1061 = vadd.f32 0.0, %v1060
  %1062 = vmatmul.f32.gmra.mxu0 %v900
  %v1063 = vpop.f32.mrf.mxu0
  %v1064 = vadd.f32 0.0, %v1063
  %1065 = vmatmul.f32.gmra.mxu0 %v903
  %v1066 = vpop.f32.mrf.mxu0
  %v1067 = vadd.f32 0.0, %v1066
  %1068 = vmatmul.f32.gmra.mxu0 %v906
  %v1069 = vpop.f32.mrf.mxu0
  %v1070 = vadd.f32 0.0, %v1069
  %1071 = vmatmul.f32.gmra.mxu0 %v909
  %v1072 = vpop.f32.mrf.mxu0
  %v1073 = vadd.f32 0.0, %v1072
  %1074 = vmatmul.f32.gmra.mxu0 %v912
  %v1075 = vpop.f32.mrf.mxu0
  %v1076 = vadd.f32 0.0, %v1075
  %1077 = vmatmul.f32.gmra.mxu0 %v915
  %v1078 = vpop.f32.mrf.mxu0
  %v1079 = vadd.f32 0.0, %v1078
  %1080 = vmatmul.f32.gmra.mxu0 %v918
  %v1081 = vpop.f32.mrf.mxu0
  %v1082 = vadd.f32 0.0, %v1081
  %1083 = vmatmul.f32.gmra.mxu0 %v921
  %v1084 = vpop.f32.mrf.mxu0
  %v1085 = vadd.f32 0.0, %v1084
  %1086 = vmatmul.f32.gmra.mxu0 %v924
  %v1087 = vpop.f32.mrf.mxu0
  %v1088 = vadd.f32 0.0, %v1087
  %1089 = vmatmul.f32.gmra.mxu0 %v927
  %v1090 = vpop.f32.mrf.mxu0
  %v1091 = vadd.f32 0.0, %v1090
  %1092 = vmatmul.f32.gmra.mxu0 %v930
  %v1093 = vpop.f32.mrf.mxu0
  %v1094 = vadd.f32 0.0, %v1093
  %1095 = vmatmul.f32.gmra.mxu0 %v933
  %v1096 = vpop.f32.mrf.mxu0
  %v1097 = vadd.f32 0.0, %v1096
  %1098 = vmatmul.f32.gmra.mxu0 %v936
  %v1099 = vpop.f32.mrf.mxu0
  %v1100 = vadd.f32 0.0, %v1099
  %1101 = vmatmul.f32.gmra.mxu0 %v939
  %v1102 = vpop.f32.mrf.mxu0
  %v1103 = vadd.f32 0.0, %v1102
  %1104 = vmatmul.f32.gmra.mxu0 %v942
  %v1105 = vpop.f32.mrf.mxu0
  %v1106 = vadd.f32 0.0, %v1105
  %1107 = vmatmul.f32.gmra.mxu0 %v945
  %v1108 = vpop.f32.mrf.mxu0
  %v1109 = vadd.f32 0.0, %v1108
  %1110 = vmatmul.f32.gmra.mxu0 %v948
  %v1111 = vpop.f32.mrf.mxu0
  %v1112 = vadd.f32 0.0, %v1111
  %1113 = vmatmul.f32.gmra.mxu0 %v951
  %v1114 = vpop.f32.mrf.mxu0
  %v1115 = vadd.f32 0.0, %v1114
  %1116 = vmatmul.f32.gmra.mxu0 %v954
  %v1117 = vpop.f32.mrf.mxu0
  %v1118 = vadd.f32 0.0, %v1117
  %1119 = vmatmul.f32.gmra.mxu0 %v957
  %v1120 = vpop.f32.mrf.mxu0
  %v1121 = vadd.f32 0.0, %v1120
  %1122 = vmatmul.f32.gmra.mxu0 %v960
  %v1123 = vpop.f32.mrf.mxu0
  %v1124 = vadd.f32 0.0, %v1123
  %1125 = vmatmul.f32.gmra.mxu0 %v963
  %v1126 = vpop.f32.mrf.mxu0
  %v1127 = vadd.f32 0.0, %v1126
  %1128 = vmatmul.f32.gmra.mxu0 %v966
  %v1129 = vpop.f32.mrf.mxu0
  %v1130 = vadd.f32 0.0, %v1129
  %1131 = vmatmul.f32.gmra.mxu0 %v969
  %v1132 = vpop.f32.mrf.mxu0
  %v1133 = vadd.f32 0.0, %v1132
  %1134 = vmatmul.f32.gmra.mxu0 %v972
  %v1135 = vpop.f32.mrf.mxu0
  %v1136 = vadd.f32 0.0, %v1135
  %1137 = vmatmul.f32.gmra.mxu0 %v975
  %v1138 = vpop.f32.mrf.mxu0
  %v1139 = vadd.f32 0.0, %v1138
  %1140 = vmatmul.f32.gmra.mxu0 %v978
  %v1141 = vpop.f32.mrf.mxu0
  %v1142 = vadd.f32 0.0, %v1141
  %1143 = vmatmul.f32.gmra.mxu0 %v981
  %v1144 = vpop.f32.mrf.mxu0
  %v1145 = vadd.f32 0.0, %v1144
  %1146 = vmatmul.f32.gmra.mxu0 %v984
  %v1147 = vpop.f32.mrf.mxu0
  %v1148 = vadd.f32 0.0, %v1147
  %1149 = vmatmul.f32.gmra.mxu0 %v987
  %v1150 = vpop.f32.mrf.mxu0
  %v1151 = vadd.f32 0.0, %v1150
  %1152 = vmatmul.f32.gmra.mxu0 %v990
  %v1153 = vpop.f32.mrf.mxu0
  %v1154 = vadd.f32 0.0, %v1153
  %1155 = vmatmul.f32.gmra.mxu0 %v993
  %v1156 = vpop.f32.mrf.mxu0
  %v1157 = vadd.f32 0.0, %v1156
  %1158 = vdwg.mxu0
  %v1159 = vld [vmem:[%s3] sm:$0xff]
  %v1160 = vld [vmem:[%s3 + $0x8] sm:$0xff]
  %v1161 = vld [vmem:[%s3 + $0x10] sm:$0xff]
  %v1162 = vld [vmem:[%s3 + $0x18] sm:$0xff]
  %v1163 = vld [vmem:[%s3 + $0x20] sm:$0xff]
  %v1164 = vld [vmem:[%s3 + $0x28] sm:$0xff]
  %v1165 = vld [vmem:[%s3 + $0x30] sm:$0xff]
  %v1166 = vld [vmem:[%s3 + $0x38] sm:$0xff]
  %v1167 = vld [vmem:[%s3 + $0x40] sm:$0xff]
  %v1168 = vld [vmem:[%s3 + $0x48] sm:$0xff]
  %v1169 = vld [vmem:[%s3 + $0x50] sm:$0xff]
  %v1170 = vld [vmem:[%s3 + $0x58] sm:$0xff]
  %v1171 = vld [vmem:[%s3 + $0x60] sm:$0xff]
  %v1172 = vld [vmem:[%s3 + $0x68] sm:$0xff]
  %v1173 = vld [vmem:[%s3 + $0x70] sm:$0xff]
  %v1174 = vld [vmem:[%s3 + $0x78] sm:$0xff]
  %v1175 = vld [vmem:[%s3 + $0x80] sm:$0xff]
  %v1176 = vld [vmem:[%s3 + $0x88] sm:$0xff]
  %v1177 = vld [vmem:[%s3 + $0x90] sm:$0xff]
  %v1178 = vld [vmem:[%s3 + $0x98] sm:$0xff]
  %v1179 = vld [vmem:[%s3 + $0xa0] sm:$0xff]
  %v1180 = vld [vmem:[%s3 + $0xa8] sm:$0xff]
  %v1181 = vld [vmem:[%s3 + $0xb0] sm:$0xff]
  %v1182 = vld [vmem:[%s3 + $0xb8] sm:$0xff]
  %v1183 = vld [vmem:[%s3 + $0xc0] sm:$0xff]
  %v1184 = vld [vmem:[%s3 + $0xc8] sm:$0xff]
  %v1185 = vld [vmem:[%s3 + $0xd0] sm:$0xff]
  %v1186 = vld [vmem:[%s3 + $0xd8] sm:$0xff]
  %v1187 = vld [vmem:[%s3 + $0xe0] sm:$0xff]
  %v1188 = vld [vmem:[%s3 + $0xe8] sm:$0xff]
  %v1189 = vld [vmem:[%s3 + $0xf0] sm:$0xff]
  %v1190 = vld [vmem:[%s3 + $0xf8] sm:$0xff]
  %v1191 = vld [vmem:[%s3 + $0x100] sm:$0xff]
  %v1192 = vld [vmem:[%s3 + $0x108] sm:$0xff]
  %v1193 = vld [vmem:[%s3 + $0x110] sm:$0xff]
  %v1194 = vld [vmem:[%s3 + $0x118] sm:$0xff]
  %v1195 = vld [vmem:[%s3 + $0x120] sm:$0xff]
  %v1196 = vld [vmem:[%s3 + $0x128] sm:$0xff]
  %v1197 = vld [vmem:[%s3 + $0x130] sm:$0xff]
  %v1198 = vld [vmem:[%s3 + $0x138] sm:$0xff]
  %v1199 = vld [vmem:[%s3 + $0x140] sm:$0xff]
  %v1200 = vld [vmem:[%s3 + $0x148] sm:$0xff]
  %v1201 = vld [vmem:[%s3 + $0x150] sm:$0xff]
  %v1202 = vld [vmem:[%s3 + $0x158] sm:$0xff]
  %v1203 = vld [vmem:[%s3 + $0x160] sm:$0xff]
  %v1204 = vld [vmem:[%s3 + $0x168] sm:$0xff]
  %v1205 = vld [vmem:[%s3 + $0x170] sm:$0xff]
  %v1206 = vld [vmem:[%s3 + $0x178] sm:$0xff]
  %v1207 = vld [vmem:[%s3 + $0x180] sm:$0xff]
  %v1209 = vsel %vm74, %v1159, 0
  %v1212 = vsel %vm74, %v1160, 0
  %v1215 = vsel %vm74, %v1161, 0
  %v1218 = vsel %vm74, %v1162, 0
  %v1221 = vsel %vm74, %v1163, 0
  %v1224 = vsel %vm74, %v1164, 0
  %v1227 = vsel %vm74, %v1165, 0
  %v1230 = vsel %vm74, %v1166, 0
  %v1233 = vsel %vm74, %v1167, 0
  %v1236 = vsel %vm74, %v1168, 0
  %v1239 = vsel %vm74, %v1169, 0
  %v1242 = vsel %vm74, %v1170, 0
  %v1245 = vsel %vm74, %v1171, 0
  %v1248 = vsel %vm74, %v1172, 0
  %v1251 = vsel %vm74, %v1173, 0
  %v1254 = vsel %vm74, %v1174, 0
  %v1257 = vsel %vm74, %v1175, 0
  %v1260 = vsel %vm74, %v1176, 0
  %v1263 = vsel %vm74, %v1177, 0
  %v1266 = vsel %vm74, %v1178, 0
  %v1269 = vsel %vm74, %v1179, 0
  %v1272 = vsel %vm74, %v1180, 0
  %v1275 = vsel %vm74, %v1181, 0
  %v1278 = vsel %vm74, %v1182, 0
  %v1281 = vsel %vm74, %v1183, 0
  %v1284 = vsel %vm74, %v1184, 0
  %v1287 = vsel %vm74, %v1185, 0
  %v1290 = vsel %vm74, %v1186, 0
  %v1293 = vsel %vm74, %v1187, 0
  %v1296 = vsel %vm74, %v1188, 0
  %v1299 = vsel %vm74, %v1189, 0
  %v1302 = vsel %vm74, %v1190, 0
  %v1305 = vsel %vm74, %v1191, 0
  %v1308 = vsel %vm74, %v1192, 0
  %v1311 = vsel %vm74, %v1193, 0
  %v1314 = vsel %vm74, %v1194, 0
  %v1317 = vsel %vm74, %v1195, 0
  %v1320 = vsel %vm74, %v1196, 0
  %v1323 = vsel %vm74, %v1197, 0
  %v1326 = vsel %vm74, %v1198, 0
  %v1329 = vsel %vm74, %v1199, 0
  %v1332 = vsel %vm74, %v1200, 0
  %v1335 = vsel %vm74, %v1201, 0
  %v1338 = vsel %vm74, %v1202, 0
  %v1341 = vsel %vm74, %v1203, 0
  %v1344 = vsel %vm74, %v1204, 0
  %v1347 = vsel %vm74, %v1205, 0
  %v1350 = vsel %vm74, %v1206, 0
  %v1353 = vsel %vm74, %v1207, 0
  %1355 = vmatpush.msra.mxu0 0.0
  %1356 = vmatpush.msra.mxu0 0.0
  %1357 = vmatpush.msra.mxu0 0.0
  %1358 = vmatpush.msra.mxu0 0.0
  %1359 = vmatpush.msra.mxu0 0.0
  %1360 = vmatpush.msra.mxu0 0.0
  %1361 = vmatpush.msra.mxu0 0.0
  %1362 = vmatpush.msra.mxu0 0.0
  %1363 = vmatpush.msra.mxu0 0.0
  %1364 = vmatpush.msra.mxu0 0.0
  %1365 = vmatpush.msra.mxu0 0.0
  %1366 = vmatpush.msra.mxu0 0.0
  %1367 = vmatpush.msra.mxu0 0.0
  %1368 = vmatpush.msra.mxu0 0.0
  %1369 = vmatpush.msra.mxu0 %v224
  %1370 = vmatpush.msra.mxu0 %v23
  %1371 = vmatmul.f32.gmra.mxu0 %v1209
  %v1372 = vpop.f32.mrf.mxu0
  %v1373 = vadd.f32 0.0, %v1372
  %1374 = vmatmul.f32.gmra.mxu0 %v1212
  %v1375 = vpop.f32.mrf.mxu0
  %v1376 = vadd.f32 0.0, %v1375
  %1377 = vmatmul.f32.gmra.mxu0 %v1215
  %v1378 = vpop.f32.mrf.mxu0
  %v1379 = vadd.f32 0.0, %v1378
  %1380 = vmatmul.f32.gmra.mxu0 %v1218
  %v1381 = vpop.f32.mrf.mxu0
  %v1382 = vadd.f32 0.0, %v1381
  %1383 = vmatmul.f32.gmra.mxu0 %v1221
  %v1384 = vpop.f32.mrf.mxu0
  %v1385 = vadd.f32 0.0, %v1384
  %1386 = vmatmul.f32.gmra.mxu0 %v1224
  %v1387 = vpop.f32.mrf.mxu0
  %v1388 = vadd.f32 0.0, %v1387
  %1389 = vmatmul.f32.gmra.mxu0 %v1227
  %v1390 = vpop.f32.mrf.mxu0
  %v1391 = vadd.f32 0.0, %v1390
  %1392 = vmatmul.f32.gmra.mxu0 %v1230
  %v1393 = vpop.f32.mrf.mxu0
  %v1394 = vadd.f32 0.0, %v1393
  %1395 = vmatmul.f32.gmra.mxu0 %v1233
  %v1396 = vpop.f32.mrf.mxu0
  %v1397 = vadd.f32 0.0, %v1396
  %1398 = vmatmul.f32.gmra.mxu0 %v1236
  %v1399 = vpop.f32.mrf.mxu0
  %v1400 = vadd.f32 0.0, %v1399
  %1401 = vmatmul.f32.gmra.mxu0 %v1239
  %v1402 = vpop.f32.mrf.mxu0
  %v1403 = vadd.f32 0.0, %v1402
  %1404 = vmatmul.f32.gmra.mxu0 %v1242
  %v1405 = vpop.f32.mrf.mxu0
  %v1406 = vadd.f32 0.0, %v1405
  %1407 = vmatmul.f32.gmra.mxu0 %v1245
  %v1408 = vpop.f32.mrf.mxu0
  %v1409 = vadd.f32 0.0, %v1408
  %1410 = vmatmul.f32.gmra.mxu0 %v1248
  %v1411 = vpop.f32.mrf.mxu0
  %v1412 = vadd.f32 0.0, %v1411
  %1413 = vmatmul.f32.gmra.mxu0 %v1251
  %v1414 = vpop.f32.mrf.mxu0
  %v1415 = vadd.f32 0.0, %v1414
  %1416 = vmatmul.f32.gmra.mxu0 %v1254
  %v1417 = vpop.f32.mrf.mxu0
  %v1418 = vadd.f32 0.0, %v1417
  %1419 = vmatmul.f32.gmra.mxu0 %v1257
  %v1420 = vpop.f32.mrf.mxu0
  %v1421 = vadd.f32 0.0, %v1420
  %1422 = vmatmul.f32.gmra.mxu0 %v1260
  %v1423 = vpop.f32.mrf.mxu0
  %v1424 = vadd.f32 0.0, %v1423
  %1425 = vmatmul.f32.gmra.mxu0 %v1263
  %v1426 = vpop.f32.mrf.mxu0
  %v1427 = vadd.f32 0.0, %v1426
  %1428 = vmatmul.f32.gmra.mxu0 %v1266
  %v1429 = vpop.f32.mrf.mxu0
  %v1430 = vadd.f32 0.0, %v1429
  %1431 = vmatmul.f32.gmra.mxu0 %v1269
  %v1432 = vpop.f32.mrf.mxu0
  %v1433 = vadd.f32 0.0, %v1432
  %1434 = vmatmul.f32.gmra.mxu0 %v1272
  %v1435 = vpop.f32.mrf.mxu0
  %v1436 = vadd.f32 0.0, %v1435
  %1437 = vmatmul.f32.gmra.mxu0 %v1275
  %v1438 = vpop.f32.mrf.mxu0
  %v1439 = vadd.f32 0.0, %v1438
  %1440 = vmatmul.f32.gmra.mxu0 %v1278
  %v1441 = vpop.f32.mrf.mxu0
  %v1442 = vadd.f32 0.0, %v1441
  %1443 = vmatmul.f32.gmra.mxu0 %v1281
  %v1444 = vpop.f32.mrf.mxu0
  %v1445 = vadd.f32 0.0, %v1444
  %1446 = vmatmul.f32.gmra.mxu0 %v1284
  %v1447 = vpop.f32.mrf.mxu0
  %v1448 = vadd.f32 0.0, %v1447
  %1449 = vmatmul.f32.gmra.mxu0 %v1287
  %v1450 = vpop.f32.mrf.mxu0
  %v1451 = vadd.f32 0.0, %v1450
  %1452 = vmatmul.f32.gmra.mxu0 %v1290
  %v1453 = vpop.f32.mrf.mxu0
  %v1454 = vadd.f32 0.0, %v1453
  %1455 = vmatmul.f32.gmra.mxu0 %v1293
  %v1456 = vpop.f32.mrf.mxu0
  %v1457 = vadd.f32 0.0, %v1456
  %1458 = vmatmul.f32.gmra.mxu0 %v1296
  %v1459 = vpop.f32.mrf.mxu0
  %v1460 = vadd.f32 0.0, %v1459
  %1461 = vmatmul.f32.gmra.mxu0 %v1299
  %v1462 = vpop.f32.mrf.mxu0
  %v1463 = vadd.f32 0.0, %v1462
  %1464 = vmatmul.f32.gmra.mxu0 %v1302
  %v1465 = vpop.f32.mrf.mxu0
  %v1466 = vadd.f32 0.0, %v1465
  %1467 = vmatmul.f32.gmra.mxu0 %v1305
  %v1468 = vpop.f32.mrf.mxu0
  %v1469 = vadd.f32 0.0, %v1468
  %1470 = vmatmul.f32.gmra.mxu0 %v1308
  %v1471 = vpop.f32.mrf.mxu0
  %v1472 = vadd.f32 0.0, %v1471
  %1473 = vmatmul.f32.gmra.mxu0 %v1311
  %v1474 = vpop.f32.mrf.mxu0
  %v1475 = vadd.f32 0.0, %v1474
  %1476 = vmatmul.f32.gmra.mxu0 %v1314
  %v1477 = vpop.f32.mrf.mxu0
  %v1478 = vadd.f32 0.0, %v1477
  %1479 = vmatmul.f32.gmra.mxu0 %v1317
  %v1480 = vpop.f32.mrf.mxu0
  %v1481 = vadd.f32 0.0, %v1480
  %1482 = vmatmul.f32.gmra.mxu0 %v1320
  %v1483 = vpop.f32.mrf.mxu0
  %v1484 = vadd.f32 0.0, %v1483
  %1485 = vmatmul.f32.gmra.mxu0 %v1323
  %v1486 = vpop.f32.mrf.mxu0
  %v1487 = vadd.f32 0.0, %v1486
  %1488 = vmatmul.f32.gmra.mxu0 %v1326
  %v1489 = vpop.f32.mrf.mxu0
  %v1490 = vadd.f32 0.0, %v1489
  %1491 = vmatmul.f32.gmra.mxu0 %v1329
  %v1492 = vpop.f32.mrf.mxu0
  %v1493 = vadd.f32 0.0, %v1492
  %1494 = vmatmul.f32.gmra.mxu0 %v1332
  %v1495 = vpop.f32.mrf.mxu0
  %v1496 = vadd.f32 0.0, %v1495
  %1497 = vmatmul.f32.gmra.mxu0 %v1335
  %v1498 = vpop.f32.mrf.mxu0
  %v1499 = vadd.f32 0.0, %v1498
  %1500 = vmatmul.f32.gmra.mxu0 %v1338
  %v1501 = vpop.f32.mrf.mxu0
  %v1502 = vadd.f32 0.0, %v1501
  %1503 = vmatmul.f32.gmra.mxu0 %v1341
  %v1504 = vpop.f32.mrf.mxu0
  %v1505 = vadd.f32 0.0, %v1504
  %1506 = vmatmul.f32.gmra.mxu0 %v1344
  %v1507 = vpop.f32.mrf.mxu0
  %v1508 = vadd.f32 0.0, %v1507
  %1509 = vmatmul.f32.gmra.mxu0 %v1347
  %v1510 = vpop.f32.mrf.mxu0
  %v1511 = vadd.f32 0.0, %v1510
  %1512 = vmatmul.f32.gmra.mxu0 %v1350
  %v1513 = vpop.f32.mrf.mxu0
  %v1514 = vadd.f32 0.0, %v1513
  %1515 = vmatmul.f32.gmra.mxu0 %v1353
  %v1516 = vpop.f32.mrf.mxu0
  %v1517 = vadd.f32 0.0, %v1516
  %1518 = vdwg.mxu0
  %v1519 = vmax.f32 %v1013, %v1373
  %v1520 = vmax.f32 %v1016, %v1376
  %v1521 = vmax.f32 %v1019, %v1379
  %v1522 = vmax.f32 %v1022, %v1382
  %v1523 = vmax.f32 %v1025, %v1385
  %v1524 = vmax.f32 %v1028, %v1388
  %v1525 = vmax.f32 %v1031, %v1391
  %v1526 = vmax.f32 %v1034, %v1394
  %v1527 = vmax.f32 %v1037, %v1397
  %v1528 = vmax.f32 %v1040, %v1400
  %v1529 = vmax.f32 %v1043, %v1403
  %v1530 = vmax.f32 %v1046, %v1406
  %v1531 = vmax.f32 %v1049, %v1409
  %v1532 = vmax.f32 %v1052, %v1412
  %v1533 = vmax.f32 %v1055, %v1415
  %v1534 = vmax.f32 %v1058, %v1418
  %v1535 = vmax.f32 %v1061, %v1421
  %v1536 = vmax.f32 %v1064, %v1424
  %v1537 = vmax.f32 %v1067, %v1427
  %v1538 = vmax.f32 %v1070, %v1430
  %v1539 = vmax.f32 %v1073, %v1433
  %v1540 = vmax.f32 %v1076, %v1436
  %v1541 = vmax.f32 %v1079, %v1439
  %v1542 = vmax.f32 %v1082, %v1442
  %v1543 = vmax.f32 %v1085, %v1445
  %v1544 = vmax.f32 %v1088, %v1448
  %v1545 = vmax.f32 %v1091, %v1451
  %v1546 = vmax.f32 %v1094, %v1454
  %v1547 = vmax.f32 %v1097, %v1457
  %v1548 = vmax.f32 %v1100, %v1460
  %v1549 = vmax.f32 %v1103, %v1463
  %v1550 = vmax.f32 %v1106, %v1466
  %v1551 = vmax.f32 %v1109, %v1469
  %v1552 = vmax.f32 %v1112, %v1472
  %v1553 = vmax.f32 %v1115, %v1475
  %v1554 = vmax.f32 %v1118, %v1478
  %v1555 = vmax.f32 %v1121, %v1481
  %v1556 = vmax.f32 %v1124, %v1484
  %v1557 = vmax.f32 %v1127, %v1487
  %v1558 = vmax.f32 %v1130, %v1490
  %v1559 = vmax.f32 %v1133, %v1493
  %v1560 = vmax.f32 %v1136, %v1496
  %v1561 = vmax.f32 %v1139, %v1499
  %v1562 = vmax.f32 %v1142, %v1502
  %v1563 = vmax.f32 %v1145, %v1505
  %v1564 = vmax.f32 %v1148, %v1508
  %v1565 = vmax.f32 %v1151, %v1511
  %v1566 = vmax.f32 %v1154, %v1514
  %v1567 = vmax.f32 %v1157, %v1517
  %v1568 = vmax.f32 %v750, %v1519
  %v1569 = vmax.f32 %v751, %v1520
  %v1570 = vmax.f32 %v752, %v1521
  %v1571 = vmax.f32 %v753, %v1522
  %v1572 = vmax.f32 %v754, %v1523
  %v1573 = vmax.f32 %v755, %v1524
  %v1574 = vmax.f32 %v756, %v1525
  %v1575 = vmax.f32 %v757, %v1526
  %v1576 = vmax.f32 %v758, %v1527
  %v1577 = vmax.f32 %v759, %v1528
  %v1578 = vmax.f32 %v760, %v1529
  %v1579 = vmax.f32 %v761, %v1530
  %v1580 = vmax.f32 %v762, %v1531
  %v1581 = vmax.f32 %v763, %v1532
  %v1582 = vmax.f32 %v764, %v1533
  %v1583 = vmax.f32 %v765, %v1534
  %v1584 = vmax.f32 %v766, %v1535
  %v1585 = vmax.f32 %v767, %v1536
  %v1586 = vmax.f32 %v768, %v1537
  %v1587 = vmax.f32 %v769, %v1538
  %v1588 = vmax.f32 %v770, %v1539
  %v1589 = vmax.f32 %v771, %v1540
  %v1590 = vmax.f32 %v772, %v1541
  %v1591 = vmax.f32 %v773, %v1542
  %v1592 = vmax.f32 %v774, %v1543
  %v1593 = vmax.f32 %v775, %v1544
  %v1594 = vmax.f32 %v776, %v1545
  %v1595 = vmax.f32 %v777, %v1546
  %v1596 = vmax.f32 %v778, %v1547
  %v1597 = vmax.f32 %v779, %v1548
  %v1598 = vmax.f32 %v780, %v1549
  %v1599 = vmax.f32 %v781, %v1550
  %v1600 = vmax.f32 %v782, %v1551
  %v1601 = vmax.f32 %v783, %v1552
  %v1602 = vmax.f32 %v784, %v1553
  %v1603 = vmax.f32 %v785, %v1554
  %v1604 = vmax.f32 %v786, %v1555
  %v1605 = vmax.f32 %v787, %v1556
  %v1606 = vmax.f32 %v788, %v1557
  %v1607 = vmax.f32 %v789, %v1558
  %v1608 = vmax.f32 %v790, %v1559
  %v1609 = vmax.f32 %v791, %v1560
  %v1610 = vmax.f32 %v792, %v1561
  %v1611 = vmax.f32 %v793, %v1562
  %v1612 = vmax.f32 %v794, %v1563
  %v1613 = vmax.f32 %v795, %v1564
  %v1614 = vmax.f32 %v796, %v1565
  %v1615 = vmax.f32 %v797, %v1566
  %v1616 = vmax.f32 %v798, %v1567
  %v1617 = vld [vmem:[%s5] sm:$0x1]
  %v1619 = vperm.slane %v1617, 0
  %v1621 = vadd.f32 %v1568, %v1619
  %v1622 = vadd.f32 %v1569, %v1619
  %v1623 = vadd.f32 %v1570, %v1619
  %v1624 = vadd.f32 %v1571, %v1619
  %v1625 = vadd.f32 %v1572, %v1619
  %v1626 = vadd.f32 %v1573, %v1619
  %v1627 = vadd.f32 %v1574, %v1619
  %v1628 = vadd.f32 %v1575, %v1619
  %v1629 = vadd.f32 %v1576, %v1619
  %v1630 = vadd.f32 %v1577, %v1619
  %v1631 = vadd.f32 %v1578, %v1619
  %v1632 = vadd.f32 %v1579, %v1619
  %v1633 = vadd.f32 %v1580, %v1619
  %v1634 = vadd.f32 %v1581, %v1619
  %v1635 = vadd.f32 %v1582, %v1619
  %v1636 = vadd.f32 %v1583, %v1619
  %v1637 = vadd.f32 %v1584, %v1619
  %v1638 = vadd.f32 %v1585, %v1619
  %v1639 = vadd.f32 %v1586, %v1619
  %v1640 = vadd.f32 %v1587, %v1619
  %v1641 = vadd.f32 %v1588, %v1619
  %v1642 = vadd.f32 %v1589, %v1619
  %v1643 = vadd.f32 %v1590, %v1619
  %v1644 = vadd.f32 %v1591, %v1619
  %v1645 = vadd.f32 %v1592, %v1619
  %v1646 = vadd.f32 %v1593, %v1619
  %v1647 = vadd.f32 %v1594, %v1619
  %v1648 = vadd.f32 %v1595, %v1619
  %v1649 = vadd.f32 %v1596, %v1619
  %v1650 = vadd.f32 %v1597, %v1619
  %v1651 = vadd.f32 %v1598, %v1619
  %v1652 = vadd.f32 %v1599, %v1619
  %v1653 = vadd.f32 %v1600, %v1619
  %v1654 = vadd.f32 %v1601, %v1619
  %v1655 = vadd.f32 %v1602, %v1619
  %v1656 = vadd.f32 %v1603, %v1619
  %v1657 = vadd.f32 %v1604, %v1619
  %v1658 = vadd.f32 %v1605, %v1619
  %v1659 = vadd.f32 %v1606, %v1619
  %v1660 = vadd.f32 %v1607, %v1619
  %v1661 = vadd.f32 %v1608, %v1619
  %v1662 = vadd.f32 %v1609, %v1619
  %v1663 = vadd.f32 %v1610, %v1619
  %v1664 = vadd.f32 %v1611, %v1619
  %v1665 = vadd.f32 %v1612, %v1619
  %v1666 = vadd.f32 %v1613, %v1619
  %v1667 = vadd.f32 %v1614, %v1619
  %v1668 = vadd.f32 %v1615, %v1619
  %v1669 = vadd.f32 %v1616, %v1619
  %v1670 = vpack.c.bf16 %v1621, %v1621
  %v1671 = vpack.c.bf16 %v1622, %v1622
  %v1672 = vpack.c.bf16 %v1623, %v1623
  %v1673 = vpack.c.bf16 %v1624, %v1624
  %v1674 = vpack.c.bf16 %v1625, %v1625
  %v1675 = vpack.c.bf16 %v1626, %v1626
  %v1676 = vpack.c.bf16 %v1627, %v1627
  %v1677 = vpack.c.bf16 %v1628, %v1628
  %v1678 = vpack.c.bf16 %v1629, %v1629
  %v1679 = vpack.c.bf16 %v1630, %v1630
  %v1680 = vpack.c.bf16 %v1631, %v1631
  %v1681 = vpack.c.bf16 %v1632, %v1632
  %v1682 = vpack.c.bf16 %v1633, %v1633
  %v1683 = vpack.c.bf16 %v1634, %v1634
  %v1684 = vpack.c.bf16 %v1635, %v1635
  %v1685 = vpack.c.bf16 %v1636, %v1636
  %v1686 = vpack.c.bf16 %v1637, %v1637
  %v1687 = vpack.c.bf16 %v1638, %v1638
  %v1688 = vpack.c.bf16 %v1639, %v1639
  %v1689 = vpack.c.bf16 %v1640, %v1640
  %v1690 = vpack.c.bf16 %v1641, %v1641
  %v1691 = vpack.c.bf16 %v1642, %v1642
  %v1692 = vpack.c.bf16 %v1643, %v1643
  %v1693 = vpack.c.bf16 %v1644, %v1644
  %v1694 = vpack.c.bf16 %v1645, %v1645
  %v1695 = vpack.c.bf16 %v1646, %v1646
  %v1696 = vpack.c.bf16 %v1647, %v1647
  %v1697 = vpack.c.bf16 %v1648, %v1648
  %v1698 = vpack.c.bf16 %v1649, %v1649
  %v1699 = vpack.c.bf16 %v1650, %v1650
  %v1700 = vpack.c.bf16 %v1651, %v1651
  %v1701 = vpack.c.bf16 %v1652, %v1652
  %v1702 = vpack.c.bf16 %v1653, %v1653
  %v1703 = vpack.c.bf16 %v1654, %v1654
  %v1704 = vpack.c.bf16 %v1655, %v1655
  %v1705 = vpack.c.bf16 %v1656, %v1656
  %v1706 = vpack.c.bf16 %v1657, %v1657
  %v1707 = vpack.c.bf16 %v1658, %v1658
  %v1708 = vpack.c.bf16 %v1659, %v1659
  %v1709 = vpack.c.bf16 %v1660, %v1660
  %v1710 = vpack.c.bf16 %v1661, %v1661
  %v1711 = vpack.c.bf16 %v1662, %v1662
  %v1712 = vpack.c.bf16 %v1663, %v1663
  %v1713 = vpack.c.bf16 %v1664, %v1664
  %v1714 = vpack.c.bf16 %v1665, %v1665
  %v1715 = vpack.c.bf16 %v1666, %v1666
  %v1716 = vpack.c.bf16 %v1667, %v1667
  %v1717 = vpack.c.bf16 %v1668, %v1668
  %v1718 = vpack.c.bf16 %v1669, %v1669
  %vm1719 = vcmask 519168
  %1720 = vst.msk [vmem:[%s6] sm:$0xf] %vm1719, %v1670
  %1721 = vst.msk [vmem:[%s6 + $0x4] sm:$0xf] %vm1719, %v1671
  %1722 = vst.msk [vmem:[%s6 + $0x8] sm:$0xf] %vm1719, %v1672
  %1723 = vst.msk [vmem:[%s6 + $0xc] sm:$0xf] %vm1719, %v1673
  %1724 = vst.msk [vmem:[%s6 + $0x10] sm:$0xf] %vm1719, %v1674
  %1725 = vst.msk [vmem:[%s6 + $0x14] sm:$0xf] %vm1719, %v1675
  %1726 = vst.msk [vmem:[%s6 + $0x18] sm:$0xf] %vm1719, %v1676
  %1727 = vst.msk [vmem:[%s6 + $0x1c] sm:$0xf] %vm1719, %v1677
  %1728 = vst.msk [vmem:[%s6 + $0x20] sm:$0xf] %vm1719, %v1678
  %1729 = vst.msk [vmem:[%s6 + $0x24] sm:$0xf] %vm1719, %v1679
  %1730 = vst.msk [vmem:[%s6 + $0x28] sm:$0xf] %vm1719, %v1680
  %1731 = vst.msk [vmem:[%s6 + $0x2c] sm:$0xf] %vm1719, %v1681
  %1732 = vst.msk [vmem:[%s6 + $0x30] sm:$0xf] %vm1719, %v1682
  %1733 = vst.msk [vmem:[%s6 + $0x34] sm:$0xf] %vm1719, %v1683
  %1734 = vst.msk [vmem:[%s6 + $0x38] sm:$0xf] %vm1719, %v1684
  %1735 = vst.msk [vmem:[%s6 + $0x3c] sm:$0xf] %vm1719, %v1685
  %1736 = vst.msk [vmem:[%s6 + $0x40] sm:$0xf] %vm1719, %v1686
  %1737 = vst.msk [vmem:[%s6 + $0x44] sm:$0xf] %vm1719, %v1687
  %1738 = vst.msk [vmem:[%s6 + $0x48] sm:$0xf] %vm1719, %v1688
  %1739 = vst.msk [vmem:[%s6 + $0x4c] sm:$0xf] %vm1719, %v1689
  %1740 = vst.msk [vmem:[%s6 + $0x50] sm:$0xf] %vm1719, %v1690
  %1741 = vst.msk [vmem:[%s6 + $0x54] sm:$0xf] %vm1719, %v1691
  %1742 = vst.msk [vmem:[%s6 + $0x58] sm:$0xf] %vm1719, %v1692
  %1743 = vst.msk [vmem:[%s6 + $0x5c] sm:$0xf] %vm1719, %v1693
  %1744 = vst.msk [vmem:[%s6 + $0x60] sm:$0xf] %vm1719, %v1694
  %1745 = vst.msk [vmem:[%s6 + $0x64] sm:$0xf] %vm1719, %v1695
  %1746 = vst.msk [vmem:[%s6 + $0x68] sm:$0xf] %vm1719, %v1696
  %1747 = vst.msk [vmem:[%s6 + $0x6c] sm:$0xf] %vm1719, %v1697
  %1748 = vst.msk [vmem:[%s6 + $0x70] sm:$0xf] %vm1719, %v1698
  %1749 = vst.msk [vmem:[%s6 + $0x74] sm:$0xf] %vm1719, %v1699
  %1750 = vst.msk [vmem:[%s6 + $0x78] sm:$0xf] %vm1719, %v1700
  %1751 = vst.msk [vmem:[%s6 + $0x7c] sm:$0xf] %vm1719, %v1701
  %1752 = vst.msk [vmem:[%s6 + $0x80] sm:$0xf] %vm1719, %v1702
  %1753 = vst.msk [vmem:[%s6 + $0x84] sm:$0xf] %vm1719, %v1703
  %1754 = vst.msk [vmem:[%s6 + $0x88] sm:$0xf] %vm1719, %v1704
  %1755 = vst.msk [vmem:[%s6 + $0x8c] sm:$0xf] %vm1719, %v1705
  %1756 = vst.msk [vmem:[%s6 + $0x90] sm:$0xf] %vm1719, %v1706
  %1757 = vst.msk [vmem:[%s6 + $0x94] sm:$0xf] %vm1719, %v1707
  %1758 = vst.msk [vmem:[%s6 + $0x98] sm:$0xf] %vm1719, %v1708
  %1759 = vst.msk [vmem:[%s6 + $0x9c] sm:$0xf] %vm1719, %v1709
  %1760 = vst.msk [vmem:[%s6 + $0xa0] sm:$0xf] %vm1719, %v1710
  %1761 = vst.msk [vmem:[%s6 + $0xa4] sm:$0xf] %vm1719, %v1711
  %1762 = vst.msk [vmem:[%s6 + $0xa8] sm:$0xf] %vm1719, %v1712
  %1763 = vst.msk [vmem:[%s6 + $0xac] sm:$0xf] %vm1719, %v1713
  %1764 = vst.msk [vmem:[%s6 + $0xb0] sm:$0xf] %vm1719, %v1714
  %1765 = vst.msk [vmem:[%s6 + $0xb4] sm:$0xf] %vm1719, %v1715
  %1766 = vst.msk [vmem:[%s6 + $0xb8] sm:$0xf] %vm1719, %v1716
  %1767 = vst.msk [vmem:[%s6 + $0xbc] sm:$0xf] %vm1719, %v1717
  %1768 = vst.msk [vmem:[%s6 + $0xc0] sm:$0xf] %vm1719, %v1718
  // Predicated region
  $region26: #{mnist_forward.3} parent=0 // pred_check
    _
  $region27: #{mnist_forward.3} parent=0 // pred_check_branch
    %1770 = sbr.rel (0) target = $region29
  $region28: #{mnist_forward.3} parent=0 // pred_region
    _
  $region29: #{mnist_forward.3} parent=0 // pred_fallthru
    _
  // Predicated region
  $region30: #{mnist_forward.3} parent=0 // pred_check
    _
  $region31: #{mnist_forward.3} parent=0 // pred_check_branch
    %1772 = sbr.rel (0) target = $region33
  $region32: #{mnist_forward.3} parent=0 // pred_region
    _
  $region33: #{mnist_forward.3} parent=0 // pred_fallthru
    _

// kernel: mnist_forward.4
$region0: #{mnist_forward.4}
  #allocation0 [shape = 'u32[]', space=smem, size = 0x4, offset = 0x4, fixed_abs, tag = 'smem constant byte address 0x4 - core index']
  #allocation1 [shape = 'u32[72,128]{1,0:T(1,128)}', space=vmem, size = 0x9000, scoped, tag = 'internal scratch']
  %s0 = inlined_call_operand.vmem [shape: bf16[98,576], index: 0, kind: input, shape index: {}]
  %s1 = inlined_call_operand.vmem [shape: bf16[98,576], index: 1, kind: input, shape index: {}]
  %s2 = inlined_call_operand.vmem [shape: bf16[98,576], index: 2, kind: input, shape index: {}]
  %s3 = inlined_call_operand.vmem [shape: bf16[98,576], index: 3, kind: input, shape index: {}]
  %s4 = inlined_call_operand.vmem [shape: bf16[576,128], index: 4, kind: input, shape index: {}]
  %s5 = inlined_call_operand.vmem [shape: f32[1,128], index: 5, kind: input, shape index: {}]
  %s6 = inlined_call_operand.vmem [shape: bf16[98,128], index: 6, kind: output, shape index: {}]
  %s7 = sld [smem:[#allocation0]]
  $region34: #{mnist_forward.4} parent=0
    _
  %s9 = ssub.s32 1, %s7
  %s10 = scalar_select 0, %s9, %s7
  // Predicated region
  $region2: #{mnist_forward.4} parent=0 // pred_check
    _
  $region3: #{mnist_forward.4} parent=0 // pred_check_branch
    %12 = sbr.rel (0) target = $region5
  $region4: #{mnist_forward.4} parent=0 // pred_region
    _
  $region5: #{mnist_forward.4} parent=0 // pred_fallthru
    _
  // Predicated region
  $region6: #{mnist_forward.4} parent=0 // pred_check
    _
  $region7: #{mnist_forward.4} parent=0 // pred_check_branch
    %14 = sbr.rel (0) target = $region9
  $region8: #{mnist_forward.4} parent=0 // pred_region
    _
  $region9: #{mnist_forward.4} parent=0 // pred_fallthru
    _
  // Predicated region
  $region10: #{mnist_forward.4} parent=0 // pred_check
    _
  $region11: #{mnist_forward.4} parent=0 // pred_check_branch
    %16 = sbr.rel (0) target = $region13
  $region12: #{mnist_forward.4} parent=0 // pred_region
    _
  $region13: #{mnist_forward.4} parent=0 // pred_fallthru
    _
  // Predicated region
  $region14: #{mnist_forward.4} parent=0 // pred_check
    _
  $region15: #{mnist_forward.4} parent=0 // pred_check_branch
    %18 = sbr.rel (0) target = $region17
  $region16: #{mnist_forward.4} parent=0 // pred_region
    _
  $region17: #{mnist_forward.4} parent=0 // pred_fallthru
    _
  // Predicated region
  $region18: #{mnist_forward.4} parent=0 // pred_check
    _
  $region19: #{mnist_forward.4} parent=0 // pred_check_branch
    %20 = sbr.rel (0) target = $region21
  $region20: #{mnist_forward.4} parent=0 // pred_region
    _
  $region21: #{mnist_forward.4} parent=0 // pred_fallthru
    _
  // Predicated region
  $region22: #{mnist_forward.4} parent=0 // pred_check
    _
  $region23: #{mnist_forward.4} parent=0 // pred_check_branch
    %22 = sbr.rel (0) target = $region25
  $region24: #{mnist_forward.4} parent=0 // pred_region
    _
  $region25: #{mnist_forward.4} parent=0 // pred_fallthru
    _
  %v24 = vld [vmem:[%s4] sm:$0xf]
  %v25 = vld [vmem:[%s4 + $0x4] sm:$0xf]
  %v26 = vld [vmem:[%s4 + $0x8] sm:$0xf]
  %v27 = vld [vmem:[%s4 + $0xc] sm:$0xf]
  %v28 = vld [vmem:[%s4 + $0x10] sm:$0xf]
  %v29 = vld [vmem:[%s4 + $0x14] sm:$0xf]
  %v30 = vld [vmem:[%s4 + $0x18] sm:$0xf]
  %v31 = vld [vmem:[%s4 + $0x1c] sm:$0xf]
  %v32 = vld [vmem:[%s4 + $0x20] sm:$0xf]
  %v33 = vld [vmem:[%s4 + $0x24] sm:$0xf]
  %v34 = vld [vmem:[%s4 + $0x28] sm:$0xf]
  %v35 = vld [vmem:[%s4 + $0x2c] sm:$0xf]
  %v36 = vld [vmem:[%s4 + $0x30] sm:$0xf]
  %v37 = vld [vmem:[%s4 + $0x34] sm:$0xf]
  %v38 = vld [vmem:[%s4 + $0x38] sm:$0xf]
  %v39 = vld [vmem:[%s4 + $0x3c] sm:$0xf]
  %v40 = vld [vmem:[%s4 + $0x40] sm:$0xf]
  %v41 = vld [vmem:[%s4 + $0x44] sm:$0xf]
  %v42 = vld [vmem:[%s4 + $0x48] sm:$0xf]
  %v43 = vld [vmem:[%s4 + $0x4c] sm:$0xf]
  %v44 = vld [vmem:[%s4 + $0x50] sm:$0xf]
  %v45 = vld [vmem:[%s4 + $0x54] sm:$0xf]
  %v46 = vld [vmem:[%s4 + $0x58] sm:$0xf]
  %v47 = vld [vmem:[%s4 + $0x5c] sm:$0xf]
  %v48 = vld [vmem:[%s4 + $0x60] sm:$0xf]
  %v49 = vld [vmem:[%s4 + $0x64] sm:$0xf]
  %v50 = vld [vmem:[%s4 + $0x68] sm:$0xf]
  %v51 = vld [vmem:[%s4 + $0x6c] sm:$0xf]
  %v52 = vld [vmem:[%s4 + $0x70] sm:$0xf]
  %v53 = vld [vmem:[%s4 + $0x74] sm:$0xf]
  %v54 = vld [vmem:[%s4 + $0x78] sm:$0xf]
  %v55 = vld [vmem:[%s4 + $0x7c] sm:$0xf]
  %v56 = vld [vmem:[%s4 + $0x80] sm:$0xf]
  %v57 = vld [vmem:[%s4 + $0x84] sm:$0xf]
  %v58 = vld [vmem:[%s4 + $0x88] sm:$0xf]
  %v59 = vld [vmem:[%s4 + $0x8c] sm:$0xf]
  %v60 = vld [vmem:[%s4 + $0x90] sm:$0xf]
  %v61 = vld [vmem:[%s4 + $0x94] sm:$0xf]
  %v62 = vld [vmem:[%s4 + $0x98] sm:$0xf]
  %v63 = vld [vmem:[%s4 + $0x9c] sm:$0xf]
  %v64 = vld [vmem:[%s4 + $0xa0] sm:$0xf]
  %v65 = vld [vmem:[%s4 + $0xa4] sm:$0xf]
  %v66 = vld [vmem:[%s4 + $0xa8] sm:$0xf]
  %v67 = vld [vmem:[%s4 + $0xac] sm:$0xf]
  %v68 = vld [vmem:[%s4 + $0xb0] sm:$0xf]
  %v69 = vld [vmem:[%s4 + $0xb4] sm:$0xf]
  %v70 = vld [vmem:[%s4 + $0xb8] sm:$0xf]
  %v71 = vld [vmem:[%s4 + $0xbc] sm:$0xf]
  %v72 = vld [vmem:[%s4 + $0xc0] sm:$0xf]
  %v73 = vld [vmem:[%s4 + $0xc4] sm:$0xf]
  %v74 = vld [vmem:[%s4 + $0xc8] sm:$0xf]
  %v75 = vld [vmem:[%s4 + $0xcc] sm:$0xf]
  %v76 = vld [vmem:[%s4 + $0xd0] sm:$0xf]
  %v77 = vld [vmem:[%s4 + $0xd4] sm:$0xf]
  %v78 = vld [vmem:[%s4 + $0xd8] sm:$0xf]
  %v79 = vld [vmem:[%s4 + $0xdc] sm:$0xf]
  %v80 = vld [vmem:[%s4 + $0xe0] sm:$0xf]
  %v81 = vld [vmem:[%s4 + $0xe4] sm:$0xf]
  %v82 = vld [vmem:[%s4 + $0xe8] sm:$0xf]
  %v83 = vld [vmem:[%s4 + $0xec] sm:$0xf]
  %v84 = vld [vmem:[%s4 + $0xf0] sm:$0xf]
  %v85 = vld [vmem:[%s4 + $0xf4] sm:$0xf]
  %v86 = vld [vmem:[%s4 + $0xf8] sm:$0xf]
  %v87 = vld [vmem:[%s4 + $0xfc] sm:$0xf]
  %v88 = vld [vmem:[%s4 + $0x100] sm:$0xf]
  %v89 = vld [vmem:[%s4 + $0x104] sm:$0xf]
  %v90 = vld [vmem:[%s4 + $0x108] sm:$0xf]
  %v91 = vld [vmem:[%s4 + $0x10c] sm:$0xf]
  %v92 = vld [vmem:[%s4 + $0x110] sm:$0xf]
  %v93 = vld [vmem:[%s4 + $0x114] sm:$0xf]
  %v94 = vld [vmem:[%s4 + $0x118] sm:$0xf]
  %v95 = vld [vmem:[%s4 + $0x11c] sm:$0xf]
  %v96 = vld [vmem:[%s0] sm:$0xff]
  %v97 = vld [vmem:[%s0 + $0x8] sm:$0xff]
  %v98 = vld [vmem:[%s0 + $0x10] sm:$0xf]
  %v99 = vld [vmem:[%s0 + $0x14] sm:$0xff]
  %v100 = vld [vmem:[%s0 + $0x1c] sm:$0xff]
  %v101 = vld [vmem:[%s0 + $0x24] sm:$0xf]
  %v102 = vld [vmem:[%s0 + $0x28] sm:$0xff]
  %v103 = vld [vmem:[%s0 + $0x30] sm:$0xff]
  %v104 = vld [vmem:[%s0 + $0x38] sm:$0xf]
  %v105 = vld [vmem:[%s0 + $0x3c] sm:$0xff]
  %v106 = vld [vmem:[%s0 + $0x44] sm:$0xff]
  %v107 = vld [vmem:[%s0 + $0x4c] sm:$0xf]
  %v108 = vld [vmem:[%s0 + $0x50] sm:$0xff]
  %v109 = vld [vmem:[%s0 + $0x58] sm:$0xff]
  %v110 = vld [vmem:[%s0 + $0x60] sm:$0xf]
  %v111 = vld [vmem:[%s0 + $0x64] sm:$0xff]
  %v112 = vld [vmem:[%s0 + $0x6c] sm:$0xff]
  %v113 = vld [vmem:[%s0 + $0x74] sm:$0xf]
  %v114 = vld [vmem:[%s0 + $0x78] sm:$0xff]
  %v115 = vld [vmem:[%s0 + $0x80] sm:$0xff]
  %v116 = vld [vmem:[%s0 + $0x88] sm:$0xf]
  %v117 = vld [vmem:[%s0 + $0x8c] sm:$0xff]
  %v118 = vld [vmem:[%s0 + $0x94] sm:$0xff]
  %v119 = vld [vmem:[%s0 + $0x9c] sm:$0xf]
  %v120 = vld [vmem:[%s0 + $0xa0] sm:$0xff]
  %v121 = vld [vmem:[%s0 + $0xa8] sm:$0xff]
  %v122 = vld [vmem:[%s0 + $0xb0] sm:$0xf]
  %v123 = vld [vmem:[%s0 + $0xb4] sm:$0xff]
  %v124 = vld [vmem:[%s0 + $0xbc] sm:$0xff]
  %v125 = vld [vmem:[%s0 + $0xc4] sm:$0xf]
  %v126 = vld [vmem:[%s0 + $0xc8] sm:$0xff]
  %v127 = vld [vmem:[%s0 + $0xd0] sm:$0xff]
  %v128 = vld [vmem:[%s0 + $0xd8] sm:$0xf]
  %v129 = vld [vmem:[%s0 + $0xdc] sm:$0xff]
  %v130 = vld [vmem:[%s0 + $0xe4] sm:$0xff]
  %v131 = vld [vmem:[%s0 + $0xec] sm:$0xf]
  %v132 = vld [vmem:[%s0 + $0xf0] sm:$0x11]
  %v133 = vld [vmem:[%s0 + $0xf8] sm:$0x11]
  %v134 = vld [vmem:[%s0 + $0x100] sm:$0x1]
  %v174 = vunpack.c.l.b16 %v96
  %v175 = vunpack.c.h.b16 %v96
  %v176 = vunpack.c.l.b16 %v97
  %v177 = vunpack.c.h.b16 %v97
  %v178 = vunpack.c.l.b16 %v98
  %v179 = vunpack.c.l.b16 %v99
  %v180 = vunpack.c.h.b16 %v99
  %v181 = vunpack.c.l.b16 %v100
  %v182 = vunpack.c.h.b16 %v100
  %v183 = vunpack.c.l.b16 %v101
  %v184 = vunpack.c.l.b16 %v102
  %v185 = vunpack.c.h.b16 %v102
  %v186 = vunpack.c.l.b16 %v103
  %v187 = vunpack.c.h.b16 %v103
  %v188 = vunpack.c.l.b16 %v104
  %v189 = vunpack.c.l.b16 %v105
  %v190 = vunpack.c.h.b16 %v105
  %v191 = vunpack.c.l.b16 %v106
  %v192 = vunpack.c.h.b16 %v106
  %v193 = vunpack.c.l.b16 %v107
  %v194 = vunpack.c.l.b16 %v108
  %v195 = vunpack.c.h.b16 %v108
  %v196 = vunpack.c.l.b16 %v109
  %v197 = vunpack.c.h.b16 %v109
  %v198 = vunpack.c.l.b16 %v110
  %v199 = vunpack.c.l.b16 %v111
  %v200 = vunpack.c.h.b16 %v111
  %v201 = vunpack.c.l.b16 %v112
  %v202 = vunpack.c.h.b16 %v112
  %v203 = vunpack.c.l.b16 %v113
  %v204 = vunpack.c.l.b16 %v114
  %v205 = vunpack.c.h.b16 %v114
  %v206 = vunpack.c.l.b16 %v115
  %v207 = vunpack.c.h.b16 %v115
  %v208 = vunpack.c.l.b16 %v116
  %v209 = vunpack.c.l.b16 %v117
  %v210 = vunpack.c.h.b16 %v117
  %v211 = vunpack.c.l.b16 %v118
  %v212 = vunpack.c.h.b16 %v118
  %v213 = vunpack.c.l.b16 %v119
  %v214 = vunpack.c.l.b16 %v120
  %v215 = vunpack.c.h.b16 %v120
  %v216 = vunpack.c.l.b16 %v121
  %v217 = vunpack.c.h.b16 %v121
  %v218 = vunpack.c.l.b16 %v122
  %v219 = vunpack.c.l.b16 %v123
  %v220 = vunpack.c.h.b16 %v123
  %v221 = vunpack.c.l.b16 %v124
  %v222 = vunpack.c.h.b16 %v124
  %v223 = vunpack.c.l.b16 %v125
  %v224 = vunpack.c.l.b16 %v126
  %v225 = vunpack.c.h.b16 %v126
  %v226 = vunpack.c.l.b16 %v127
  %v227 = vunpack.c.h.b16 %v127
  %v228 = vunpack.c.l.b16 %v128
  %v229 = vunpack.c.l.b16 %v129
  %v230 = vunpack.c.h.b16 %v129
  %v231 = vunpack.c.l.b16 %v130
  %v232 = vunpack.c.h.b16 %v130
  %v233 = vunpack.c.l.b16 %v131
  %v234 = vunpack.c.l.b16 %v132
  %v235 = vunpack.c.h.b16 %v132
  %v236 = vunpack.c.l.b16 %v133
  %v237 = vunpack.c.h.b16 %v133
  %v238 = vunpack.c.l.b16 %v134
  %v239 = vpack.c.b16 %v179, %v174
  %v240 = vpack.c.b16 %v180, %v175
  %v241 = vpack.c.b16 %v181, %v176
  %v242 = vpack.c.b16 %v182, %v177
  %v243 = vpack.c.b16 %v183, %v178
  %v244 = vpack.c.b16 %v189, %v184
  %v245 = vpack.c.b16 %v190, %v185
  %v246 = vpack.c.b16 %v191, %v186
  %v247 = vpack.c.b16 %v192, %v187
  %v248 = vpack.c.b16 %v193, %v188
  %v249 = vpack.c.b16 %v199, %v194
  %v250 = vpack.c.b16 %v200, %v195
  %v251 = vpack.c.b16 %v201, %v196
  %v252 = vpack.c.b16 %v202, %v197
  %v253 = vpack.c.b16 %v203, %v198
  %v254 = vpack.c.b16 %v209, %v204
  %v255 = vpack.c.b16 %v210, %v205
  %v256 = vpack.c.b16 %v211, %v206
  %v257 = vpack.c.b16 %v212, %v207
  %v258 = vpack.c.b16 %v213, %v208
  %v259 = vpack.c.b16 %v219, %v214
  %v260 = vpack.c.b16 %v220, %v215
  %v261 = vpack.c.b16 %v221, %v216
  %v262 = vpack.c.b16 %v222, %v217
  %v263 = vpack.c.b16 %v223, %v218
  %v264 = vpack.c.b16 %v229, %v224
  %v265 = vpack.c.b16 %v230, %v225
  %v266 = vpack.c.b16 %v231, %v226
  %v267 = vpack.c.b16 %v232, %v227
  %v268 = vpack.c.b16 %v233, %v228
  %v269 = vpack.c.b16 %v234, %v234
  %v270 = vpack.c.b16 %v235, %v235
  %v271 = vpack.c.b16 %v236, %v236
  %v272 = vpack.c.b16 %v237, %v237
  %v273 = vpack.c.b16 %v238, %v238
  %v374 = vunpack.c.l.b16 %v24
  %v375 = vunpack.c.l.b16 %v25
  %v376 = vunpack.c.l.b16 %v26
  %v377 = vunpack.c.l.b16 %v27
  %v378 = vunpack.c.l.b16 %v28
  %v379 = vunpack.c.l.b16 %v29
  %v380 = vunpack.c.l.b16 %v30
  %v381 = vunpack.c.l.b16 %v31
  %v382 = vunpack.c.l.b16 %v32
  %v383 = vunpack.c.l.b16 %v33
  %v384 = vunpack.c.l.b16 %v34
  %v385 = vunpack.c.l.b16 %v35
  %v386 = vunpack.c.l.b16 %v36
  %v387 = vunpack.c.l.b16 %v37
  %v388 = vunpack.c.l.b16 %v38
  %v389 = vunpack.c.l.b16 %v39
  %v390 = vunpack.c.l.b16 %v40
  %v391 = vunpack.c.l.b16 %v41
  %v392 = vunpack.c.l.b16 %v42
  %v393 = vunpack.c.l.b16 %v43
  %v394 = vunpack.c.l.b16 %v44
  %v395 = vunpack.c.l.b16 %v45
  %v396 = vunpack.c.l.b16 %v46
  %v397 = vunpack.c.l.b16 %v47
  %v398 = vunpack.c.l.b16 %v48
  %v399 = vunpack.c.l.b16 %v49
  %v400 = vunpack.c.l.b16 %v50
  %v401 = vunpack.c.l.b16 %v51
  %v402 = vunpack.c.l.b16 %v52
  %v403 = vunpack.c.l.b16 %v53
  %v404 = vunpack.c.l.b16 %v54
  %v405 = vunpack.c.l.b16 %v55
  %v406 = vunpack.c.l.b16 %v56
  %v407 = vunpack.c.l.b16 %v57
  %v408 = vunpack.c.l.b16 %v58
  %v409 = vunpack.c.l.b16 %v59
  %v410 = vunpack.c.l.b16 %v60
  %v411 = vunpack.c.l.b16 %v61
  %v412 = vunpack.c.l.b16 %v62
  %v413 = vunpack.c.l.b16 %v63
  %v414 = vunpack.c.l.b16 %v64
  %v415 = vunpack.c.l.b16 %v65
  %v416 = vunpack.c.l.b16 %v66
  %v417 = vunpack.c.l.b16 %v67
  %v418 = vunpack.c.l.b16 %v68
  %v419 = vunpack.c.l.b16 %v69
  %v420 = vunpack.c.l.b16 %v70
  %v421 = vunpack.c.l.b16 %v71
  %v422 = vunpack.c.l.b16 %v72
  %v423 = vunpack.c.l.b16 %v73
  %v424 = vunpack.c.l.b16 %v74
  %v425 = vunpack.c.l.b16 %v75
  %v426 = vunpack.c.l.b16 %v76
  %v427 = vunpack.c.l.b16 %v77
  %v428 = vunpack.c.l.b16 %v78
  %v429 = vunpack.c.l.b16 %v79
  %v430 = vunpack.c.l.b16 %v80
  %v431 = vunpack.c.l.b16 %v81
  %v432 = vunpack.c.l.b16 %v82
  %v433 = vunpack.c.l.b16 %v83
  %v434 = vunpack.c.l.b16 %v84
  %v435 = vunpack.c.l.b16 %v85
  %v436 = vunpack.c.l.b16 %v86
  %v437 = vunpack.c.l.b16 %v87
  %v438 = vunpack.c.l.b16 %v88
  %v439 = vunpack.c.l.b16 %v89
  %v440 = vunpack.c.l.b16 %v90
  %v441 = vunpack.c.l.b16 %v91
  %v442 = vunpack.c.l.b16 %v92
  %v443 = vunpack.c.l.b16 %v93
  %v444 = vunpack.c.l.b16 %v94
  %v445 = vunpack.c.l.b16 %v95
  %v446 = vpack.c.b16 %v375, %v374
  %v447 = vpack.c.b16 %v377, %v376
  %v448 = vpack.c.b16 %v379, %v378
  %v449 = vpack.c.b16 %v381, %v380
  %v450 = vpack.c.b16 %v383, %v382
  %v451 = vpack.c.b16 %v385, %v384
  %v452 = vpack.c.b16 %v387, %v386
  %v453 = vpack.c.b16 %v389, %v388
  %v454 = vpack.c.b16 %v391, %v390
  %v455 = vpack.c.b16 %v393, %v392
  %v456 = vpack.c.b16 %v395, %v394
  %v457 = vpack.c.b16 %v397, %v396
  %v458 = vpack.c.b16 %v399, %v398
  %v459 = vpack.c.b16 %v401, %v400
  %v460 = vpack.c.b16 %v403, %v402
  %v461 = vpack.c.b16 %v405, %v404
  %v462 = vpack.c.b16 %v407, %v406
  %v463 = vpack.c.b16 %v409, %v408
  %v464 = vpack.c.b16 %v411, %v410
  %v465 = vpack.c.b16 %v413, %v412
  %v466 = vpack.c.b16 %v415, %v414
  %v467 = vpack.c.b16 %v417, %v416
  %v468 = vpack.c.b16 %v419, %v418
  %v469 = vpack.c.b16 %v421, %v420
  %v470 = vpack.c.b16 %v423, %v422
  %v471 = vpack.c.b16 %v425, %v424
  %v472 = vpack.c.b16 %v427, %v426
  %v473 = vpack.c.b16 %v429, %v428
  %v474 = vpack.c.b16 %v431, %v430
  %v475 = vpack.c.b16 %v433, %v432
  %v476 = vpack.c.b16 %v435, %v434
  %v477 = vpack.c.b16 %v437, %v436
  %v478 = vpack.c.b16 %v439, %v438
  %v479 = vpack.c.b16 %v441, %v440
  %v480 = vpack.c.b16 %v443, %v442
  %v481 = vpack.c.b16 %v445, %v444
  %vm518 = vcmask 523264
  %v520 = vsel %vm518, %v243, 0
  %v523 = vsel %vm518, %v248, 0
  %v526 = vsel %vm518, %v253, 0
  %v529 = vsel %vm518, %v258, 0
  %v532 = vsel %vm518, %v263, 0
  %v535 = vsel %vm518, %v268, 0
  %v538 = vsel %vm518, %v273, 0
  %540 = vmatpush.bf16.msra.mxu0 %v453
  %541 = vmatpush.bf16.msra.mxu0 %v452
  %542 = vmatpush.bf16.msra.mxu0 %v451
  %543 = vmatpush.bf16.msra.mxu0 %v450
  %544 = vmatpush.bf16.msra.mxu0 %v449
  %545 = vmatpush.bf16.msra.mxu0 %v448
  %546 = vmatpush.bf16.msra.mxu0 %v447
  %547 = vmatpush.bf16.msra.mxu0 %v446
  %548 = vmatmul.bf16.gmra.mxu0 %v239
  %v549 = vpop.f32.mrf.mxu0
  %v550 = vadd.f32 0.0, %v549
  %v551 = vpop.f32.mrf.mxu0
  %v552 = vadd.f32 0.0, %v551
  %553 = vmatmul.bf16.gmra.mxu0 %v244
  %v554 = vpop.f32.mrf.mxu0
  %v555 = vadd.f32 0.0, %v554
  %v556 = vpop.f32.mrf.mxu0
  %v557 = vadd.f32 0.0, %v556
  %558 = vmatmul.bf16.gmra.mxu0 %v249
  %v559 = vpop.f32.mrf.mxu0
  %v560 = vadd.f32 0.0, %v559
  %v561 = vpop.f32.mrf.mxu0
  %v562 = vadd.f32 0.0, %v561
  %563 = vmatmul.bf16.gmra.mxu0 %v254
  %v564 = vpop.f32.mrf.mxu0
  %v565 = vadd.f32 0.0, %v564
  %v566 = vpop.f32.mrf.mxu0
  %v567 = vadd.f32 0.0, %v566
  %568 = vmatmul.bf16.gmra.mxu0 %v259
  %v569 = vpop.f32.mrf.mxu0
  %v570 = vadd.f32 0.0, %v569
  %v571 = vpop.f32.mrf.mxu0
  %v572 = vadd.f32 0.0, %v571
  %573 = vmatmul.bf16.gmra.mxu0 %v264
  %v574 = vpop.f32.mrf.mxu0
  %v575 = vadd.f32 0.0, %v574
  %v576 = vpop.f32.mrf.mxu0
  %v577 = vadd.f32 0.0, %v576
  %578 = vmatmul.bf16.gmra.mxu0 %v269
  %v579 = vpop.f32.mrf.mxu0
  %v580 = vadd.f32 0.0, %v579
  %v581 = vpop.f32.mrf.mxu0
  %582 = vdwg.mxu0
  %583 = vmatpush.bf16.msra.mxu0 %v461
  %584 = vmatpush.bf16.msra.mxu0 %v460
  %585 = vmatpush.bf16.msra.mxu0 %v459
  %586 = vmatpush.bf16.msra.mxu0 %v458
  %587 = vmatpush.bf16.msra.mxu0 %v457
  %588 = vmatpush.bf16.msra.mxu0 %v456
  %589 = vmatpush.bf16.msra.mxu0 %v455
  %590 = vmatpush.bf16.msra.mxu0 %v454
  %591 = vmatmul.bf16.gmra.mxu0 %v240
  %v592 = vpop.f32.mrf.mxu0
  %v593 = vadd.f32 %v550, %v592
  %v594 = vpop.f32.mrf.mxu0
  %v595 = vadd.f32 %v552, %v594
  %596 = vmatmul.bf16.gmra.mxu0 %v245
  %v597 = vpop.f32.mrf.mxu0
  %v598 = vadd.f32 %v555, %v597
  %v599 = vpop.f32.mrf.mxu0
  %v600 = vadd.f32 %v557, %v599
  %601 = vmatmul.bf16.gmra.mxu0 %v250
  %v602 = vpop.f32.mrf.mxu0
  %v603 = vadd.f32 %v560, %v602
  %v604 = vpop.f32.mrf.mxu0
  %v605 = vadd.f32 %v562, %v604
  %606 = vmatmul.bf16.gmra.mxu0 %v255
  %v607 = vpop.f32.mrf.mxu0
  %v608 = vadd.f32 %v565, %v607
  %v609 = vpop.f32.mrf.mxu0
  %v610 = vadd.f32 %v567, %v609
  %611 = vmatmul.bf16.gmra.mxu0 %v260
  %v612 = vpop.f32.mrf.mxu0
  %v613 = vadd.f32 %v570, %v612
  %v614 = vpop.f32.mrf.mxu0
  %v615 = vadd.f32 %v572, %v614
  %616 = vmatmul.bf16.gmra.mxu0 %v265
  %v617 = vpop.f32.mrf.mxu0
  %v618 = vadd.f32 %v575, %v617
  %v619 = vpop.f32.mrf.mxu0
  %v620 = vadd.f32 %v577, %v619
  %621 = vmatmul.bf16.gmra.mxu0 %v270
  %v622 = vpop.f32.mrf.mxu0
  %v623 = vadd.f32 %v580, %v622
  %v624 = vpop.f32.mrf.mxu0
  %625 = vdwg.mxu0
  %626 = vmatpush.bf16.msra.mxu0 %v469
  %627 = vmatpush.bf16.msra.mxu0 %v468
  %628 = vmatpush.bf16.msra.mxu0 %v467
  %629 = vmatpush.bf16.msra.mxu0 %v466
  %630 = vmatpush.bf16.msra.mxu0 %v465
  %631 = vmatpush.bf16.msra.mxu0 %v464
  %632 = vmatpush.bf16.msra.mxu0 %v463
  %633 = vmatpush.bf16.msra.mxu0 %v462
  %634 = vmatmul.bf16.gmra.mxu0 %v241
  %v635 = vpop.f32.mrf.mxu0
  %v636 = vadd.f32 %v593, %v635
  %v637 = vpop.f32.mrf.mxu0
  %v638 = vadd.f32 %v595, %v637
  %639 = vmatmul.bf16.gmra.mxu0 %v246
  %v640 = vpop.f32.mrf.mxu0
  %v641 = vadd.f32 %v598, %v640
  %v642 = vpop.f32.mrf.mxu0
  %v643 = vadd.f32 %v600, %v642
  %644 = vmatmul.bf16.gmra.mxu0 %v251
  %v645 = vpop.f32.mrf.mxu0
  %v646 = vadd.f32 %v603, %v645
  %v647 = vpop.f32.mrf.mxu0
  %v648 = vadd.f32 %v605, %v647
  %649 = vmatmul.bf16.gmra.mxu0 %v256
  %v650 = vpop.f32.mrf.mxu0
  %v651 = vadd.f32 %v608, %v650
  %v652 = vpop.f32.mrf.mxu0
  %v653 = vadd.f32 %v610, %v652
  %654 = vmatmul.bf16.gmra.mxu0 %v261
  %v655 = vpop.f32.mrf.mxu0
  %v656 = vadd.f32 %v613, %v655
  %v657 = vpop.f32.mrf.mxu0
  %v658 = vadd.f32 %v615, %v657
  %659 = vmatmul.bf16.gmra.mxu0 %v266
  %v660 = vpop.f32.mrf.mxu0
  %v661 = vadd.f32 %v618, %v660
  %v662 = vpop.f32.mrf.mxu0
  %v663 = vadd.f32 %v620, %v662
  %664 = vmatmul.bf16.gmra.mxu0 %v271
  %v665 = vpop.f32.mrf.mxu0
  %v666 = vadd.f32 %v623, %v665
  %v667 = vpop.f32.mrf.mxu0
  %668 = vdwg.mxu0
  %669 = vmatpush.bf16.msra.mxu0 %v477
  %670 = vmatpush.bf16.msra.mxu0 %v476
  %671 = vmatpush.bf16.msra.mxu0 %v475
  %672 = vmatpush.bf16.msra.mxu0 %v474
  %673 = vmatpush.bf16.msra.mxu0 %v473
  %674 = vmatpush.bf16.msra.mxu0 %v472
  %675 = vmatpush.bf16.msra.mxu0 %v471
  %676 = vmatpush.bf16.msra.mxu0 %v470
  %677 = vmatmul.bf16.gmra.mxu0 %v242
  %v678 = vpop.f32.mrf.mxu0
  %v679 = vadd.f32 %v636, %v678
  %v680 = vpop.f32.mrf.mxu0
  %v681 = vadd.f32 %v638, %v680
  %682 = vmatmul.bf16.gmra.mxu0 %v247
  %v683 = vpop.f32.mrf.mxu0
  %v684 = vadd.f32 %v641, %v683
  %v685 = vpop.f32.mrf.mxu0
  %v686 = vadd.f32 %v643, %v685
  %687 = vmatmul.bf16.gmra.mxu0 %v252
  %v688 = vpop.f32.mrf.mxu0
  %v689 = vadd.f32 %v646, %v688
  %v690 = vpop.f32.mrf.mxu0
  %v691 = vadd.f32 %v648, %v690
  %692 = vmatmul.bf16.gmra.mxu0 %v257
  %v693 = vpop.f32.mrf.mxu0
  %v694 = vadd.f32 %v651, %v693
  %v695 = vpop.f32.mrf.mxu0
  %v696 = vadd.f32 %v653, %v695
  %697 = vmatmul.bf16.gmra.mxu0 %v262
  %v698 = vpop.f32.mrf.mxu0
  %v699 = vadd.f32 %v656, %v698
  %v700 = vpop.f32.mrf.mxu0
  %v701 = vadd.f32 %v658, %v700
  %702 = vmatmul.bf16.gmra.mxu0 %v267
  %v703 = vpop.f32.mrf.mxu0
  %v704 = vadd.f32 %v661, %v703
  %v705 = vpop.f32.mrf.mxu0
  %v706 = vadd.f32 %v663, %v705
  %707 = vmatmul.bf16.gmra.mxu0 %v272
  %v708 = vpop.f32.mrf.mxu0
  %v709 = vadd.f32 %v666, %v708
  %v710 = vpop.f32.mrf.mxu0
  %711 = vdwg.mxu0
  %712 = vmatpush.bf16.msra.mxu0 0
  %713 = vmatpush.bf16.msra.mxu0 0
  %714 = vmatpush.bf16.msra.mxu0 0
  %715 = vmatpush.bf16.msra.mxu0 0
  %716 = vmatpush.bf16.msra.mxu0 %v481
  %717 = vmatpush.bf16.msra.mxu0 %v480
  %718 = vmatpush.bf16.msra.mxu0 %v479
  %719 = vmatpush.bf16.msra.mxu0 %v478
  %720 = vmatmul.bf16.gmra.mxu0 %v520
  %v721 = vpop.f32.mrf.mxu0
  %v722 = vadd.f32 %v679, %v721
  %v723 = vpop.f32.mrf.mxu0
  %v724 = vadd.f32 %v681, %v723
  %725 = vmatmul.bf16.gmra.mxu0 %v523
  %v726 = vpop.f32.mrf.mxu0
  %v727 = vadd.f32 %v684, %v726
  %v728 = vpop.f32.mrf.mxu0
  %v729 = vadd.f32 %v686, %v728
  %730 = vmatmul.bf16.gmra.mxu0 %v526
  %v731 = vpop.f32.mrf.mxu0
  %v732 = vadd.f32 %v689, %v731
  %v733 = vpop.f32.mrf.mxu0
  %v734 = vadd.f32 %v691, %v733
  %735 = vmatmul.bf16.gmra.mxu0 %v529
  %v736 = vpop.f32.mrf.mxu0
  %v737 = vadd.f32 %v694, %v736
  %v738 = vpop.f32.mrf.mxu0
  %v739 = vadd.f32 %v696, %v738
  %740 = vmatmul.bf16.gmra.mxu0 %v532
  %v741 = vpop.f32.mrf.mxu0
  %v742 = vadd.f32 %v699, %v741
  %v743 = vpop.f32.mrf.mxu0
  %v744 = vadd.f32 %v701, %v743
  %745 = vmatmul.bf16.gmra.mxu0 %v535
  %v746 = vpop.f32.mrf.mxu0
  %v747 = vadd.f32 %v704, %v746
  %v748 = vpop.f32.mrf.mxu0
  %v749 = vadd.f32 %v706, %v748
  %750 = vmatmul.bf16.gmra.mxu0 %v538
  %v751 = vpop.f32.mrf.mxu0
  %v752 = vadd.f32 %v709, %v751
  %v753 = vpop.f32.mrf.mxu0
  %754 = vdwg.mxu0
  %v755 = vld [vmem:[%s1] sm:$0xff]
  %v756 = vld [vmem:[%s1 + $0x8] sm:$0xff]
  %v757 = vld [vmem:[%s1 + $0x10] sm:$0xf]
  %v758 = vld [vmem:[%s1 + $0x14] sm:$0xff]
  %v759 = vld [vmem:[%s1 + $0x1c] sm:$0xff]
  %v760 = vld [vmem:[%s1 + $0x24] sm:$0xf]
  %v761 = vld [vmem:[%s1 + $0x28] sm:$0xff]
  %v762 = vld [vmem:[%s1 + $0x30] sm:$0xff]
  %v763 = vld [vmem:[%s1 + $0x38] sm:$0xf]
  %v764 = vld [vmem:[%s1 + $0x3c] sm:$0xff]
  %v765 = vld [vmem:[%s1 + $0x44] sm:$0xff]
  %v766 = vld [vmem:[%s1 + $0x4c] sm:$0xf]
  %v767 = vld [vmem:[%s1 + $0x50] sm:$0xff]
  %v768 = vld [vmem:[%s1 + $0x58] sm:$0xff]
  %v769 = vld [vmem:[%s1 + $0x60] sm:$0xf]
  %v770 = vld [vmem:[%s1 + $0x64] sm:$0xff]
  %v771 = vld [vmem:[%s1 + $0x6c] sm:$0xff]
  %v772 = vld [vmem:[%s1 + $0x74] sm:$0xf]
  %v773 = vld [vmem:[%s1 + $0x78] sm:$0xff]
  %v774 = vld [vmem:[%s1 + $0x80] sm:$0xff]
  %v775 = vld [vmem:[%s1 + $0x88] sm:$0xf]
  %v776 = vld [vmem:[%s1 + $0x8c] sm:$0xff]
  %v777 = vld [vmem:[%s1 + $0x94] sm:$0xff]
  %v778 = vld [vmem:[%s1 + $0x9c] sm:$0xf]
  %v779 = vld [vmem:[%s1 + $0xa0] sm:$0xff]
  %v780 = vld [vmem:[%s1 + $0xa8] sm:$0xff]
  %v781 = vld [vmem:[%s1 + $0xb0] sm:$0xf]
  %v782 = vld [vmem:[%s1 + $0xb4] sm:$0xff]
  %v783 = vld [vmem:[%s1 + $0xbc] sm:$0xff]
  %v784 = vld [vmem:[%s1 + $0xc4] sm:$0xf]
  %v785 = vld [vmem:[%s1 + $0xc8] sm:$0xff]
  %v786 = vld [vmem:[%s1 + $0xd0] sm:$0xff]
  %v787 = vld [vmem:[%s1 + $0xd8] sm:$0xf]
  %v788 = vld [vmem:[%s1 + $0xdc] sm:$0xff]
  %v789 = vld [vmem:[%s1 + $0xe4] sm:$0xff]
  %v790 = vld [vmem:[%s1 + $0xec] sm:$0xf]
  %v791 = vld [vmem:[%s1 + $0xf0] sm:$0x11]
  %v792 = vld [vmem:[%s1 + $0xf8] sm:$0x11]
  %v793 = vld [vmem:[%s1 + $0x100] sm:$0x1]
  %v833 = vunpack.c.l.b16 %v755
  %v834 = vunpack.c.h.b16 %v755
  %v835 = vunpack.c.l.b16 %v756
  %v836 = vunpack.c.h.b16 %v756
  %v837 = vunpack.c.l.b16 %v757
  %v838 = vunpack.c.l.b16 %v758
  %v839 = vunpack.c.h.b16 %v758
  %v840 = vunpack.c.l.b16 %v759
  %v841 = vunpack.c.h.b16 %v759
  %v842 = vunpack.c.l.b16 %v760
  %v843 = vunpack.c.l.b16 %v761
  %v844 = vunpack.c.h.b16 %v761
  %v845 = vunpack.c.l.b16 %v762
  %v846 = vunpack.c.h.b16 %v762
  %v847 = vunpack.c.l.b16 %v763
  %v848 = vunpack.c.l.b16 %v764
  %v849 = vunpack.c.h.b16 %v764
  %v850 = vunpack.c.l.b16 %v765
  %v851 = vunpack.c.h.b16 %v765
  %v852 = vunpack.c.l.b16 %v766
  %v853 = vunpack.c.l.b16 %v767
  %v854 = vunpack.c.h.b16 %v767
  %v855 = vunpack.c.l.b16 %v768
  %v856 = vunpack.c.h.b16 %v768
  %v857 = vunpack.c.l.b16 %v769
  %v858 = vunpack.c.l.b16 %v770
  %v859 = vunpack.c.h.b16 %v770
  %v860 = vunpack.c.l.b16 %v771
  %v861 = vunpack.c.h.b16 %v771
  %v862 = vunpack.c.l.b16 %v772
  %v863 = vunpack.c.l.b16 %v773
  %v864 = vunpack.c.h.b16 %v773
  %v865 = vunpack.c.l.b16 %v774
  %v866 = vunpack.c.h.b16 %v774
  %v867 = vunpack.c.l.b16 %v775
  %v868 = vunpack.c.l.b16 %v776
  %v869 = vunpack.c.h.b16 %v776
  %v870 = vunpack.c.l.b16 %v777
  %v871 = vunpack.c.h.b16 %v777
  %v872 = vunpack.c.l.b16 %v778
  %v873 = vunpack.c.l.b16 %v779
  %v874 = vunpack.c.h.b16 %v779
  %v875 = vunpack.c.l.b16 %v780
  %v876 = vunpack.c.h.b16 %v780
  %v877 = vunpack.c.l.b16 %v781
  %v878 = vunpack.c.l.b16 %v782
  %v879 = vunpack.c.h.b16 %v782
  %v880 = vunpack.c.l.b16 %v783
  %v881 = vunpack.c.h.b16 %v783
  %v882 = vunpack.c.l.b16 %v784
  %v883 = vunpack.c.l.b16 %v785
  %v884 = vunpack.c.h.b16 %v785
  %v885 = vunpack.c.l.b16 %v786
  %v886 = vunpack.c.h.b16 %v786
  %v887 = vunpack.c.l.b16 %v787
  %v888 = vunpack.c.l.b16 %v788
  %v889 = vunpack.c.h.b16 %v788
  %v890 = vunpack.c.l.b16 %v789
  %v891 = vunpack.c.h.b16 %v789
  %v892 = vunpack.c.l.b16 %v790
  %v893 = vunpack.c.l.b16 %v791
  %v894 = vunpack.c.h.b16 %v791
  %v895 = vunpack.c.l.b16 %v792
  %v896 = vunpack.c.h.b16 %v792
  %v897 = vunpack.c.l.b16 %v793
  %v898 = vpack.c.b16 %v838, %v833
  %v899 = vpack.c.b16 %v839, %v834
  %v900 = vpack.c.b16 %v840, %v835
  %v901 = vpack.c.b16 %v841, %v836
  %v902 = vpack.c.b16 %v842, %v837
  %v903 = vpack.c.b16 %v848, %v843
  %v904 = vpack.c.b16 %v849, %v844
  %v905 = vpack.c.b16 %v850, %v845
  %v906 = vpack.c.b16 %v851, %v846
  %v907 = vpack.c.b16 %v852, %v847
  %v908 = vpack.c.b16 %v858, %v853
  %v909 = vpack.c.b16 %v859, %v854
  %v910 = vpack.c.b16 %v860, %v855
  %v911 = vpack.c.b16 %v861, %v856
  %v912 = vpack.c.b16 %v862, %v857
  %v913 = vpack.c.b16 %v868, %v863
  %v914 = vpack.c.b16 %v869, %v864
  %v915 = vpack.c.b16 %v870, %v865
  %v916 = vpack.c.b16 %v871, %v866
  %v917 = vpack.c.b16 %v872, %v867
  %v918 = vpack.c.b16 %v878, %v873
  %v919 = vpack.c.b16 %v879, %v874
  %v920 = vpack.c.b16 %v880, %v875
  %v921 = vpack.c.b16 %v881, %v876
  %v922 = vpack.c.b16 %v882, %v877
  %v923 = vpack.c.b16 %v888, %v883
  %v924 = vpack.c.b16 %v889, %v884
  %v925 = vpack.c.b16 %v890, %v885
  %v926 = vpack.c.b16 %v891, %v886
  %v927 = vpack.c.b16 %v892, %v887
  %v928 = vpack.c.b16 %v893, %v893
  %v929 = vpack.c.b16 %v894, %v894
  %v930 = vpack.c.b16 %v895, %v895
  %v931 = vpack.c.b16 %v896, %v896
  %v932 = vpack.c.b16 %v897, %v897
  %v962 = vsel %vm518, %v902, 0
  %v965 = vsel %vm518, %v907, 0
  %v968 = vsel %vm518, %v912, 0
  %v971 = vsel %vm518, %v917, 0
  %v974 = vsel %vm518, %v922, 0
  %v977 = vsel %vm518, %v927, 0
  %v980 = vsel %vm518, %v932, 0
  %982 = vmatpush.bf16.msra.mxu0 %v453
  %983 = vmatpush.bf16.msra.mxu0 %v452
  %984 = vmatpush.bf16.msra.mxu0 %v451
  %985 = vmatpush.bf16.msra.mxu0 %v450
  %986 = vmatpush.bf16.msra.mxu0 %v449
  %987 = vmatpush.bf16.msra.mxu0 %v448
  %988 = vmatpush.bf16.msra.mxu0 %v447
  %989 = vmatpush.bf16.msra.mxu0 %v446
  %990 = vmatmul.bf16.gmra.mxu0 %v898
  %v991 = vpop.f32.mrf.mxu0
  %v992 = vadd.f32 0.0, %v991
  %v993 = vpop.f32.mrf.mxu0
  %v994 = vadd.f32 0.0, %v993
  %995 = vmatmul.bf16.gmra.mxu0 %v903
  %v996 = vpop.f32.mrf.mxu0
  %v997 = vadd.f32 0.0, %v996
  %v998 = vpop.f32.mrf.mxu0
  %v999 = vadd.f32 0.0, %v998
  %1000 = vmatmul.bf16.gmra.mxu0 %v908
  %v1001 = vpop.f32.mrf.mxu0
  %v1002 = vadd.f32 0.0, %v1001
  %v1003 = vpop.f32.mrf.mxu0
  %v1004 = vadd.f32 0.0, %v1003
  %1005 = vmatmul.bf16.gmra.mxu0 %v913
  %v1006 = vpop.f32.mrf.mxu0
  %v1007 = vadd.f32 0.0, %v1006
  %v1008 = vpop.f32.mrf.mxu0
  %v1009 = vadd.f32 0.0, %v1008
  %1010 = vmatmul.bf16.gmra.mxu0 %v918
  %v1011 = vpop.f32.mrf.mxu0
  %v1012 = vadd.f32 0.0, %v1011
  %v1013 = vpop.f32.mrf.mxu0
  %v1014 = vadd.f32 0.0, %v1013
  %1015 = vmatmul.bf16.gmra.mxu0 %v923
  %v1016 = vpop.f32.mrf.mxu0
  %v1017 = vadd.f32 0.0, %v1016
  %v1018 = vpop.f32.mrf.mxu0
  %v1019 = vadd.f32 0.0, %v1018
  %1020 = vmatmul.bf16.gmra.mxu0 %v928
  %v1021 = vpop.f32.mrf.mxu0
  %v1022 = vadd.f32 0.0, %v1021
  %v1023 = vpop.f32.mrf.mxu0
  %1024 = vdwg.mxu0
  %1025 = vmatpush.bf16.msra.mxu0 %v461
  %1026 = vmatpush.bf16.msra.mxu0 %v460
  %1027 = vmatpush.bf16.msra.mxu0 %v459
  %1028 = vmatpush.bf16.msra.mxu0 %v458
  %1029 = vmatpush.bf16.msra.mxu0 %v457
  %1030 = vmatpush.bf16.msra.mxu0 %v456
  %1031 = vmatpush.bf16.msra.mxu0 %v455
  %1032 = vmatpush.bf16.msra.mxu0 %v454
  %1033 = vmatmul.bf16.gmra.mxu0 %v899
  %v1034 = vpop.f32.mrf.mxu0
  %v1035 = vadd.f32 %v992, %v1034
  %v1036 = vpop.f32.mrf.mxu0
  %v1037 = vadd.f32 %v994, %v1036
  %1038 = vmatmul.bf16.gmra.mxu0 %v904
  %v1039 = vpop.f32.mrf.mxu0
  %v1040 = vadd.f32 %v997, %v1039
  %v1041 = vpop.f32.mrf.mxu0
  %v1042 = vadd.f32 %v999, %v1041
  %1043 = vmatmul.bf16.gmra.mxu0 %v909
  %v1044 = vpop.f32.mrf.mxu0
  %v1045 = vadd.f32 %v1002, %v1044
  %v1046 = vpop.f32.mrf.mxu0
  %v1047 = vadd.f32 %v1004, %v1046
  %1048 = vmatmul.bf16.gmra.mxu0 %v914
  %v1049 = vpop.f32.mrf.mxu0
  %v1050 = vadd.f32 %v1007, %v1049
  %v1051 = vpop.f32.mrf.mxu0
  %v1052 = vadd.f32 %v1009, %v1051
  %1053 = vmatmul.bf16.gmra.mxu0 %v919
  %v1054 = vpop.f32.mrf.mxu0
  %v1055 = vadd.f32 %v1012, %v1054
  %v1056 = vpop.f32.mrf.mxu0
  %v1057 = vadd.f32 %v1014, %v1056
  %1058 = vmatmul.bf16.gmra.mxu0 %v924
  %v1059 = vpop.f32.mrf.mxu0
  %v1060 = vadd.f32 %v1017, %v1059
  %v1061 = vpop.f32.mrf.mxu0
  %v1062 = vadd.f32 %v1019, %v1061
  %1063 = vmatmul.bf16.gmra.mxu0 %v929
  %v1064 = vpop.f32.mrf.mxu0
  %v1065 = vadd.f32 %v1022, %v1064
  %v1066 = vpop.f32.mrf.mxu0
  %1067 = vdwg.mxu0
  %1068 = vmatpush.bf16.msra.mxu0 %v469
  %1069 = vmatpush.bf16.msra.mxu0 %v468
  %1070 = vmatpush.bf16.msra.mxu0 %v467
  %1071 = vmatpush.bf16.msra.mxu0 %v466
  %1072 = vmatpush.bf16.msra.mxu0 %v465
  %1073 = vmatpush.bf16.msra.mxu0 %v464
  %1074 = vmatpush.bf16.msra.mxu0 %v463
  %1075 = vmatpush.bf16.msra.mxu0 %v462
  %1076 = vmatmul.bf16.gmra.mxu0 %v900
  %v1077 = vpop.f32.mrf.mxu0
  %v1078 = vadd.f32 %v1035, %v1077
  %v1079 = vpop.f32.mrf.mxu0
  %v1080 = vadd.f32 %v1037, %v1079
  %1081 = vmatmul.bf16.gmra.mxu0 %v905
  %v1082 = vpop.f32.mrf.mxu0
  %v1083 = vadd.f32 %v1040, %v1082
  %v1084 = vpop.f32.mrf.mxu0
  %v1085 = vadd.f32 %v1042, %v1084
  %1086 = vmatmul.bf16.gmra.mxu0 %v910
  %v1087 = vpop.f32.mrf.mxu0
  %v1088 = vadd.f32 %v1045, %v1087
  %v1089 = vpop.f32.mrf.mxu0
  %v1090 = vadd.f32 %v1047, %v1089
  %1091 = vmatmul.bf16.gmra.mxu0 %v915
  %v1092 = vpop.f32.mrf.mxu0
  %v1093 = vadd.f32 %v1050, %v1092
  %v1094 = vpop.f32.mrf.mxu0
  %v1095 = vadd.f32 %v1052, %v1094
  %1096 = vmatmul.bf16.gmra.mxu0 %v920
  %v1097 = vpop.f32.mrf.mxu0
  %v1098 = vadd.f32 %v1055, %v1097
  %v1099 = vpop.f32.mrf.mxu0
  %v1100 = vadd.f32 %v1057, %v1099
  %1101 = vmatmul.bf16.gmra.mxu0 %v925
  %v1102 = vpop.f32.mrf.mxu0
  %v1103 = vadd.f32 %v1060, %v1102
  %v1104 = vpop.f32.mrf.mxu0
  %v1105 = vadd.f32 %v1062, %v1104
  %1106 = vmatmul.bf16.gmra.mxu0 %v930
  %v1107 = vpop.f32.mrf.mxu0
  %v1108 = vadd.f32 %v1065, %v1107
  %v1109 = vpop.f32.mrf.mxu0
  %1110 = vdwg.mxu0
  %1111 = vmatpush.bf16.msra.mxu0 %v477
  %1112 = vmatpush.bf16.msra.mxu0 %v476
  %1113 = vmatpush.bf16.msra.mxu0 %v475
  %1114 = vmatpush.bf16.msra.mxu0 %v474
  %1115 = vmatpush.bf16.msra.mxu0 %v473
  %1116 = vmatpush.bf16.msra.mxu0 %v472
  %1117 = vmatpush.bf16.msra.mxu0 %v471
  %1118 = vmatpush.bf16.msra.mxu0 %v470
  %1119 = vmatmul.bf16.gmra.mxu0 %v901
  %v1120 = vpop.f32.mrf.mxu0
  %v1121 = vadd.f32 %v1078, %v1120
  %v1122 = vpop.f32.mrf.mxu0
  %v1123 = vadd.f32 %v1080, %v1122
  %1124 = vmatmul.bf16.gmra.mxu0 %v906
  %v1125 = vpop.f32.mrf.mxu0
  %v1126 = vadd.f32 %v1083, %v1125
  %v1127 = vpop.f32.mrf.mxu0
  %v1128 = vadd.f32 %v1085, %v1127
  %1129 = vmatmul.bf16.gmra.mxu0 %v911
  %v1130 = vpop.f32.mrf.mxu0
  %v1131 = vadd.f32 %v1088, %v1130
  %v1132 = vpop.f32.mrf.mxu0
  %v1133 = vadd.f32 %v1090, %v1132
  %1134 = vmatmul.bf16.gmra.mxu0 %v916
  %v1135 = vpop.f32.mrf.mxu0
  %v1136 = vadd.f32 %v1093, %v1135
  %v1137 = vpop.f32.mrf.mxu0
  %v1138 = vadd.f32 %v1095, %v1137
  %1139 = vmatmul.bf16.gmra.mxu0 %v921
  %v1140 = vpop.f32.mrf.mxu0
  %v1141 = vadd.f32 %v1098, %v1140
  %v1142 = vpop.f32.mrf.mxu0
  %v1143 = vadd.f32 %v1100, %v1142
  %1144 = vmatmul.bf16.gmra.mxu0 %v926
  %v1145 = vpop.f32.mrf.mxu0
  %v1146 = vadd.f32 %v1103, %v1145
  %v1147 = vpop.f32.mrf.mxu0
  %v1148 = vadd.f32 %v1105, %v1147
  %1149 = vmatmul.bf16.gmra.mxu0 %v931
  %v1150 = vpop.f32.mrf.mxu0
  %v1151 = vadd.f32 %v1108, %v1150
  %v1152 = vpop.f32.mrf.mxu0
  %1153 = vdwg.mxu0
  %1154 = vmatpush.bf16.msra.mxu0 0
  %1155 = vmatpush.bf16.msra.mxu0 0
  %1156 = vmatpush.bf16.msra.mxu0 0
  %1157 = vmatpush.bf16.msra.mxu0 0
  %1158 = vmatpush.bf16.msra.mxu0 %v481
  %1159 = vmatpush.bf16.msra.mxu0 %v480
  %1160 = vmatpush.bf16.msra.mxu0 %v479
  %1161 = vmatpush.bf16.msra.mxu0 %v478
  %1162 = vmatmul.bf16.gmra.mxu0 %v962
  %v1163 = vpop.f32.mrf.mxu0
  %v1164 = vadd.f32 %v1121, %v1163
  %v1165 = vpop.f32.mrf.mxu0
  %v1166 = vadd.f32 %v1123, %v1165
  %1167 = vmatmul.bf16.gmra.mxu0 %v965
  %v1168 = vpop.f32.mrf.mxu0
  %v1169 = vadd.f32 %v1126, %v1168
  %v1170 = vpop.f32.mrf.mxu0
  %v1171 = vadd.f32 %v1128, %v1170
  %1172 = vmatmul.bf16.gmra.mxu0 %v968
  %v1173 = vpop.f32.mrf.mxu0
  %v1174 = vadd.f32 %v1131, %v1173
  %v1175 = vpop.f32.mrf.mxu0
  %v1176 = vadd.f32 %v1133, %v1175
  %1177 = vmatmul.bf16.gmra.mxu0 %v971
  %v1178 = vpop.f32.mrf.mxu0
  %v1179 = vadd.f32 %v1136, %v1178
  %v1180 = vpop.f32.mrf.mxu0
  %v1181 = vadd.f32 %v1138, %v1180
  %1182 = vmatmul.bf16.gmra.mxu0 %v974
  %v1183 = vpop.f32.mrf.mxu0
  %v1184 = vadd.f32 %v1141, %v1183
  %v1185 = vpop.f32.mrf.mxu0
  %v1186 = vadd.f32 %v1143, %v1185
  %1187 = vmatmul.bf16.gmra.mxu0 %v977
  %v1188 = vpop.f32.mrf.mxu0
  %v1189 = vadd.f32 %v1146, %v1188
  %v1190 = vpop.f32.mrf.mxu0
  %v1191 = vadd.f32 %v1148, %v1190
  %1192 = vmatmul.bf16.gmra.mxu0 %v980
  %v1193 = vpop.f32.mrf.mxu0
  %v1194 = vadd.f32 %v1151, %v1193
  %v1195 = vpop.f32.mrf.mxu0
  %1196 = vdwg.mxu0
  %v1197 = vmax.f32 %v722, %v1164
  %v1198 = vmax.f32 %v724, %v1166
  %v1199 = vmax.f32 %v727, %v1169
  %v1200 = vmax.f32 %v729, %v1171
  %v1201 = vmax.f32 %v732, %v1174
  %v1202 = vmax.f32 %v734, %v1176
  %v1203 = vmax.f32 %v737, %v1179
  %v1204 = vmax.f32 %v739, %v1181
  %v1205 = vmax.f32 %v742, %v1184
  %v1206 = vmax.f32 %v744, %v1186
  %v1207 = vmax.f32 %v747, %v1189
  %v1208 = vmax.f32 %v749, %v1191
  %v1209 = vmax.f32 %v752, %v1194
  %v1210 = vld [vmem:[%s2] sm:$0xff]
  %v1211 = vld [vmem:[%s2 + $0x8] sm:$0xff]
  %v1212 = vld [vmem:[%s2 + $0x10] sm:$0xf]
  %v1213 = vld [vmem:[%s2 + $0x14] sm:$0xff]
  %v1214 = vld [vmem:[%s2 + $0x1c] sm:$0xff]
  %v1215 = vld [vmem:[%s2 + $0x24] sm:$0xf]
  %v1216 = vld [vmem:[%s2 + $0x28] sm:$0xff]
  %v1217 = vld [vmem:[%s2 + $0x30] sm:$0xff]
  %v1218 = vld [vmem:[%s2 + $0x38] sm:$0xf]
  %v1219 = vld [vmem:[%s2 + $0x3c] sm:$0xff]
  %v1220 = vld [vmem:[%s2 + $0x44] sm:$0xff]
  %v1221 = vld [vmem:[%s2 + $0x4c] sm:$0xf]
  %v1222 = vld [vmem:[%s2 + $0x50] sm:$0xff]
  %v1223 = vld [vmem:[%s2 + $0x58] sm:$0xff]
  %v1224 = vld [vmem:[%s2 + $0x60] sm:$0xf]
  %v1225 = vld [vmem:[%s2 + $0x64] sm:$0xff]
  %v1226 = vld [vmem:[%s2 + $0x6c] sm:$0xff]
  %v1227 = vld [vmem:[%s2 + $0x74] sm:$0xf]
  %v1228 = vld [vmem:[%s2 + $0x78] sm:$0xff]
  %v1229 = vld [vmem:[%s2 + $0x80] sm:$0xff]
  %v1230 = vld [vmem:[%s2 + $0x88] sm:$0xf]
  %v1231 = vld [vmem:[%s2 + $0x8c] sm:$0xff]
  %v1232 = vld [vmem:[%s2 + $0x94] sm:$0xff]
  %v1233 = vld [vmem:[%s2 + $0x9c] sm:$0xf]
  %v1234 = vld [vmem:[%s2 + $0xa0] sm:$0xff]
  %v1235 = vld [vmem:[%s2 + $0xa8] sm:$0xff]
  %v1236 = vld [vmem:[%s2 + $0xb0] sm:$0xf]
  %v1237 = vld [vmem:[%s2 + $0xb4] sm:$0xff]
  %v1238 = vld [vmem:[%s2 + $0xbc] sm:$0xff]
  %v1239 = vld [vmem:[%s2 + $0xc4] sm:$0xf]
  %v1240 = vld [vmem:[%s2 + $0xc8] sm:$0xff]
  %v1241 = vld [vmem:[%s2 + $0xd0] sm:$0xff]
  %v1242 = vld [vmem:[%s2 + $0xd8] sm:$0xf]
  %v1243 = vld [vmem:[%s2 + $0xdc] sm:$0xff]
  %v1244 = vld [vmem:[%s2 + $0xe4] sm:$0xff]
  %v1245 = vld [vmem:[%s2 + $0xec] sm:$0xf]
  %v1246 = vld [vmem:[%s2 + $0xf0] sm:$0x11]
  %v1247 = vld [vmem:[%s2 + $0xf8] sm:$0x11]
  %v1248 = vld [vmem:[%s2 + $0x100] sm:$0x1]
  %v1288 = vunpack.c.l.b16 %v1210
  %v1289 = vunpack.c.h.b16 %v1210
  %v1290 = vunpack.c.l.b16 %v1211
  %v1291 = vunpack.c.h.b16 %v1211
  %v1292 = vunpack.c.l.b16 %v1212
  %v1293 = vunpack.c.l.b16 %v1213
  %v1294 = vunpack.c.h.b16 %v1213
  %v1295 = vunpack.c.l.b16 %v1214
  %v1296 = vunpack.c.h.b16 %v1214
  %v1297 = vunpack.c.l.b16 %v1215
  %v1298 = vunpack.c.l.b16 %v1216
  %v1299 = vunpack.c.h.b16 %v1216
  %v1300 = vunpack.c.l.b16 %v1217
  %v1301 = vunpack.c.h.b16 %v1217
  %v1302 = vunpack.c.l.b16 %v1218
  %v1303 = vunpack.c.l.b16 %v1219
  %v1304 = vunpack.c.h.b16 %v1219
  %v1305 = vunpack.c.l.b16 %v1220
  %v1306 = vunpack.c.h.b16 %v1220
  %v1307 = vunpack.c.l.b16 %v1221
  %v1308 = vunpack.c.l.b16 %v1222
  %v1309 = vunpack.c.h.b16 %v1222
  %v1310 = vunpack.c.l.b16 %v1223
  %v1311 = vunpack.c.h.b16 %v1223
  %v1312 = vunpack.c.l.b16 %v1224
  %v1313 = vunpack.c.l.b16 %v1225
  %v1314 = vunpack.c.h.b16 %v1225
  %v1315 = vunpack.c.l.b16 %v1226
  %v1316 = vunpack.c.h.b16 %v1226
  %v1317 = vunpack.c.l.b16 %v1227
  %v1318 = vunpack.c.l.b16 %v1228
  %v1319 = vunpack.c.h.b16 %v1228
  %v1320 = vunpack.c.l.b16 %v1229
  %v1321 = vunpack.c.h.b16 %v1229
  %v1322 = vunpack.c.l.b16 %v1230
  %v1323 = vunpack.c.l.b16 %v1231
  %v1324 = vunpack.c.h.b16 %v1231
  %v1325 = vunpack.c.l.b16 %v1232
  %v1326 = vunpack.c.h.b16 %v1232
  %v1327 = vunpack.c.l.b16 %v1233
  %v1328 = vunpack.c.l.b16 %v1234
  %v1329 = vunpack.c.h.b16 %v1234
  %v1330 = vunpack.c.l.b16 %v1235
  %v1331 = vunpack.c.h.b16 %v1235
  %v1332 = vunpack.c.l.b16 %v1236
  %v1333 = vunpack.c.l.b16 %v1237
  %v1334 = vunpack.c.h.b16 %v1237
  %v1335 = vunpack.c.l.b16 %v1238
  %v1336 = vunpack.c.h.b16 %v1238
  %v1337 = vunpack.c.l.b16 %v1239
  %v1338 = vunpack.c.l.b16 %v1240
  %v1339 = vunpack.c.h.b16 %v1240
  %v1340 = vunpack.c.l.b16 %v1241
  %v1341 = vunpack.c.h.b16 %v1241
  %v1342 = vunpack.c.l.b16 %v1242
  %v1343 = vunpack.c.l.b16 %v1243
  %v1344 = vunpack.c.h.b16 %v1243
  %v1345 = vunpack.c.l.b16 %v1244
  %v1346 = vunpack.c.h.b16 %v1244
  %v1347 = vunpack.c.l.b16 %v1245
  %v1348 = vunpack.c.l.b16 %v1246
  %v1349 = vunpack.c.h.b16 %v1246
  %v1350 = vunpack.c.l.b16 %v1247
  %v1351 = vunpack.c.h.b16 %v1247
  %v1352 = vunpack.c.l.b16 %v1248
  %v1353 = vpack.c.b16 %v1293, %v1288
  %v1354 = vpack.c.b16 %v1294, %v1289
  %v1355 = vpack.c.b16 %v1295, %v1290
  %v1356 = vpack.c.b16 %v1296, %v1291
  %v1357 = vpack.c.b16 %v1297, %v1292
  %v1358 = vpack.c.b16 %v1303, %v1298
  %v1359 = vpack.c.b16 %v1304, %v1299
  %v1360 = vpack.c.b16 %v1305, %v1300
  %v1361 = vpack.c.b16 %v1306, %v1301
  %v1362 = vpack.c.b16 %v1307, %v1302
  %v1363 = vpack.c.b16 %v1313, %v1308
  %v1364 = vpack.c.b16 %v1314, %v1309
  %v1365 = vpack.c.b16 %v1315, %v1310
  %v1366 = vpack.c.b16 %v1316, %v1311
  %v1367 = vpack.c.b16 %v1317, %v1312
  %v1368 = vpack.c.b16 %v1323, %v1318
  %v1369 = vpack.c.b16 %v1324, %v1319
  %v1370 = vpack.c.b16 %v1325, %v1320
  %v1371 = vpack.c.b16 %v1326, %v1321
  %v1372 = vpack.c.b16 %v1327, %v1322
  %v1373 = vpack.c.b16 %v1333, %v1328
  %v1374 = vpack.c.b16 %v1334, %v1329
  %v1375 = vpack.c.b16 %v1335, %v1330
  %v1376 = vpack.c.b16 %v1336, %v1331
  %v1377 = vpack.c.b16 %v1337, %v1332
  %v1378 = vpack.c.b16 %v1343, %v1338
  %v1379 = vpack.c.b16 %v1344, %v1339
  %v1380 = vpack.c.b16 %v1345, %v1340
  %v1381 = vpack.c.b16 %v1346, %v1341
  %v1382 = vpack.c.b16 %v1347, %v1342
  %v1383 = vpack.c.b16 %v1348, %v1348
  %v1384 = vpack.c.b16 %v1349, %v1349
  %v1385 = vpack.c.b16 %v1350, %v1350
  %v1386 = vpack.c.b16 %v1351, %v1351
  %v1387 = vpack.c.b16 %v1352, %v1352
  %v1417 = vsel %vm518, %v1357, 0
  %v1420 = vsel %vm518, %v1362, 0
  %v1423 = vsel %vm518, %v1367, 0
  %v1426 = vsel %vm518, %v1372, 0
  %v1429 = vsel %vm518, %v1377, 0
  %v1432 = vsel %vm518, %v1382, 0
  %v1435 = vsel %vm518, %v1387, 0
  %1437 = vmatpush.bf16.msra.mxu0 %v453
  %1438 = vmatpush.bf16.msra.mxu0 %v452
  %1439 = vmatpush.bf16.msra.mxu0 %v451
  %1440 = vmatpush.bf16.msra.mxu0 %v450
  %1441 = vmatpush.bf16.msra.mxu0 %v449
  %1442 = vmatpush.bf16.msra.mxu0 %v448
  %1443 = vmatpush.bf16.msra.mxu0 %v447
  %1444 = vmatpush.bf16.msra.mxu0 %v446
  %1445 = vmatmul.bf16.gmra.mxu0 %v1353
  %v1446 = vpop.f32.mrf.mxu0
  %v1447 = vadd.f32 0.0, %v1446
  %v1448 = vpop.f32.mrf.mxu0
  %v1449 = vadd.f32 0.0, %v1448
  %1450 = vmatmul.bf16.gmra.mxu0 %v1358
  %v1451 = vpop.f32.mrf.mxu0
  %v1452 = vadd.f32 0.0, %v1451
  %v1453 = vpop.f32.mrf.mxu0
  %v1454 = vadd.f32 0.0, %v1453
  %1455 = vmatmul.bf16.gmra.mxu0 %v1363
  %v1456 = vpop.f32.mrf.mxu0
  %v1457 = vadd.f32 0.0, %v1456
  %v1458 = vpop.f32.mrf.mxu0
  %v1459 = vadd.f32 0.0, %v1458
  %1460 = vmatmul.bf16.gmra.mxu0 %v1368
  %v1461 = vpop.f32.mrf.mxu0
  %v1462 = vadd.f32 0.0, %v1461
  %v1463 = vpop.f32.mrf.mxu0
  %v1464 = vadd.f32 0.0, %v1463
  %1465 = vmatmul.bf16.gmra.mxu0 %v1373
  %v1466 = vpop.f32.mrf.mxu0
  %v1467 = vadd.f32 0.0, %v1466
  %v1468 = vpop.f32.mrf.mxu0
  %v1469 = vadd.f32 0.0, %v1468
  %1470 = vmatmul.bf16.gmra.mxu0 %v1378
  %v1471 = vpop.f32.mrf.mxu0
  %v1472 = vadd.f32 0.0, %v1471
  %v1473 = vpop.f32.mrf.mxu0
  %v1474 = vadd.f32 0.0, %v1473
  %1475 = vmatmul.bf16.gmra.mxu0 %v1383
  %v1476 = vpop.f32.mrf.mxu0
  %v1477 = vadd.f32 0.0, %v1476
  %v1478 = vpop.f32.mrf.mxu0
  %1479 = vdwg.mxu0
  %1480 = vmatpush.bf16.msra.mxu0 %v461
  %1481 = vmatpush.bf16.msra.mxu0 %v460
  %1482 = vmatpush.bf16.msra.mxu0 %v459
  %1483 = vmatpush.bf16.msra.mxu0 %v458
  %1484 = vmatpush.bf16.msra.mxu0 %v457
  %1485 = vmatpush.bf16.msra.mxu0 %v456
  %1486 = vmatpush.bf16.msra.mxu0 %v455
  %1487 = vmatpush.bf16.msra.mxu0 %v454
  %1488 = vmatmul.bf16.gmra.mxu0 %v1354
  %v1489 = vpop.f32.mrf.mxu0
  %v1490 = vadd.f32 %v1447, %v1489
  %v1491 = vpop.f32.mrf.mxu0
  %v1492 = vadd.f32 %v1449, %v1491
  %1493 = vmatmul.bf16.gmra.mxu0 %v1359
  %v1494 = vpop.f32.mrf.mxu0
  %v1495 = vadd.f32 %v1452, %v1494
  %v1496 = vpop.f32.mrf.mxu0
  %v1497 = vadd.f32 %v1454, %v1496
  %1498 = vmatmul.bf16.gmra.mxu0 %v1364
  %v1499 = vpop.f32.mrf.mxu0
  %v1500 = vadd.f32 %v1457, %v1499
  %v1501 = vpop.f32.mrf.mxu0
  %v1502 = vadd.f32 %v1459, %v1501
  %1503 = vmatmul.bf16.gmra.mxu0 %v1369
  %v1504 = vpop.f32.mrf.mxu0
  %v1505 = vadd.f32 %v1462, %v1504
  %v1506 = vpop.f32.mrf.mxu0
  %v1507 = vadd.f32 %v1464, %v1506
  %1508 = vmatmul.bf16.gmra.mxu0 %v1374
  %v1509 = vpop.f32.mrf.mxu0
  %v1510 = vadd.f32 %v1467, %v1509
  %v1511 = vpop.f32.mrf.mxu0
  %v1512 = vadd.f32 %v1469, %v1511
  %1513 = vmatmul.bf16.gmra.mxu0 %v1379
  %v1514 = vpop.f32.mrf.mxu0
  %v1515 = vadd.f32 %v1472, %v1514
  %v1516 = vpop.f32.mrf.mxu0
  %v1517 = vadd.f32 %v1474, %v1516
  %1518 = vmatmul.bf16.gmra.mxu0 %v1384
  %v1519 = vpop.f32.mrf.mxu0
  %v1520 = vadd.f32 %v1477, %v1519
  %v1521 = vpop.f32.mrf.mxu0
  %1522 = vdwg.mxu0
  %1523 = vmatpush.bf16.msra.mxu0 %v469
  %1524 = vmatpush.bf16.msra.mxu0 %v468
  %1525 = vmatpush.bf16.msra.mxu0 %v467
  %1526 = vmatpush.bf16.msra.mxu0 %v466
  %1527 = vmatpush.bf16.msra.mxu0 %v465
  %1528 = vmatpush.bf16.msra.mxu0 %v464
  %1529 = vmatpush.bf16.msra.mxu0 %v463
  %1530 = vmatpush.bf16.msra.mxu0 %v462
  %1531 = vmatmul.bf16.gmra.mxu0 %v1355
  %v1532 = vpop.f32.mrf.mxu0
  %v1533 = vadd.f32 %v1490, %v1532
  %v1534 = vpop.f32.mrf.mxu0
  %v1535 = vadd.f32 %v1492, %v1534
  %1536 = vmatmul.bf16.gmra.mxu0 %v1360
  %v1537 = vpop.f32.mrf.mxu0
  %v1538 = vadd.f32 %v1495, %v1537
  %v1539 = vpop.f32.mrf.mxu0
  %v1540 = vadd.f32 %v1497, %v1539
  %1541 = vmatmul.bf16.gmra.mxu0 %v1365
  %v1542 = vpop.f32.mrf.mxu0
  %v1543 = vadd.f32 %v1500, %v1542
  %v1544 = vpop.f32.mrf.mxu0
  %v1545 = vadd.f32 %v1502, %v1544
  %1546 = vmatmul.bf16.gmra.mxu0 %v1370
  %v1547 = vpop.f32.mrf.mxu0
  %v1548 = vadd.f32 %v1505, %v1547
  %v1549 = vpop.f32.mrf.mxu0
  %v1550 = vadd.f32 %v1507, %v1549
  %1551 = vmatmul.bf16.gmra.mxu0 %v1375
  %v1552 = vpop.f32.mrf.mxu0
  %v1553 = vadd.f32 %v1510, %v1552
  %v1554 = vpop.f32.mrf.mxu0
  %v1555 = vadd.f32 %v1512, %v1554
  %1556 = vmatmul.bf16.gmra.mxu0 %v1380
  %v1557 = vpop.f32.mrf.mxu0
  %v1558 = vadd.f32 %v1515, %v1557
  %v1559 = vpop.f32.mrf.mxu0
  %v1560 = vadd.f32 %v1517, %v1559
  %1561 = vmatmul.bf16.gmra.mxu0 %v1385
  %v1562 = vpop.f32.mrf.mxu0
  %v1563 = vadd.f32 %v1520, %v1562
  %v1564 = vpop.f32.mrf.mxu0
  %1565 = vdwg.mxu0
  %1566 = vmatpush.bf16.msra.mxu0 %v477
  %1567 = vmatpush.bf16.msra.mxu0 %v476
  %1568 = vmatpush.bf16.msra.mxu0 %v475
  %1569 = vmatpush.bf16.msra.mxu0 %v474
  %1570 = vmatpush.bf16.msra.mxu0 %v473
  %1571 = vmatpush.bf16.msra.mxu0 %v472
  %1572 = vmatpush.bf16.msra.mxu0 %v471
  %1573 = vmatpush.bf16.msra.mxu0 %v470
  %1574 = vmatmul.bf16.gmra.mxu0 %v1356
  %v1575 = vpop.f32.mrf.mxu0
  %v1576 = vadd.f32 %v1533, %v1575
  %v1577 = vpop.f32.mrf.mxu0
  %v1578 = vadd.f32 %v1535, %v1577
  %1579 = vmatmul.bf16.gmra.mxu0 %v1361
  %v1580 = vpop.f32.mrf.mxu0
  %v1581 = vadd.f32 %v1538, %v1580
  %v1582 = vpop.f32.mrf.mxu0
  %v1583 = vadd.f32 %v1540, %v1582
  %1584 = vmatmul.bf16.gmra.mxu0 %v1366
  %v1585 = vpop.f32.mrf.mxu0
  %v1586 = vadd.f32 %v1543, %v1585
  %v1587 = vpop.f32.mrf.mxu0
  %v1588 = vadd.f32 %v1545, %v1587
  %1589 = vmatmul.bf16.gmra.mxu0 %v1371
  %v1590 = vpop.f32.mrf.mxu0
  %v1591 = vadd.f32 %v1548, %v1590
  %v1592 = vpop.f32.mrf.mxu0
  %v1593 = vadd.f32 %v1550, %v1592
  %1594 = vmatmul.bf16.gmra.mxu0 %v1376
  %v1595 = vpop.f32.mrf.mxu0
  %v1596 = vadd.f32 %v1553, %v1595
  %v1597 = vpop.f32.mrf.mxu0
  %v1598 = vadd.f32 %v1555, %v1597
  %1599 = vmatmul.bf16.gmra.mxu0 %v1381
  %v1600 = vpop.f32.mrf.mxu0
  %v1601 = vadd.f32 %v1558, %v1600
  %v1602 = vpop.f32.mrf.mxu0
  %v1603 = vadd.f32 %v1560, %v1602
  %1604 = vmatmul.bf16.gmra.mxu0 %v1386
  %v1605 = vpop.f32.mrf.mxu0
  %v1606 = vadd.f32 %v1563, %v1605
  %v1607 = vpop.f32.mrf.mxu0
  %1608 = vdwg.mxu0
  %1609 = vmatpush.bf16.msra.mxu0 0
  %1610 = vmatpush.bf16.msra.mxu0 0
  %1611 = vmatpush.bf16.msra.mxu0 0
  %1612 = vmatpush.bf16.msra.mxu0 0
  %1613 = vmatpush.bf16.msra.mxu0 %v481
  %1614 = vmatpush.bf16.msra.mxu0 %v480
  %1615 = vmatpush.bf16.msra.mxu0 %v479
  %1616 = vmatpush.bf16.msra.mxu0 %v478
  %1617 = vmatmul.bf16.gmra.mxu0 %v1417
  %v1618 = vpop.f32.mrf.mxu0
  %v1619 = vadd.f32 %v1576, %v1618
  %v1620 = vpop.f32.mrf.mxu0
  %v1621 = vadd.f32 %v1578, %v1620
  %1622 = vmatmul.bf16.gmra.mxu0 %v1420
  %v1623 = vpop.f32.mrf.mxu0
  %v1624 = vadd.f32 %v1581, %v1623
  %v1625 = vpop.f32.mrf.mxu0
  %v1626 = vadd.f32 %v1583, %v1625
  %1627 = vmatmul.bf16.gmra.mxu0 %v1423
  %v1628 = vpop.f32.mrf.mxu0
  %v1629 = vadd.f32 %v1586, %v1628
  %v1630 = vpop.f32.mrf.mxu0
  %v1631 = vadd.f32 %v1588, %v1630
  %1632 = vmatmul.bf16.gmra.mxu0 %v1426
  %v1633 = vpop.f32.mrf.mxu0
  %v1634 = vadd.f32 %v1591, %v1633
  %v1635 = vpop.f32.mrf.mxu0
  %v1636 = vadd.f32 %v1593, %v1635
  %1637 = vmatmul.bf16.gmra.mxu0 %v1429
  %v1638 = vpop.f32.mrf.mxu0
  %v1639 = vadd.f32 %v1596, %v1638
  %v1640 = vpop.f32.mrf.mxu0
  %v1641 = vadd.f32 %v1598, %v1640
  %1642 = vmatmul.bf16.gmra.mxu0 %v1432
  %v1643 = vpop.f32.mrf.mxu0
  %v1644 = vadd.f32 %v1601, %v1643
  %v1645 = vpop.f32.mrf.mxu0
  %v1646 = vadd.f32 %v1603, %v1645
  %1647 = vmatmul.bf16.gmra.mxu0 %v1435
  %v1648 = vpop.f32.mrf.mxu0
  %v1649 = vadd.f32 %v1606, %v1648
  %v1650 = vpop.f32.mrf.mxu0
  %1651 = vdwg.mxu0
  %v1652 = vld [vmem:[%s3] sm:$0xff]
  %v1653 = vld [vmem:[%s3 + $0x8] sm:$0xff]
  %v1654 = vld [vmem:[%s3 + $0x10] sm:$0xf]
  %v1655 = vld [vmem:[%s3 + $0x14] sm:$0xff]
  %v1656 = vld [vmem:[%s3 + $0x1c] sm:$0xff]
  %v1657 = vld [vmem:[%s3 + $0x24] sm:$0xf]
  %v1658 = vld [vmem:[%s3 + $0x28] sm:$0xff]
  %v1659 = vld [vmem:[%s3 + $0x30] sm:$0xff]
  %v1660 = vld [vmem:[%s3 + $0x38] sm:$0xf]
  %v1661 = vld [vmem:[%s3 + $0x3c] sm:$0xff]
  %v1662 = vld [vmem:[%s3 + $0x44] sm:$0xff]
  %v1663 = vld [vmem:[%s3 + $0x4c] sm:$0xf]
  %v1664 = vld [vmem:[%s3 + $0x50] sm:$0xff]
  %v1665 = vld [vmem:[%s3 + $0x58] sm:$0xff]
  %v1666 = vld [vmem:[%s3 + $0x60] sm:$0xf]
  %v1667 = vld [vmem:[%s3 + $0x64] sm:$0xff]
  %v1668 = vld [vmem:[%s3 + $0x6c] sm:$0xff]
  %v1669 = vld [vmem:[%s3 + $0x74] sm:$0xf]
  %v1670 = vld [vmem:[%s3 + $0x78] sm:$0xff]
  %v1671 = vld [vmem:[%s3 + $0x80] sm:$0xff]
  %v1672 = vld [vmem:[%s3 + $0x88] sm:$0xf]
  %v1673 = vld [vmem:[%s3 + $0x8c] sm:$0xff]
  %v1674 = vld [vmem:[%s3 + $0x94] sm:$0xff]
  %v1675 = vld [vmem:[%s3 + $0x9c] sm:$0xf]
  %v1676 = vld [vmem:[%s3 + $0xa0] sm:$0xff]
  %v1677 = vld [vmem:[%s3 + $0xa8] sm:$0xff]
  %v1678 = vld [vmem:[%s3 + $0xb0] sm:$0xf]
  %v1679 = vld [vmem:[%s3 + $0xb4] sm:$0xff]
  %v1680 = vld [vmem:[%s3 + $0xbc] sm:$0xff]
  %v1681 = vld [vmem:[%s3 + $0xc4] sm:$0xf]
  %v1682 = vld [vmem:[%s3 + $0xc8] sm:$0xff]
  %v1683 = vld [vmem:[%s3 + $0xd0] sm:$0xff]
  %v1684 = vld [vmem:[%s3 + $0xd8] sm:$0xf]
  %v1685 = vld [vmem:[%s3 + $0xdc] sm:$0xff]
  %v1686 = vld [vmem:[%s3 + $0xe4] sm:$0xff]
  %v1687 = vld [vmem:[%s3 + $0xec] sm:$0xf]
  %v1688 = vld [vmem:[%s3 + $0xf0] sm:$0x11]
  %v1689 = vld [vmem:[%s3 + $0xf8] sm:$0x11]
  %v1690 = vld [vmem:[%s3 + $0x100] sm:$0x1]
  %v1730 = vunpack.c.l.b16 %v1652
  %v1731 = vunpack.c.h.b16 %v1652
  %v1732 = vunpack.c.l.b16 %v1653
  %v1733 = vunpack.c.h.b16 %v1653
  %v1734 = vunpack.c.l.b16 %v1654
  %v1735 = vunpack.c.l.b16 %v1655
  %v1736 = vunpack.c.h.b16 %v1655
  %v1737 = vunpack.c.l.b16 %v1656
  %v1738 = vunpack.c.h.b16 %v1656
  %v1739 = vunpack.c.l.b16 %v1657
  %v1740 = vunpack.c.l.b16 %v1658
  %v1741 = vunpack.c.h.b16 %v1658
  %v1742 = vunpack.c.l.b16 %v1659
  %v1743 = vunpack.c.h.b16 %v1659
  %v1744 = vunpack.c.l.b16 %v1660
  %v1745 = vunpack.c.l.b16 %v1661
  %v1746 = vunpack.c.h.b16 %v1661
  %v1747 = vunpack.c.l.b16 %v1662
  %v1748 = vunpack.c.h.b16 %v1662
  %v1749 = vunpack.c.l.b16 %v1663
  %v1750 = vunpack.c.l.b16 %v1664
  %v1751 = vunpack.c.h.b16 %v1664
  %v1752 = vunpack.c.l.b16 %v1665
  %v1753 = vunpack.c.h.b16 %v1665
  %v1754 = vunpack.c.l.b16 %v1666
  %v1755 = vunpack.c.l.b16 %v1667
  %v1756 = vunpack.c.h.b16 %v1667
  %v1757 = vunpack.c.l.b16 %v1668
  %v1758 = vunpack.c.h.b16 %v1668
  %v1759 = vunpack.c.l.b16 %v1669
  %v1760 = vunpack.c.l.b16 %v1670
  %v1761 = vunpack.c.h.b16 %v1670
  %v1762 = vunpack.c.l.b16 %v1671
  %v1763 = vunpack.c.h.b16 %v1671
  %v1764 = vunpack.c.l.b16 %v1672
  %v1765 = vunpack.c.l.b16 %v1673
  %v1766 = vunpack.c.h.b16 %v1673
  %v1767 = vunpack.c.l.b16 %v1674
  %v1768 = vunpack.c.h.b16 %v1674
  %v1769 = vunpack.c.l.b16 %v1675
  %v1770 = vunpack.c.l.b16 %v1676
  %v1771 = vunpack.c.h.b16 %v1676
  %v1772 = vunpack.c.l.b16 %v1677
  %v1773 = vunpack.c.h.b16 %v1677
  %v1774 = vunpack.c.l.b16 %v1678
  %v1775 = vunpack.c.l.b16 %v1679
  %v1776 = vunpack.c.h.b16 %v1679
  %v1777 = vunpack.c.l.b16 %v1680
  %v1778 = vunpack.c.h.b16 %v1680
  %v1779 = vunpack.c.l.b16 %v1681
  %v1780 = vunpack.c.l.b16 %v1682
  %v1781 = vunpack.c.h.b16 %v1682
  %v1782 = vunpack.c.l.b16 %v1683
  %v1783 = vunpack.c.h.b16 %v1683
  %v1784 = vunpack.c.l.b16 %v1684
  %v1785 = vunpack.c.l.b16 %v1685
  %v1786 = vunpack.c.h.b16 %v1685
  %v1787 = vunpack.c.l.b16 %v1686
  %v1788 = vunpack.c.h.b16 %v1686
  %v1789 = vunpack.c.l.b16 %v1687
  %v1790 = vunpack.c.l.b16 %v1688
  %v1791 = vunpack.c.h.b16 %v1688
  %v1792 = vunpack.c.l.b16 %v1689
  %v1793 = vunpack.c.h.b16 %v1689
  %v1794 = vunpack.c.l.b16 %v1690
  %v1795 = vpack.c.b16 %v1735, %v1730
  %v1796 = vpack.c.b16 %v1736, %v1731
  %v1797 = vpack.c.b16 %v1737, %v1732
  %v1798 = vpack.c.b16 %v1738, %v1733
  %v1799 = vpack.c.b16 %v1739, %v1734
  %v1800 = vpack.c.b16 %v1745, %v1740
  %v1801 = vpack.c.b16 %v1746, %v1741
  %v1802 = vpack.c.b16 %v1747, %v1742
  %v1803 = vpack.c.b16 %v1748, %v1743
  %v1804 = vpack.c.b16 %v1749, %v1744
  %v1805 = vpack.c.b16 %v1755, %v1750
  %v1806 = vpack.c.b16 %v1756, %v1751
  %v1807 = vpack.c.b16 %v1757, %v1752
  %v1808 = vpack.c.b16 %v1758, %v1753
  %v1809 = vpack.c.b16 %v1759, %v1754
  %v1810 = vpack.c.b16 %v1765, %v1760
  %v1811 = vpack.c.b16 %v1766, %v1761
  %v1812 = vpack.c.b16 %v1767, %v1762
  %v1813 = vpack.c.b16 %v1768, %v1763
  %v1814 = vpack.c.b16 %v1769, %v1764
  %v1815 = vpack.c.b16 %v1775, %v1770
  %v1816 = vpack.c.b16 %v1776, %v1771
  %v1817 = vpack.c.b16 %v1777, %v1772
  %v1818 = vpack.c.b16 %v1778, %v1773
  %v1819 = vpack.c.b16 %v1779, %v1774
  %v1820 = vpack.c.b16 %v1785, %v1780
  %v1821 = vpack.c.b16 %v1786, %v1781
  %v1822 = vpack.c.b16 %v1787, %v1782
  %v1823 = vpack.c.b16 %v1788, %v1783
  %v1824 = vpack.c.b16 %v1789, %v1784
  %v1825 = vpack.c.b16 %v1790, %v1790
  %v1826 = vpack.c.b16 %v1791, %v1791
  %v1827 = vpack.c.b16 %v1792, %v1792
  %v1828 = vpack.c.b16 %v1793, %v1793
  %v1829 = vpack.c.b16 %v1794, %v1794
  %v1859 = vsel %vm518, %v1799, 0
  %v1862 = vsel %vm518, %v1804, 0
  %v1865 = vsel %vm518, %v1809, 0
  %v1868 = vsel %vm518, %v1814, 0
  %v1871 = vsel %vm518, %v1819, 0
  %v1874 = vsel %vm518, %v1824, 0
  %v1877 = vsel %vm518, %v1829, 0
  %1879 = vmatpush.bf16.msra.mxu0 %v453
  %1880 = vmatpush.bf16.msra.mxu0 %v452
  %1881 = vmatpush.bf16.msra.mxu0 %v451
  %1882 = vmatpush.bf16.msra.mxu0 %v450
  %1883 = vmatpush.bf16.msra.mxu0 %v449
  %1884 = vmatpush.bf16.msra.mxu0 %v448
  %1885 = vmatpush.bf16.msra.mxu0 %v447
  %1886 = vmatpush.bf16.msra.mxu0 %v446
  %1887 = vmatmul.bf16.gmra.mxu0 %v1795
  %v1888 = vpop.f32.mrf.mxu0
  %v1889 = vadd.f32 0.0, %v1888
  %v1890 = vpop.f32.mrf.mxu0
  %v1891 = vadd.f32 0.0, %v1890
  %1892 = vmatmul.bf16.gmra.mxu0 %v1800
  %v1893 = vpop.f32.mrf.mxu0
  %v1894 = vadd.f32 0.0, %v1893
  %v1895 = vpop.f32.mrf.mxu0
  %v1896 = vadd.f32 0.0, %v1895
  %1897 = vmatmul.bf16.gmra.mxu0 %v1805
  %v1898 = vpop.f32.mrf.mxu0
  %v1899 = vadd.f32 0.0, %v1898
  %v1900 = vpop.f32.mrf.mxu0
  %v1901 = vadd.f32 0.0, %v1900
  %1902 = vmatmul.bf16.gmra.mxu0 %v1810
  %v1903 = vpop.f32.mrf.mxu0
  %v1904 = vadd.f32 0.0, %v1903
  %v1905 = vpop.f32.mrf.mxu0
  %v1906 = vadd.f32 0.0, %v1905
  %1907 = vmatmul.bf16.gmra.mxu0 %v1815
  %v1908 = vpop.f32.mrf.mxu0
  %v1909 = vadd.f32 0.0, %v1908
  %v1910 = vpop.f32.mrf.mxu0
  %v1911 = vadd.f32 0.0, %v1910
  %1912 = vmatmul.bf16.gmra.mxu0 %v1820
  %v1913 = vpop.f32.mrf.mxu0
  %v1914 = vadd.f32 0.0, %v1913
  %v1915 = vpop.f32.mrf.mxu0
  %v1916 = vadd.f32 0.0, %v1915
  %1917 = vmatmul.bf16.gmra.mxu0 %v1825
  %v1918 = vpop.f32.mrf.mxu0
  %v1919 = vadd.f32 0.0, %v1918
  %v1920 = vpop.f32.mrf.mxu0
  %1921 = vdwg.mxu0
  %1922 = vmatpush.bf16.msra.mxu0 %v461
  %1923 = vmatpush.bf16.msra.mxu0 %v460
  %1924 = vmatpush.bf16.msra.mxu0 %v459
  %1925 = vmatpush.bf16.msra.mxu0 %v458
  %1926 = vmatpush.bf16.msra.mxu0 %v457
  %1927 = vmatpush.bf16.msra.mxu0 %v456
  %1928 = vmatpush.bf16.msra.mxu0 %v455
  %1929 = vmatpush.bf16.msra.mxu0 %v454
  %1930 = vmatmul.bf16.gmra.mxu0 %v1796
  %v1931 = vpop.f32.mrf.mxu0
  %v1932 = vadd.f32 %v1889, %v1931
  %v1933 = vpop.f32.mrf.mxu0
  %v1934 = vadd.f32 %v1891, %v1933
  %1935 = vmatmul.bf16.gmra.mxu0 %v1801
  %v1936 = vpop.f32.mrf.mxu0
  %v1937 = vadd.f32 %v1894, %v1936
  %v1938 = vpop.f32.mrf.mxu0
  %v1939 = vadd.f32 %v1896, %v1938
  %1940 = vmatmul.bf16.gmra.mxu0 %v1806
  %v1941 = vpop.f32.mrf.mxu0
  %v1942 = vadd.f32 %v1899, %v1941
  %v1943 = vpop.f32.mrf.mxu0
  %v1944 = vadd.f32 %v1901, %v1943
  %1945 = vmatmul.bf16.gmra.mxu0 %v1811
  %v1946 = vpop.f32.mrf.mxu0
  %v1947 = vadd.f32 %v1904, %v1946
  %v1948 = vpop.f32.mrf.mxu0
  %v1949 = vadd.f32 %v1906, %v1948
  %1950 = vmatmul.bf16.gmra.mxu0 %v1816
  %v1951 = vpop.f32.mrf.mxu0
  %v1952 = vadd.f32 %v1909, %v1951
  %v1953 = vpop.f32.mrf.mxu0
  %v1954 = vadd.f32 %v1911, %v1953
  %1955 = vmatmul.bf16.gmra.mxu0 %v1821
  %v1956 = vpop.f32.mrf.mxu0
  %v1957 = vadd.f32 %v1914, %v1956
  %v1958 = vpop.f32.mrf.mxu0
  %v1959 = vadd.f32 %v1916, %v1958
  %1960 = vmatmul.bf16.gmra.mxu0 %v1826
  %v1961 = vpop.f32.mrf.mxu0
  %v1962 = vadd.f32 %v1919, %v1961
  %v1963 = vpop.f32.mrf.mxu0
  %1964 = vdwg.mxu0
  %1965 = vmatpush.bf16.msra.mxu0 %v469
  %1966 = vmatpush.bf16.msra.mxu0 %v468
  %1967 = vmatpush.bf16.msra.mxu0 %v467
  %1968 = vmatpush.bf16.msra.mxu0 %v466
  %1969 = vmatpush.bf16.msra.mxu0 %v465
  %1970 = vmatpush.bf16.msra.mxu0 %v464
  %1971 = vmatpush.bf16.msra.mxu0 %v463
  %1972 = vmatpush.bf16.msra.mxu0 %v462
  %1973 = vmatmul.bf16.gmra.mxu0 %v1797
  %v1974 = vpop.f32.mrf.mxu0
  %v1975 = vadd.f32 %v1932, %v1974
  %v1976 = vpop.f32.mrf.mxu0
  %v1977 = vadd.f32 %v1934, %v1976
  %1978 = vmatmul.bf16.gmra.mxu0 %v1802
  %v1979 = vpop.f32.mrf.mxu0
  %v1980 = vadd.f32 %v1937, %v1979
  %v1981 = vpop.f32.mrf.mxu0
  %v1982 = vadd.f32 %v1939, %v1981
  %1983 = vmatmul.bf16.gmra.mxu0 %v1807
  %v1984 = vpop.f32.mrf.mxu0
  %v1985 = vadd.f32 %v1942, %v1984
  %v1986 = vpop.f32.mrf.mxu0
  %v1987 = vadd.f32 %v1944, %v1986
  %1988 = vmatmul.bf16.gmra.mxu0 %v1812
  %v1989 = vpop.f32.mrf.mxu0
  %v1990 = vadd.f32 %v1947, %v1989
  %v1991 = vpop.f32.mrf.mxu0
  %v1992 = vadd.f32 %v1949, %v1991
  %1993 = vmatmul.bf16.gmra.mxu0 %v1817
  %v1994 = vpop.f32.mrf.mxu0
  %v1995 = vadd.f32 %v1952, %v1994
  %v1996 = vpop.f32.mrf.mxu0
  %v1997 = vadd.f32 %v1954, %v1996
  %1998 = vmatmul.bf16.gmra.mxu0 %v1822
  %v1999 = vpop.f32.mrf.mxu0
  %v2000 = vadd.f32 %v1957, %v1999
  %v2001 = vpop.f32.mrf.mxu0
  %v2002 = vadd.f32 %v1959, %v2001
  %2003 = vmatmul.bf16.gmra.mxu0 %v1827
  %v2004 = vpop.f32.mrf.mxu0
  %v2005 = vadd.f32 %v1962, %v2004
  %v2006 = vpop.f32.mrf.mxu0
  %2007 = vdwg.mxu0
  %2008 = vmatpush.bf16.msra.mxu0 %v477
  %2009 = vmatpush.bf16.msra.mxu0 %v476
  %2010 = vmatpush.bf16.msra.mxu0 %v475
  %2011 = vmatpush.bf16.msra.mxu0 %v474
  %2012 = vmatpush.bf16.msra.mxu0 %v473
  %2013 = vmatpush.bf16.msra.mxu0 %v472
  %2014 = vmatpush.bf16.msra.mxu0 %v471
  %2015 = vmatpush.bf16.msra.mxu0 %v470
  %2016 = vmatmul.bf16.gmra.mxu0 %v1798
  %v2017 = vpop.f32.mrf.mxu0
  %v2018 = vadd.f32 %v1975, %v2017
  %v2019 = vpop.f32.mrf.mxu0
  %v2020 = vadd.f32 %v1977, %v2019
  %2021 = vmatmul.bf16.gmra.mxu0 %v1803
  %v2022 = vpop.f32.mrf.mxu0
  %v2023 = vadd.f32 %v1980, %v2022
  %v2024 = vpop.f32.mrf.mxu0
  %v2025 = vadd.f32 %v1982, %v2024
  %2026 = vmatmul.bf16.gmra.mxu0 %v1808
  %v2027 = vpop.f32.mrf.mxu0
  %v2028 = vadd.f32 %v1985, %v2027
  %v2029 = vpop.f32.mrf.mxu0
  %v2030 = vadd.f32 %v1987, %v2029
  %2031 = vmatmul.bf16.gmra.mxu0 %v1813
  %v2032 = vpop.f32.mrf.mxu0
  %v2033 = vadd.f32 %v1990, %v2032
  %v2034 = vpop.f32.mrf.mxu0
  %v2035 = vadd.f32 %v1992, %v2034
  %2036 = vmatmul.bf16.gmra.mxu0 %v1818
  %v2037 = vpop.f32.mrf.mxu0
  %v2038 = vadd.f32 %v1995, %v2037
  %v2039 = vpop.f32.mrf.mxu0
  %v2040 = vadd.f32 %v1997, %v2039
  %2041 = vmatmul.bf16.gmra.mxu0 %v1823
  %v2042 = vpop.f32.mrf.mxu0
  %v2043 = vadd.f32 %v2000, %v2042
  %v2044 = vpop.f32.mrf.mxu0
  %v2045 = vadd.f32 %v2002, %v2044
  %2046 = vmatmul.bf16.gmra.mxu0 %v1828
  %v2047 = vpop.f32.mrf.mxu0
  %v2048 = vadd.f32 %v2005, %v2047
  %v2049 = vpop.f32.mrf.mxu0
  %2050 = vdwg.mxu0
  %2051 = vmatpush.bf16.msra.mxu0 0
  %2052 = vmatpush.bf16.msra.mxu0 0
  %2053 = vmatpush.bf16.msra.mxu0 0
  %2054 = vmatpush.bf16.msra.mxu0 0
  %2055 = vmatpush.bf16.msra.mxu0 %v481
  %2056 = vmatpush.bf16.msra.mxu0 %v480
  %2057 = vmatpush.bf16.msra.mxu0 %v479
  %2058 = vmatpush.bf16.msra.mxu0 %v478
  %2059 = vmatmul.bf16.gmra.mxu0 %v1859
  %v2060 = vpop.f32.mrf.mxu0
  %v2061 = vadd.f32 %v2018, %v2060
  %v2062 = vpop.f32.mrf.mxu0
  %v2063 = vadd.f32 %v2020, %v2062
  %2064 = vmatmul.bf16.gmra.mxu0 %v1862
  %v2065 = vpop.f32.mrf.mxu0
  %v2066 = vadd.f32 %v2023, %v2065
  %v2067 = vpop.f32.mrf.mxu0
  %v2068 = vadd.f32 %v2025, %v2067
  %2069 = vmatmul.bf16.gmra.mxu0 %v1865
  %v2070 = vpop.f32.mrf.mxu0
  %v2071 = vadd.f32 %v2028, %v2070
  %v2072 = vpop.f32.mrf.mxu0
  %v2073 = vadd.f32 %v2030, %v2072
  %2074 = vmatmul.bf16.gmra.mxu0 %v1868
  %v2075 = vpop.f32.mrf.mxu0
  %v2076 = vadd.f32 %v2033, %v2075
  %v2077 = vpop.f32.mrf.mxu0
  %v2078 = vadd.f32 %v2035, %v2077
  %2079 = vmatmul.bf16.gmra.mxu0 %v1871
  %v2080 = vpop.f32.mrf.mxu0
  %v2081 = vadd.f32 %v2038, %v2080
  %v2082 = vpop.f32.mrf.mxu0
  %v2083 = vadd.f32 %v2040, %v2082
  %2084 = vmatmul.bf16.gmra.mxu0 %v1874
  %v2085 = vpop.f32.mrf.mxu0
  %v2086 = vadd.f32 %v2043, %v2085
  %v2087 = vpop.f32.mrf.mxu0
  %v2088 = vadd.f32 %v2045, %v2087
  %2089 = vmatmul.bf16.gmra.mxu0 %v1877
  %v2090 = vpop.f32.mrf.mxu0
  %v2091 = vadd.f32 %v2048, %v2090
  %v2092 = vpop.f32.mrf.mxu0
  %2093 = vdwg.mxu0
  %v2094 = vmax.f32 %v1619, %v2061
  %v2095 = vmax.f32 %v1621, %v2063
  %v2096 = vmax.f32 %v1624, %v2066
  %v2097 = vmax.f32 %v1626, %v2068
  %v2098 = vmax.f32 %v1629, %v2071
  %v2099 = vmax.f32 %v1631, %v2073
  %v2100 = vmax.f32 %v1634, %v2076
  %v2101 = vmax.f32 %v1636, %v2078
  %v2102 = vmax.f32 %v1639, %v2081
  %v2103 = vmax.f32 %v1641, %v2083
  %v2104 = vmax.f32 %v1644, %v2086
  %v2105 = vmax.f32 %v1646, %v2088
  %v2106 = vmax.f32 %v1649, %v2091
  %v2107 = vmax.f32 %v1197, %v2094
  %v2108 = vmax.f32 %v1198, %v2095
  %v2109 = vmax.f32 %v1199, %v2096
  %v2110 = vmax.f32 %v1200, %v2097
  %v2111 = vmax.f32 %v1201, %v2098
  %v2112 = vmax.f32 %v1202, %v2099
  %v2113 = vmax.f32 %v1203, %v2100
  %v2114 = vmax.f32 %v1204, %v2101
  %v2115 = vmax.f32 %v1205, %v2102
  %v2116 = vmax.f32 %v1206, %v2103
  %v2117 = vmax.f32 %v1207, %v2104
  %v2118 = vmax.f32 %v1208, %v2105
  %v2119 = vmax.f32 %v1209, %v2106
  %v2120 = vld [vmem:[%s5] sm:$0x1]
  %v2122 = vperm.slane %v2120, 0
  %v2124 = vadd.f32 %v2107, %v2122
  %v2125 = vadd.f32 %v2108, %v2122
  %v2126 = vadd.f32 %v2109, %v2122
  %v2127 = vadd.f32 %v2110, %v2122
  %v2128 = vadd.f32 %v2111, %v2122
  %v2129 = vadd.f32 %v2112, %v2122
  %v2130 = vadd.f32 %v2113, %v2122
  %v2131 = vadd.f32 %v2114, %v2122
  %v2132 = vadd.f32 %v2115, %v2122
  %v2133 = vadd.f32 %v2116, %v2122
  %v2134 = vadd.f32 %v2117, %v2122
  %v2135 = vadd.f32 %v2118, %v2122
  %v2136 = vadd.f32 %v2119, %v2122
  %v2137 = vpack.c.bf16 %v2124, %v2124
  %v2138 = vpack.c.bf16 %v2125, %v2125
  %v2139 = vpack.c.bf16 %v2126, %v2126
  %v2140 = vpack.c.bf16 %v2127, %v2127
  %v2141 = vpack.c.bf16 %v2128, %v2128
  %v2142 = vpack.c.bf16 %v2129, %v2129
  %v2143 = vpack.c.bf16 %v2130, %v2130
  %v2144 = vpack.c.bf16 %v2131, %v2131
  %v2145 = vpack.c.bf16 %v2132, %v2132
  %v2146 = vpack.c.bf16 %v2133, %v2133
  %v2147 = vpack.c.bf16 %v2134, %v2134
  %v2148 = vpack.c.bf16 %v2135, %v2135
  %v2149 = vpack.c.bf16 %v2136, %v2136
  %2150 = vst [vmem:[%s6] sm:$0xf] %v2137
  %2151 = vst [vmem:[%s6 + $0x4] sm:$0xf] %v2138
  %2152 = vst [vmem:[%s6 + $0x8] sm:$0xf] %v2139
  %2153 = vst [vmem:[%s6 + $0xc] sm:$0xf] %v2140
  %2154 = vst [vmem:[%s6 + $0x10] sm:$0xf] %v2141
  %2155 = vst [vmem:[%s6 + $0x14] sm:$0xf] %v2142
  %2156 = vst [vmem:[%s6 + $0x18] sm:$0xf] %v2143
  %2157 = vst [vmem:[%s6 + $0x1c] sm:$0xf] %v2144
  %2158 = vst [vmem:[%s6 + $0x20] sm:$0xf] %v2145
  %2159 = vst [vmem:[%s6 + $0x24] sm:$0xf] %v2146
  %2160 = vst [vmem:[%s6 + $0x28] sm:$0xf] %v2147
  %2161 = vst [vmem:[%s6 + $0x2c] sm:$0xf] %v2148
  %2162 = vst [vmem:[%s6 + $0x30] sm:$0x1] %v2149
  // Predicated region
  $region26: #{mnist_forward.4} parent=0 // pred_check
    _
  $region27: #{mnist_forward.4} parent=0 // pred_check_branch
    %2164 = sbr.rel (0) target = $region29
  $region28: #{mnist_forward.4} parent=0 // pred_region
    _
  $region29: #{mnist_forward.4} parent=0 // pred_fallthru
    _
  // Predicated region
  $region30: #{mnist_forward.4} parent=0 // pred_check
    _
  $region31: #{mnist_forward.4} parent=0 // pred_check_branch
    %2166 = sbr.rel (0) target = $region33
  $region32: #{mnist_forward.4} parent=0 // pred_region
    _
  $region33: #{mnist_forward.4} parent=0 // pred_fallthru
    _

// kernel: mnist_forward.5
$region0: #{mnist_forward.5}
  #allocation0 [shape = 'u32[]', space=smem, size = 0x4, offset = 0x4, fixed_abs, tag = 'smem constant byte address 0x4 - core index']
  #allocation1 [shape = 'u32[72,128]{1,0:T(1,128)}', space=vmem, size = 0x9000, scoped, tag = 'internal scratch']
  %s0 = inlined_call_operand.vmem [shape: bf16[2,6272], index: 0, kind: input, shape index: {}]
  %s1 = inlined_call_operand.vmem [shape: bf16[6272,128], index: 1, kind: input, shape index: {}]
  %s2 = inlined_call_operand.vmem [shape: f32[1,128], index: 2, kind: input, shape index: {}]
  %s3 = inlined_call_operand.vmem [shape: bf16[128,10], index: 3, kind: input, shape index: {}]
  %s4 = inlined_call_operand.vmem [shape: f32[1,10], index: 4, kind: input, shape index: {}]
  %s5 = inlined_call_operand.hbm [shape: f32[2,10], index: 5, kind: output, shape index: {}]
  %s6 = sld [smem:[#allocation0]]
  $region30: #{mnist_forward.5} parent=0
    _
  %s8 = ssub.s32 1, %s6
  %s9 = scalar_select 0, %s8, %s6
  $region1: #{mnist_forward.5} parent=0
    #allocation2 [shape = 'u8[1024]{0}', space=vmem, size = 0x400, scoped, tag = 'output window, operand 0, single buffered']
    #allocation3 [shape = 's32[1]{0}', space=sflag, size = 0x4, scoped, tag = 'scoped memory for mnist_forward.5']
    %10 = vsyncpa [#allocation3], 0
    // Predicated region
    $region2: #{mnist_forward.5} parent=1 // pred_check
      _
    $region3: #{mnist_forward.5} parent=1 // pred_check_branch
      %12 = sbr.rel (0) target = $region5
    $region4: #{mnist_forward.5} parent=1 // pred_region
      _
    $region5: #{mnist_forward.5} parent=1 // pred_fallthru
      _
    // Predicated region
    $region6: #{mnist_forward.5} parent=1 // pred_check
      _
    $region7: #{mnist_forward.5} parent=1 // pred_check_branch
      %14 = sbr.rel (0) target = $region9
    $region8: #{mnist_forward.5} parent=1 // pred_region
      _
    $region9: #{mnist_forward.5} parent=1 // pred_fallthru
      _
    // Predicated region
    $region10: #{mnist_forward.5} parent=1 // pred_check
      _
    $region11: #{mnist_forward.5} parent=1 // pred_check_branch
      %16 = sbr.rel (0) target = $region13
    $region12: #{mnist_forward.5} parent=1 // pred_region
      _
    $region13: #{mnist_forward.5} parent=1 // pred_fallthru
      _
    // Predicated region
    $region14: #{mnist_forward.5} parent=1 // pred_check
      _
    $region15: #{mnist_forward.5} parent=1 // pred_check_branch
      %18 = sbr.rel (0) target = $region17
    $region16: #{mnist_forward.5} parent=1 // pred_region
      _
    $region17: #{mnist_forward.5} parent=1 // pred_fallthru
      _
    // Predicated region
    $region18: #{mnist_forward.5} parent=1 // pred_check
      _
    $region19: #{mnist_forward.5} parent=1 // pred_check_branch
      %20 = sbr.rel (0) target = $region21
    $region20: #{mnist_forward.5} parent=1 // pred_region
      _
    $region21: #{mnist_forward.5} parent=1 // pred_fallthru
      _
    %v21 = vld [vmem:[%s0] sm:$0xff]
    %v22 = vld [vmem:[%s0 + $0x8] sm:$0xff]
    %v23 = vld [vmem:[%s0 + $0x10] sm:$0xff]
    %v24 = vld [vmem:[%s0 + $0x18] sm:$0xff]
    %v25 = vld [vmem:[%s0 + $0x20] sm:$0xff]
    %v26 = vld [vmem:[%s0 + $0x28] sm:$0xff]
    %v27 = vld [vmem:[%s0 + $0x30] sm:$0x1]
    %v28 = vld [vmem:[%s1] sm:$0xf]
    %v29 = vld [vmem:[%s1 + $0x4] sm:$0xf]
    %v30 = vld [vmem:[%s1 + $0x8] sm:$0xf]
    %v31 = vld [vmem:[%s1 + $0xc] sm:$0xf]
    %v32 = vld [vmem:[%s1 + $0x10] sm:$0xf]
    %v33 = vld [vmem:[%s1 + $0x14] sm:$0xf]
    %v34 = vld [vmem:[%s1 + $0x18] sm:$0xf]
    %v35 = vld [vmem:[%s1 + $0x1c] sm:$0xf]
    %v36 = vld [vmem:[%s1 + $0x20] sm:$0xf]
    %v37 = vld [vmem:[%s1 + $0x24] sm:$0xf]
    %v38 = vld [vmem:[%s1 + $0x28] sm:$0xf]
    %v39 = vld [vmem:[%s1 + $0x2c] sm:$0xf]
    %v40 = vld [vmem:[%s1 + $0x30] sm:$0xf]
    %v41 = vld [vmem:[%s1 + $0x34] sm:$0xf]
    %v42 = vld [vmem:[%s1 + $0x38] sm:$0xf]
    %v43 = vld [vmem:[%s1 + $0x3c] sm:$0xf]
    %v44 = vld [vmem:[%s1 + $0x40] sm:$0xf]
    %v45 = vld [vmem:[%s1 + $0x44] sm:$0xf]
    %v46 = vld [vmem:[%s1 + $0x48] sm:$0xf]
    %v47 = vld [vmem:[%s1 + $0x4c] sm:$0xf]
    %v48 = vld [vmem:[%s1 + $0x50] sm:$0xf]
    %v49 = vld [vmem:[%s1 + $0x54] sm:$0xf]
    %v50 = vld [vmem:[%s1 + $0x58] sm:$0xf]
    %v51 = vld [vmem:[%s1 + $0x5c] sm:$0xf]
    %v52 = vld [vmem:[%s1 + $0x60] sm:$0xf]
    %v53 = vld [vmem:[%s1 + $0x64] sm:$0xf]
    %v54 = vld [vmem:[%s1 + $0x68] sm:$0xf]
    %v55 = vld [vmem:[%s1 + $0x6c] sm:$0xf]
    %v56 = vld [vmem:[%s1 + $0x70] sm:$0xf]
    %v57 = vld [vmem:[%s1 + $0x74] sm:$0xf]
    %v58 = vld [vmem:[%s1 + $0x78] sm:$0xf]
    %v59 = vld [vmem:[%s1 + $0x7c] sm:$0xf]
    %v60 = vld [vmem:[%s1 + $0x80] sm:$0xf]
    %v61 = vld [vmem:[%s1 + $0x84] sm:$0xf]
    %v62 = vld [vmem:[%s1 + $0x88] sm:$0xf]
    %v63 = vld [vmem:[%s1 + $0x8c] sm:$0xf]
    %v64 = vld [vmem:[%s1 + $0x90] sm:$0xf]
    %v65 = vld [vmem:[%s1 + $0x94] sm:$0xf]
    %v66 = vld [vmem:[%s1 + $0x98] sm:$0xf]
    %v67 = vld [vmem:[%s1 + $0x9c] sm:$0xf]
    %v68 = vld [vmem:[%s1 + $0xa0] sm:$0xf]
    %v69 = vld [vmem:[%s1 + $0xa4] sm:$0xf]
    %v70 = vld [vmem:[%s1 + $0xa8] sm:$0xf]
    %v71 = vld [vmem:[%s1 + $0xac] sm:$0xf]
    %v72 = vld [vmem:[%s1 + $0xb0] sm:$0xf]
    %v73 = vld [vmem:[%s1 + $0xb4] sm:$0xf]
    %v74 = vld [vmem:[%s1 + $0xb8] sm:$0xf]
    %v75 = vld [vmem:[%s1 + $0xbc] sm:$0xf]
    %v76 = vld [vmem:[%s1 + $0xc0] sm:$0xf]
    %v77 = vld [vmem:[%s1 + $0xc4] sm:$0xf]
    %v78 = vld [vmem:[%s1 + $0xc8] sm:$0xf]
    %v79 = vld [vmem:[%s1 + $0xcc] sm:$0xf]
    %v80 = vld [vmem:[%s1 + $0xd0] sm:$0xf]
    %v81 = vld [vmem:[%s1 + $0xd4] sm:$0xf]
    %v82 = vld [vmem:[%s1 + $0xd8] sm:$0xf]
    %v83 = vld [vmem:[%s1 + $0xdc] sm:$0xf]
    %v84 = vld [vmem:[%s1 + $0xe0] sm:$0xf]
    %v85 = vld [vmem:[%s1 + $0xe4] sm:$0xf]
    %v86 = vld [vmem:[%s1 + $0xe8] sm:$0xf]
    %v87 = vld [vmem:[%s1 + $0xec] sm:$0xf]
    %v88 = vld [vmem:[%s1 + $0xf0] sm:$0xf]
    %v89 = vld [vmem:[%s1 + $0xf4] sm:$0xf]
    %v90 = vld [vmem:[%s1 + $0xf8] sm:$0xf]
    %v91 = vld [vmem:[%s1 + $0xfc] sm:$0xf]
    %v92 = vld [vmem:[%s1 + $0x100] sm:$0xf]
    %v93 = vld [vmem:[%s1 + $0x104] sm:$0xf]
    %v94 = vld [vmem:[%s1 + $0x108] sm:$0xf]
    %v95 = vld [vmem:[%s1 + $0x10c] sm:$0xf]
    %v96 = vld [vmem:[%s1 + $0x110] sm:$0xf]
    %v97 = vld [vmem:[%s1 + $0x114] sm:$0xf]
    %v98 = vld [vmem:[%s1 + $0x118] sm:$0xf]
    %v99 = vld [vmem:[%s1 + $0x11c] sm:$0xf]
    %v100 = vld [vmem:[%s1 + $0x120] sm:$0xf]
    %v101 = vld [vmem:[%s1 + $0x124] sm:$0xf]
    %v102 = vld [vmem:[%s1 + $0x128] sm:$0xf]
    %v103 = vld [vmem:[%s1 + $0x12c] sm:$0xf]
    %v104 = vld [vmem:[%s1 + $0x130] sm:$0xf]
    %v105 = vld [vmem:[%s1 + $0x134] sm:$0xf]
    %v106 = vld [vmem:[%s1 + $0x138] sm:$0xf]
    %v107 = vld [vmem:[%s1 + $0x13c] sm:$0xf]
    %v108 = vld [vmem:[%s1 + $0x140] sm:$0xf]
    %v109 = vld [vmem:[%s1 + $0x144] sm:$0xf]
    %v110 = vld [vmem:[%s1 + $0x148] sm:$0xf]
    %v111 = vld [vmem:[%s1 + $0x14c] sm:$0xf]
    %v112 = vld [vmem:[%s1 + $0x150] sm:$0xf]
    %v113 = vld [vmem:[%s1 + $0x154] sm:$0xf]
    %v114 = vld [vmem:[%s1 + $0x158] sm:$0xf]
    %v115 = vld [vmem:[%s1 + $0x15c] sm:$0xf]
    %v116 = vld [vmem:[%s1 + $0x160] sm:$0xf]
    %v117 = vld [vmem:[%s1 + $0x164] sm:$0xf]
    %v118 = vld [vmem:[%s1 + $0x168] sm:$0xf]
    %v119 = vld [vmem:[%s1 + $0x16c] sm:$0xf]
    %v120 = vld [vmem:[%s1 + $0x170] sm:$0xf]
    %v121 = vld [vmem:[%s1 + $0x174] sm:$0xf]
    %v122 = vld [vmem:[%s1 + $0x178] sm:$0xf]
    %v123 = vld [vmem:[%s1 + $0x17c] sm:$0xf]
    %v124 = vld [vmem:[%s1 + $0x180] sm:$0xf]
    %v125 = vld [vmem:[%s1 + $0x184] sm:$0xf]
    %v126 = vld [vmem:[%s1 + $0x188] sm:$0xf]
    %v127 = vld [vmem:[%s1 + $0x18c] sm:$0xf]
    %v128 = vld [vmem:[%s1 + $0x190] sm:$0xf]
    %v129 = vld [vmem:[%s1 + $0x194] sm:$0xf]
    %v130 = vld [vmem:[%s1 + $0x198] sm:$0xf]
    %v131 = vld [vmem:[%s1 + $0x19c] sm:$0xf]
    %v132 = vld [vmem:[%s1 + $0x1a0] sm:$0xf]
    %v133 = vld [vmem:[%s1 + $0x1a4] sm:$0xf]
    %v134 = vld [vmem:[%s1 + $0x1a8] sm:$0xf]
    %v135 = vld [vmem:[%s1 + $0x1ac] sm:$0xf]
    %v136 = vld [vmem:[%s1 + $0x1b0] sm:$0xf]
    %v137 = vld [vmem:[%s1 + $0x1b4] sm:$0xf]
    %v138 = vld [vmem:[%s1 + $0x1b8] sm:$0xf]
    %v139 = vld [vmem:[%s1 + $0x1bc] sm:$0xf]
    %v140 = vld [vmem:[%s1 + $0x1c0] sm:$0xf]
    %v141 = vld [vmem:[%s1 + $0x1c4] sm:$0xf]
    %v142 = vld [vmem:[%s1 + $0x1c8] sm:$0xf]
    %v143 = vld [vmem:[%s1 + $0x1cc] sm:$0xf]
    %v144 = vld [vmem:[%s1 + $0x1d0] sm:$0xf]
    %v145 = vld [vmem:[%s1 + $0x1d4] sm:$0xf]
    %v146 = vld [vmem:[%s1 + $0x1d8] sm:$0xf]
    %v147 = vld [vmem:[%s1 + $0x1dc] sm:$0xf]
    %v148 = vld [vmem:[%s1 + $0x1e0] sm:$0xf]
    %v149 = vld [vmem:[%s1 + $0x1e4] sm:$0xf]
    %v150 = vld [vmem:[%s1 + $0x1e8] sm:$0xf]
    %v151 = vld [vmem:[%s1 + $0x1ec] sm:$0xf]
    %v152 = vld [vmem:[%s1 + $0x1f0] sm:$0xf]
    %v153 = vld [vmem:[%s1 + $0x1f4] sm:$0xf]
    %v154 = vld [vmem:[%s1 + $0x1f8] sm:$0xf]
    %v155 = vld [vmem:[%s1 + $0x1fc] sm:$0xf]
    %v156 = vld [vmem:[%s1 + $0x200] sm:$0xf]
    %v157 = vld [vmem:[%s1 + $0x204] sm:$0xf]
    %v158 = vld [vmem:[%s1 + $0x208] sm:$0xf]
    %v159 = vld [vmem:[%s1 + $0x20c] sm:$0xf]
    %v160 = vld [vmem:[%s1 + $0x210] sm:$0xf]
    %v161 = vld [vmem:[%s1 + $0x214] sm:$0xf]
    %v162 = vld [vmem:[%s1 + $0x218] sm:$0xf]
    %v163 = vld [vmem:[%s1 + $0x21c] sm:$0xf]
    %v164 = vld [vmem:[%s1 + $0x220] sm:$0xf]
    %v165 = vld [vmem:[%s1 + $0x224] sm:$0xf]
    %v166 = vld [vmem:[%s1 + $0x228] sm:$0xf]
    %v167 = vld [vmem:[%s1 + $0x22c] sm:$0xf]
    %v168 = vld [vmem:[%s1 + $0x230] sm:$0xf]
    %v169 = vld [vmem:[%s1 + $0x234] sm:$0xf]
    %v170 = vld [vmem:[%s1 + $0x238] sm:$0xf]
    %v171 = vld [vmem:[%s1 + $0x23c] sm:$0xf]
    %v172 = vld [vmem:[%s1 + $0x240] sm:$0xf]
    %v173 = vld [vmem:[%s1 + $0x244] sm:$0xf]
    %v174 = vld [vmem:[%s1 + $0x248] sm:$0xf]
    %v175 = vld [vmem:[%s1 + $0x24c] sm:$0xf]
    %v176 = vld [vmem:[%s1 + $0x250] sm:$0xf]
    %v177 = vld [vmem:[%s1 + $0x254] sm:$0xf]
    %v178 = vld [vmem:[%s1 + $0x258] sm:$0xf]
    %v179 = vld [vmem:[%s1 + $0x25c] sm:$0xf]
    %v180 = vld [vmem:[%s1 + $0x260] sm:$0xf]
    %v181 = vld [vmem:[%s1 + $0x264] sm:$0xf]
    %v182 = vld [vmem:[%s1 + $0x268] sm:$0xf]
    %v183 = vld [vmem:[%s1 + $0x26c] sm:$0xf]
    %v184 = vld [vmem:[%s1 + $0x270] sm:$0xf]
    %v185 = vld [vmem:[%s1 + $0x274] sm:$0xf]
    %v186 = vld [vmem:[%s1 + $0x278] sm:$0xf]
    %v187 = vld [vmem:[%s1 + $0x27c] sm:$0xf]
    %v188 = vld [vmem:[%s1 + $0x280] sm:$0xf]
    %v189 = vld [vmem:[%s1 + $0x284] sm:$0xf]
    %v190 = vld [vmem:[%s1 + $0x288] sm:$0xf]
    %v191 = vld [vmem:[%s1 + $0x28c] sm:$0xf]
    %v192 = vld [vmem:[%s1 + $0x290] sm:$0xf]
    %v193 = vld [vmem:[%s1 + $0x294] sm:$0xf]
    %v194 = vld [vmem:[%s1 + $0x298] sm:$0xf]
    %v195 = vld [vmem:[%s1 + $0x29c] sm:$0xf]
    %v196 = vld [vmem:[%s1 + $0x2a0] sm:$0xf]
    %v197 = vld [vmem:[%s1 + $0x2a4] sm:$0xf]
    %v198 = vld [vmem:[%s1 + $0x2a8] sm:$0xf]
    %v199 = vld [vmem:[%s1 + $0x2ac] sm:$0xf]
    %v200 = vld [vmem:[%s1 + $0x2b0] sm:$0xf]
    %v201 = vld [vmem:[%s1 + $0x2b4] sm:$0xf]
    %v202 = vld [vmem:[%s1 + $0x2b8] sm:$0xf]
    %v203 = vld [vmem:[%s1 + $0x2bc] sm:$0xf]
    %v204 = vld [vmem:[%s1 + $0x2c0] sm:$0xf]
    %v205 = vld [vmem:[%s1 + $0x2c4] sm:$0xf]
    %v206 = vld [vmem:[%s1 + $0x2c8] sm:$0xf]
    %v207 = vld [vmem:[%s1 + $0x2cc] sm:$0xf]
    %v208 = vld [vmem:[%s1 + $0x2d0] sm:$0xf]
    %v209 = vld [vmem:[%s1 + $0x2d4] sm:$0xf]
    %v210 = vld [vmem:[%s1 + $0x2d8] sm:$0xf]
    %v211 = vld [vmem:[%s1 + $0x2dc] sm:$0xf]
    %v212 = vld [vmem:[%s1 + $0x2e0] sm:$0xf]
    %v213 = vld [vmem:[%s1 + $0x2e4] sm:$0xf]
    %v214 = vld [vmem:[%s1 + $0x2e8] sm:$0xf]
    %v215 = vld [vmem:[%s1 + $0x2ec] sm:$0xf]
    %v216 = vld [vmem:[%s1 + $0x2f0] sm:$0xf]
    %v217 = vld [vmem:[%s1 + $0x2f4] sm:$0xf]
    %v218 = vld [vmem:[%s1 + $0x2f8] sm:$0xf]
    %v219 = vld [vmem:[%s1 + $0x2fc] sm:$0xf]
    %v220 = vld [vmem:[%s1 + $0x300] sm:$0xf]
    %v221 = vld [vmem:[%s1 + $0x304] sm:$0xf]
    %v222 = vld [vmem:[%s1 + $0x308] sm:$0xf]
    %v223 = vld [vmem:[%s1 + $0x30c] sm:$0xf]
    %v224 = vld [vmem:[%s1 + $0x310] sm:$0xf]
    %v225 = vld [vmem:[%s1 + $0x314] sm:$0xf]
    %v226 = vld [vmem:[%s1 + $0x318] sm:$0xf]
    %v227 = vld [vmem:[%s1 + $0x31c] sm:$0xf]
    %v228 = vld [vmem:[%s1 + $0x320] sm:$0xf]
    %v229 = vld [vmem:[%s1 + $0x324] sm:$0xf]
    %v230 = vld [vmem:[%s1 + $0x328] sm:$0xf]
    %v231 = vld [vmem:[%s1 + $0x32c] sm:$0xf]
    %v232 = vld [vmem:[%s1 + $0x330] sm:$0xf]
    %v233 = vld [vmem:[%s1 + $0x334] sm:$0xf]
    %v234 = vld [vmem:[%s1 + $0x338] sm:$0xf]
    %v235 = vld [vmem:[%s1 + $0x33c] sm:$0xf]
    %v236 = vld [vmem:[%s1 + $0x340] sm:$0xf]
    %v237 = vld [vmem:[%s1 + $0x344] sm:$0xf]
    %v238 = vld [vmem:[%s1 + $0x348] sm:$0xf]
    %v239 = vld [vmem:[%s1 + $0x34c] sm:$0xf]
    %v240 = vld [vmem:[%s1 + $0x350] sm:$0xf]
    %v241 = vld [vmem:[%s1 + $0x354] sm:$0xf]
    %v242 = vld [vmem:[%s1 + $0x358] sm:$0xf]
    %v243 = vld [vmem:[%s1 + $0x35c] sm:$0xf]
    %v244 = vld [vmem:[%s1 + $0x360] sm:$0xf]
    %v245 = vld [vmem:[%s1 + $0x364] sm:$0xf]
    %v246 = vld [vmem:[%s1 + $0x368] sm:$0xf]
    %v247 = vld [vmem:[%s1 + $0x36c] sm:$0xf]
    %v248 = vld [vmem:[%s1 + $0x370] sm:$0xf]
    %v249 = vld [vmem:[%s1 + $0x374] sm:$0xf]
    %v250 = vld [vmem:[%s1 + $0x378] sm:$0xf]
    %v251 = vld [vmem:[%s1 + $0x37c] sm:$0xf]
    %v252 = vld [vmem:[%s1 + $0x380] sm:$0xf]
    %v253 = vld [vmem:[%s1 + $0x384] sm:$0xf]
    %v254 = vld [vmem:[%s1 + $0x388] sm:$0xf]
    %v255 = vld [vmem:[%s1 + $0x38c] sm:$0xf]
    %v256 = vld [vmem:[%s1 + $0x390] sm:$0xf]
    %v257 = vld [vmem:[%s1 + $0x394] sm:$0xf]
    %v258 = vld [vmem:[%s1 + $0x398] sm:$0xf]
    %v259 = vld [vmem:[%s1 + $0x39c] sm:$0xf]
    %v260 = vld [vmem:[%s1 + $0x3a0] sm:$0xf]
    %v261 = vld [vmem:[%s1 + $0x3a4] sm:$0xf]
    %v262 = vld [vmem:[%s1 + $0x3a8] sm:$0xf]
    %v263 = vld [vmem:[%s1 + $0x3ac] sm:$0xf]
    %v264 = vld [vmem:[%s1 + $0x3b0] sm:$0xf]
    %v265 = vld [vmem:[%s1 + $0x3b4] sm:$0xf]
    %v266 = vld [vmem:[%s1 + $0x3b8] sm:$0xf]
    %v267 = vld [vmem:[%s1 + $0x3bc] sm:$0xf]
    %v268 = vld [vmem:[%s1 + $0x3c0] sm:$0xf]
    %v269 = vld [vmem:[%s1 + $0x3c4] sm:$0xf]
    %v270 = vld [vmem:[%s1 + $0x3c8] sm:$0xf]
    %v271 = vld [vmem:[%s1 + $0x3cc] sm:$0xf]
    %v272 = vld [vmem:[%s1 + $0x3d0] sm:$0xf]
    %v273 = vld [vmem:[%s1 + $0x3d4] sm:$0xf]
    %v274 = vld [vmem:[%s1 + $0x3d8] sm:$0xf]
    %v275 = vld [vmem:[%s1 + $0x3dc] sm:$0xf]
    %v276 = vld [vmem:[%s1 + $0x3e0] sm:$0xf]
    %v277 = vld [vmem:[%s1 + $0x3e4] sm:$0xf]
    %v278 = vld [vmem:[%s1 + $0x3e8] sm:$0xf]
    %v279 = vld [vmem:[%s1 + $0x3ec] sm:$0xf]
    %v280 = vld [vmem:[%s1 + $0x3f0] sm:$0xf]
    %v281 = vld [vmem:[%s1 + $0x3f4] sm:$0xf]
    %v282 = vld [vmem:[%s1 + $0x3f8] sm:$0xf]
    %v283 = vld [vmem:[%s1 + $0x3fc] sm:$0xf]
    %v284 = vld [vmem:[%s1 + $0x400] sm:$0xf]
    %v285 = vld [vmem:[%s1 + $0x404] sm:$0xf]
    %v286 = vld [vmem:[%s1 + $0x408] sm:$0xf]
    %v287 = vld [vmem:[%s1 + $0x40c] sm:$0xf]
    %v288 = vld [vmem:[%s1 + $0x410] sm:$0xf]
    %v289 = vld [vmem:[%s1 + $0x414] sm:$0xf]
    %v290 = vld [vmem:[%s1 + $0x418] sm:$0xf]
    %v291 = vld [vmem:[%s1 + $0x41c] sm:$0xf]
    %v292 = vld [vmem:[%s1 + $0x420] sm:$0xf]
    %v293 = vld [vmem:[%s1 + $0x424] sm:$0xf]
    %v294 = vld [vmem:[%s1 + $0x428] sm:$0xf]
    %v295 = vld [vmem:[%s1 + $0x42c] sm:$0xf]
    %v296 = vld [vmem:[%s1 + $0x430] sm:$0xf]
    %v297 = vld [vmem:[%s1 + $0x434] sm:$0xf]
    %v298 = vld [vmem:[%s1 + $0x438] sm:$0xf]
    %v299 = vld [vmem:[%s1 + $0x43c] sm:$0xf]
    %v300 = vld [vmem:[%s1 + $0x440] sm:$0xf]
    %v301 = vld [vmem:[%s1 + $0x444] sm:$0xf]
    %v302 = vld [vmem:[%s1 + $0x448] sm:$0xf]
    %v303 = vld [vmem:[%s1 + $0x44c] sm:$0xf]
    %v304 = vld [vmem:[%s1 + $0x450] sm:$0xf]
    %v305 = vld [vmem:[%s1 + $0x454] sm:$0xf]
    %v306 = vld [vmem:[%s1 + $0x458] sm:$0xf]
    %v307 = vld [vmem:[%s1 + $0x45c] sm:$0xf]
    %v308 = vld [vmem:[%s1 + $0x460] sm:$0xf]
    %v309 = vld [vmem:[%s1 + $0x464] sm:$0xf]
    %v310 = vld [vmem:[%s1 + $0x468] sm:$0xf]
    %v311 = vld [vmem:[%s1 + $0x46c] sm:$0xf]
    %v312 = vld [vmem:[%s1 + $0x470] sm:$0xf]
    %v313 = vld [vmem:[%s1 + $0x474] sm:$0xf]
    %v314 = vld [vmem:[%s1 + $0x478] sm:$0xf]
    %v315 = vld [vmem:[%s1 + $0x47c] sm:$0xf]
    %v316 = vld [vmem:[%s1 + $0x480] sm:$0xf]
    %v317 = vld [vmem:[%s1 + $0x484] sm:$0xf]
    %v318 = vld [vmem:[%s1 + $0x488] sm:$0xf]
    %v319 = vld [vmem:[%s1 + $0x48c] sm:$0xf]
    %v320 = vld [vmem:[%s1 + $0x490] sm:$0xf]
    %v321 = vld [vmem:[%s1 + $0x494] sm:$0xf]
    %v322 = vld [vmem:[%s1 + $0x498] sm:$0xf]
    %v323 = vld [vmem:[%s1 + $0x49c] sm:$0xf]
    %v324 = vld [vmem:[%s1 + $0x4a0] sm:$0xf]
    %v325 = vld [vmem:[%s1 + $0x4a4] sm:$0xf]
    %v326 = vld [vmem:[%s1 + $0x4a8] sm:$0xf]
    %v327 = vld [vmem:[%s1 + $0x4ac] sm:$0xf]
    %v328 = vld [vmem:[%s1 + $0x4b0] sm:$0xf]
    %v329 = vld [vmem:[%s1 + $0x4b4] sm:$0xf]
    %v330 = vld [vmem:[%s1 + $0x4b8] sm:$0xf]
    %v331 = vld [vmem:[%s1 + $0x4bc] sm:$0xf]
    %v332 = vld [vmem:[%s1 + $0x4c0] sm:$0xf]
    %v333 = vld [vmem:[%s1 + $0x4c4] sm:$0xf]
    %v334 = vld [vmem:[%s1 + $0x4c8] sm:$0xf]
    %v335 = vld [vmem:[%s1 + $0x4cc] sm:$0xf]
    %v336 = vld [vmem:[%s1 + $0x4d0] sm:$0xf]
    %v337 = vld [vmem:[%s1 + $0x4d4] sm:$0xf]
    %v338 = vld [vmem:[%s1 + $0x4d8] sm:$0xf]
    %v339 = vld [vmem:[%s1 + $0x4dc] sm:$0xf]
    %v340 = vld [vmem:[%s1 + $0x4e0] sm:$0xf]
    %v341 = vld [vmem:[%s1 + $0x4e4] sm:$0xf]
    %v342 = vld [vmem:[%s1 + $0x4e8] sm:$0xf]
    %v343 = vld [vmem:[%s1 + $0x4ec] sm:$0xf]
    %v344 = vld [vmem:[%s1 + $0x4f0] sm:$0xf]
    %v345 = vld [vmem:[%s1 + $0x4f4] sm:$0xf]
    %v346 = vld [vmem:[%s1 + $0x4f8] sm:$0xf]
    %v347 = vld [vmem:[%s1 + $0x4fc] sm:$0xf]
    %v348 = vld [vmem:[%s1 + $0x500] sm:$0xf]
    %v349 = vld [vmem:[%s1 + $0x504] sm:$0xf]
    %v350 = vld [vmem:[%s1 + $0x508] sm:$0xf]
    %v351 = vld [vmem:[%s1 + $0x50c] sm:$0xf]
    %v352 = vld [vmem:[%s1 + $0x510] sm:$0xf]
    %v353 = vld [vmem:[%s1 + $0x514] sm:$0xf]
    %v354 = vld [vmem:[%s1 + $0x518] sm:$0xf]
    %v355 = vld [vmem:[%s1 + $0x51c] sm:$0xf]
    %v356 = vld [vmem:[%s1 + $0x520] sm:$0xf]
    %v357 = vld [vmem:[%s1 + $0x524] sm:$0xf]
    %v358 = vld [vmem:[%s1 + $0x528] sm:$0xf]
    %v359 = vld [vmem:[%s1 + $0x52c] sm:$0xf]
    %v360 = vld [vmem:[%s1 + $0x530] sm:$0xf]
    %v361 = vld [vmem:[%s1 + $0x534] sm:$0xf]
    %v362 = vld [vmem:[%s1 + $0x538] sm:$0xf]
    %v363 = vld [vmem:[%s1 + $0x53c] sm:$0xf]
    %v364 = vld [vmem:[%s1 + $0x540] sm:$0xf]
    %v365 = vld [vmem:[%s1 + $0x544] sm:$0xf]
    %v366 = vld [vmem:[%s1 + $0x548] sm:$0xf]
    %v367 = vld [vmem:[%s1 + $0x54c] sm:$0xf]
    %v368 = vld [vmem:[%s1 + $0x550] sm:$0xf]
    %v369 = vld [vmem:[%s1 + $0x554] sm:$0xf]
    %v370 = vld [vmem:[%s1 + $0x558] sm:$0xf]
    %v371 = vld [vmem:[%s1 + $0x55c] sm:$0xf]
    %v372 = vld [vmem:[%s1 + $0x560] sm:$0xf]
    %v373 = vld [vmem:[%s1 + $0x564] sm:$0xf]
    %v374 = vld [vmem:[%s1 + $0x568] sm:$0xf]
    %v375 = vld [vmem:[%s1 + $0x56c] sm:$0xf]
    %v376 = vld [vmem:[%s1 + $0x570] sm:$0xf]
    %v377 = vld [vmem:[%s1 + $0x574] sm:$0xf]
    %v378 = vld [vmem:[%s1 + $0x578] sm:$0xf]
    %v379 = vld [vmem:[%s1 + $0x57c] sm:$0xf]
    %v380 = vld [vmem:[%s1 + $0x580] sm:$0xf]
    %v381 = vld [vmem:[%s1 + $0x584] sm:$0xf]
    %v382 = vld [vmem:[%s1 + $0x588] sm:$0xf]
    %v383 = vld [vmem:[%s1 + $0x58c] sm:$0xf]
    %v384 = vld [vmem:[%s1 + $0x590] sm:$0xf]
    %v385 = vld [vmem:[%s1 + $0x594] sm:$0xf]
    %v386 = vld [vmem:[%s1 + $0x598] sm:$0xf]
    %v387 = vld [vmem:[%s1 + $0x59c] sm:$0xf]
    %v388 = vld [vmem:[%s1 + $0x5a0] sm:$0xf]
    %v389 = vld [vmem:[%s1 + $0x5a4] sm:$0xf]
    %v390 = vld [vmem:[%s1 + $0x5a8] sm:$0xf]
    %v391 = vld [vmem:[%s1 + $0x5ac] sm:$0xf]
    %v392 = vld [vmem:[%s1 + $0x5b0] sm:$0xf]
    %v393 = vld [vmem:[%s1 + $0x5b4] sm:$0xf]
    %v394 = vld [vmem:[%s1 + $0x5b8] sm:$0xf]
    %v395 = vld [vmem:[%s1 + $0x5bc] sm:$0xf]
    %v396 = vld [vmem:[%s1 + $0x5c0] sm:$0xf]
    %v397 = vld [vmem:[%s1 + $0x5c4] sm:$0xf]
    %v398 = vld [vmem:[%s1 + $0x5c8] sm:$0xf]
    %v399 = vld [vmem:[%s1 + $0x5cc] sm:$0xf]
    %v400 = vld [vmem:[%s1 + $0x5d0] sm:$0xf]
    %v401 = vld [vmem:[%s1 + $0x5d4] sm:$0xf]
    %v402 = vld [vmem:[%s1 + $0x5d8] sm:$0xf]
    %v403 = vld [vmem:[%s1 + $0x5dc] sm:$0xf]
    %v404 = vld [vmem:[%s1 + $0x5e0] sm:$0xf]
    %v405 = vld [vmem:[%s1 + $0x5e4] sm:$0xf]
    %v406 = vld [vmem:[%s1 + $0x5e8] sm:$0xf]
    %v407 = vld [vmem:[%s1 + $0x5ec] sm:$0xf]
    %v408 = vld [vmem:[%s1 + $0x5f0] sm:$0xf]
    %v409 = vld [vmem:[%s1 + $0x5f4] sm:$0xf]
    %v410 = vld [vmem:[%s1 + $0x5f8] sm:$0xf]
    %v411 = vld [vmem:[%s1 + $0x5fc] sm:$0xf]
    %v412 = vld [vmem:[%s1 + $0x600] sm:$0xf]
    %v413 = vld [vmem:[%s1 + $0x604] sm:$0xf]
    %v414 = vld [vmem:[%s1 + $0x608] sm:$0xf]
    %v415 = vld [vmem:[%s1 + $0x60c] sm:$0xf]
    %v416 = vld [vmem:[%s1 + $0x610] sm:$0xf]
    %v417 = vld [vmem:[%s1 + $0x614] sm:$0xf]
    %v418 = vld [vmem:[%s1 + $0x618] sm:$0xf]
    %v419 = vld [vmem:[%s1 + $0x61c] sm:$0xf]
    %v420 = vld [vmem:[%s1 + $0x620] sm:$0xf]
    %v421 = vld [vmem:[%s1 + $0x624] sm:$0xf]
    %v422 = vld [vmem:[%s1 + $0x628] sm:$0xf]
    %v423 = vld [vmem:[%s1 + $0x62c] sm:$0xf]
    %v424 = vld [vmem:[%s1 + $0x630] sm:$0xf]
    %v425 = vld [vmem:[%s1 + $0x634] sm:$0xf]
    %v426 = vld [vmem:[%s1 + $0x638] sm:$0xf]
    %v427 = vld [vmem:[%s1 + $0x63c] sm:$0xf]
    %v428 = vld [vmem:[%s1 + $0x640] sm:$0xf]
    %v429 = vld [vmem:[%s1 + $0x644] sm:$0xf]
    %v430 = vld [vmem:[%s1 + $0x648] sm:$0xf]
    %v431 = vld [vmem:[%s1 + $0x64c] sm:$0xf]
    %v432 = vld [vmem:[%s1 + $0x650] sm:$0xf]
    %v433 = vld [vmem:[%s1 + $0x654] sm:$0xf]
    %v434 = vld [vmem:[%s1 + $0x658] sm:$0xf]
    %v435 = vld [vmem:[%s1 + $0x65c] sm:$0xf]
    %v436 = vld [vmem:[%s1 + $0x660] sm:$0xf]
    %v437 = vld [vmem:[%s1 + $0x664] sm:$0xf]
    %v438 = vld [vmem:[%s1 + $0x668] sm:$0xf]
    %v439 = vld [vmem:[%s1 + $0x66c] sm:$0xf]
    %v440 = vld [vmem:[%s1 + $0x670] sm:$0xf]
    %v441 = vld [vmem:[%s1 + $0x674] sm:$0xf]
    %v442 = vld [vmem:[%s1 + $0x678] sm:$0xf]
    %v443 = vld [vmem:[%s1 + $0x67c] sm:$0xf]
    %v444 = vld [vmem:[%s1 + $0x680] sm:$0xf]
    %v445 = vld [vmem:[%s1 + $0x684] sm:$0xf]
    %v446 = vld [vmem:[%s1 + $0x688] sm:$0xf]
    %v447 = vld [vmem:[%s1 + $0x68c] sm:$0xf]
    %v448 = vld [vmem:[%s1 + $0x690] sm:$0xf]
    %v449 = vld [vmem:[%s1 + $0x694] sm:$0xf]
    %v450 = vld [vmem:[%s1 + $0x698] sm:$0xf]
    %v451 = vld [vmem:[%s1 + $0x69c] sm:$0xf]
    %v452 = vld [vmem:[%s1 + $0x6a0] sm:$0xf]
    %v453 = vld [vmem:[%s1 + $0x6a4] sm:$0xf]
    %v454 = vld [vmem:[%s1 + $0x6a8] sm:$0xf]
    %v455 = vld [vmem:[%s1 + $0x6ac] sm:$0xf]
    %v456 = vld [vmem:[%s1 + $0x6b0] sm:$0xf]
    %v457 = vld [vmem:[%s1 + $0x6b4] sm:$0xf]
    %v458 = vld [vmem:[%s1 + $0x6b8] sm:$0xf]
    %v459 = vld [vmem:[%s1 + $0x6bc] sm:$0xf]
    %v460 = vld [vmem:[%s1 + $0x6c0] sm:$0xf]
    %v461 = vld [vmem:[%s1 + $0x6c4] sm:$0xf]
    %v462 = vld [vmem:[%s1 + $0x6c8] sm:$0xf]
    %v463 = vld [vmem:[%s1 + $0x6cc] sm:$0xf]
    %v464 = vld [vmem:[%s1 + $0x6d0] sm:$0xf]
    %v465 = vld [vmem:[%s1 + $0x6d4] sm:$0xf]
    %v466 = vld [vmem:[%s1 + $0x6d8] sm:$0xf]
    %v467 = vld [vmem:[%s1 + $0x6dc] sm:$0xf]
    %v468 = vld [vmem:[%s1 + $0x6e0] sm:$0xf]
    %v469 = vld [vmem:[%s1 + $0x6e4] sm:$0xf]
    %v470 = vld [vmem:[%s1 + $0x6e8] sm:$0xf]
    %v471 = vld [vmem:[%s1 + $0x6ec] sm:$0xf]
    %v472 = vld [vmem:[%s1 + $0x6f0] sm:$0xf]
    %v473 = vld [vmem:[%s1 + $0x6f4] sm:$0xf]
    %v474 = vld [vmem:[%s1 + $0x6f8] sm:$0xf]
    %v475 = vld [vmem:[%s1 + $0x6fc] sm:$0xf]
    %v476 = vld [vmem:[%s1 + $0x700] sm:$0xf]
    %v477 = vld [vmem:[%s1 + $0x704] sm:$0xf]
    %v478 = vld [vmem:[%s1 + $0x708] sm:$0xf]
    %v479 = vld [vmem:[%s1 + $0x70c] sm:$0xf]
    %v480 = vld [vmem:[%s1 + $0x710] sm:$0xf]
    %v481 = vld [vmem:[%s1 + $0x714] sm:$0xf]
    %v482 = vld [vmem:[%s1 + $0x718] sm:$0xf]
    %v483 = vld [vmem:[%s1 + $0x71c] sm:$0xf]
    %v484 = vld [vmem:[%s1 + $0x720] sm:$0xf]
    %v485 = vld [vmem:[%s1 + $0x724] sm:$0xf]
    %v486 = vld [vmem:[%s1 + $0x728] sm:$0xf]
    %v487 = vld [vmem:[%s1 + $0x72c] sm:$0xf]
    %v488 = vld [vmem:[%s1 + $0x730] sm:$0xf]
    %v489 = vld [vmem:[%s1 + $0x734] sm:$0xf]
    %v490 = vld [vmem:[%s1 + $0x738] sm:$0xf]
    %v491 = vld [vmem:[%s1 + $0x73c] sm:$0xf]
    %v492 = vld [vmem:[%s1 + $0x740] sm:$0xf]
    %v493 = vld [vmem:[%s1 + $0x744] sm:$0xf]
    %v494 = vld [vmem:[%s1 + $0x748] sm:$0xf]
    %v495 = vld [vmem:[%s1 + $0x74c] sm:$0xf]
    %v496 = vld [vmem:[%s1 + $0x750] sm:$0xf]
    %v497 = vld [vmem:[%s1 + $0x754] sm:$0xf]
    %v498 = vld [vmem:[%s1 + $0x758] sm:$0xf]
    %v499 = vld [vmem:[%s1 + $0x75c] sm:$0xf]
    %v500 = vld [vmem:[%s1 + $0x760] sm:$0xf]
    %v501 = vld [vmem:[%s1 + $0x764] sm:$0xf]
    %v502 = vld [vmem:[%s1 + $0x768] sm:$0xf]
    %v503 = vld [vmem:[%s1 + $0x76c] sm:$0xf]
    %v504 = vld [vmem:[%s1 + $0x770] sm:$0xf]
    %v505 = vld [vmem:[%s1 + $0x774] sm:$0xf]
    %v506 = vld [vmem:[%s1 + $0x778] sm:$0xf]
    %v507 = vld [vmem:[%s1 + $0x77c] sm:$0xf]
    %v508 = vld [vmem:[%s1 + $0x780] sm:$0xf]
    %v509 = vld [vmem:[%s1 + $0x784] sm:$0xf]
    %v510 = vld [vmem:[%s1 + $0x788] sm:$0xf]
    %v511 = vld [vmem:[%s1 + $0x78c] sm:$0xf]
    %v512 = vld [vmem:[%s1 + $0x790] sm:$0xf]
    %v513 = vld [vmem:[%s1 + $0x794] sm:$0xf]
    %v514 = vld [vmem:[%s1 + $0x798] sm:$0xf]
    %v515 = vld [vmem:[%s1 + $0x79c] sm:$0xf]
    %v516 = vld [vmem:[%s1 + $0x7a0] sm:$0xf]
    %v517 = vld [vmem:[%s1 + $0x7a4] sm:$0xf]
    %v518 = vld [vmem:[%s1 + $0x7a8] sm:$0xf]
    %v519 = vld [vmem:[%s1 + $0x7ac] sm:$0xf]
    %v520 = vld [vmem:[%s1 + $0x7b0] sm:$0xf]
    %v521 = vld [vmem:[%s1 + $0x7b4] sm:$0xf]
    %v522 = vld [vmem:[%s1 + $0x7b8] sm:$0xf]
    %v523 = vld [vmem:[%s1 + $0x7bc] sm:$0xf]
    %v524 = vld [vmem:[%s1 + $0x7c0] sm:$0xf]
    %v525 = vld [vmem:[%s1 + $0x7c4] sm:$0xf]
    %v526 = vld [vmem:[%s1 + $0x7c8] sm:$0xf]
    %v527 = vld [vmem:[%s1 + $0x7cc] sm:$0xf]
    %v528 = vld [vmem:[%s1 + $0x7d0] sm:$0xf]
    %v529 = vld [vmem:[%s1 + $0x7d4] sm:$0xf]
    %v530 = vld [vmem:[%s1 + $0x7d8] sm:$0xf]
    %v531 = vld [vmem:[%s1 + $0x7dc] sm:$0xf]
    %v532 = vld [vmem:[%s1 + $0x7e0] sm:$0xf]
    %v533 = vld [vmem:[%s1 + $0x7e4] sm:$0xf]
    %v534 = vld [vmem:[%s1 + $0x7e8] sm:$0xf]
    %v535 = vld [vmem:[%s1 + $0x7ec] sm:$0xf]
    %v536 = vld [vmem:[%s1 + $0x7f0] sm:$0xf]
    %v537 = vld [vmem:[%s1 + $0x7f4] sm:$0xf]
    %v538 = vld [vmem:[%s1 + $0x7f8] sm:$0xf]
    %v539 = vld [vmem:[%s1 + $0x7fc] sm:$0xf]
    %v540 = vld [vmem:[%s1 + $0x800] sm:$0xf]
    %v541 = vld [vmem:[%s1 + $0x804] sm:$0xf]
    %v542 = vld [vmem:[%s1 + $0x808] sm:$0xf]
    %v543 = vld [vmem:[%s1 + $0x80c] sm:$0xf]
    %v544 = vld [vmem:[%s1 + $0x810] sm:$0xf]
    %v545 = vld [vmem:[%s1 + $0x814] sm:$0xf]
    %v546 = vld [vmem:[%s1 + $0x818] sm:$0xf]
    %v547 = vld [vmem:[%s1 + $0x81c] sm:$0xf]
    %v548 = vld [vmem:[%s1 + $0x820] sm:$0xf]
    %v549 = vld [vmem:[%s1 + $0x824] sm:$0xf]
    %v550 = vld [vmem:[%s1 + $0x828] sm:$0xf]
    %v551 = vld [vmem:[%s1 + $0x82c] sm:$0xf]
    %v552 = vld [vmem:[%s1 + $0x830] sm:$0xf]
    %v553 = vld [vmem:[%s1 + $0x834] sm:$0xf]
    %v554 = vld [vmem:[%s1 + $0x838] sm:$0xf]
    %v555 = vld [vmem:[%s1 + $0x83c] sm:$0xf]
    %v556 = vld [vmem:[%s1 + $0x840] sm:$0xf]
    %v557 = vld [vmem:[%s1 + $0x844] sm:$0xf]
    %v558 = vld [vmem:[%s1 + $0x848] sm:$0xf]
    %v559 = vld [vmem:[%s1 + $0x84c] sm:$0xf]
    %v560 = vld [vmem:[%s1 + $0x850] sm:$0xf]
    %v561 = vld [vmem:[%s1 + $0x854] sm:$0xf]
    %v562 = vld [vmem:[%s1 + $0x858] sm:$0xf]
    %v563 = vld [vmem:[%s1 + $0x85c] sm:$0xf]
    %v564 = vld [vmem:[%s1 + $0x860] sm:$0xf]
    %v565 = vld [vmem:[%s1 + $0x864] sm:$0xf]
    %v566 = vld [vmem:[%s1 + $0x868] sm:$0xf]
    %v567 = vld [vmem:[%s1 + $0x86c] sm:$0xf]
    %v568 = vld [vmem:[%s1 + $0x870] sm:$0xf]
    %v569 = vld [vmem:[%s1 + $0x874] sm:$0xf]
    %v570 = vld [vmem:[%s1 + $0x878] sm:$0xf]
    %v571 = vld [vmem:[%s1 + $0x87c] sm:$0xf]
    %v572 = vld [vmem:[%s1 + $0x880] sm:$0xf]
    %v573 = vld [vmem:[%s1 + $0x884] sm:$0xf]
    %v574 = vld [vmem:[%s1 + $0x888] sm:$0xf]
    %v575 = vld [vmem:[%s1 + $0x88c] sm:$0xf]
    %v576 = vld [vmem:[%s1 + $0x890] sm:$0xf]
    %v577 = vld [vmem:[%s1 + $0x894] sm:$0xf]
    %v578 = vld [vmem:[%s1 + $0x898] sm:$0xf]
    %v579 = vld [vmem:[%s1 + $0x89c] sm:$0xf]
    %v580 = vld [vmem:[%s1 + $0x8a0] sm:$0xf]
    %v581 = vld [vmem:[%s1 + $0x8a4] sm:$0xf]
    %v582 = vld [vmem:[%s1 + $0x8a8] sm:$0xf]
    %v583 = vld [vmem:[%s1 + $0x8ac] sm:$0xf]
    %v584 = vld [vmem:[%s1 + $0x8b0] sm:$0xf]
    %v585 = vld [vmem:[%s1 + $0x8b4] sm:$0xf]
    %v586 = vld [vmem:[%s1 + $0x8b8] sm:$0xf]
    %v587 = vld [vmem:[%s1 + $0x8bc] sm:$0xf]
    %v588 = vld [vmem:[%s1 + $0x8c0] sm:$0xf]
    %v589 = vld [vmem:[%s1 + $0x8c4] sm:$0xf]
    %v590 = vld [vmem:[%s1 + $0x8c8] sm:$0xf]
    %v591 = vld [vmem:[%s1 + $0x8cc] sm:$0xf]
    %v592 = vld [vmem:[%s1 + $0x8d0] sm:$0xf]
    %v593 = vld [vmem:[%s1 + $0x8d4] sm:$0xf]
    %v594 = vld [vmem:[%s1 + $0x8d8] sm:$0xf]
    %v595 = vld [vmem:[%s1 + $0x8dc] sm:$0xf]
    %v596 = vld [vmem:[%s1 + $0x8e0] sm:$0xf]
    %v597 = vld [vmem:[%s1 + $0x8e4] sm:$0xf]
    %v598 = vld [vmem:[%s1 + $0x8e8] sm:$0xf]
    %v599 = vld [vmem:[%s1 + $0x8ec] sm:$0xf]
    %v600 = vld [vmem:[%s1 + $0x8f0] sm:$0xf]
    %v601 = vld [vmem:[%s1 + $0x8f4] sm:$0xf]
    %v602 = vld [vmem:[%s1 + $0x8f8] sm:$0xf]
    %v603 = vld [vmem:[%s1 + $0x8fc] sm:$0xf]
    %v604 = vld [vmem:[%s1 + $0x900] sm:$0xf]
    %v605 = vld [vmem:[%s1 + $0x904] sm:$0xf]
    %v606 = vld [vmem:[%s1 + $0x908] sm:$0xf]
    %v607 = vld [vmem:[%s1 + $0x90c] sm:$0xf]
    %v608 = vld [vmem:[%s1 + $0x910] sm:$0xf]
    %v609 = vld [vmem:[%s1 + $0x914] sm:$0xf]
    %v610 = vld [vmem:[%s1 + $0x918] sm:$0xf]
    %v611 = vld [vmem:[%s1 + $0x91c] sm:$0xf]
    %v612 = vld [vmem:[%s1 + $0x920] sm:$0xf]
    %v613 = vld [vmem:[%s1 + $0x924] sm:$0xf]
    %v614 = vld [vmem:[%s1 + $0x928] sm:$0xf]
    %v615 = vld [vmem:[%s1 + $0x92c] sm:$0xf]
    %v616 = vld [vmem:[%s1 + $0x930] sm:$0xf]
    %v617 = vld [vmem:[%s1 + $0x934] sm:$0xf]
    %v618 = vld [vmem:[%s1 + $0x938] sm:$0xf]
    %v619 = vld [vmem:[%s1 + $0x93c] sm:$0xf]
    %v620 = vld [vmem:[%s1 + $0x940] sm:$0xf]
    %v621 = vld [vmem:[%s1 + $0x944] sm:$0xf]
    %v622 = vld [vmem:[%s1 + $0x948] sm:$0xf]
    %v623 = vld [vmem:[%s1 + $0x94c] sm:$0xf]
    %v624 = vld [vmem:[%s1 + $0x950] sm:$0xf]
    %v625 = vld [vmem:[%s1 + $0x954] sm:$0xf]
    %v626 = vld [vmem:[%s1 + $0x958] sm:$0xf]
    %v627 = vld [vmem:[%s1 + $0x95c] sm:$0xf]
    %v628 = vld [vmem:[%s1 + $0x960] sm:$0xf]
    %v629 = vld [vmem:[%s1 + $0x964] sm:$0xf]
    %v630 = vld [vmem:[%s1 + $0x968] sm:$0xf]
    %v631 = vld [vmem:[%s1 + $0x96c] sm:$0xf]
    %v632 = vld [vmem:[%s1 + $0x970] sm:$0xf]
    %v633 = vld [vmem:[%s1 + $0x974] sm:$0xf]
    %v634 = vld [vmem:[%s1 + $0x978] sm:$0xf]
    %v635 = vld [vmem:[%s1 + $0x97c] sm:$0xf]
    %v636 = vld [vmem:[%s1 + $0x980] sm:$0xf]
    %v637 = vld [vmem:[%s1 + $0x984] sm:$0xf]
    %v638 = vld [vmem:[%s1 + $0x988] sm:$0xf]
    %v639 = vld [vmem:[%s1 + $0x98c] sm:$0xf]
    %v640 = vld [vmem:[%s1 + $0x990] sm:$0xf]
    %v641 = vld [vmem:[%s1 + $0x994] sm:$0xf]
    %v642 = vld [vmem:[%s1 + $0x998] sm:$0xf]
    %v643 = vld [vmem:[%s1 + $0x99c] sm:$0xf]
    %v644 = vld [vmem:[%s1 + $0x9a0] sm:$0xf]
    %v645 = vld [vmem:[%s1 + $0x9a4] sm:$0xf]
    %v646 = vld [vmem:[%s1 + $0x9a8] sm:$0xf]
    %v647 = vld [vmem:[%s1 + $0x9ac] sm:$0xf]
    %v648 = vld [vmem:[%s1 + $0x9b0] sm:$0xf]
    %v649 = vld [vmem:[%s1 + $0x9b4] sm:$0xf]
    %v650 = vld [vmem:[%s1 + $0x9b8] sm:$0xf]
    %v651 = vld [vmem:[%s1 + $0x9bc] sm:$0xf]
    %v652 = vld [vmem:[%s1 + $0x9c0] sm:$0xf]
    %v653 = vld [vmem:[%s1 + $0x9c4] sm:$0xf]
    %v654 = vld [vmem:[%s1 + $0x9c8] sm:$0xf]
    %v655 = vld [vmem:[%s1 + $0x9cc] sm:$0xf]
    %v656 = vld [vmem:[%s1 + $0x9d0] sm:$0xf]
    %v657 = vld [vmem:[%s1 + $0x9d4] sm:$0xf]
    %v658 = vld [vmem:[%s1 + $0x9d8] sm:$0xf]
    %v659 = vld [vmem:[%s1 + $0x9dc] sm:$0xf]
    %v660 = vld [vmem:[%s1 + $0x9e0] sm:$0xf]
    %v661 = vld [vmem:[%s1 + $0x9e4] sm:$0xf]
    %v662 = vld [vmem:[%s1 + $0x9e8] sm:$0xf]
    %v663 = vld [vmem:[%s1 + $0x9ec] sm:$0xf]
    %v664 = vld [vmem:[%s1 + $0x9f0] sm:$0xf]
    %v665 = vld [vmem:[%s1 + $0x9f4] sm:$0xf]
    %v666 = vld [vmem:[%s1 + $0x9f8] sm:$0xf]
    %v667 = vld [vmem:[%s1 + $0x9fc] sm:$0xf]
    %v668 = vld [vmem:[%s1 + $0xa00] sm:$0xf]
    %v669 = vld [vmem:[%s1 + $0xa04] sm:$0xf]
    %v670 = vld [vmem:[%s1 + $0xa08] sm:$0xf]
    %v671 = vld [vmem:[%s1 + $0xa0c] sm:$0xf]
    %v672 = vld [vmem:[%s1 + $0xa10] sm:$0xf]
    %v673 = vld [vmem:[%s1 + $0xa14] sm:$0xf]
    %v674 = vld [vmem:[%s1 + $0xa18] sm:$0xf]
    %v675 = vld [vmem:[%s1 + $0xa1c] sm:$0xf]
    %v676 = vld [vmem:[%s1 + $0xa20] sm:$0xf]
    %v677 = vld [vmem:[%s1 + $0xa24] sm:$0xf]
    %v678 = vld [vmem:[%s1 + $0xa28] sm:$0xf]
    %v679 = vld [vmem:[%s1 + $0xa2c] sm:$0xf]
    %v680 = vld [vmem:[%s1 + $0xa30] sm:$0xf]
    %v681 = vld [vmem:[%s1 + $0xa34] sm:$0xf]
    %v682 = vld [vmem:[%s1 + $0xa38] sm:$0xf]
    %v683 = vld [vmem:[%s1 + $0xa3c] sm:$0xf]
    %v684 = vld [vmem:[%s1 + $0xa40] sm:$0xf]
    %v685 = vld [vmem:[%s1 + $0xa44] sm:$0xf]
    %v686 = vld [vmem:[%s1 + $0xa48] sm:$0xf]
    %v687 = vld [vmem:[%s1 + $0xa4c] sm:$0xf]
    %v688 = vld [vmem:[%s1 + $0xa50] sm:$0xf]
    %v689 = vld [vmem:[%s1 + $0xa54] sm:$0xf]
    %v690 = vld [vmem:[%s1 + $0xa58] sm:$0xf]
    %v691 = vld [vmem:[%s1 + $0xa5c] sm:$0xf]
    %v692 = vld [vmem:[%s1 + $0xa60] sm:$0xf]
    %v693 = vld [vmem:[%s1 + $0xa64] sm:$0xf]
    %v694 = vld [vmem:[%s1 + $0xa68] sm:$0xf]
    %v695 = vld [vmem:[%s1 + $0xa6c] sm:$0xf]
    %v696 = vld [vmem:[%s1 + $0xa70] sm:$0xf]
    %v697 = vld [vmem:[%s1 + $0xa74] sm:$0xf]
    %v698 = vld [vmem:[%s1 + $0xa78] sm:$0xf]
    %v699 = vld [vmem:[%s1 + $0xa7c] sm:$0xf]
    %v700 = vld [vmem:[%s1 + $0xa80] sm:$0xf]
    %v701 = vld [vmem:[%s1 + $0xa84] sm:$0xf]
    %v702 = vld [vmem:[%s1 + $0xa88] sm:$0xf]
    %v703 = vld [vmem:[%s1 + $0xa8c] sm:$0xf]
    %v704 = vld [vmem:[%s1 + $0xa90] sm:$0xf]
    %v705 = vld [vmem:[%s1 + $0xa94] sm:$0xf]
    %v706 = vld [vmem:[%s1 + $0xa98] sm:$0xf]
    %v707 = vld [vmem:[%s1 + $0xa9c] sm:$0xf]
    %v708 = vld [vmem:[%s1 + $0xaa0] sm:$0xf]
    %v709 = vld [vmem:[%s1 + $0xaa4] sm:$0xf]
    %v710 = vld [vmem:[%s1 + $0xaa8] sm:$0xf]
    %v711 = vld [vmem:[%s1 + $0xaac] sm:$0xf]
    %v712 = vld [vmem:[%s1 + $0xab0] sm:$0xf]
    %v713 = vld [vmem:[%s1 + $0xab4] sm:$0xf]
    %v714 = vld [vmem:[%s1 + $0xab8] sm:$0xf]
    %v715 = vld [vmem:[%s1 + $0xabc] sm:$0xf]
    %v716 = vld [vmem:[%s1 + $0xac0] sm:$0xf]
    %v717 = vld [vmem:[%s1 + $0xac4] sm:$0xf]
    %v718 = vld [vmem:[%s1 + $0xac8] sm:$0xf]
    %v719 = vld [vmem:[%s1 + $0xacc] sm:$0xf]
    %v720 = vld [vmem:[%s1 + $0xad0] sm:$0xf]
    %v721 = vld [vmem:[%s1 + $0xad4] sm:$0xf]
    %v722 = vld [vmem:[%s1 + $0xad8] sm:$0xf]
    %v723 = vld [vmem:[%s1 + $0xadc] sm:$0xf]
    %v724 = vld [vmem:[%s1 + $0xae0] sm:$0xf]
    %v725 = vld [vmem:[%s1 + $0xae4] sm:$0xf]
    %v726 = vld [vmem:[%s1 + $0xae8] sm:$0xf]
    %v727 = vld [vmem:[%s1 + $0xaec] sm:$0xf]
    %v728 = vld [vmem:[%s1 + $0xaf0] sm:$0xf]
    %v729 = vld [vmem:[%s1 + $0xaf4] sm:$0xf]
    %v730 = vld [vmem:[%s1 + $0xaf8] sm:$0xf]
    %v731 = vld [vmem:[%s1 + $0xafc] sm:$0xf]
    %v732 = vld [vmem:[%s1 + $0xb00] sm:$0xf]
    %v733 = vld [vmem:[%s1 + $0xb04] sm:$0xf]
    %v734 = vld [vmem:[%s1 + $0xb08] sm:$0xf]
    %v735 = vld [vmem:[%s1 + $0xb0c] sm:$0xf]
    %v736 = vld [vmem:[%s1 + $0xb10] sm:$0xf]
    %v737 = vld [vmem:[%s1 + $0xb14] sm:$0xf]
    %v738 = vld [vmem:[%s1 + $0xb18] sm:$0xf]
    %v739 = vld [vmem:[%s1 + $0xb1c] sm:$0xf]
    %v740 = vld [vmem:[%s1 + $0xb20] sm:$0xf]
    %v741 = vld [vmem:[%s1 + $0xb24] sm:$0xf]
    %v742 = vld [vmem:[%s1 + $0xb28] sm:$0xf]
    %v743 = vld [vmem:[%s1 + $0xb2c] sm:$0xf]
    %v744 = vld [vmem:[%s1 + $0xb30] sm:$0xf]
    %v745 = vld [vmem:[%s1 + $0xb34] sm:$0xf]
    %v746 = vld [vmem:[%s1 + $0xb38] sm:$0xf]
    %v747 = vld [vmem:[%s1 + $0xb3c] sm:$0xf]
    %v748 = vld [vmem:[%s1 + $0xb40] sm:$0xf]
    %v749 = vld [vmem:[%s1 + $0xb44] sm:$0xf]
    %v750 = vld [vmem:[%s1 + $0xb48] sm:$0xf]
    %v751 = vld [vmem:[%s1 + $0xb4c] sm:$0xf]
    %v752 = vld [vmem:[%s1 + $0xb50] sm:$0xf]
    %v753 = vld [vmem:[%s1 + $0xb54] sm:$0xf]
    %v754 = vld [vmem:[%s1 + $0xb58] sm:$0xf]
    %v755 = vld [vmem:[%s1 + $0xb5c] sm:$0xf]
    %v756 = vld [vmem:[%s1 + $0xb60] sm:$0xf]
    %v757 = vld [vmem:[%s1 + $0xb64] sm:$0xf]
    %v758 = vld [vmem:[%s1 + $0xb68] sm:$0xf]
    %v759 = vld [vmem:[%s1 + $0xb6c] sm:$0xf]
    %v760 = vld [vmem:[%s1 + $0xb70] sm:$0xf]
    %v761 = vld [vmem:[%s1 + $0xb74] sm:$0xf]
    %v762 = vld [vmem:[%s1 + $0xb78] sm:$0xf]
    %v763 = vld [vmem:[%s1 + $0xb7c] sm:$0xf]
    %v764 = vld [vmem:[%s1 + $0xb80] sm:$0xf]
    %v765 = vld [vmem:[%s1 + $0xb84] sm:$0xf]
    %v766 = vld [vmem:[%s1 + $0xb88] sm:$0xf]
    %v767 = vld [vmem:[%s1 + $0xb8c] sm:$0xf]
    %v768 = vld [vmem:[%s1 + $0xb90] sm:$0xf]
    %v769 = vld [vmem:[%s1 + $0xb94] sm:$0xf]
    %v770 = vld [vmem:[%s1 + $0xb98] sm:$0xf]
    %v771 = vld [vmem:[%s1 + $0xb9c] sm:$0xf]
    %v772 = vld [vmem:[%s1 + $0xba0] sm:$0xf]
    %v773 = vld [vmem:[%s1 + $0xba4] sm:$0xf]
    %v774 = vld [vmem:[%s1 + $0xba8] sm:$0xf]
    %v775 = vld [vmem:[%s1 + $0xbac] sm:$0xf]
    %v776 = vld [vmem:[%s1 + $0xbb0] sm:$0xf]
    %v777 = vld [vmem:[%s1 + $0xbb4] sm:$0xf]
    %v778 = vld [vmem:[%s1 + $0xbb8] sm:$0xf]
    %v779 = vld [vmem:[%s1 + $0xbbc] sm:$0xf]
    %v780 = vld [vmem:[%s1 + $0xbc0] sm:$0xf]
    %v781 = vld [vmem:[%s1 + $0xbc4] sm:$0xf]
    %v782 = vld [vmem:[%s1 + $0xbc8] sm:$0xf]
    %v783 = vld [vmem:[%s1 + $0xbcc] sm:$0xf]
    %v784 = vld [vmem:[%s1 + $0xbd0] sm:$0xf]
    %v785 = vld [vmem:[%s1 + $0xbd4] sm:$0xf]
    %v786 = vld [vmem:[%s1 + $0xbd8] sm:$0xf]
    %v787 = vld [vmem:[%s1 + $0xbdc] sm:$0xf]
    %v788 = vld [vmem:[%s1 + $0xbe0] sm:$0xf]
    %v789 = vld [vmem:[%s1 + $0xbe4] sm:$0xf]
    %v790 = vld [vmem:[%s1 + $0xbe8] sm:$0xf]
    %v791 = vld [vmem:[%s1 + $0xbec] sm:$0xf]
    %v792 = vld [vmem:[%s1 + $0xbf0] sm:$0xf]
    %v793 = vld [vmem:[%s1 + $0xbf4] sm:$0xf]
    %v794 = vld [vmem:[%s1 + $0xbf8] sm:$0xf]
    %v795 = vld [vmem:[%s1 + $0xbfc] sm:$0xf]
    %v796 = vld [vmem:[%s1 + $0xc00] sm:$0xf]
    %v797 = vld [vmem:[%s1 + $0xc04] sm:$0xf]
    %v798 = vld [vmem:[%s1 + $0xc08] sm:$0xf]
    %v799 = vld [vmem:[%s1 + $0xc0c] sm:$0xf]
    %v800 = vld [vmem:[%s1 + $0xc10] sm:$0xf]
    %v801 = vld [vmem:[%s1 + $0xc14] sm:$0xf]
    %v802 = vld [vmem:[%s1 + $0xc18] sm:$0xf]
    %v803 = vld [vmem:[%s1 + $0xc1c] sm:$0xf]
    %v804 = vld [vmem:[%s1 + $0xc20] sm:$0xf]
    %v805 = vld [vmem:[%s1 + $0xc24] sm:$0xf]
    %v806 = vld [vmem:[%s1 + $0xc28] sm:$0xf]
    %v807 = vld [vmem:[%s1 + $0xc2c] sm:$0xf]
    %v808 = vld [vmem:[%s1 + $0xc30] sm:$0xf]
    %v809 = vld [vmem:[%s1 + $0xc34] sm:$0xf]
    %v810 = vld [vmem:[%s1 + $0xc38] sm:$0xf]
    %v811 = vld [vmem:[%s1 + $0xc3c] sm:$0xf]
    %v812 = vld [vmem:[%s2] sm:$0x1]
    %v814 = vperm.slane %v812, 0
    %817 = vst [vmem:[#allocation1] ss:$9 sm:$0xff] %v21
    %v818 = vld [vmem:[#allocation1] sm:$0xff]
    %v819 = vld [vmem:[#allocation1 + $0x9] sm:$0xff]
    %v820 = vld [vmem:[#allocation1 + $0x12] sm:$0xff]
    %v821 = vld [vmem:[#allocation1 + $0x1b] sm:$0xff]
    %v822 = vld [vmem:[#allocation1 + $0x24] sm:$0xff]
    %v823 = vld [vmem:[#allocation1 + $0x2d] sm:$0xff]
    %v824 = vld [vmem:[#allocation1 + $0x36] sm:$0xff]
    %v825 = vld [vmem:[#allocation1 + $0x3f] sm:$0xff]
    %827 = vst [vmem:[#allocation1] ss:$9 sm:$0xff] %v22
    %v828 = vld [vmem:[#allocation1] sm:$0xff]
    %v829 = vld [vmem:[#allocation1 + $0x9] sm:$0xff]
    %v830 = vld [vmem:[#allocation1 + $0x12] sm:$0xff]
    %v831 = vld [vmem:[#allocation1 + $0x1b] sm:$0xff]
    %v832 = vld [vmem:[#allocation1 + $0x24] sm:$0xff]
    %v833 = vld [vmem:[#allocation1 + $0x2d] sm:$0xff]
    %v834 = vld [vmem:[#allocation1 + $0x36] sm:$0xff]
    %v835 = vld [vmem:[#allocation1 + $0x3f] sm:$0xff]
    %837 = vst [vmem:[#allocation1] ss:$9 sm:$0xff] %v23
    %v838 = vld [vmem:[#allocation1] sm:$0xff]
    %v839 = vld [vmem:[#allocation1 + $0x9] sm:$0xff]
    %v840 = vld [vmem:[#allocation1 + $0x12] sm:$0xff]
    %v841 = vld [vmem:[#allocation1 + $0x1b] sm:$0xff]
    %v842 = vld [vmem:[#allocation1 + $0x24] sm:$0xff]
    %v843 = vld [vmem:[#allocation1 + $0x2d] sm:$0xff]
    %v844 = vld [vmem:[#allocation1 + $0x36] sm:$0xff]
    %v845 = vld [vmem:[#allocation1 + $0x3f] sm:$0xff]
    %847 = vst [vmem:[#allocation1] ss:$9 sm:$0xff] %v24
    %v848 = vld [vmem:[#allocation1] sm:$0xff]
    %v849 = vld [vmem:[#allocation1 + $0x9] sm:$0xff]
    %v850 = vld [vmem:[#allocation1 + $0x12] sm:$0xff]
    %v851 = vld [vmem:[#allocation1 + $0x1b] sm:$0xff]
    %v852 = vld [vmem:[#allocation1 + $0x24] sm:$0xff]
    %v853 = vld [vmem:[#allocation1 + $0x2d] sm:$0xff]
    %v854 = vld [vmem:[#allocation1 + $0x36] sm:$0xff]
    %v855 = vld [vmem:[#allocation1 + $0x3f] sm:$0xff]
    %857 = vst [vmem:[#allocation1] ss:$9 sm:$0xff] %v25
    %v858 = vld [vmem:[#allocation1] sm:$0xff]
    %v859 = vld [vmem:[#allocation1 + $0x9] sm:$0xff]
    %v860 = vld [vmem:[#allocation1 + $0x12] sm:$0xff]
    %v861 = vld [vmem:[#allocation1 + $0x1b] sm:$0xff]
    %v862 = vld [vmem:[#allocation1 + $0x24] sm:$0xff]
    %v863 = vld [vmem:[#allocation1 + $0x2d] sm:$0xff]
    %v864 = vld [vmem:[#allocation1 + $0x36] sm:$0xff]
    %v865 = vld [vmem:[#allocation1 + $0x3f] sm:$0xff]
    %867 = vst [vmem:[#allocation1] ss:$9 sm:$0xff] %v26
    %v868 = vld [vmem:[#allocation1] sm:$0xff]
    %v869 = vld [vmem:[#allocation1 + $0x9] sm:$0xff]
    %v870 = vld [vmem:[#allocation1 + $0x12] sm:$0xff]
    %v871 = vld [vmem:[#allocation1 + $0x1b] sm:$0xff]
    %v872 = vld [vmem:[#allocation1 + $0x24] sm:$0xff]
    %v873 = vld [vmem:[#allocation1 + $0x2d] sm:$0xff]
    %v874 = vld [vmem:[#allocation1 + $0x36] sm:$0xff]
    %v875 = vld [vmem:[#allocation1 + $0x3f] sm:$0xff]
    %877 = vst [vmem:[#allocation1] ss:$9 sm:$0xff] %v27
    %v878 = vld [vmem:[#allocation1] sm:$0xff]
    %v1712 = vunpack.c.l.b16 %v28
    %v1713 = vunpack.c.l.b16 %v29
    %v1714 = vunpack.c.l.b16 %v30
    %v1715 = vunpack.c.l.b16 %v31
    %v1716 = vunpack.c.l.b16 %v32
    %v1717 = vunpack.c.l.b16 %v33
    %v1718 = vunpack.c.l.b16 %v34
    %v1719 = vunpack.c.l.b16 %v35
    %v1720 = vunpack.c.l.b16 %v36
    %v1721 = vunpack.c.l.b16 %v37
    %v1722 = vunpack.c.l.b16 %v38
    %v1723 = vunpack.c.l.b16 %v39
    %v1724 = vunpack.c.l.b16 %v40
    %v1725 = vunpack.c.l.b16 %v41
    %v1726 = vunpack.c.l.b16 %v42
    %v1727 = vunpack.c.l.b16 %v43
    %v1728 = vunpack.c.l.b16 %v44
    %v1729 = vunpack.c.l.b16 %v45
    %v1730 = vunpack.c.l.b16 %v46
    %v1731 = vunpack.c.l.b16 %v47
    %v1732 = vunpack.c.l.b16 %v48
    %v1733 = vunpack.c.l.b16 %v49
    %v1734 = vunpack.c.l.b16 %v50
    %v1735 = vunpack.c.l.b16 %v51
    %v1736 = vunpack.c.l.b16 %v52
    %v1737 = vunpack.c.l.b16 %v53
    %v1738 = vunpack.c.l.b16 %v54
    %v1739 = vunpack.c.l.b16 %v55
    %v1740 = vunpack.c.l.b16 %v56
    %v1741 = vunpack.c.l.b16 %v57
    %v1742 = vunpack.c.l.b16 %v58
    %v1743 = vunpack.c.l.b16 %v59
    %v1744 = vunpack.c.l.b16 %v60
    %v1745 = vunpack.c.l.b16 %v61
    %v1746 = vunpack.c.l.b16 %v62
    %v1747 = vunpack.c.l.b16 %v63
    %v1748 = vunpack.c.l.b16 %v64
    %v1749 = vunpack.c.l.b16 %v65
    %v1750 = vunpack.c.l.b16 %v66
    %v1751 = vunpack.c.l.b16 %v67
    %v1752 = vunpack.c.l.b16 %v68
    %v1753 = vunpack.c.l.b16 %v69
    %v1754 = vunpack.c.l.b16 %v70
    %v1755 = vunpack.c.l.b16 %v71
    %v1756 = vunpack.c.l.b16 %v72
    %v1757 = vunpack.c.l.b16 %v73
    %v1758 = vunpack.c.l.b16 %v74
    %v1759 = vunpack.c.l.b16 %v75
    %v1760 = vunpack.c.l.b16 %v76
    %v1761 = vunpack.c.l.b16 %v77
    %v1762 = vunpack.c.l.b16 %v78
    %v1763 = vunpack.c.l.b16 %v79
    %v1764 = vunpack.c.l.b16 %v80
    %v1765 = vunpack.c.l.b16 %v81
    %v1766 = vunpack.c.l.b16 %v82
    %v1767 = vunpack.c.l.b16 %v83
    %v1768 = vunpack.c.l.b16 %v84
    %v1769 = vunpack.c.l.b16 %v85
    %v1770 = vunpack.c.l.b16 %v86
    %v1771 = vunpack.c.l.b16 %v87
    %v1772 = vunpack.c.l.b16 %v88
    %v1773 = vunpack.c.l.b16 %v89
    %v1774 = vunpack.c.l.b16 %v90
    %v1775 = vunpack.c.l.b16 %v91
    %v1776 = vunpack.c.l.b16 %v92
    %v1777 = vunpack.c.l.b16 %v93
    %v1778 = vunpack.c.l.b16 %v94
    %v1779 = vunpack.c.l.b16 %v95
    %v1780 = vunpack.c.l.b16 %v96
    %v1781 = vunpack.c.l.b16 %v97
    %v1782 = vunpack.c.l.b16 %v98
    %v1783 = vunpack.c.l.b16 %v99
    %v1784 = vunpack.c.l.b16 %v100
    %v1785 = vunpack.c.l.b16 %v101
    %v1786 = vunpack.c.l.b16 %v102
    %v1787 = vunpack.c.l.b16 %v103
    %v1788 = vunpack.c.l.b16 %v104
    %v1789 = vunpack.c.l.b16 %v105
    %v1790 = vunpack.c.l.b16 %v106
    %v1791 = vunpack.c.l.b16 %v107
    %v1792 = vunpack.c.l.b16 %v108
    %v1793 = vunpack.c.l.b16 %v109
    %v1794 = vunpack.c.l.b16 %v110
    %v1795 = vunpack.c.l.b16 %v111
    %v1796 = vunpack.c.l.b16 %v112
    %v1797 = vunpack.c.l.b16 %v113
    %v1798 = vunpack.c.l.b16 %v114
    %v1799 = vunpack.c.l.b16 %v115
    %v1800 = vunpack.c.l.b16 %v116
    %v1801 = vunpack.c.l.b16 %v117
    %v1802 = vunpack.c.l.b16 %v118
    %v1803 = vunpack.c.l.b16 %v119
    %v1804 = vunpack.c.l.b16 %v120
    %v1805 = vunpack.c.l.b16 %v121
    %v1806 = vunpack.c.l.b16 %v122
    %v1807 = vunpack.c.l.b16 %v123
    %v1808 = vunpack.c.l.b16 %v124
    %v1809 = vunpack.c.l.b16 %v125
    %v1810 = vunpack.c.l.b16 %v126
    %v1811 = vunpack.c.l.b16 %v127
    %v1812 = vunpack.c.l.b16 %v128
    %v1813 = vunpack.c.l.b16 %v129
    %v1814 = vunpack.c.l.b16 %v130
    %v1815 = vunpack.c.l.b16 %v131
    %v1816 = vunpack.c.l.b16 %v132
    %v1817 = vunpack.c.l.b16 %v133
    %v1818 = vunpack.c.l.b16 %v134
    %v1819 = vunpack.c.l.b16 %v135
    %v1820 = vunpack.c.l.b16 %v136
    %v1821 = vunpack.c.l.b16 %v137
    %v1822 = vunpack.c.l.b16 %v138
    %v1823 = vunpack.c.l.b16 %v139
    %v1824 = vunpack.c.l.b16 %v140
    %v1825 = vunpack.c.l.b16 %v141
    %v1826 = vunpack.c.l.b16 %v142
    %v1827 = vunpack.c.l.b16 %v143
    %v1828 = vunpack.c.l.b16 %v144
    %v1829 = vunpack.c.l.b16 %v145
    %v1830 = vunpack.c.l.b16 %v146
    %v1831 = vunpack.c.l.b16 %v147
    %v1832 = vunpack.c.l.b16 %v148
    %v1833 = vunpack.c.l.b16 %v149
    %v1834 = vunpack.c.l.b16 %v150
    %v1835 = vunpack.c.l.b16 %v151
    %v1836 = vunpack.c.l.b16 %v152
    %v1837 = vunpack.c.l.b16 %v153
    %v1838 = vunpack.c.l.b16 %v154
    %v1839 = vunpack.c.l.b16 %v155
    %v1840 = vunpack.c.l.b16 %v156
    %v1841 = vunpack.c.l.b16 %v157
    %v1842 = vunpack.c.l.b16 %v158
    %v1843 = vunpack.c.l.b16 %v159
    %v1844 = vunpack.c.l.b16 %v160
    %v1845 = vunpack.c.l.b16 %v161
    %v1846 = vunpack.c.l.b16 %v162
    %v1847 = vunpack.c.l.b16 %v163
    %v1848 = vunpack.c.l.b16 %v164
    %v1849 = vunpack.c.l.b16 %v165
    %v1850 = vunpack.c.l.b16 %v166
    %v1851 = vunpack.c.l.b16 %v167
    %v1852 = vunpack.c.l.b16 %v168
    %v1853 = vunpack.c.l.b16 %v169
    %v1854 = vunpack.c.l.b16 %v170
    %v1855 = vunpack.c.l.b16 %v171
    %v1856 = vunpack.c.l.b16 %v172
    %v1857 = vunpack.c.l.b16 %v173
    %v1858 = vunpack.c.l.b16 %v174
    %v1859 = vunpack.c.l.b16 %v175
    %v1860 = vunpack.c.l.b16 %v176
    %v1861 = vunpack.c.l.b16 %v177
    %v1862 = vunpack.c.l.b16 %v178
    %v1863 = vunpack.c.l.b16 %v179
    %v1864 = vunpack.c.l.b16 %v180
    %v1865 = vunpack.c.l.b16 %v181
    %v1866 = vunpack.c.l.b16 %v182
    %v1867 = vunpack.c.l.b16 %v183
    %v1868 = vunpack.c.l.b16 %v184
    %v1869 = vunpack.c.l.b16 %v185
    %v1870 = vunpack.c.l.b16 %v186
    %v1871 = vunpack.c.l.b16 %v187
    %v1872 = vunpack.c.l.b16 %v188
    %v1873 = vunpack.c.l.b16 %v189
    %v1874 = vunpack.c.l.b16 %v190
    %v1875 = vunpack.c.l.b16 %v191
    %v1876 = vunpack.c.l.b16 %v192
    %v1877 = vunpack.c.l.b16 %v193
    %v1878 = vunpack.c.l.b16 %v194
    %v1879 = vunpack.c.l.b16 %v195
    %v1880 = vunpack.c.l.b16 %v196
    %v1881 = vunpack.c.l.b16 %v197
    %v1882 = vunpack.c.l.b16 %v198
    %v1883 = vunpack.c.l.b16 %v199
    %v1884 = vunpack.c.l.b16 %v200
    %v1885 = vunpack.c.l.b16 %v201
    %v1886 = vunpack.c.l.b16 %v202
    %v1887 = vunpack.c.l.b16 %v203
    %v1888 = vunpack.c.l.b16 %v204
    %v1889 = vunpack.c.l.b16 %v205
    %v1890 = vunpack.c.l.b16 %v206
    %v1891 = vunpack.c.l.b16 %v207
    %v1892 = vunpack.c.l.b16 %v208
    %v1893 = vunpack.c.l.b16 %v209
    %v1894 = vunpack.c.l.b16 %v210
    %v1895 = vunpack.c.l.b16 %v211
    %v1896 = vunpack.c.l.b16 %v212
    %v1897 = vunpack.c.l.b16 %v213
    %v1898 = vunpack.c.l.b16 %v214
    %v1899 = vunpack.c.l.b16 %v215
    %v1900 = vunpack.c.l.b16 %v216
    %v1901 = vunpack.c.l.b16 %v217
    %v1902 = vunpack.c.l.b16 %v218
    %v1903 = vunpack.c.l.b16 %v219
    %v1904 = vunpack.c.l.b16 %v220
    %v1905 = vunpack.c.l.b16 %v221
    %v1906 = vunpack.c.l.b16 %v222
    %v1907 = vunpack.c.l.b16 %v223
    %v1908 = vunpack.c.l.b16 %v224
    %v1909 = vunpack.c.l.b16 %v225
    %v1910 = vunpack.c.l.b16 %v226
    %v1911 = vunpack.c.l.b16 %v227
    %v1912 = vunpack.c.l.b16 %v228
    %v1913 = vunpack.c.l.b16 %v229
    %v1914 = vunpack.c.l.b16 %v230
    %v1915 = vunpack.c.l.b16 %v231
    %v1916 = vunpack.c.l.b16 %v232
    %v1917 = vunpack.c.l.b16 %v233
    %v1918 = vunpack.c.l.b16 %v234
    %v1919 = vunpack.c.l.b16 %v235
    %v1920 = vunpack.c.l.b16 %v236
    %v1921 = vunpack.c.l.b16 %v237
    %v1922 = vunpack.c.l.b16 %v238
    %v1923 = vunpack.c.l.b16 %v239
    %v1924 = vunpack.c.l.b16 %v240
    %v1925 = vunpack.c.l.b16 %v241
    %v1926 = vunpack.c.l.b16 %v242
    %v1927 = vunpack.c.l.b16 %v243
    %v1928 = vunpack.c.l.b16 %v244
    %v1929 = vunpack.c.l.b16 %v245
    %v1930 = vunpack.c.l.b16 %v246
    %v1931 = vunpack.c.l.b16 %v247
    %v1932 = vunpack.c.l.b16 %v248
    %v1933 = vunpack.c.l.b16 %v249
    %v1934 = vunpack.c.l.b16 %v250
    %v1935 = vunpack.c.l.b16 %v251
    %v1936 = vunpack.c.l.b16 %v252
    %v1937 = vunpack.c.l.b16 %v253
    %v1938 = vunpack.c.l.b16 %v254
    %v1939 = vunpack.c.l.b16 %v255
    %v1940 = vunpack.c.l.b16 %v256
    %v1941 = vunpack.c.l.b16 %v257
    %v1942 = vunpack.c.l.b16 %v258
    %v1943 = vunpack.c.l.b16 %v259
    %v1944 = vunpack.c.l.b16 %v260
    %v1945 = vunpack.c.l.b16 %v261
    %v1946 = vunpack.c.l.b16 %v262
    %v1947 = vunpack.c.l.b16 %v263
    %v1948 = vunpack.c.l.b16 %v264
    %v1949 = vunpack.c.l.b16 %v265
    %v1950 = vunpack.c.l.b16 %v266
    %v1951 = vunpack.c.l.b16 %v267
    %v1952 = vunpack.c.l.b16 %v268
    %v1953 = vunpack.c.l.b16 %v269
    %v1954 = vunpack.c.l.b16 %v270
    %v1955 = vunpack.c.l.b16 %v271
    %v1956 = vunpack.c.l.b16 %v272
    %v1957 = vunpack.c.l.b16 %v273
    %v1958 = vunpack.c.l.b16 %v274
    %v1959 = vunpack.c.l.b16 %v275
    %v1960 = vunpack.c.l.b16 %v276
    %v1961 = vunpack.c.l.b16 %v277
    %v1962 = vunpack.c.l.b16 %v278
    %v1963 = vunpack.c.l.b16 %v279
    %v1964 = vunpack.c.l.b16 %v280
    %v1965 = vunpack.c.l.b16 %v281
    %v1966 = vunpack.c.l.b16 %v282
    %v1967 = vunpack.c.l.b16 %v283
    %v1968 = vunpack.c.l.b16 %v284
    %v1969 = vunpack.c.l.b16 %v285
    %v1970 = vunpack.c.l.b16 %v286
    %v1971 = vunpack.c.l.b16 %v287
    %v1972 = vunpack.c.l.b16 %v288
    %v1973 = vunpack.c.l.b16 %v289
    %v1974 = vunpack.c.l.b16 %v290
    %v1975 = vunpack.c.l.b16 %v291
    %v1976 = vunpack.c.l.b16 %v292
    %v1977 = vunpack.c.l.b16 %v293
    %v1978 = vunpack.c.l.b16 %v294
    %v1979 = vunpack.c.l.b16 %v295
    %v1980 = vunpack.c.l.b16 %v296
    %v1981 = vunpack.c.l.b16 %v297
    %v1982 = vunpack.c.l.b16 %v298
    %v1983 = vunpack.c.l.b16 %v299
    %v1984 = vunpack.c.l.b16 %v300
    %v1985 = vunpack.c.l.b16 %v301
    %v1986 = vunpack.c.l.b16 %v302
    %v1987 = vunpack.c.l.b16 %v303
    %v1988 = vunpack.c.l.b16 %v304
    %v1989 = vunpack.c.l.b16 %v305
    %v1990 = vunpack.c.l.b16 %v306
    %v1991 = vunpack.c.l.b16 %v307
    %v1992 = vunpack.c.l.b16 %v308
    %v1993 = vunpack.c.l.b16 %v309
    %v1994 = vunpack.c.l.b16 %v310
    %v1995 = vunpack.c.l.b16 %v311
    %v1996 = vunpack.c.l.b16 %v312
    %v1997 = vunpack.c.l.b16 %v313
    %v1998 = vunpack.c.l.b16 %v314
    %v1999 = vunpack.c.l.b16 %v315
    %v2000 = vunpack.c.l.b16 %v316
    %v2001 = vunpack.c.l.b16 %v317
    %v2002 = vunpack.c.l.b16 %v318
    %v2003 = vunpack.c.l.b16 %v319
    %v2004 = vunpack.c.l.b16 %v320
    %v2005 = vunpack.c.l.b16 %v321
    %v2006 = vunpack.c.l.b16 %v322
    %v2007 = vunpack.c.l.b16 %v323
    %v2008 = vunpack.c.l.b16 %v324
    %v2009 = vunpack.c.l.b16 %v325
    %v2010 = vunpack.c.l.b16 %v326
    %v2011 = vunpack.c.l.b16 %v327
    %v2012 = vunpack.c.l.b16 %v328
    %v2013 = vunpack.c.l.b16 %v329
    %v2014 = vunpack.c.l.b16 %v330
    %v2015 = vunpack.c.l.b16 %v331
    %v2016 = vunpack.c.l.b16 %v332
    %v2017 = vunpack.c.l.b16 %v333
    %v2018 = vunpack.c.l.b16 %v334
    %v2019 = vunpack.c.l.b16 %v335
    %v2020 = vunpack.c.l.b16 %v336
    %v2021 = vunpack.c.l.b16 %v337
    %v2022 = vunpack.c.l.b16 %v338
    %v2023 = vunpack.c.l.b16 %v339
    %v2024 = vunpack.c.l.b16 %v340
    %v2025 = vunpack.c.l.b16 %v341
    %v2026 = vunpack.c.l.b16 %v342
    %v2027 = vunpack.c.l.b16 %v343
    %v2028 = vunpack.c.l.b16 %v344
    %v2029 = vunpack.c.l.b16 %v345
    %v2030 = vunpack.c.l.b16 %v346
    %v2031 = vunpack.c.l.b16 %v347
    %v2032 = vunpack.c.l.b16 %v348
    %v2033 = vunpack.c.l.b16 %v349
    %v2034 = vunpack.c.l.b16 %v350
    %v2035 = vunpack.c.l.b16 %v351
    %v2036 = vunpack.c.l.b16 %v352
    %v2037 = vunpack.c.l.b16 %v353
    %v2038 = vunpack.c.l.b16 %v354
    %v2039 = vunpack.c.l.b16 %v355
    %v2040 = vunpack.c.l.b16 %v356
    %v2041 = vunpack.c.l.b16 %v357
    %v2042 = vunpack.c.l.b16 %v358
    %v2043 = vunpack.c.l.b16 %v359
    %v2044 = vunpack.c.l.b16 %v360
    %v2045 = vunpack.c.l.b16 %v361
    %v2046 = vunpack.c.l.b16 %v362
    %v2047 = vunpack.c.l.b16 %v363
    %v2048 = vunpack.c.l.b16 %v364
    %v2049 = vunpack.c.l.b16 %v365
    %v2050 = vunpack.c.l.b16 %v366
    %v2051 = vunpack.c.l.b16 %v367
    %v2052 = vunpack.c.l.b16 %v368
    %v2053 = vunpack.c.l.b16 %v369
    %v2054 = vunpack.c.l.b16 %v370
    %v2055 = vunpack.c.l.b16 %v371
    %v2056 = vunpack.c.l.b16 %v372
    %v2057 = vunpack.c.l.b16 %v373
    %v2058 = vunpack.c.l.b16 %v374
    %v2059 = vunpack.c.l.b16 %v375
    %v2060 = vunpack.c.l.b16 %v376
    %v2061 = vunpack.c.l.b16 %v377
    %v2062 = vunpack.c.l.b16 %v378
    %v2063 = vunpack.c.l.b16 %v379
    %v2064 = vunpack.c.l.b16 %v380
    %v2065 = vunpack.c.l.b16 %v381
    %v2066 = vunpack.c.l.b16 %v382
    %v2067 = vunpack.c.l.b16 %v383
    %v2068 = vunpack.c.l.b16 %v384
    %v2069 = vunpack.c.l.b16 %v385
    %v2070 = vunpack.c.l.b16 %v386
    %v2071 = vunpack.c.l.b16 %v387
    %v2072 = vunpack.c.l.b16 %v388
    %v2073 = vunpack.c.l.b16 %v389
    %v2074 = vunpack.c.l.b16 %v390
    %v2075 = vunpack.c.l.b16 %v391
    %v2076 = vunpack.c.l.b16 %v392
    %v2077 = vunpack.c.l.b16 %v393
    %v2078 = vunpack.c.l.b16 %v394
    %v2079 = vunpack.c.l.b16 %v395
    %v2080 = vunpack.c.l.b16 %v396
    %v2081 = vunpack.c.l.b16 %v397
    %v2082 = vunpack.c.l.b16 %v398
    %v2083 = vunpack.c.l.b16 %v399
    %v2084 = vunpack.c.l.b16 %v400
    %v2085 = vunpack.c.l.b16 %v401
    %v2086 = vunpack.c.l.b16 %v402
    %v2087 = vunpack.c.l.b16 %v403
    %v2088 = vunpack.c.l.b16 %v404
    %v2089 = vunpack.c.l.b16 %v405
    %v2090 = vunpack.c.l.b16 %v406
    %v2091 = vunpack.c.l.b16 %v407
    %v2092 = vunpack.c.l.b16 %v408
    %v2093 = vunpack.c.l.b16 %v409
    %v2094 = vunpack.c.l.b16 %v410
    %v2095 = vunpack.c.l.b16 %v411
    %v2096 = vunpack.c.l.b16 %v412
    %v2097 = vunpack.c.l.b16 %v413
    %v2098 = vunpack.c.l.b16 %v414
    %v2099 = vunpack.c.l.b16 %v415
    %v2100 = vunpack.c.l.b16 %v416
    %v2101 = vunpack.c.l.b16 %v417
    %v2102 = vunpack.c.l.b16 %v418
    %v2103 = vunpack.c.l.b16 %v419
    %v2104 = vunpack.c.l.b16 %v420
    %v2105 = vunpack.c.l.b16 %v421
    %v2106 = vunpack.c.l.b16 %v422
    %v2107 = vunpack.c.l.b16 %v423
    %v2108 = vunpack.c.l.b16 %v424
    %v2109 = vunpack.c.l.b16 %v425
    %v2110 = vunpack.c.l.b16 %v426
    %v2111 = vunpack.c.l.b16 %v427
    %v2112 = vunpack.c.l.b16 %v428
    %v2113 = vunpack.c.l.b16 %v429
    %v2114 = vunpack.c.l.b16 %v430
    %v2115 = vunpack.c.l.b16 %v431
    %v2116 = vunpack.c.l.b16 %v432
    %v2117 = vunpack.c.l.b16 %v433
    %v2118 = vunpack.c.l.b16 %v434
    %v2119 = vunpack.c.l.b16 %v435
    %v2120 = vunpack.c.l.b16 %v436
    %v2121 = vunpack.c.l.b16 %v437
    %v2122 = vunpack.c.l.b16 %v438
    %v2123 = vunpack.c.l.b16 %v439
    %v2124 = vunpack.c.l.b16 %v440
    %v2125 = vunpack.c.l.b16 %v441
    %v2126 = vunpack.c.l.b16 %v442
    %v2127 = vunpack.c.l.b16 %v443
    %v2128 = vunpack.c.l.b16 %v444
    %v2129 = vunpack.c.l.b16 %v445
    %v2130 = vunpack.c.l.b16 %v446
    %v2131 = vunpack.c.l.b16 %v447
    %v2132 = vunpack.c.l.b16 %v448
    %v2133 = vunpack.c.l.b16 %v449
    %v2134 = vunpack.c.l.b16 %v450
    %v2135 = vunpack.c.l.b16 %v451
    %v2136 = vunpack.c.l.b16 %v452
    %v2137 = vunpack.c.l.b16 %v453
    %v2138 = vunpack.c.l.b16 %v454
    %v2139 = vunpack.c.l.b16 %v455
    %v2140 = vunpack.c.l.b16 %v456
    %v2141 = vunpack.c.l.b16 %v457
    %v2142 = vunpack.c.l.b16 %v458
    %v2143 = vunpack.c.l.b16 %v459
    %v2144 = vunpack.c.l.b16 %v460
    %v2145 = vunpack.c.l.b16 %v461
    %v2146 = vunpack.c.l.b16 %v462
    %v2147 = vunpack.c.l.b16 %v463
    %v2148 = vunpack.c.l.b16 %v464
    %v2149 = vunpack.c.l.b16 %v465
    %v2150 = vunpack.c.l.b16 %v466
    %v2151 = vunpack.c.l.b16 %v467
    %v2152 = vunpack.c.l.b16 %v468
    %v2153 = vunpack.c.l.b16 %v469
    %v2154 = vunpack.c.l.b16 %v470
    %v2155 = vunpack.c.l.b16 %v471
    %v2156 = vunpack.c.l.b16 %v472
    %v2157 = vunpack.c.l.b16 %v473
    %v2158 = vunpack.c.l.b16 %v474
    %v2159 = vunpack.c.l.b16 %v475
    %v2160 = vunpack.c.l.b16 %v476
    %v2161 = vunpack.c.l.b16 %v477
    %v2162 = vunpack.c.l.b16 %v478
    %v2163 = vunpack.c.l.b16 %v479
    %v2164 = vunpack.c.l.b16 %v480
    %v2165 = vunpack.c.l.b16 %v481
    %v2166 = vunpack.c.l.b16 %v482
    %v2167 = vunpack.c.l.b16 %v483
    %v2168 = vunpack.c.l.b16 %v484
    %v2169 = vunpack.c.l.b16 %v485
    %v2170 = vunpack.c.l.b16 %v486
    %v2171 = vunpack.c.l.b16 %v487
    %v2172 = vunpack.c.l.b16 %v488
    %v2173 = vunpack.c.l.b16 %v489
    %v2174 = vunpack.c.l.b16 %v490
    %v2175 = vunpack.c.l.b16 %v491
    %v2176 = vunpack.c.l.b16 %v492
    %v2177 = vunpack.c.l.b16 %v493
    %v2178 = vunpack.c.l.b16 %v494
    %v2179 = vunpack.c.l.b16 %v495
    %v2180 = vunpack.c.l.b16 %v496
    %v2181 = vunpack.c.l.b16 %v497
    %v2182 = vunpack.c.l.b16 %v498
    %v2183 = vunpack.c.l.b16 %v499
    %v2184 = vunpack.c.l.b16 %v500
    %v2185 = vunpack.c.l.b16 %v501
    %v2186 = vunpack.c.l.b16 %v502
    %v2187 = vunpack.c.l.b16 %v503
    %v2188 = vunpack.c.l.b16 %v504
    %v2189 = vunpack.c.l.b16 %v505
    %v2190 = vunpack.c.l.b16 %v506
    %v2191 = vunpack.c.l.b16 %v507
    %v2192 = vunpack.c.l.b16 %v508
    %v2193 = vunpack.c.l.b16 %v509
    %v2194 = vunpack.c.l.b16 %v510
    %v2195 = vunpack.c.l.b16 %v511
    %v2196 = vunpack.c.l.b16 %v512
    %v2197 = vunpack.c.l.b16 %v513
    %v2198 = vunpack.c.l.b16 %v514
    %v2199 = vunpack.c.l.b16 %v515
    %v2200 = vunpack.c.l.b16 %v516
    %v2201 = vunpack.c.l.b16 %v517
    %v2202 = vunpack.c.l.b16 %v518
    %v2203 = vunpack.c.l.b16 %v519
    %v2204 = vunpack.c.l.b16 %v520
    %v2205 = vunpack.c.l.b16 %v521
    %v2206 = vunpack.c.l.b16 %v522
    %v2207 = vunpack.c.l.b16 %v523
    %v2208 = vunpack.c.l.b16 %v524
    %v2209 = vunpack.c.l.b16 %v525
    %v2210 = vunpack.c.l.b16 %v526
    %v2211 = vunpack.c.l.b16 %v527
    %v2212 = vunpack.c.l.b16 %v528
    %v2213 = vunpack.c.l.b16 %v529
    %v2214 = vunpack.c.l.b16 %v530
    %v2215 = vunpack.c.l.b16 %v531
    %v2216 = vunpack.c.l.b16 %v532
    %v2217 = vunpack.c.l.b16 %v533
    %v2218 = vunpack.c.l.b16 %v534
    %v2219 = vunpack.c.l.b16 %v535
    %v2220 = vunpack.c.l.b16 %v536
    %v2221 = vunpack.c.l.b16 %v537
    %v2222 = vunpack.c.l.b16 %v538
    %v2223 = vunpack.c.l.b16 %v539
    %v2224 = vunpack.c.l.b16 %v540
    %v2225 = vunpack.c.l.b16 %v541
    %v2226 = vunpack.c.l.b16 %v542
    %v2227 = vunpack.c.l.b16 %v543
    %v2228 = vunpack.c.l.b16 %v544
    %v2229 = vunpack.c.l.b16 %v545
    %v2230 = vunpack.c.l.b16 %v546
    %v2231 = vunpack.c.l.b16 %v547
    %v2232 = vunpack.c.l.b16 %v548
    %v2233 = vunpack.c.l.b16 %v549
    %v2234 = vunpack.c.l.b16 %v550
    %v2235 = vunpack.c.l.b16 %v551
    %v2236 = vunpack.c.l.b16 %v552
    %v2237 = vunpack.c.l.b16 %v553
    %v2238 = vunpack.c.l.b16 %v554
    %v2239 = vunpack.c.l.b16 %v555
    %v2240 = vunpack.c.l.b16 %v556
    %v2241 = vunpack.c.l.b16 %v557
    %v2242 = vunpack.c.l.b16 %v558
    %v2243 = vunpack.c.l.b16 %v559
    %v2244 = vunpack.c.l.b16 %v560
    %v2245 = vunpack.c.l.b16 %v561
    %v2246 = vunpack.c.l.b16 %v562
    %v2247 = vunpack.c.l.b16 %v563
    %v2248 = vunpack.c.l.b16 %v564
    %v2249 = vunpack.c.l.b16 %v565
    %v2250 = vunpack.c.l.b16 %v566
    %v2251 = vunpack.c.l.b16 %v567
    %v2252 = vunpack.c.l.b16 %v568
    %v2253 = vunpack.c.l.b16 %v569
    %v2254 = vunpack.c.l.b16 %v570
    %v2255 = vunpack.c.l.b16 %v571
    %v2256 = vunpack.c.l.b16 %v572
    %v2257 = vunpack.c.l.b16 %v573
    %v2258 = vunpack.c.l.b16 %v574
    %v2259 = vunpack.c.l.b16 %v575
    %v2260 = vunpack.c.l.b16 %v576
    %v2261 = vunpack.c.l.b16 %v577
    %v2262 = vunpack.c.l.b16 %v578
    %v2263 = vunpack.c.l.b16 %v579
    %v2264 = vunpack.c.l.b16 %v580
    %v2265 = vunpack.c.l.b16 %v581
    %v2266 = vunpack.c.l.b16 %v582
    %v2267 = vunpack.c.l.b16 %v583
    %v2268 = vunpack.c.l.b16 %v584
    %v2269 = vunpack.c.l.b16 %v585
    %v2270 = vunpack.c.l.b16 %v586
    %v2271 = vunpack.c.l.b16 %v587
    %v2272 = vunpack.c.l.b16 %v588
    %v2273 = vunpack.c.l.b16 %v589
    %v2274 = vunpack.c.l.b16 %v590
    %v2275 = vunpack.c.l.b16 %v591
    %v2276 = vunpack.c.l.b16 %v592
    %v2277 = vunpack.c.l.b16 %v593
    %v2278 = vunpack.c.l.b16 %v594
    %v2279 = vunpack.c.l.b16 %v595
    %v2280 = vunpack.c.l.b16 %v596
    %v2281 = vunpack.c.l.b16 %v597
    %v2282 = vunpack.c.l.b16 %v598
    %v2283 = vunpack.c.l.b16 %v599
    %v2284 = vunpack.c.l.b16 %v600
    %v2285 = vunpack.c.l.b16 %v601
    %v2286 = vunpack.c.l.b16 %v602
    %v2287 = vunpack.c.l.b16 %v603
    %v2288 = vunpack.c.l.b16 %v604
    %v2289 = vunpack.c.l.b16 %v605
    %v2290 = vunpack.c.l.b16 %v606
    %v2291 = vunpack.c.l.b16 %v607
    %v2292 = vunpack.c.l.b16 %v608
    %v2293 = vunpack.c.l.b16 %v609
    %v2294 = vunpack.c.l.b16 %v610
    %v2295 = vunpack.c.l.b16 %v611
    %v2296 = vunpack.c.l.b16 %v612
    %v2297 = vunpack.c.l.b16 %v613
    %v2298 = vunpack.c.l.b16 %v614
    %v2299 = vunpack.c.l.b16 %v615
    %v2300 = vunpack.c.l.b16 %v616
    %v2301 = vunpack.c.l.b16 %v617
    %v2302 = vunpack.c.l.b16 %v618
    %v2303 = vunpack.c.l.b16 %v619
    %v2304 = vunpack.c.l.b16 %v620
    %v2305 = vunpack.c.l.b16 %v621
    %v2306 = vunpack.c.l.b16 %v622
    %v2307 = vunpack.c.l.b16 %v623
    %v2308 = vunpack.c.l.b16 %v624
    %v2309 = vunpack.c.l.b16 %v625
    %v2310 = vunpack.c.l.b16 %v626
    %v2311 = vunpack.c.l.b16 %v627
    %v2312 = vunpack.c.l.b16 %v628
    %v2313 = vunpack.c.l.b16 %v629
    %v2314 = vunpack.c.l.b16 %v630
    %v2315 = vunpack.c.l.b16 %v631
    %v2316 = vunpack.c.l.b16 %v632
    %v2317 = vunpack.c.l.b16 %v633
    %v2318 = vunpack.c.l.b16 %v634
    %v2319 = vunpack.c.l.b16 %v635
    %v2320 = vunpack.c.l.b16 %v636
    %v2321 = vunpack.c.l.b16 %v637
    %v2322 = vunpack.c.l.b16 %v638
    %v2323 = vunpack.c.l.b16 %v639
    %v2324 = vunpack.c.l.b16 %v640
    %v2325 = vunpack.c.l.b16 %v641
    %v2326 = vunpack.c.l.b16 %v642
    %v2327 = vunpack.c.l.b16 %v643
    %v2328 = vunpack.c.l.b16 %v644
    %v2329 = vunpack.c.l.b16 %v645
    %v2330 = vunpack.c.l.b16 %v646
    %v2331 = vunpack.c.l.b16 %v647
    %v2332 = vunpack.c.l.b16 %v648
    %v2333 = vunpack.c.l.b16 %v649
    %v2334 = vunpack.c.l.b16 %v650
    %v2335 = vunpack.c.l.b16 %v651
    %v2336 = vunpack.c.l.b16 %v652
    %v2337 = vunpack.c.l.b16 %v653
    %v2338 = vunpack.c.l.b16 %v654
    %v2339 = vunpack.c.l.b16 %v655
    %v2340 = vunpack.c.l.b16 %v656
    %v2341 = vunpack.c.l.b16 %v657
    %v2342 = vunpack.c.l.b16 %v658
    %v2343 = vunpack.c.l.b16 %v659
    %v2344 = vunpack.c.l.b16 %v660
    %v2345 = vunpack.c.l.b16 %v661
    %v2346 = vunpack.c.l.b16 %v662
    %v2347 = vunpack.c.l.b16 %v663
    %v2348 = vunpack.c.l.b16 %v664
    %v2349 = vunpack.c.l.b16 %v665
    %v2350 = vunpack.c.l.b16 %v666
    %v2351 = vunpack.c.l.b16 %v667
    %v2352 = vunpack.c.l.b16 %v668
    %v2353 = vunpack.c.l.b16 %v669
    %v2354 = vunpack.c.l.b16 %v670
    %v2355 = vunpack.c.l.b16 %v671
    %v2356 = vunpack.c.l.b16 %v672
    %v2357 = vunpack.c.l.b16 %v673
    %v2358 = vunpack.c.l.b16 %v674
    %v2359 = vunpack.c.l.b16 %v675
    %v2360 = vunpack.c.l.b16 %v676
    %v2361 = vunpack.c.l.b16 %v677
    %v2362 = vunpack.c.l.b16 %v678
    %v2363 = vunpack.c.l.b16 %v679
    %v2364 = vunpack.c.l.b16 %v680
    %v2365 = vunpack.c.l.b16 %v681
    %v2366 = vunpack.c.l.b16 %v682
    %v2367 = vunpack.c.l.b16 %v683
    %v2368 = vunpack.c.l.b16 %v684
    %v2369 = vunpack.c.l.b16 %v685
    %v2370 = vunpack.c.l.b16 %v686
    %v2371 = vunpack.c.l.b16 %v687
    %v2372 = vunpack.c.l.b16 %v688
    %v2373 = vunpack.c.l.b16 %v689
    %v2374 = vunpack.c.l.b16 %v690
    %v2375 = vunpack.c.l.b16 %v691
    %v2376 = vunpack.c.l.b16 %v692
    %v2377 = vunpack.c.l.b16 %v693
    %v2378 = vunpack.c.l.b16 %v694
    %v2379 = vunpack.c.l.b16 %v695
    %v2380 = vunpack.c.l.b16 %v696
    %v2381 = vunpack.c.l.b16 %v697
    %v2382 = vunpack.c.l.b16 %v698
    %v2383 = vunpack.c.l.b16 %v699
    %v2384 = vunpack.c.l.b16 %v700
    %v2385 = vunpack.c.l.b16 %v701
    %v2386 = vunpack.c.l.b16 %v702
    %v2387 = vunpack.c.l.b16 %v703
    %v2388 = vunpack.c.l.b16 %v704
    %v2389 = vunpack.c.l.b16 %v705
    %v2390 = vunpack.c.l.b16 %v706
    %v2391 = vunpack.c.l.b16 %v707
    %v2392 = vunpack.c.l.b16 %v708
    %v2393 = vunpack.c.l.b16 %v709
    %v2394 = vunpack.c.l.b16 %v710
    %v2395 = vunpack.c.l.b16 %v711
    %v2396 = vunpack.c.l.b16 %v712
    %v2397 = vunpack.c.l.b16 %v713
    %v2398 = vunpack.c.l.b16 %v714
    %v2399 = vunpack.c.l.b16 %v715
    %v2400 = vunpack.c.l.b16 %v716
    %v2401 = vunpack.c.l.b16 %v717
    %v2402 = vunpack.c.l.b16 %v718
    %v2403 = vunpack.c.l.b16 %v719
    %v2404 = vunpack.c.l.b16 %v720
    %v2405 = vunpack.c.l.b16 %v721
    %v2406 = vunpack.c.l.b16 %v722
    %v2407 = vunpack.c.l.b16 %v723
    %v2408 = vunpack.c.l.b16 %v724
    %v2409 = vunpack.c.l.b16 %v725
    %v2410 = vunpack.c.l.b16 %v726
    %v2411 = vunpack.c.l.b16 %v727
    %v2412 = vunpack.c.l.b16 %v728
    %v2413 = vunpack.c.l.b16 %v729
    %v2414 = vunpack.c.l.b16 %v730
    %v2415 = vunpack.c.l.b16 %v731
    %v2416 = vunpack.c.l.b16 %v732
    %v2417 = vunpack.c.l.b16 %v733
    %v2418 = vunpack.c.l.b16 %v734
    %v2419 = vunpack.c.l.b16 %v735
    %v2420 = vunpack.c.l.b16 %v736
    %v2421 = vunpack.c.l.b16 %v737
    %v2422 = vunpack.c.l.b16 %v738
    %v2423 = vunpack.c.l.b16 %v739
    %v2424 = vunpack.c.l.b16 %v740
    %v2425 = vunpack.c.l.b16 %v741
    %v2426 = vunpack.c.l.b16 %v742
    %v2427 = vunpack.c.l.b16 %v743
    %v2428 = vunpack.c.l.b16 %v744
    %v2429 = vunpack.c.l.b16 %v745
    %v2430 = vunpack.c.l.b16 %v746
    %v2431 = vunpack.c.l.b16 %v747
    %v2432 = vunpack.c.l.b16 %v748
    %v2433 = vunpack.c.l.b16 %v749
    %v2434 = vunpack.c.l.b16 %v750
    %v2435 = vunpack.c.l.b16 %v751
    %v2436 = vunpack.c.l.b16 %v752
    %v2437 = vunpack.c.l.b16 %v753
    %v2438 = vunpack.c.l.b16 %v754
    %v2439 = vunpack.c.l.b16 %v755
    %v2440 = vunpack.c.l.b16 %v756
    %v2441 = vunpack.c.l.b16 %v757
    %v2442 = vunpack.c.l.b16 %v758
    %v2443 = vunpack.c.l.b16 %v759
    %v2444 = vunpack.c.l.b16 %v760
    %v2445 = vunpack.c.l.b16 %v761
    %v2446 = vunpack.c.l.b16 %v762
    %v2447 = vunpack.c.l.b16 %v763
    %v2448 = vunpack.c.l.b16 %v764
    %v2449 = vunpack.c.l.b16 %v765
    %v2450 = vunpack.c.l.b16 %v766
    %v2451 = vunpack.c.l.b16 %v767
    %v2452 = vunpack.c.l.b16 %v768
    %v2453 = vunpack.c.l.b16 %v769
    %v2454 = vunpack.c.l.b16 %v770
    %v2455 = vunpack.c.l.b16 %v771
    %v2456 = vunpack.c.l.b16 %v772
    %v2457 = vunpack.c.l.b16 %v773
    %v2458 = vunpack.c.l.b16 %v774
    %v2459 = vunpack.c.l.b16 %v775
    %v2460 = vunpack.c.l.b16 %v776
    %v2461 = vunpack.c.l.b16 %v777
    %v2462 = vunpack.c.l.b16 %v778
    %v2463 = vunpack.c.l.b16 %v779
    %v2464 = vunpack.c.l.b16 %v780
    %v2465 = vunpack.c.l.b16 %v781
    %v2466 = vunpack.c.l.b16 %v782
    %v2467 = vunpack.c.l.b16 %v783
    %v2468 = vunpack.c.l.b16 %v784
    %v2469 = vunpack.c.l.b16 %v785
    %v2470 = vunpack.c.l.b16 %v786
    %v2471 = vunpack.c.l.b16 %v787
    %v2472 = vunpack.c.l.b16 %v788
    %v2473 = vunpack.c.l.b16 %v789
    %v2474 = vunpack.c.l.b16 %v790
    %v2475 = vunpack.c.l.b16 %v791
    %v2476 = vunpack.c.l.b16 %v792
    %v2477 = vunpack.c.l.b16 %v793
    %v2478 = vunpack.c.l.b16 %v794
    %v2479 = vunpack.c.l.b16 %v795
    %v2480 = vunpack.c.l.b16 %v796
    %v2481 = vunpack.c.l.b16 %v797
    %v2482 = vunpack.c.l.b16 %v798
    %v2483 = vunpack.c.l.b16 %v799
    %v2484 = vunpack.c.l.b16 %v800
    %v2485 = vunpack.c.l.b16 %v801
    %v2486 = vunpack.c.l.b16 %v802
    %v2487 = vunpack.c.l.b16 %v803
    %v2488 = vunpack.c.l.b16 %v804
    %v2489 = vunpack.c.l.b16 %v805
    %v2490 = vunpack.c.l.b16 %v806
    %v2491 = vunpack.c.l.b16 %v807
    %v2492 = vunpack.c.l.b16 %v808
    %v2493 = vunpack.c.l.b16 %v809
    %v2494 = vunpack.c.l.b16 %v810
    %v2495 = vunpack.c.l.b16 %v811
    %v2496 = vpack.c.b16 %v1713, %v1712
    %v2497 = vpack.c.b16 %v1715, %v1714
    %v2498 = vpack.c.b16 %v1717, %v1716
    %v2499 = vpack.c.b16 %v1719, %v1718
    %v2500 = vpack.c.b16 %v1721, %v1720
    %v2501 = vpack.c.b16 %v1723, %v1722
    %v2502 = vpack.c.b16 %v1725, %v1724
    %v2503 = vpack.c.b16 %v1727, %v1726
    %v2504 = vpack.c.b16 %v1729, %v1728
    %v2505 = vpack.c.b16 %v1731, %v1730
    %v2506 = vpack.c.b16 %v1733, %v1732
    %v2507 = vpack.c.b16 %v1735, %v1734
    %v2508 = vpack.c.b16 %v1737, %v1736
    %v2509 = vpack.c.b16 %v1739, %v1738
    %v2510 = vpack.c.b16 %v1741, %v1740
    %v2511 = vpack.c.b16 %v1743, %v1742
    %v2512 = vpack.c.b16 %v1745, %v1744
    %v2513 = vpack.c.b16 %v1747, %v1746
    %v2514 = vpack.c.b16 %v1749, %v1748
    %v2515 = vpack.c.b16 %v1751, %v1750
    %v2516 = vpack.c.b16 %v1753, %v1752
    %v2517 = vpack.c.b16 %v1755, %v1754
    %v2518 = vpack.c.b16 %v1757, %v1756
    %v2519 = vpack.c.b16 %v1759, %v1758
    %v2520 = vpack.c.b16 %v1761, %v1760
    %v2521 = vpack.c.b16 %v1763, %v1762
    %v2522 = vpack.c.b16 %v1765, %v1764
    %v2523 = vpack.c.b16 %v1767, %v1766
    %v2524 = vpack.c.b16 %v1769, %v1768
    %v2525 = vpack.c.b16 %v1771, %v1770
    %v2526 = vpack.c.b16 %v1773, %v1772
    %v2527 = vpack.c.b16 %v1775, %v1774
    %v2528 = vpack.c.b16 %v1777, %v1776
    %v2529 = vpack.c.b16 %v1779, %v1778
    %v2530 = vpack.c.b16 %v1781, %v1780
    %v2531 = vpack.c.b16 %v1783, %v1782
    %v2532 = vpack.c.b16 %v1785, %v1784
    %v2533 = vpack.c.b16 %v1787, %v1786
    %v2534 = vpack.c.b16 %v1789, %v1788
    %v2535 = vpack.c.b16 %v1791, %v1790
    %v2536 = vpack.c.b16 %v1793, %v1792
    %v2537 = vpack.c.b16 %v1795, %v1794
    %v2538 = vpack.c.b16 %v1797, %v1796
    %v2539 = vpack.c.b16 %v1799, %v1798
    %v2540 = vpack.c.b16 %v1801, %v1800
    %v2541 = vpack.c.b16 %v1803, %v1802
    %v2542 = vpack.c.b16 %v1805, %v1804
    %v2543 = vpack.c.b16 %v1807, %v1806
    %v2544 = vpack.c.b16 %v1809, %v1808
    %v2545 = vpack.c.b16 %v1811, %v1810
    %v2546 = vpack.c.b16 %v1813, %v1812
    %v2547 = vpack.c.b16 %v1815, %v1814
    %v2548 = vpack.c.b16 %v1817, %v1816
    %v2549 = vpack.c.b16 %v1819, %v1818
    %v2550 = vpack.c.b16 %v1821, %v1820
    %v2551 = vpack.c.b16 %v1823, %v1822
    %v2552 = vpack.c.b16 %v1825, %v1824
    %v2553 = vpack.c.b16 %v1827, %v1826
    %v2554 = vpack.c.b16 %v1829, %v1828
    %v2555 = vpack.c.b16 %v1831, %v1830
    %v2556 = vpack.c.b16 %v1833, %v1832
    %v2557 = vpack.c.b16 %v1835, %v1834
    %v2558 = vpack.c.b16 %v1837, %v1836
    %v2559 = vpack.c.b16 %v1839, %v1838
    %v2560 = vpack.c.b16 %v1841, %v1840
    %v2561 = vpack.c.b16 %v1843, %v1842
    %v2562 = vpack.c.b16 %v1845, %v1844
    %v2563 = vpack.c.b16 %v1847, %v1846
    %v2564 = vpack.c.b16 %v1849, %v1848
    %v2565 = vpack.c.b16 %v1851, %v1850
    %v2566 = vpack.c.b16 %v1853, %v1852
    %v2567 = vpack.c.b16 %v1855, %v1854
    %v2568 = vpack.c.b16 %v1857, %v1856
    %v2569 = vpack.c.b16 %v1859, %v1858
    %v2570 = vpack.c.b16 %v1861, %v1860
    %v2571 = vpack.c.b16 %v1863, %v1862
    %v2572 = vpack.c.b16 %v1865, %v1864
    %v2573 = vpack.c.b16 %v1867, %v1866
    %v2574 = vpack.c.b16 %v1869, %v1868
    %v2575 = vpack.c.b16 %v1871, %v1870
    %v2576 = vpack.c.b16 %v1873, %v1872
    %v2577 = vpack.c.b16 %v1875, %v1874
    %v2578 = vpack.c.b16 %v1877, %v1876
    %v2579 = vpack.c.b16 %v1879, %v1878
    %v2580 = vpack.c.b16 %v1881, %v1880
    %v2581 = vpack.c.b16 %v1883, %v1882
    %v2582 = vpack.c.b16 %v1885, %v1884
    %v2583 = vpack.c.b16 %v1887, %v1886
    %v2584 = vpack.c.b16 %v1889, %v1888
    %v2585 = vpack.c.b16 %v1891, %v1890
    %v2586 = vpack.c.b16 %v1893, %v1892
    %v2587 = vpack.c.b16 %v1895, %v1894
    %v2588 = vpack.c.b16 %v1897, %v1896
    %v2589 = vpack.c.b16 %v1899, %v1898
    %v2590 = vpack.c.b16 %v1901, %v1900
    %v2591 = vpack.c.b16 %v1903, %v1902
    %v2592 = vpack.c.b16 %v1905, %v1904
    %v2593 = vpack.c.b16 %v1907, %v1906
    %v2594 = vpack.c.b16 %v1909, %v1908
    %v2595 = vpack.c.b16 %v1911, %v1910
    %v2596 = vpack.c.b16 %v1913, %v1912
    %v2597 = vpack.c.b16 %v1915, %v1914
    %v2598 = vpack.c.b16 %v1917, %v1916
    %v2599 = vpack.c.b16 %v1919, %v1918
    %v2600 = vpack.c.b16 %v1921, %v1920
    %v2601 = vpack.c.b16 %v1923, %v1922
    %v2602 = vpack.c.b16 %v1925, %v1924
    %v2603 = vpack.c.b16 %v1927, %v1926
    %v2604 = vpack.c.b16 %v1929, %v1928
    %v2605 = vpack.c.b16 %v1931, %v1930
    %v2606 = vpack.c.b16 %v1933, %v1932
    %v2607 = vpack.c.b16 %v1935, %v1934
    %v2608 = vpack.c.b16 %v1937, %v1936
    %v2609 = vpack.c.b16 %v1939, %v1938
    %v2610 = vpack.c.b16 %v1941, %v1940
    %v2611 = vpack.c.b16 %v1943, %v1942
    %v2612 = vpack.c.b16 %v1945, %v1944
    %v2613 = vpack.c.b16 %v1947, %v1946
    %v2614 = vpack.c.b16 %v1949, %v1948
    %v2615 = vpack.c.b16 %v1951, %v1950
    %v2616 = vpack.c.b16 %v1953, %v1952
    %v2617 = vpack.c.b16 %v1955, %v1954
    %v2618 = vpack.c.b16 %v1957, %v1956
    %v2619 = vpack.c.b16 %v1959, %v1958
    %v2620 = vpack.c.b16 %v1961, %v1960
    %v2621 = vpack.c.b16 %v1963, %v1962
    %v2622 = vpack.c.b16 %v1965, %v1964
    %v2623 = vpack.c.b16 %v1967, %v1966
    %v2624 = vpack.c.b16 %v1969, %v1968
    %v2625 = vpack.c.b16 %v1971, %v1970
    %v2626 = vpack.c.b16 %v1973, %v1972
    %v2627 = vpack.c.b16 %v1975, %v1974
    %v2628 = vpack.c.b16 %v1977, %v1976
    %v2629 = vpack.c.b16 %v1979, %v1978
    %v2630 = vpack.c.b16 %v1981, %v1980
    %v2631 = vpack.c.b16 %v1983, %v1982
    %v2632 = vpack.c.b16 %v1985, %v1984
    %v2633 = vpack.c.b16 %v1987, %v1986
    %v2634 = vpack.c.b16 %v1989, %v1988
    %v2635 = vpack.c.b16 %v1991, %v1990
    %v2636 = vpack.c.b16 %v1993, %v1992
    %v2637 = vpack.c.b16 %v1995, %v1994
    %v2638 = vpack.c.b16 %v1997, %v1996
    %v2639 = vpack.c.b16 %v1999, %v1998
    %v2640 = vpack.c.b16 %v2001, %v2000
    %v2641 = vpack.c.b16 %v2003, %v2002
    %v2642 = vpack.c.b16 %v2005, %v2004
    %v2643 = vpack.c.b16 %v2007, %v2006
    %v2644 = vpack.c.b16 %v2009, %v2008
    %v2645 = vpack.c.b16 %v2011, %v2010
    %v2646 = vpack.c.b16 %v2013, %v2012
    %v2647 = vpack.c.b16 %v2015, %v2014
    %v2648 = vpack.c.b16 %v2017, %v2016
    %v2649 = vpack.c.b16 %v2019, %v2018
    %v2650 = vpack.c.b16 %v2021, %v2020
    %v2651 = vpack.c.b16 %v2023, %v2022
    %v2652 = vpack.c.b16 %v2025, %v2024
    %v2653 = vpack.c.b16 %v2027, %v2026
    %v2654 = vpack.c.b16 %v2029, %v2028
    %v2655 = vpack.c.b16 %v2031, %v2030
    %v2656 = vpack.c.b16 %v2033, %v2032
    %v2657 = vpack.c.b16 %v2035, %v2034
    %v2658 = vpack.c.b16 %v2037, %v2036
    %v2659 = vpack.c.b16 %v2039, %v2038
    %v2660 = vpack.c.b16 %v2041, %v2040
    %v2661 = vpack.c.b16 %v2043, %v2042
    %v2662 = vpack.c.b16 %v2045, %v2044
    %v2663 = vpack.c.b16 %v2047, %v2046
    %v2664 = vpack.c.b16 %v2049, %v2048
    %v2665 = vpack.c.b16 %v2051, %v2050
    %v2666 = vpack.c.b16 %v2053, %v2052
    %v2667 = vpack.c.b16 %v2055, %v2054
    %v2668 = vpack.c.b16 %v2057, %v2056
    %v2669 = vpack.c.b16 %v2059, %v2058
    %v2670 = vpack.c.b16 %v2061, %v2060
    %v2671 = vpack.c.b16 %v2063, %v2062
    %v2672 = vpack.c.b16 %v2065, %v2064
    %v2673 = vpack.c.b16 %v2067, %v2066
    %v2674 = vpack.c.b16 %v2069, %v2068
    %v2675 = vpack.c.b16 %v2071, %v2070
    %v2676 = vpack.c.b16 %v2073, %v2072
    %v2677 = vpack.c.b16 %v2075, %v2074
    %v2678 = vpack.c.b16 %v2077, %v2076
    %v2679 = vpack.c.b16 %v2079, %v2078
    %v2680 = vpack.c.b16 %v2081, %v2080
    %v2681 = vpack.c.b16 %v2083, %v2082
    %v2682 = vpack.c.b16 %v2085, %v2084
    %v2683 = vpack.c.b16 %v2087, %v2086
    %v2684 = vpack.c.b16 %v2089, %v2088
    %v2685 = vpack.c.b16 %v2091, %v2090
    %v2686 = vpack.c.b16 %v2093, %v2092
    %v2687 = vpack.c.b16 %v2095, %v2094
    %v2688 = vpack.c.b16 %v2097, %v2096
    %v2689 = vpack.c.b16 %v2099, %v2098
    %v2690 = vpack.c.b16 %v2101, %v2100
    %v2691 = vpack.c.b16 %v2103, %v2102
    %v2692 = vpack.c.b16 %v2105, %v2104
    %v2693 = vpack.c.b16 %v2107, %v2106
    %v2694 = vpack.c.b16 %v2109, %v2108
    %v2695 = vpack.c.b16 %v2111, %v2110
    %v2696 = vpack.c.b16 %v2113, %v2112
    %v2697 = vpack.c.b16 %v2115, %v2114
    %v2698 = vpack.c.b16 %v2117, %v2116
    %v2699 = vpack.c.b16 %v2119, %v2118
    %v2700 = vpack.c.b16 %v2121, %v2120
    %v2701 = vpack.c.b16 %v2123, %v2122
    %v2702 = vpack.c.b16 %v2125, %v2124
    %v2703 = vpack.c.b16 %v2127, %v2126
    %v2704 = vpack.c.b16 %v2129, %v2128
    %v2705 = vpack.c.b16 %v2131, %v2130
    %v2706 = vpack.c.b16 %v2133, %v2132
    %v2707 = vpack.c.b16 %v2135, %v2134
    %v2708 = vpack.c.b16 %v2137, %v2136
    %v2709 = vpack.c.b16 %v2139, %v2138
    %v2710 = vpack.c.b16 %v2141, %v2140
    %v2711 = vpack.c.b16 %v2143, %v2142
    %v2712 = vpack.c.b16 %v2145, %v2144
    %v2713 = vpack.c.b16 %v2147, %v2146
    %v2714 = vpack.c.b16 %v2149, %v2148
    %v2715 = vpack.c.b16 %v2151, %v2150
    %v2716 = vpack.c.b16 %v2153, %v2152
    %v2717 = vpack.c.b16 %v2155, %v2154
    %v2718 = vpack.c.b16 %v2157, %v2156
    %v2719 = vpack.c.b16 %v2159, %v2158
    %v2720 = vpack.c.b16 %v2161, %v2160
    %v2721 = vpack.c.b16 %v2163, %v2162
    %v2722 = vpack.c.b16 %v2165, %v2164
    %v2723 = vpack.c.b16 %v2167, %v2166
    %v2724 = vpack.c.b16 %v2169, %v2168
    %v2725 = vpack.c.b16 %v2171, %v2170
    %v2726 = vpack.c.b16 %v2173, %v2172
    %v2727 = vpack.c.b16 %v2175, %v2174
    %v2728 = vpack.c.b16 %v2177, %v2176
    %v2729 = vpack.c.b16 %v2179, %v2178
    %v2730 = vpack.c.b16 %v2181, %v2180
    %v2731 = vpack.c.b16 %v2183, %v2182
    %v2732 = vpack.c.b16 %v2185, %v2184
    %v2733 = vpack.c.b16 %v2187, %v2186
    %v2734 = vpack.c.b16 %v2189, %v2188
    %v2735 = vpack.c.b16 %v2191, %v2190
    %v2736 = vpack.c.b16 %v2193, %v2192
    %v2737 = vpack.c.b16 %v2195, %v2194
    %v2738 = vpack.c.b16 %v2197, %v2196
    %v2739 = vpack.c.b16 %v2199, %v2198
    %v2740 = vpack.c.b16 %v2201, %v2200
    %v2741 = vpack.c.b16 %v2203, %v2202
    %v2742 = vpack.c.b16 %v2205, %v2204
    %v2743 = vpack.c.b16 %v2207, %v2206
    %v2744 = vpack.c.b16 %v2209, %v2208
    %v2745 = vpack.c.b16 %v2211, %v2210
    %v2746 = vpack.c.b16 %v2213, %v2212
    %v2747 = vpack.c.b16 %v2215, %v2214
    %v2748 = vpack.c.b16 %v2217, %v2216
    %v2749 = vpack.c.b16 %v2219, %v2218
    %v2750 = vpack.c.b16 %v2221, %v2220
    %v2751 = vpack.c.b16 %v2223, %v2222
    %v2752 = vpack.c.b16 %v2225, %v2224
    %v2753 = vpack.c.b16 %v2227, %v2226
    %v2754 = vpack.c.b16 %v2229, %v2228
    %v2755 = vpack.c.b16 %v2231, %v2230
    %v2756 = vpack.c.b16 %v2233, %v2232
    %v2757 = vpack.c.b16 %v2235, %v2234
    %v2758 = vpack.c.b16 %v2237, %v2236
    %v2759 = vpack.c.b16 %v2239, %v2238
    %v2760 = vpack.c.b16 %v2241, %v2240
    %v2761 = vpack.c.b16 %v2243, %v2242
    %v2762 = vpack.c.b16 %v2245, %v2244
    %v2763 = vpack.c.b16 %v2247, %v2246
    %v2764 = vpack.c.b16 %v2249, %v2248
    %v2765 = vpack.c.b16 %v2251, %v2250
    %v2766 = vpack.c.b16 %v2253, %v2252
    %v2767 = vpack.c.b16 %v2255, %v2254
    %v2768 = vpack.c.b16 %v2257, %v2256
    %v2769 = vpack.c.b16 %v2259, %v2258
    %v2770 = vpack.c.b16 %v2261, %v2260
    %v2771 = vpack.c.b16 %v2263, %v2262
    %v2772 = vpack.c.b16 %v2265, %v2264
    %v2773 = vpack.c.b16 %v2267, %v2266
    %v2774 = vpack.c.b16 %v2269, %v2268
    %v2775 = vpack.c.b16 %v2271, %v2270
    %v2776 = vpack.c.b16 %v2273, %v2272
    %v2777 = vpack.c.b16 %v2275, %v2274
    %v2778 = vpack.c.b16 %v2277, %v2276
    %v2779 = vpack.c.b16 %v2279, %v2278
    %v2780 = vpack.c.b16 %v2281, %v2280
    %v2781 = vpack.c.b16 %v2283, %v2282
    %v2782 = vpack.c.b16 %v2285, %v2284
    %v2783 = vpack.c.b16 %v2287, %v2286
    %v2784 = vpack.c.b16 %v2289, %v2288
    %v2785 = vpack.c.b16 %v2291, %v2290
    %v2786 = vpack.c.b16 %v2293, %v2292
    %v2787 = vpack.c.b16 %v2295, %v2294
    %v2788 = vpack.c.b16 %v2297, %v2296
    %v2789 = vpack.c.b16 %v2299, %v2298
    %v2790 = vpack.c.b16 %v2301, %v2300
    %v2791 = vpack.c.b16 %v2303, %v2302
    %v2792 = vpack.c.b16 %v2305, %v2304
    %v2793 = vpack.c.b16 %v2307, %v2306
    %v2794 = vpack.c.b16 %v2309, %v2308
    %v2795 = vpack.c.b16 %v2311, %v2310
    %v2796 = vpack.c.b16 %v2313, %v2312
    %v2797 = vpack.c.b16 %v2315, %v2314
    %v2798 = vpack.c.b16 %v2317, %v2316
    %v2799 = vpack.c.b16 %v2319, %v2318
    %v2800 = vpack.c.b16 %v2321, %v2320
    %v2801 = vpack.c.b16 %v2323, %v2322
    %v2802 = vpack.c.b16 %v2325, %v2324
    %v2803 = vpack.c.b16 %v2327, %v2326
    %v2804 = vpack.c.b16 %v2329, %v2328
    %v2805 = vpack.c.b16 %v2331, %v2330
    %v2806 = vpack.c.b16 %v2333, %v2332
    %v2807 = vpack.c.b16 %v2335, %v2334
    %v2808 = vpack.c.b16 %v2337, %v2336
    %v2809 = vpack.c.b16 %v2339, %v2338
    %v2810 = vpack.c.b16 %v2341, %v2340
    %v2811 = vpack.c.b16 %v2343, %v2342
    %v2812 = vpack.c.b16 %v2345, %v2344
    %v2813 = vpack.c.b16 %v2347, %v2346
    %v2814 = vpack.c.b16 %v2349, %v2348
    %v2815 = vpack.c.b16 %v2351, %v2350
    %v2816 = vpack.c.b16 %v2353, %v2352
    %v2817 = vpack.c.b16 %v2355, %v2354
    %v2818 = vpack.c.b16 %v2357, %v2356
    %v2819 = vpack.c.b16 %v2359, %v2358
    %v2820 = vpack.c.b16 %v2361, %v2360
    %v2821 = vpack.c.b16 %v2363, %v2362
    %v2822 = vpack.c.b16 %v2365, %v2364
    %v2823 = vpack.c.b16 %v2367, %v2366
    %v2824 = vpack.c.b16 %v2369, %v2368
    %v2825 = vpack.c.b16 %v2371, %v2370
    %v2826 = vpack.c.b16 %v2373, %v2372
    %v2827 = vpack.c.b16 %v2375, %v2374
    %v2828 = vpack.c.b16 %v2377, %v2376
    %v2829 = vpack.c.b16 %v2379, %v2378
    %v2830 = vpack.c.b16 %v2381, %v2380
    %v2831 = vpack.c.b16 %v2383, %v2382
    %v2832 = vpack.c.b16 %v2385, %v2384
    %v2833 = vpack.c.b16 %v2387, %v2386
    %v2834 = vpack.c.b16 %v2389, %v2388
    %v2835 = vpack.c.b16 %v2391, %v2390
    %v2836 = vpack.c.b16 %v2393, %v2392
    %v2837 = vpack.c.b16 %v2395, %v2394
    %v2838 = vpack.c.b16 %v2397, %v2396
    %v2839 = vpack.c.b16 %v2399, %v2398
    %v2840 = vpack.c.b16 %v2401, %v2400
    %v2841 = vpack.c.b16 %v2403, %v2402
    %v2842 = vpack.c.b16 %v2405, %v2404
    %v2843 = vpack.c.b16 %v2407, %v2406
    %v2844 = vpack.c.b16 %v2409, %v2408
    %v2845 = vpack.c.b16 %v2411, %v2410
    %v2846 = vpack.c.b16 %v2413, %v2412
    %v2847 = vpack.c.b16 %v2415, %v2414
    %v2848 = vpack.c.b16 %v2417, %v2416
    %v2849 = vpack.c.b16 %v2419, %v2418
    %v2850 = vpack.c.b16 %v2421, %v2420
    %v2851 = vpack.c.b16 %v2423, %v2422
    %v2852 = vpack.c.b16 %v2425, %v2424
    %v2853 = vpack.c.b16 %v2427, %v2426
    %v2854 = vpack.c.b16 %v2429, %v2428
    %v2855 = vpack.c.b16 %v2431, %v2430
    %v2856 = vpack.c.b16 %v2433, %v2432
    %v2857 = vpack.c.b16 %v2435, %v2434
    %v2858 = vpack.c.b16 %v2437, %v2436
    %v2859 = vpack.c.b16 %v2439, %v2438
    %v2860 = vpack.c.b16 %v2441, %v2440
    %v2861 = vpack.c.b16 %v2443, %v2442
    %v2862 = vpack.c.b16 %v2445, %v2444
    %v2863 = vpack.c.b16 %v2447, %v2446
    %v2864 = vpack.c.b16 %v2449, %v2448
    %v2865 = vpack.c.b16 %v2451, %v2450
    %v2866 = vpack.c.b16 %v2453, %v2452
    %v2867 = vpack.c.b16 %v2455, %v2454
    %v2868 = vpack.c.b16 %v2457, %v2456
    %v2869 = vpack.c.b16 %v2459, %v2458
    %v2870 = vpack.c.b16 %v2461, %v2460
    %v2871 = vpack.c.b16 %v2463, %v2462
    %v2872 = vpack.c.b16 %v2465, %v2464
    %v2873 = vpack.c.b16 %v2467, %v2466
    %v2874 = vpack.c.b16 %v2469, %v2468
    %v2875 = vpack.c.b16 %v2471, %v2470
    %v2876 = vpack.c.b16 %v2473, %v2472
    %v2877 = vpack.c.b16 %v2475, %v2474
    %v2878 = vpack.c.b16 %v2477, %v2476
    %v2879 = vpack.c.b16 %v2479, %v2478
    %v2880 = vpack.c.b16 %v2481, %v2480
    %v2881 = vpack.c.b16 %v2483, %v2482
    %v2882 = vpack.c.b16 %v2485, %v2484
    %v2883 = vpack.c.b16 %v2487, %v2486
    %v2884 = vpack.c.b16 %v2489, %v2488
    %v2885 = vpack.c.b16 %v2491, %v2490
    %v2886 = vpack.c.b16 %v2493, %v2492
    %v2887 = vpack.c.b16 %v2495, %v2494
    %3280 = vmatpush.bf16.msra.mxu0 %v2503
    %3281 = vmatpush.bf16.msra.mxu0 %v2502
    %3282 = vmatpush.bf16.msra.mxu0 %v2501
    %3283 = vmatpush.bf16.msra.mxu0 %v2500
    %3284 = vmatpush.bf16.msra.mxu0 %v2499
    %3285 = vmatpush.bf16.msra.mxu0 %v2498
    %3286 = vmatpush.bf16.msra.mxu0 %v2497
    %3287 = vmatpush.bf16.msra.mxu0 %v2496
    %3288 = vmatmul.bf16.gmra.mxu0 %v818
    %v3289 = vpop.f32.mrf.mxu0
    %v3290 = vadd.f32 %v814, %v3289
    %v3291 = vpop.f32.mrf.mxu0
    %3292 = vdwg.mxu0
    %3293 = vmatpush.bf16.msra.mxu0 %v2511
    %3294 = vmatpush.bf16.msra.mxu0 %v2510
    %3295 = vmatpush.bf16.msra.mxu0 %v2509
    %3296 = vmatpush.bf16.msra.mxu0 %v2508
    %3297 = vmatpush.bf16.msra.mxu0 %v2507
    %3298 = vmatpush.bf16.msra.mxu0 %v2506
    %3299 = vmatpush.bf16.msra.mxu0 %v2505
    %3300 = vmatpush.bf16.msra.mxu0 %v2504
    %3301 = vmatmul.bf16.gmra.mxu0 %v819
    %v3302 = vpop.f32.mrf.mxu0
    %v3303 = vadd.f32 %v3290, %v3302
    %v3304 = vpop.f32.mrf.mxu0
    %3305 = vdwg.mxu0
    %3306 = vmatpush.bf16.msra.mxu0 %v2519
    %3307 = vmatpush.bf16.msra.mxu0 %v2518
    %3308 = vmatpush.bf16.msra.mxu0 %v2517
    %3309 = vmatpush.bf16.msra.mxu0 %v2516
    %3310 = vmatpush.bf16.msra.mxu0 %v2515
    %3311 = vmatpush.bf16.msra.mxu0 %v2514
    %3312 = vmatpush.bf16.msra.mxu0 %v2513
    %3313 = vmatpush.bf16.msra.mxu0 %v2512
    %3314 = vmatmul.bf16.gmra.mxu0 %v820
    %v3315 = vpop.f32.mrf.mxu0
    %v3316 = vadd.f32 %v3303, %v3315
    %v3317 = vpop.f32.mrf.mxu0
    %3318 = vdwg.mxu0
    %3319 = vmatpush.bf16.msra.mxu0 %v2527
    %3320 = vmatpush.bf16.msra.mxu0 %v2526
    %3321 = vmatpush.bf16.msra.mxu0 %v2525
    %3322 = vmatpush.bf16.msra.mxu0 %v2524
    %3323 = vmatpush.bf16.msra.mxu0 %v2523
    %3324 = vmatpush.bf16.msra.mxu0 %v2522
    %3325 = vmatpush.bf16.msra.mxu0 %v2521
    %3326 = vmatpush.bf16.msra.mxu0 %v2520
    %3327 = vmatmul.bf16.gmra.mxu0 %v821
    %v3328 = vpop.f32.mrf.mxu0
    %v3329 = vadd.f32 %v3316, %v3328
    %v3330 = vpop.f32.mrf.mxu0
    %3331 = vdwg.mxu0
    %3332 = vmatpush.bf16.msra.mxu0 %v2535
    %3333 = vmatpush.bf16.msra.mxu0 %v2534
    %3334 = vmatpush.bf16.msra.mxu0 %v2533
    %3335 = vmatpush.bf16.msra.mxu0 %v2532
    %3336 = vmatpush.bf16.msra.mxu0 %v2531
    %3337 = vmatpush.bf16.msra.mxu0 %v2530
    %3338 = vmatpush.bf16.msra.mxu0 %v2529
    %3339 = vmatpush.bf16.msra.mxu0 %v2528
    %3340 = vmatmul.bf16.gmra.mxu0 %v822
    %v3341 = vpop.f32.mrf.mxu0
    %v3342 = vadd.f32 %v3329, %v3341
    %v3343 = vpop.f32.mrf.mxu0
    %3344 = vdwg.mxu0
    %3345 = vmatpush.bf16.msra.mxu0 %v2543
    %3346 = vmatpush.bf16.msra.mxu0 %v2542
    %3347 = vmatpush.bf16.msra.mxu0 %v2541
    %3348 = vmatpush.bf16.msra.mxu0 %v2540
    %3349 = vmatpush.bf16.msra.mxu0 %v2539
    %3350 = vmatpush.bf16.msra.mxu0 %v2538
    %3351 = vmatpush.bf16.msra.mxu0 %v2537
    %3352 = vmatpush.bf16.msra.mxu0 %v2536
    %3353 = vmatmul.bf16.gmra.mxu0 %v823
    %v3354 = vpop.f32.mrf.mxu0
    %v3355 = vadd.f32 %v3342, %v3354
    %v3356 = vpop.f32.mrf.mxu0
    %3357 = vdwg.mxu0
    %3358 = vmatpush.bf16.msra.mxu0 %v2551
    %3359 = vmatpush.bf16.msra.mxu0 %v2550
    %3360 = vmatpush.bf16.msra.mxu0 %v2549
    %3361 = vmatpush.bf16.msra.mxu0 %v2548
    %3362 = vmatpush.bf16.msra.mxu0 %v2547
    %3363 = vmatpush.bf16.msra.mxu0 %v2546
    %3364 = vmatpush.bf16.msra.mxu0 %v2545
    %3365 = vmatpush.bf16.msra.mxu0 %v2544
    %3366 = vmatmul.bf16.gmra.mxu0 %v824
    %v3367 = vpop.f32.mrf.mxu0
    %v3368 = vadd.f32 %v3355, %v3367
    %v3369 = vpop.f32.mrf.mxu0
    %3370 = vdwg.mxu0
    %3371 = vmatpush.bf16.msra.mxu0 %v2559
    %3372 = vmatpush.bf16.msra.mxu0 %v2558
    %3373 = vmatpush.bf16.msra.mxu0 %v2557
    %3374 = vmatpush.bf16.msra.mxu0 %v2556
    %3375 = vmatpush.bf16.msra.mxu0 %v2555
    %3376 = vmatpush.bf16.msra.mxu0 %v2554
    %3377 = vmatpush.bf16.msra.mxu0 %v2553
    %3378 = vmatpush.bf16.msra.mxu0 %v2552
    %3379 = vmatmul.bf16.gmra.mxu0 %v825
    %v3380 = vpop.f32.mrf.mxu0
    %v3381 = vadd.f32 %v3368, %v3380
    %v3382 = vpop.f32.mrf.mxu0
    %3383 = vdwg.mxu0
    %3384 = vmatpush.bf16.msra.mxu0 %v2567
    %3385 = vmatpush.bf16.msra.mxu0 %v2566
    %3386 = vmatpush.bf16.msra.mxu0 %v2565
    %3387 = vmatpush.bf16.msra.mxu0 %v2564
    %3388 = vmatpush.bf16.msra.mxu0 %v2563
    %3389 = vmatpush.bf16.msra.mxu0 %v2562
    %3390 = vmatpush.bf16.msra.mxu0 %v2561
    %3391 = vmatpush.bf16.msra.mxu0 %v2560
    %3392 = vmatmul.bf16.gmra.mxu0 %v828
    %v3393 = vpop.f32.mrf.mxu0
    %v3394 = vadd.f32 %v3381, %v3393
    %v3395 = vpop.f32.mrf.mxu0
    %3396 = vdwg.mxu0
    %3397 = vmatpush.bf16.msra.mxu0 %v2575
    %3398 = vmatpush.bf16.msra.mxu0 %v2574
    %3399 = vmatpush.bf16.msra.mxu0 %v2573
    %3400 = vmatpush.bf16.msra.mxu0 %v2572
    %3401 = vmatpush.bf16.msra.mxu0 %v2571
    %3402 = vmatpush.bf16.msra.mxu0 %v2570
    %3403 = vmatpush.bf16.msra.mxu0 %v2569
    %3404 = vmatpush.bf16.msra.mxu0 %v2568
    %3405 = vmatmul.bf16.gmra.mxu0 %v829
    %v3406 = vpop.f32.mrf.mxu0
    %v3407 = vadd.f32 %v3394, %v3406
    %v3408 = vpop.f32.mrf.mxu0
    %3409 = vdwg.mxu0
    %3410 = vmatpush.bf16.msra.mxu0 %v2583
    %3411 = vmatpush.bf16.msra.mxu0 %v2582
    %3412 = vmatpush.bf16.msra.mxu0 %v2581
    %3413 = vmatpush.bf16.msra.mxu0 %v2580
    %3414 = vmatpush.bf16.msra.mxu0 %v2579
    %3415 = vmatpush.bf16.msra.mxu0 %v2578
    %3416 = vmatpush.bf16.msra.mxu0 %v2577
    %3417 = vmatpush.bf16.msra.mxu0 %v2576
    %3418 = vmatmul.bf16.gmra.mxu0 %v830
    %v3419 = vpop.f32.mrf.mxu0
    %v3420 = vadd.f32 %v3407, %v3419
    %v3421 = vpop.f32.mrf.mxu0
    %3422 = vdwg.mxu0
    %3423 = vmatpush.bf16.msra.mxu0 %v2591
    %3424 = vmatpush.bf16.msra.mxu0 %v2590
    %3425 = vmatpush.bf16.msra.mxu0 %v2589
    %3426 = vmatpush.bf16.msra.mxu0 %v2588
    %3427 = vmatpush.bf16.msra.mxu0 %v2587
    %3428 = vmatpush.bf16.msra.mxu0 %v2586
    %3429 = vmatpush.bf16.msra.mxu0 %v2585
    %3430 = vmatpush.bf16.msra.mxu0 %v2584
    %3431 = vmatmul.bf16.gmra.mxu0 %v831
    %v3432 = vpop.f32.mrf.mxu0
    %v3433 = vadd.f32 %v3420, %v3432
    %v3434 = vpop.f32.mrf.mxu0
    %3435 = vdwg.mxu0
    %3436 = vmatpush.bf16.msra.mxu0 %v2599
    %3437 = vmatpush.bf16.msra.mxu0 %v2598
    %3438 = vmatpush.bf16.msra.mxu0 %v2597
    %3439 = vmatpush.bf16.msra.mxu0 %v2596
    %3440 = vmatpush.bf16.msra.mxu0 %v2595
    %3441 = vmatpush.bf16.msra.mxu0 %v2594
    %3442 = vmatpush.bf16.msra.mxu0 %v2593
    %3443 = vmatpush.bf16.msra.mxu0 %v2592
    %3444 = vmatmul.bf16.gmra.mxu0 %v832
    %v3445 = vpop.f32.mrf.mxu0
    %v3446 = vadd.f32 %v3433, %v3445
    %v3447 = vpop.f32.mrf.mxu0
    %3448 = vdwg.mxu0
    %3449 = vmatpush.bf16.msra.mxu0 %v2607
    %3450 = vmatpush.bf16.msra.mxu0 %v2606
    %3451 = vmatpush.bf16.msra.mxu0 %v2605
    %3452 = vmatpush.bf16.msra.mxu0 %v2604
    %3453 = vmatpush.bf16.msra.mxu0 %v2603
    %3454 = vmatpush.bf16.msra.mxu0 %v2602
    %3455 = vmatpush.bf16.msra.mxu0 %v2601
    %3456 = vmatpush.bf16.msra.mxu0 %v2600
    %3457 = vmatmul.bf16.gmra.mxu0 %v833
    %v3458 = vpop.f32.mrf.mxu0
    %v3459 = vadd.f32 %v3446, %v3458
    %v3460 = vpop.f32.mrf.mxu0
    %3461 = vdwg.mxu0
    %3462 = vmatpush.bf16.msra.mxu0 %v2615
    %3463 = vmatpush.bf16.msra.mxu0 %v2614
    %3464 = vmatpush.bf16.msra.mxu0 %v2613
    %3465 = vmatpush.bf16.msra.mxu0 %v2612
    %3466 = vmatpush.bf16.msra.mxu0 %v2611
    %3467 = vmatpush.bf16.msra.mxu0 %v2610
    %3468 = vmatpush.bf16.msra.mxu0 %v2609
    %3469 = vmatpush.bf16.msra.mxu0 %v2608
    %3470 = vmatmul.bf16.gmra.mxu0 %v834
    %v3471 = vpop.f32.mrf.mxu0
    %v3472 = vadd.f32 %v3459, %v3471
    %v3473 = vpop.f32.mrf.mxu0
    %3474 = vdwg.mxu0
    %3475 = vmatpush.bf16.msra.mxu0 %v2623
    %3476 = vmatpush.bf16.msra.mxu0 %v2622
    %3477 = vmatpush.bf16.msra.mxu0 %v2621
    %3478 = vmatpush.bf16.msra.mxu0 %v2620
    %3479 = vmatpush.bf16.msra.mxu0 %v2619
    %3480 = vmatpush.bf16.msra.mxu0 %v2618
    %3481 = vmatpush.bf16.msra.mxu0 %v2617
    %3482 = vmatpush.bf16.msra.mxu0 %v2616
    %3483 = vmatmul.bf16.gmra.mxu0 %v835
    %v3484 = vpop.f32.mrf.mxu0
    %v3485 = vadd.f32 %v3472, %v3484
    %v3486 = vpop.f32.mrf.mxu0
    %3487 = vdwg.mxu0
    %3488 = vmatpush.bf16.msra.mxu0 %v2631
    %3489 = vmatpush.bf16.msra.mxu0 %v2630
    %3490 = vmatpush.bf16.msra.mxu0 %v2629
    %3491 = vmatpush.bf16.msra.mxu0 %v2628
    %3492 = vmatpush.bf16.msra.mxu0 %v2627
    %3493 = vmatpush.bf16.msra.mxu0 %v2626
    %3494 = vmatpush.bf16.msra.mxu0 %v2625
    %3495 = vmatpush.bf16.msra.mxu0 %v2624
    %3496 = vmatmul.bf16.gmra.mxu0 %v838
    %v3497 = vpop.f32.mrf.mxu0
    %v3498 = vadd.f32 %v3485, %v3497
    %v3499 = vpop.f32.mrf.mxu0
    %3500 = vdwg.mxu0
    %3501 = vmatpush.bf16.msra.mxu0 %v2639
    %3502 = vmatpush.bf16.msra.mxu0 %v2638
    %3503 = vmatpush.bf16.msra.mxu0 %v2637
    %3504 = vmatpush.bf16.msra.mxu0 %v2636
    %3505 = vmatpush.bf16.msra.mxu0 %v2635
    %3506 = vmatpush.bf16.msra.mxu0 %v2634
    %3507 = vmatpush.bf16.msra.mxu0 %v2633
    %3508 = vmatpush.bf16.msra.mxu0 %v2632
    %3509 = vmatmul.bf16.gmra.mxu0 %v839
    %v3510 = vpop.f32.mrf.mxu0
    %v3511 = vadd.f32 %v3498, %v3510
    %v3512 = vpop.f32.mrf.mxu0
    %3513 = vdwg.mxu0
    %3514 = vmatpush.bf16.msra.mxu0 %v2647
    %3515 = vmatpush.bf16.msra.mxu0 %v2646
    %3516 = vmatpush.bf16.msra.mxu0 %v2645
    %3517 = vmatpush.bf16.msra.mxu0 %v2644
    %3518 = vmatpush.bf16.msra.mxu0 %v2643
    %3519 = vmatpush.bf16.msra.mxu0 %v2642
    %3520 = vmatpush.bf16.msra.mxu0 %v2641
    %3521 = vmatpush.bf16.msra.mxu0 %v2640
    %3522 = vmatmul.bf16.gmra.mxu0 %v840
    %v3523 = vpop.f32.mrf.mxu0
    %v3524 = vadd.f32 %v3511, %v3523
    %v3525 = vpop.f32.mrf.mxu0
    %3526 = vdwg.mxu0
    %3527 = vmatpush.bf16.msra.mxu0 %v2655
    %3528 = vmatpush.bf16.msra.mxu0 %v2654
    %3529 = vmatpush.bf16.msra.mxu0 %v2653
    %3530 = vmatpush.bf16.msra.mxu0 %v2652
    %3531 = vmatpush.bf16.msra.mxu0 %v2651
    %3532 = vmatpush.bf16.msra.mxu0 %v2650
    %3533 = vmatpush.bf16.msra.mxu0 %v2649
    %3534 = vmatpush.bf16.msra.mxu0 %v2648
    %3535 = vmatmul.bf16.gmra.mxu0 %v841
    %v3536 = vpop.f32.mrf.mxu0
    %v3537 = vadd.f32 %v3524, %v3536
    %v3538 = vpop.f32.mrf.mxu0
    %3539 = vdwg.mxu0
    %3540 = vmatpush.bf16.msra.mxu0 %v2663
    %3541 = vmatpush.bf16.msra.mxu0 %v2662
    %3542 = vmatpush.bf16.msra.mxu0 %v2661
    %3543 = vmatpush.bf16.msra.mxu0 %v2660
    %3544 = vmatpush.bf16.msra.mxu0 %v2659
    %3545 = vmatpush.bf16.msra.mxu0 %v2658
    %3546 = vmatpush.bf16.msra.mxu0 %v2657
    %3547 = vmatpush.bf16.msra.mxu0 %v2656
    %3548 = vmatmul.bf16.gmra.mxu0 %v842
    %v3549 = vpop.f32.mrf.mxu0
    %v3550 = vadd.f32 %v3537, %v3549
    %v3551 = vpop.f32.mrf.mxu0
    %3552 = vdwg.mxu0
    %3553 = vmatpush.bf16.msra.mxu0 %v2671
    %3554 = vmatpush.bf16.msra.mxu0 %v2670
    %3555 = vmatpush.bf16.msra.mxu0 %v2669
    %3556 = vmatpush.bf16.msra.mxu0 %v2668
    %3557 = vmatpush.bf16.msra.mxu0 %v2667
    %3558 = vmatpush.bf16.msra.mxu0 %v2666
    %3559 = vmatpush.bf16.msra.mxu0 %v2665
    %3560 = vmatpush.bf16.msra.mxu0 %v2664
    %3561 = vmatmul.bf16.gmra.mxu0 %v843
    %v3562 = vpop.f32.mrf.mxu0
    %v3563 = vadd.f32 %v3550, %v3562
    %v3564 = vpop.f32.mrf.mxu0
    %3565 = vdwg.mxu0
    %3566 = vmatpush.bf16.msra.mxu0 %v2679
    %3567 = vmatpush.bf16.msra.mxu0 %v2678
    %3568 = vmatpush.bf16.msra.mxu0 %v2677
    %3569 = vmatpush.bf16.msra.mxu0 %v2676
    %3570 = vmatpush.bf16.msra.mxu0 %v2675
    %3571 = vmatpush.bf16.msra.mxu0 %v2674
    %3572 = vmatpush.bf16.msra.mxu0 %v2673
    %3573 = vmatpush.bf16.msra.mxu0 %v2672
    %3574 = vmatmul.bf16.gmra.mxu0 %v844
    %v3575 = vpop.f32.mrf.mxu0
    %v3576 = vadd.f32 %v3563, %v3575
    %v3577 = vpop.f32.mrf.mxu0
    %3578 = vdwg.mxu0
    %3579 = vmatpush.bf16.msra.mxu0 %v2687
    %3580 = vmatpush.bf16.msra.mxu0 %v2686
    %3581 = vmatpush.bf16.msra.mxu0 %v2685
    %3582 = vmatpush.bf16.msra.mxu0 %v2684
    %3583 = vmatpush.bf16.msra.mxu0 %v2683
    %3584 = vmatpush.bf16.msra.mxu0 %v2682
    %3585 = vmatpush.bf16.msra.mxu0 %v2681
    %3586 = vmatpush.bf16.msra.mxu0 %v2680
    %3587 = vmatmul.bf16.gmra.mxu0 %v845
    %v3588 = vpop.f32.mrf.mxu0
    %v3589 = vadd.f32 %v3576, %v3588
    %v3590 = vpop.f32.mrf.mxu0
    %3591 = vdwg.mxu0
    %3592 = vmatpush.bf16.msra.mxu0 %v2695
    %3593 = vmatpush.bf16.msra.mxu0 %v2694
    %3594 = vmatpush.bf16.msra.mxu0 %v2693
    %3595 = vmatpush.bf16.msra.mxu0 %v2692
    %3596 = vmatpush.bf16.msra.mxu0 %v2691
    %3597 = vmatpush.bf16.msra.mxu0 %v2690
    %3598 = vmatpush.bf16.msra.mxu0 %v2689
    %3599 = vmatpush.bf16.msra.mxu0 %v2688
    %3600 = vmatmul.bf16.gmra.mxu0 %v848
    %v3601 = vpop.f32.mrf.mxu0
    %v3602 = vadd.f32 %v3589, %v3601
    %v3603 = vpop.f32.mrf.mxu0
    %3604 = vdwg.mxu0
    %3605 = vmatpush.bf16.msra.mxu0 %v2703
    %3606 = vmatpush.bf16.msra.mxu0 %v2702
    %3607 = vmatpush.bf16.msra.mxu0 %v2701
    %3608 = vmatpush.bf16.msra.mxu0 %v2700
    %3609 = vmatpush.bf16.msra.mxu0 %v2699
    %3610 = vmatpush.bf16.msra.mxu0 %v2698
    %3611 = vmatpush.bf16.msra.mxu0 %v2697
    %3612 = vmatpush.bf16.msra.mxu0 %v2696
    %3613 = vmatmul.bf16.gmra.mxu0 %v849
    %v3614 = vpop.f32.mrf.mxu0
    %v3615 = vadd.f32 %v3602, %v3614
    %v3616 = vpop.f32.mrf.mxu0
    %3617 = vdwg.mxu0
    %3618 = vmatpush.bf16.msra.mxu0 %v2711
    %3619 = vmatpush.bf16.msra.mxu0 %v2710
    %3620 = vmatpush.bf16.msra.mxu0 %v2709
    %3621 = vmatpush.bf16.msra.mxu0 %v2708
    %3622 = vmatpush.bf16.msra.mxu0 %v2707
    %3623 = vmatpush.bf16.msra.mxu0 %v2706
    %3624 = vmatpush.bf16.msra.mxu0 %v2705
    %3625 = vmatpush.bf16.msra.mxu0 %v2704
    %3626 = vmatmul.bf16.gmra.mxu0 %v850
    %v3627 = vpop.f32.mrf.mxu0
    %v3628 = vadd.f32 %v3615, %v3627
    %v3629 = vpop.f32.mrf.mxu0
    %3630 = vdwg.mxu0
    %3631 = vmatpush.bf16.msra.mxu0 %v2719
    %3632 = vmatpush.bf16.msra.mxu0 %v2718
    %3633 = vmatpush.bf16.msra.mxu0 %v2717
    %3634 = vmatpush.bf16.msra.mxu0 %v2716
    %3635 = vmatpush.bf16.msra.mxu0 %v2715
    %3636 = vmatpush.bf16.msra.mxu0 %v2714
    %3637 = vmatpush.bf16.msra.mxu0 %v2713
    %3638 = vmatpush.bf16.msra.mxu0 %v2712
    %3639 = vmatmul.bf16.gmra.mxu0 %v851
    %v3640 = vpop.f32.mrf.mxu0
    %v3641 = vadd.f32 %v3628, %v3640
    %v3642 = vpop.f32.mrf.mxu0
    %3643 = vdwg.mxu0
    %3644 = vmatpush.bf16.msra.mxu0 %v2727
    %3645 = vmatpush.bf16.msra.mxu0 %v2726
    %3646 = vmatpush.bf16.msra.mxu0 %v2725
    %3647 = vmatpush.bf16.msra.mxu0 %v2724
    %3648 = vmatpush.bf16.msra.mxu0 %v2723
    %3649 = vmatpush.bf16.msra.mxu0 %v2722
    %3650 = vmatpush.bf16.msra.mxu0 %v2721
    %3651 = vmatpush.bf16.msra.mxu0 %v2720
    %3652 = vmatmul.bf16.gmra.mxu0 %v852
    %v3653 = vpop.f32.mrf.mxu0
    %v3654 = vadd.f32 %v3641, %v3653
    %v3655 = vpop.f32.mrf.mxu0
    %3656 = vdwg.mxu0
    %3657 = vmatpush.bf16.msra.mxu0 %v2735
    %3658 = vmatpush.bf16.msra.mxu0 %v2734
    %3659 = vmatpush.bf16.msra.mxu0 %v2733
    %3660 = vmatpush.bf16.msra.mxu0 %v2732
    %3661 = vmatpush.bf16.msra.mxu0 %v2731
    %3662 = vmatpush.bf16.msra.mxu0 %v2730
    %3663 = vmatpush.bf16.msra.mxu0 %v2729
    %3664 = vmatpush.bf16.msra.mxu0 %v2728
    %3665 = vmatmul.bf16.gmra.mxu0 %v853
    %v3666 = vpop.f32.mrf.mxu0
    %v3667 = vadd.f32 %v3654, %v3666
    %v3668 = vpop.f32.mrf.mxu0
    %3669 = vdwg.mxu0
    %3670 = vmatpush.bf16.msra.mxu0 %v2743
    %3671 = vmatpush.bf16.msra.mxu0 %v2742
    %3672 = vmatpush.bf16.msra.mxu0 %v2741
    %3673 = vmatpush.bf16.msra.mxu0 %v2740
    %3674 = vmatpush.bf16.msra.mxu0 %v2739
    %3675 = vmatpush.bf16.msra.mxu0 %v2738
    %3676 = vmatpush.bf16.msra.mxu0 %v2737
    %3677 = vmatpush.bf16.msra.mxu0 %v2736
    %3678 = vmatmul.bf16.gmra.mxu0 %v854
    %v3679 = vpop.f32.mrf.mxu0
    %v3680 = vadd.f32 %v3667, %v3679
    %v3681 = vpop.f32.mrf.mxu0
    %3682 = vdwg.mxu0
    %3683 = vmatpush.bf16.msra.mxu0 %v2751
    %3684 = vmatpush.bf16.msra.mxu0 %v2750
    %3685 = vmatpush.bf16.msra.mxu0 %v2749
    %3686 = vmatpush.bf16.msra.mxu0 %v2748
    %3687 = vmatpush.bf16.msra.mxu0 %v2747
    %3688 = vmatpush.bf16.msra.mxu0 %v2746
    %3689 = vmatpush.bf16.msra.mxu0 %v2745
    %3690 = vmatpush.bf16.msra.mxu0 %v2744
    %3691 = vmatmul.bf16.gmra.mxu0 %v855
    %v3692 = vpop.f32.mrf.mxu0
    %v3693 = vadd.f32 %v3680, %v3692
    %v3694 = vpop.f32.mrf.mxu0
    %3695 = vdwg.mxu0
    %3696 = vmatpush.bf16.msra.mxu0 %v2759
    %3697 = vmatpush.bf16.msra.mxu0 %v2758
    %3698 = vmatpush.bf16.msra.mxu0 %v2757
    %3699 = vmatpush.bf16.msra.mxu0 %v2756
    %3700 = vmatpush.bf16.msra.mxu0 %v2755
    %3701 = vmatpush.bf16.msra.mxu0 %v2754
    %3702 = vmatpush.bf16.msra.mxu0 %v2753
    %3703 = vmatpush.bf16.msra.mxu0 %v2752
    %3704 = vmatmul.bf16.gmra.mxu0 %v858
    %v3705 = vpop.f32.mrf.mxu0
    %v3706 = vadd.f32 %v3693, %v3705
    %v3707 = vpop.f32.mrf.mxu0
    %3708 = vdwg.mxu0
    %3709 = vmatpush.bf16.msra.mxu0 %v2767
    %3710 = vmatpush.bf16.msra.mxu0 %v2766
    %3711 = vmatpush.bf16.msra.mxu0 %v2765
    %3712 = vmatpush.bf16.msra.mxu0 %v2764
    %3713 = vmatpush.bf16.msra.mxu0 %v2763
    %3714 = vmatpush.bf16.msra.mxu0 %v2762
    %3715 = vmatpush.bf16.msra.mxu0 %v2761
    %3716 = vmatpush.bf16.msra.mxu0 %v2760
    %3717 = vmatmul.bf16.gmra.mxu0 %v859
    %v3718 = vpop.f32.mrf.mxu0
    %v3719 = vadd.f32 %v3706, %v3718
    %v3720 = vpop.f32.mrf.mxu0
    %3721 = vdwg.mxu0
    %3722 = vmatpush.bf16.msra.mxu0 %v2775
    %3723 = vmatpush.bf16.msra.mxu0 %v2774
    %3724 = vmatpush.bf16.msra.mxu0 %v2773
    %3725 = vmatpush.bf16.msra.mxu0 %v2772
    %3726 = vmatpush.bf16.msra.mxu0 %v2771
    %3727 = vmatpush.bf16.msra.mxu0 %v2770
    %3728 = vmatpush.bf16.msra.mxu0 %v2769
    %3729 = vmatpush.bf16.msra.mxu0 %v2768
    %3730 = vmatmul.bf16.gmra.mxu0 %v860
    %v3731 = vpop.f32.mrf.mxu0
    %v3732 = vadd.f32 %v3719, %v3731
    %v3733 = vpop.f32.mrf.mxu0
    %3734 = vdwg.mxu0
    %3735 = vmatpush.bf16.msra.mxu0 %v2783
    %3736 = vmatpush.bf16.msra.mxu0 %v2782
    %3737 = vmatpush.bf16.msra.mxu0 %v2781
    %3738 = vmatpush.bf16.msra.mxu0 %v2780
    %3739 = vmatpush.bf16.msra.mxu0 %v2779
    %3740 = vmatpush.bf16.msra.mxu0 %v2778
    %3741 = vmatpush.bf16.msra.mxu0 %v2777
    %3742 = vmatpush.bf16.msra.mxu0 %v2776
    %3743 = vmatmul.bf16.gmra.mxu0 %v861
    %v3744 = vpop.f32.mrf.mxu0
    %v3745 = vadd.f32 %v3732, %v3744
    %v3746 = vpop.f32.mrf.mxu0
    %3747 = vdwg.mxu0
    %3748 = vmatpush.bf16.msra.mxu0 %v2791
    %3749 = vmatpush.bf16.msra.mxu0 %v2790
    %3750 = vmatpush.bf16.msra.mxu0 %v2789
    %3751 = vmatpush.bf16.msra.mxu0 %v2788
    %3752 = vmatpush.bf16.msra.mxu0 %v2787
    %3753 = vmatpush.bf16.msra.mxu0 %v2786
    %3754 = vmatpush.bf16.msra.mxu0 %v2785
    %3755 = vmatpush.bf16.msra.mxu0 %v2784
    %3756 = vmatmul.bf16.gmra.mxu0 %v862
    %v3757 = vpop.f32.mrf.mxu0
    %v3758 = vadd.f32 %v3745, %v3757
    %v3759 = vpop.f32.mrf.mxu0
    %3760 = vdwg.mxu0
    %3761 = vmatpush.bf16.msra.mxu0 %v2799
    %3762 = vmatpush.bf16.msra.mxu0 %v2798
    %3763 = vmatpush.bf16.msra.mxu0 %v2797
    %3764 = vmatpush.bf16.msra.mxu0 %v2796
    %3765 = vmatpush.bf16.msra.mxu0 %v2795
    %3766 = vmatpush.bf16.msra.mxu0 %v2794
    %3767 = vmatpush.bf16.msra.mxu0 %v2793
    %3768 = vmatpush.bf16.msra.mxu0 %v2792
    %3769 = vmatmul.bf16.gmra.mxu0 %v863
    %v3770 = vpop.f32.mrf.mxu0
    %v3771 = vadd.f32 %v3758, %v3770
    %v3772 = vpop.f32.mrf.mxu0
    %3773 = vdwg.mxu0
    %3774 = vmatpush.bf16.msra.mxu0 %v2807
    %3775 = vmatpush.bf16.msra.mxu0 %v2806
    %3776 = vmatpush.bf16.msra.mxu0 %v2805
    %3777 = vmatpush.bf16.msra.mxu0 %v2804
    %3778 = vmatpush.bf16.msra.mxu0 %v2803
    %3779 = vmatpush.bf16.msra.mxu0 %v2802
    %3780 = vmatpush.bf16.msra.mxu0 %v2801
    %3781 = vmatpush.bf16.msra.mxu0 %v2800
    %3782 = vmatmul.bf16.gmra.mxu0 %v864
    %v3783 = vpop.f32.mrf.mxu0
    %v3784 = vadd.f32 %v3771, %v3783
    %v3785 = vpop.f32.mrf.mxu0
    %3786 = vdwg.mxu0
    %3787 = vmatpush.bf16.msra.mxu0 %v2815
    %3788 = vmatpush.bf16.msra.mxu0 %v2814
    %3789 = vmatpush.bf16.msra.mxu0 %v2813
    %3790 = vmatpush.bf16.msra.mxu0 %v2812
    %3791 = vmatpush.bf16.msra.mxu0 %v2811
    %3792 = vmatpush.bf16.msra.mxu0 %v2810
    %3793 = vmatpush.bf16.msra.mxu0 %v2809
    %3794 = vmatpush.bf16.msra.mxu0 %v2808
    %3795 = vmatmul.bf16.gmra.mxu0 %v865
    %v3796 = vpop.f32.mrf.mxu0
    %v3797 = vadd.f32 %v3784, %v3796
    %v3798 = vpop.f32.mrf.mxu0
    %3799 = vdwg.mxu0
    %3800 = vmatpush.bf16.msra.mxu0 %v2823
    %3801 = vmatpush.bf16.msra.mxu0 %v2822
    %3802 = vmatpush.bf16.msra.mxu0 %v2821
    %3803 = vmatpush.bf16.msra.mxu0 %v2820
    %3804 = vmatpush.bf16.msra.mxu0 %v2819
    %3805 = vmatpush.bf16.msra.mxu0 %v2818
    %3806 = vmatpush.bf16.msra.mxu0 %v2817
    %3807 = vmatpush.bf16.msra.mxu0 %v2816
    %3808 = vmatmul.bf16.gmra.mxu0 %v868
    %v3809 = vpop.f32.mrf.mxu0
    %v3810 = vadd.f32 %v3797, %v3809
    %v3811 = vpop.f32.mrf.mxu0
    %3812 = vdwg.mxu0
    %3813 = vmatpush.bf16.msra.mxu0 %v2831
    %3814 = vmatpush.bf16.msra.mxu0 %v2830
    %3815 = vmatpush.bf16.msra.mxu0 %v2829
    %3816 = vmatpush.bf16.msra.mxu0 %v2828
    %3817 = vmatpush.bf16.msra.mxu0 %v2827
    %3818 = vmatpush.bf16.msra.mxu0 %v2826
    %3819 = vmatpush.bf16.msra.mxu0 %v2825
    %3820 = vmatpush.bf16.msra.mxu0 %v2824
    %3821 = vmatmul.bf16.gmra.mxu0 %v869
    %v3822 = vpop.f32.mrf.mxu0
    %v3823 = vadd.f32 %v3810, %v3822
    %v3824 = vpop.f32.mrf.mxu0
    %3825 = vdwg.mxu0
    %3826 = vmatpush.bf16.msra.mxu0 %v2839
    %3827 = vmatpush.bf16.msra.mxu0 %v2838
    %3828 = vmatpush.bf16.msra.mxu0 %v2837
    %3829 = vmatpush.bf16.msra.mxu0 %v2836
    %3830 = vmatpush.bf16.msra.mxu0 %v2835
    %3831 = vmatpush.bf16.msra.mxu0 %v2834
    %3832 = vmatpush.bf16.msra.mxu0 %v2833
    %3833 = vmatpush.bf16.msra.mxu0 %v2832
    %3834 = vmatmul.bf16.gmra.mxu0 %v870
    %v3835 = vpop.f32.mrf.mxu0
    %v3836 = vadd.f32 %v3823, %v3835
    %v3837 = vpop.f32.mrf.mxu0
    %3838 = vdwg.mxu0
    %3839 = vmatpush.bf16.msra.mxu0 %v2847
    %3840 = vmatpush.bf16.msra.mxu0 %v2846
    %3841 = vmatpush.bf16.msra.mxu0 %v2845
    %3842 = vmatpush.bf16.msra.mxu0 %v2844
    %3843 = vmatpush.bf16.msra.mxu0 %v2843
    %3844 = vmatpush.bf16.msra.mxu0 %v2842
    %3845 = vmatpush.bf16.msra.mxu0 %v2841
    %3846 = vmatpush.bf16.msra.mxu0 %v2840
    %3847 = vmatmul.bf16.gmra.mxu0 %v871
    %v3848 = vpop.f32.mrf.mxu0
    %v3849 = vadd.f32 %v3836, %v3848
    %v3850 = vpop.f32.mrf.mxu0
    %3851 = vdwg.mxu0
    %3852 = vmatpush.bf16.msra.mxu0 %v2855
    %3853 = vmatpush.bf16.msra.mxu0 %v2854
    %3854 = vmatpush.bf16.msra.mxu0 %v2853
    %3855 = vmatpush.bf16.msra.mxu0 %v2852
    %3856 = vmatpush.bf16.msra.mxu0 %v2851
    %3857 = vmatpush.bf16.msra.mxu0 %v2850
    %3858 = vmatpush.bf16.msra.mxu0 %v2849
    %3859 = vmatpush.bf16.msra.mxu0 %v2848
    %3860 = vmatmul.bf16.gmra.mxu0 %v872
    %v3861 = vpop.f32.mrf.mxu0
    %v3862 = vadd.f32 %v3849, %v3861
    %v3863 = vpop.f32.mrf.mxu0
    %3864 = vdwg.mxu0
    %3865 = vmatpush.bf16.msra.mxu0 %v2863
    %3866 = vmatpush.bf16.msra.mxu0 %v2862
    %3867 = vmatpush.bf16.msra.mxu0 %v2861
    %3868 = vmatpush.bf16.msra.mxu0 %v2860
    %3869 = vmatpush.bf16.msra.mxu0 %v2859
    %3870 = vmatpush.bf16.msra.mxu0 %v2858
    %3871 = vmatpush.bf16.msra.mxu0 %v2857
    %3872 = vmatpush.bf16.msra.mxu0 %v2856
    %3873 = vmatmul.bf16.gmra.mxu0 %v873
    %v3874 = vpop.f32.mrf.mxu0
    %v3875 = vadd.f32 %v3862, %v3874
    %v3876 = vpop.f32.mrf.mxu0
    %3877 = vdwg.mxu0
    %3878 = vmatpush.bf16.msra.mxu0 %v2871
    %3879 = vmatpush.bf16.msra.mxu0 %v2870
    %3880 = vmatpush.bf16.msra.mxu0 %v2869
    %3881 = vmatpush.bf16.msra.mxu0 %v2868
    %3882 = vmatpush.bf16.msra.mxu0 %v2867
    %3883 = vmatpush.bf16.msra.mxu0 %v2866
    %3884 = vmatpush.bf16.msra.mxu0 %v2865
    %3885 = vmatpush.bf16.msra.mxu0 %v2864
    %3886 = vmatmul.bf16.gmra.mxu0 %v874
    %v3887 = vpop.f32.mrf.mxu0
    %v3888 = vadd.f32 %v3875, %v3887
    %v3889 = vpop.f32.mrf.mxu0
    %3890 = vdwg.mxu0
    %3891 = vmatpush.bf16.msra.mxu0 %v2879
    %3892 = vmatpush.bf16.msra.mxu0 %v2878
    %3893 = vmatpush.bf16.msra.mxu0 %v2877
    %3894 = vmatpush.bf16.msra.mxu0 %v2876
    %3895 = vmatpush.bf16.msra.mxu0 %v2875
    %3896 = vmatpush.bf16.msra.mxu0 %v2874
    %3897 = vmatpush.bf16.msra.mxu0 %v2873
    %3898 = vmatpush.bf16.msra.mxu0 %v2872
    %3899 = vmatmul.bf16.gmra.mxu0 %v875
    %v3900 = vpop.f32.mrf.mxu0
    %v3901 = vadd.f32 %v3888, %v3900
    %v3902 = vpop.f32.mrf.mxu0
    %3903 = vdwg.mxu0
    %3904 = vmatpush.bf16.msra.mxu0 %v2887
    %3905 = vmatpush.bf16.msra.mxu0 %v2886
    %3906 = vmatpush.bf16.msra.mxu0 %v2885
    %3907 = vmatpush.bf16.msra.mxu0 %v2884
    %3908 = vmatpush.bf16.msra.mxu0 %v2883
    %3909 = vmatpush.bf16.msra.mxu0 %v2882
    %3910 = vmatpush.bf16.msra.mxu0 %v2881
    %3911 = vmatpush.bf16.msra.mxu0 %v2880
    %3912 = vmatmul.bf16.gmra.mxu0 %v878
    %v3913 = vpop.f32.mrf.mxu0
    %v3914 = vadd.f32 %v3901, %v3913
    %v3915 = vpop.f32.mrf.mxu0
    %3916 = vdwg.mxu0
    %v3917 = vxor.u32 %v3914, 2147483648
    %v3918 = vmul.f32 %v3917, 1.442695
    %v3919 = vpow.pop %v3918
    %v3920 = vadd.f32 %v3919, 1.0
    %v3921 = vrcp.pop %v3920
    %v3922 = vmul.f32 %v3920, %v3921
    %v3923 = vsub.f32 1.0, %v3922
    %v3924 = vmul.f32 %v3921, %v3923
    %v3925 = vadd.f32 %v3921, %v3924
    %vm3926 = vweird.f32 %v3920
    %vm3927 = vweird.f32 %v3921
    %vm3928 = vmor %vm3926, %vm3927
    %v3929 = vsel %vm3928, %v3921, %v3925
    %v3930 = vand.u32 2147483647, %v3920
    %vm3931 = vcmp.eq.f32.partialorder %v3930, 8.507059e+37
    %v3932 = vand.u32 %v3920, 2147483648
    %v3933 = vor.u32 1.1754944e-38, %v3932
    %v3934 = vsel %vm3931, %v3933, %v3929
    %v3935 = vmul.f32 1.0, %v3934
    %v3936 = vpack.c.bf16 %v3935, %v3935
    %v3937 = vld [vmem:[%s3] sm:$0xf]
    %v3938 = vld [vmem:[%s3 + $0x4] sm:$0xf]
    %v3939 = vld [vmem:[%s3 + $0x8] sm:$0xf]
    %v3940 = vld [vmem:[%s3 + $0xc] sm:$0xf]
    %v3941 = vld [vmem:[%s3 + $0x10] sm:$0xf]
    %v3942 = vld [vmem:[%s3 + $0x14] sm:$0xf]
    %v3943 = vld [vmem:[%s3 + $0x18] sm:$0xf]
    %v3944 = vld [vmem:[%s3 + $0x1c] sm:$0xf]
    %v3945 = vld [vmem:[%s3 + $0x20] sm:$0xf]
    %v3946 = vld [vmem:[%s3 + $0x24] sm:$0xf]
    %v3947 = vld [vmem:[%s3 + $0x28] sm:$0xf]
    %v3948 = vld [vmem:[%s3 + $0x2c] sm:$0xf]
    %v3949 = vld [vmem:[%s3 + $0x30] sm:$0xf]
    %v3950 = vld [vmem:[%s3 + $0x34] sm:$0xf]
    %v3951 = vld [vmem:[%s3 + $0x38] sm:$0xf]
    %v3952 = vld [vmem:[%s3 + $0x3c] sm:$0xf]
    %v3953 = vld [vmem:[%s4] sm:$0x1]
    %v3955 = vperm.slane %v3953, 0
    %v3973 = vunpack.c.l.b16 %v3937
    %v3974 = vunpack.c.l.b16 %v3938
    %v3975 = vunpack.c.l.b16 %v3939
    %v3976 = vunpack.c.l.b16 %v3940
    %v3977 = vunpack.c.l.b16 %v3941
    %v3978 = vunpack.c.l.b16 %v3942
    %v3979 = vunpack.c.l.b16 %v3943
    %v3980 = vunpack.c.l.b16 %v3944
    %v3981 = vunpack.c.l.b16 %v3945
    %v3982 = vunpack.c.l.b16 %v3946
    %v3983 = vunpack.c.l.b16 %v3947
    %v3984 = vunpack.c.l.b16 %v3948
    %v3985 = vunpack.c.l.b16 %v3949
    %v3986 = vunpack.c.l.b16 %v3950
    %v3987 = vunpack.c.l.b16 %v3951
    %v3988 = vunpack.c.l.b16 %v3952
    %v3989 = vpack.c.b16 %v3974, %v3973
    %v3990 = vpack.c.b16 %v3976, %v3975
    %v3991 = vpack.c.b16 %v3978, %v3977
    %v3992 = vpack.c.b16 %v3980, %v3979
    %v3993 = vpack.c.b16 %v3982, %v3981
    %v3994 = vpack.c.b16 %v3984, %v3983
    %v3995 = vpack.c.b16 %v3986, %v3985
    %v3996 = vpack.c.b16 %v3988, %v3987
    %4005 = vmatpush.bf16.msra.mxu0 %v3996
    %4006 = vmatpush.bf16.msra.mxu0 %v3995
    %4007 = vmatpush.bf16.msra.mxu0 %v3994
    %4008 = vmatpush.bf16.msra.mxu0 %v3993
    %4009 = vmatpush.bf16.msra.mxu0 %v3992
    %4010 = vmatpush.bf16.msra.mxu0 %v3991
    %4011 = vmatpush.bf16.msra.mxu0 %v3990
    %4012 = vmatpush.bf16.msra.mxu0 %v3989
    %4013 = vmatmul.bf16.gmra.mxu0 %v3936
    %v4014 = vpop.f32.mrf.mxu0
    %v4015 = vadd.f32 %v3955, %v4014
    %v4016 = vpop.f32.mrf.mxu0
    %4017 = vdwg.mxu0
    %vm4018 = vcmask 74752
    %v4019 = vsel %vm4018, %v4015, -inf
    %4020 = vmax.xlane.f32.xlu0 %v4019
    %v4021 = vpop.xlane.xlu0 %4020
    %v4022 = vsub.f32 %v4015, %v4021
    %v4023 = vmul.f32 %v4022, 1.442695
    %v4024 = vpow.pop %v4023
    %v4025 = vsel %vm4018, %v4024, 0.0
    %4026 = vadd.xlane.f32.xlu0 %v4025
    %v4027 = vpop.xlane.xlu0 %4026
    %v4028 = vrcp.pop %v4027
    %v4029 = vmul.f32 %v4027, %v4028
    %v4030 = vsub.f32 1.0, %v4029
    %v4031 = vmul.f32 %v4028, %v4030
    %v4032 = vadd.f32 %v4028, %v4031
    %vm4033 = vweird.f32 %v4027
    %vm4034 = vweird.f32 %v4028
    %vm4035 = vmor %vm4033, %vm4034
    %v4036 = vsel %vm4035, %v4028, %v4032
    %v4037 = vand.u32 2147483647, %v4027
    %vm4038 = vcmp.eq.f32.partialorder %v4037, 8.507059e+37
    %v4039 = vand.u32 %v4027, 2147483648
    %v4040 = vor.u32 1.1754944e-38, %v4039
    %v4041 = vsel %vm4038, %v4040, %v4036
    %v4042 = vmul.f32 %v4024, %v4041
    %4043 = vst.msk [vmem:[#allocation2] sm:$0x3] %vm4018, %v4042
    // Predicated region
    $region22: #{mnist_forward.5} parent=1 // pred_check
      _
    $region23: #{mnist_forward.5} parent=1 // pred_check_branch
      %4045 = sbr.rel (0) target = $region25
    $region24: #{mnist_forward.5} parent=1 // pred_region
      %4047 = vsyncadd [#allocation3], 0
      %s4049 = sshll.u32 [#allocation2], 4
      %s4050 = int_to_ptr.vmem [resolvable:$true] %s4049
      %s4051 = sshll.u32 %s5, 4
      %s4052 = int_to_ptr.hbm [resolvable:$true] %s4051
      %4054 = dma.vmem_to_hbm [thread:$0]  %s4050, 32, %s4052, [#allocation3]
    $region25: #{mnist_forward.5} parent=1 // pred_fallthru
      _
    // Predicated region
    $region26: #{mnist_forward.5} parent=1 // pred_check
      _
    $region27: #{mnist_forward.5} parent=1 // pred_check_branch
      %4056 = sbr.rel (0) target = $region29
    $region28: #{mnist_forward.5} parent=1 // pred_region
      %4058 = dma.done [#allocation3], 32
    $region29: #{mnist_forward.5} parent=1 // pred_fallthru
      _
    %4059 = vsyncpa [#allocation3], 1

</llo_original>
